<compile_context>
chip_gen: v7x
topology: tpu7x:2x2x1
jax: 0.10.0
libtpu: 0.0.40
codegen_flags: <defaults>
</compile_context>

<pallas_src>
import numpy as np

import jax
import jax.numpy as jnp
from jax.experimental import pallas as pl
from jax.experimental.pallas import tpu as pltpu


# ----------------------------- config ---------------------------------------
class Cfg:
    tts_adapter_hidden_size = 128
    tts_adapter_intermediate_size = 256
    tts_adapter_attention_heads = 4
    tts_adapter_hidden_layers = 2
    block_size = 2
    hidden_size = 128               # encoder hidden size (cross-attn KV input)
    code_layers = 3
    code_size = 32
    audio_special_tokens = 2
    audio_vocab_size = 128
    rope_theta = 10000.0
    rms_norm_eps = 1e-6
    num_key_value_groups = 4        # heads // kv_heads


CFG = Cfg()
HEAD_DIM = CFG.tts_adapter_hidden_size // CFG.tts_adapter_attention_heads      # 32
N_HEADS = CFG.tts_adapter_attention_heads                                      # 4
N_KV_HEADS = N_HEADS // CFG.num_key_value_groups                               # 1

# bf16 for MXU weights on all gens (elementwise math stays f32).
MATMUL_WEIGHT_DTYPE = jnp.bfloat16

BLOCK0_KEYS = ("self_attn_norm", "q_w", "kv_w", "self_o_w",
               "enc_norm", "enc_q_w", "enc_kv_w", "enc_o_w",
               "final_norm", "gate_up_w", "down_w")
REST_KEYS = ("self_attn_norm", "q_w", "kv_w", "self_o_w",
             "final_norm", "gate_up_w", "down_w")


# ----------------------------- host-side helpers ----------------------------
def _rope_tables(positions, head_dim, theta):
    inv_freq = 1.0 / (theta ** (jnp.arange(0, head_dim, 2, dtype=jnp.float32)
                                / head_dim))
    freqs = positions.astype(jnp.float32)[:, None] * inv_freq[None, :]
    cos = jnp.concatenate([jnp.cos(freqs), jnp.cos(freqs)], axis=-1)
    sin = jnp.concatenate([jnp.sin(freqs), jnp.sin(freqs)], axis=-1)
    return cos, sin                                   # [T, head_dim] each


def _rot_half_matrix(head_dim, n_heads):
    """Block-diag matrix R s.t. (x @ R) == neox rotate_half(x) per head."""
    half = head_dim // 2
    r = np.zeros((head_dim, head_dim), np.float32)
    r[np.arange(half) + half, np.arange(half)] = -1.0     # rot[:half] = -x[half:]
    r[np.arange(half), np.arange(half) + half] = 1.0      # rot[half:] =  x[:half]
    return jnp.asarray(np.kron(np.eye(n_heads, dtype=np.float32), r))


# ----------------------------- fused Pallas kernel ---------------------------
def _make_fused_kernel(cfg, seq_len):
    H = cfg.tts_adapter_hidden_size
    I = cfg.tts_adapter_intermediate_size
    V = cfg.audio_vocab_size
    D, NH = HEAD_DIM, N_HEADS
    Lh = cfg.tts_adapter_hidden_layers
    B = cfg.block_size
    CL = cfg.code_layers
    eps = cfg.rms_norm_eps
    T = seq_len
    n0, nr = len(BLOCK0_KEYS), len(REST_KEYS)
    scale = float(D) ** -0.5

    def kernel(ids_ref, table_ref, enc_ref, cosq_ref, sinq_ref, rot_ref, *refs):
        b0_refs = refs[:n0]
        pos = n0
        rest_hbm = ()
        if B > 1:
            rest_hbm = refs[pos:pos + nr]
            pos += nr
        out_ref = refs[pos]
        pos += 1
        if B > 1:
            rest_vmem = refs[pos:pos + nr]
            dma_sem = refs[pos + nr]

        # ---- 1) kick off HBM->VMEM prefetch of b>0 weight stacks (overlap
        #         with block-0 compute instead of paying it in the prologue) --
        copies = []
        if B > 1:
            copies = [pltpu.make_async_copy(rest_hbm[i], rest_vmem[i],
                                            dma_sem.at[i]) for i in range(nr)]
            for cp in copies:
                cp.start()

        # ---- 2) embedding: multi-hot @ table (one MXU pass; sum semantics) --
        ids = ids_ref[...]                                 # [T, CL] int32
        viota = jax.lax.broadcasted_iota(jnp.int32, (T, V), 1)
        mh = jnp.zeros((T, V), jnp.float32)
        for c in range(CL):
            mh = mh + (viota == ids[:, c:c + 1]).astype(jnp.float32)
        h = jnp.dot(mh, table_ref[...], preferred_element_type=jnp.float32)

        enc = enc_ref[...]                                 # [T_enc, H] f32
        cos_q = cosq_ref[...]                              # [T, NH*D] f32
        sin_q = sinq_ref[...]
        cos_k = cos_q[:, :D]
        sin_k = sin_q[:, :D]
        rot_q = rot_ref[...]                               # [NH*D, NH*D] f32
        rot_k = rot_q[:D, :D]                              # top-left block

        # ---- shared kernel math (all elementwise in f32) --------------------
        def rmsn(x, wn):
            var = jnp.mean(x * x, axis=-1, keepdims=True)
            return x * jax.lax.rsqrt(var + eps) * wn

        def wdot(x, w):
            # bf16 (or f32) weight matmul, f32 accumulation.
            return jnp.dot(x.astype(w.dtype), w,
                           preferred_element_type=jnp.float32)

        def attn(q, k, v, causal):
            # q: [Tq, NH*D]; k, v: [Tk, D] (single shared GQA K/V head).
            tq, tk = q.shape[0], k.shape[0]
            # stack heads onto sublanes -> [NH*Tq, D]
            qs = jnp.concatenate(
                [q[:, hh * D:(hh + 1) * D] for hh in range(NH)], axis=0)
            s = jax.lax.dot_general(qs, k, (((1,), (1,)), ((), ())),
                                    preferred_element_type=jnp.float32) * scale
            if causal:
                ki = jax.lax.broadcasted_iota(jnp.int32, (NH * tq, tk), 1)
                qi1 = jax.lax.broadcasted_iota(jnp.int32, (tq, tk), 0)
                qi = jnp.concatenate([qi1] * NH, axis=0)
                s = jnp.where(ki <= qi, s, -1e30)
            m = jnp.max(s, axis=-1, keepdims=True)
            p = jnp.exp(s - m)
            p = p * pl.reciprocal(jnp.sum(p, axis=-1, keepdims=True),
                                  approx=True)
            o = jnp.dot(p, v, preferred_element_type=jnp.float32)  # [NH*Tq, D]
            # unstack heads back onto lanes -> [Tq, NH*D]
            return jnp.concatenate(
                [o[hh * tq:(hh + 1) * tq, :] for hh in range(NH)], axis=-1)

        def block_step(h, w, has_cross):
            # -- self attention (causal, RoPE, GQA) --
            resid = h
            x = rmsn(h, w["self_attn_norm"])
            q = wdot(x, w["q_w"])                          # [T, NH*D]
            kv = wdot(x, w["kv_w"])                        # [T, 2*D]
            k, v = kv[:, :D], kv[:, D:]
            q = q * cos_q + jnp.dot(q, rot_q,
                                    preferred_element_type=jnp.float32) * sin_q
            k = k * cos_k + jnp.dot(k, rot_k,
                                    preferred_element_type=jnp.float32) * sin_k
            h = resid + wdot(attn(q, k, v, causal=True), w["self_o_w"])

            # -- cross attention on encoder states (block 0 only) --
            if has_cross:
                resid = h
                x = rmsn(h, w["enc_norm"])
                q = wdot(x, w["enc_q_w"])
                kv = wdot(enc, w["enc_kv_w"])
                k, v = kv[:, :D], kv[:, D:]
                h = resid + wdot(attn(q, k, v, causal=False), w["enc_o_w"])

            # -- MLP (SwiGLU) --
            resid = h
            x = rmsn(h, w["final_norm"])
            gu = wdot(x, w["gate_up_w"])
            gate, up = gu[:, :I], gu[:, I:]
            h = resid + wdot(gate * jax.nn.sigmoid(gate) * up, w["down_w"])
            return h

        def load_ws(refs_tuple, keys, i):
            w = {}
            for key, r in zip(keys, refs_tuple):
                if key.endswith("norm"):
                    w[key] = r[pl.ds(i, 1), :]             # [1, H] f32
                else:
                    w[key] = r[i]                          # [in, out] bf16
            return w

        # ---- 3) all adapter blocks, fully resident in VMEM ------------------
        for b in range(B):
            if b == 1:
                for cp in copies:                          # b>0 weights ready?
                    cp.wait()
            resid_outer = h
            for l in range(Lh):
                if b == 0:
                    w = load_ws(b0_refs, BLOCK0_KEYS, l)
                else:
                    w = load_ws(rest_vmem, REST_KEYS, (b - 1) * Lh + l)
                h = block_step(h, w, has_cross=(b == 0))
            # collect BEFORE the outer residual add (matches reference model)
            out_ref[:, b * H:(b + 1) * H] = h.astype(out_ref.dtype)
            h = resid_outer + h

    return kernel


# ----------------------------- parameters -----------------------------------
def init_params(key, cfg):
    H = cfg.tts_adapter_hidden_size
    I = cfg.tts_adapter_intermediate_size
    D = HEAD_DIM
    Hq, Hkv = N_HEADS, N_KV_HEADS

    def nrm(k, shape):
        return 0.02 * jax.random.normal(k, shape, jnp.float32)

    keys = iter(jax.random.split(
        key, 1 + cfg.tts_adapter_hidden_layers * cfg.block_size * 16))
    params = {"embed": nrm(next(keys), (cfg.audio_vocab_size, H)), "layers": []}
    for _ in range(cfg.tts_adapter_hidden_layers):
        blocks = []
        for b in range(cfg.block_size):
            p = {
                "self_attn_norm": jnp.ones((H,), jnp.float32),
                "qkv_w": nrm(next(keys), (H, (Hq + 2 * Hkv) * D)),
                "self_o_w": nrm(next(keys), (Hq * D, H)),
                "final_norm": jnp.ones((H,), jnp.float32),
                "gate_up_w": nrm(next(keys), (H, 2 * I)),
                "down_w": nrm(next(keys), (I, H)),
            }
            if b == 0:
                p.update({
                    "enc_norm": jnp.ones((H,), jnp.float32),
                    "enc_q_w": nrm(next(keys), (H, Hq * D)),
                    "enc_kv_w": nrm(next(keys), (cfg.hidden_size, 2 * Hkv * D)),
                    "enc_o_w": nrm(next(keys), (Hq * D, H)),
                })
            blocks.append(p)
        params["layers"].append(blocks)
    return params


def pack_params(params, cfg=CFG):
    """Stack per-(layer,block) weights once, outside jit (layout plumbing).

    Matmul weights -> MATMUL_WEIGHT_DTYPE (bf16); qkv split into q_w / kv_w;
    norm weights / embedding table stay f32.
    """
    L, B = cfg.tts_adapter_hidden_layers, cfg.block_size
    q_size = N_HEADS * HEAD_DIM
    wdt = MATMUL_WEIGHT_DTYPE

    def get(l, b, key):
        p = params["layers"][l][b]
        if key == "q_w":
            return p["qkv_w"][:, :q_size].astype(wdt)
        if key == "kv_w":
            return p["qkv_w"][:, q_size:].astype(wdt)
        v = p[key]
        if key.endswith("norm"):
            return v.astype(jnp.float32)
        return v.astype(wdt)

    block0 = tuple(jnp.stack([get(l, 0, k) for l in range(L)], axis=0)
                   for k in BLOCK0_KEYS)
    rest = tuple()
    if B > 1:
        rest = tuple(
            jnp.stack([get(l, b, k) for b in range(1, B) for l in range(L)],
                      axis=0)
            for k in REST_KEYS)
    return {"embed": params["embed"].astype(jnp.float32),
            "block0": block0, "rest": rest}


# ----------------------------- forward ---------------------------------------
def tts_adapter_forward(packed, input_ids, positions, encoder_hidden_states,
                        cfg=CFG):
    T = input_ids.shape[0]
    H = cfg.tts_adapter_hidden_size
    B = cfg.block_size

    pos_bias = (jnp.arange(cfg.code_layers, dtype=jnp.int32)
                * (cfg.code_size + cfg.audio_special_tokens))
    ids2d = input_ids.astype(jnp.int32) + pos_bias[None, :]      # [T, CL]
    cos, sin = _rope_tables(positions, HEAD_DIM, cfg.rope_theta)  # [T, D]
    cos_q = jnp.tile(cos, (1, N_HEADS))                           # [T, NH*D]
    sin_q = jnp.tile(sin, (1, N_HEADS))
    rot = _rot_half_matrix(HEAD_DIM, N_HEADS)                     # [NH*D, NH*D]

    vmem_args = [ids2d, packed["embed"],
                 encoder_hidden_states.astype(jnp.float32),
                 cos_q, sin_q, rot] + list(packed["block0"])
    hbm_args = list(packed["rest"])
    nr = len(hbm_args)

    def full_spec(a):
        nd = a.ndim
        return pl.BlockSpec(a.shape, lambda i, _n=nd: (0,) * _n)

    in_specs = ([full_spec(a) for a in vmem_args]
                + [pl.BlockSpec(memory_space=pl.ANY) for _ in hbm_args])
    scratch = [pltpu.VMEM(a.shape, a.dtype) for a in hbm_args]
    if nr:
        scratch.append(pltpu.SemaphoreType.DMA((nr,)))

    kernel = _make_fused_kernel(cfg, T)
    out = pl.pallas_call(
        kernel,
        out_shape=jax.ShapeDtypeStruct((T, B * H), jnp.float32),
        grid_spec=pltpu.PrefetchScalarGridSpec(
            num_scalar_prefetch=0,
            grid=(1,),                          # single step: whole model fused
            in_specs=in_specs,
            out_specs=pl.BlockSpec((T, B * H), lambda i: (0, 0)),
            scratch_shapes=scratch,
        ),
        compiler_params=pltpu.CompilerParams(
            dimension_semantics=("arbitrary",)),
    )(*vmem_args, *hbm_args)
    return out


# ----------------------------- pure-JAX reference (f32 ground truth) ---------
def _rms_ref(x, w, eps):
    xf = x.astype(jnp.float32)
    var = jnp.mean(xf * xf, axis=-1, keepdims=True)
    return xf * jax.lax.rsqrt(var + eps) * w.astype(jnp.float32)


def _rope_ref(x, cos, sin):
    d2 = x.shape[-1] // 2
    rot = jnp.concatenate([-x[:, d2:], x[:, :d2]], axis=-1)
    return x * cos + rot * sin


def _rope_heads_ref(x, cos, sin, n_heads, head_dim):
    if n_heads == 1:
        return _rope_ref(x, cos, sin)
    return jnp.concatenate(
        [_rope_ref(x[:, i * head_dim:(i + 1) * head_dim], cos, sin)
         for i in range(n_heads)], axis=-1)


def _mha_ref(q, k, v, cos, sin, *, n_heads, n_kv_heads, head_dim, scale,
             causal, rope_q):
    tq, tk = q.shape[0], k.shape[0]
    group = n_heads // n_kv_heads
    keep = None
    if causal:
        qi = jax.lax.broadcasted_iota(jnp.int32, (tq, tk), 0)
        ki = jax.lax.broadcasted_iota(jnp.int32, (tq, tk), 1)
        keep = ki <= qi
    outs = []
    for h in range(n_heads):
        qh = q[:, h * head_dim:(h + 1) * head_dim]
        if rope_q:
            qh = _rope_ref(qh, cos, sin)
        g = h // group
        kh = k[:, g * head_dim:(g + 1) * head_dim]
        vh = v[:, g * head_dim:(g + 1) * head_dim]
        s = jax.lax.dot_general(qh, kh, (((1,), (1,)), ((), ())),
                                preferred_element_type=jnp.float32) * scale
        if causal:
            s = jnp.where(keep, s, -1e30)
        m = jnp.max(s, axis=-1, keepdims=True)
        p = jnp.exp(s - m)
        p = p / jnp.sum(p, axis=-1, keepdims=True)
        outs.append(jnp.dot(p, vh, preferred_element_type=jnp.float32))
    return jnp.concatenate(outs, axis=-1)


def _ref_block_step(h, p, enc, cos, sin, *, has_cross, cfg):
    D, NH, NKV = HEAD_DIM, N_HEADS, N_KV_HEADS
    I = cfg.tts_adapter_intermediate_size
    eps = cfg.rms_norm_eps
    scale = float(D) ** -0.5
    q_size, kv_size = NH * D, NKV * D

    resid = h
    x = _rms_ref(h, p["self_attn_norm"], eps)
    qkv = jnp.dot(x, p["qkv_w"], preferred_element_type=jnp.float32)
    q = qkv[:, :q_size]
    k = qkv[:, q_size:q_size + kv_size]
    v = qkv[:, q_size + kv_size:]
    k = _rope_heads_ref(k, cos, sin, NKV, D)
    o = _mha_ref(q, k, v, cos, sin, n_heads=NH, n_kv_heads=NKV, head_dim=D,
                 scale=scale, causal=True, rope_q=True)
    h = resid + jnp.dot(o, p["self_o_w"], preferred_element_type=jnp.float32)

    if has_cross:
        resid = h
        x = _rms_ref(h, p["enc_norm"], eps)
        q = jnp.dot(x, p["enc_q_w"], preferred_element_type=jnp.float32)
        kv = jnp.dot(enc, p["enc_kv_w"], preferred_element_type=jnp.float32)
        k, v = kv[:, :kv_size], kv[:, kv_size:]
        o = _mha_ref(q, k, v, cos, sin, n_heads=NH, n_kv_heads=NKV, head_dim=D,
                     scale=scale, causal=False, rope_q=False)
        h = resid + jnp.dot(o, p["enc_o_w"], preferred_element_type=jnp.float32)

    resid = h
    x = _rms_ref(h, p["final_norm"], eps)
    gu = jnp.dot(x, p["gate_up_w"], preferred_element_type=jnp.float32)
    gate, up = gu[:, :I], gu[:, I:]
    h = resid + jnp.dot(gate * jax.nn.sigmoid(gate) * up, p["down_w"],
                        preferred_element_type=jnp.float32)
    return h


def reference_forward(params, input_ids, positions, encoder_hidden_states,
                      cfg=CFG):
    pos_bias = (jnp.arange(cfg.code_layers, dtype=jnp.int32)
                * (cfg.code_size + cfg.audio_special_tokens))
    ids = input_ids.astype(jnp.int32) + pos_bias[None, :]
    h = jnp.sum(params["embed"][ids].astype(jnp.float32), axis=1)     # [T, H]
    cos, sin = _rope_tables(positions, HEAD_DIM, cfg.rope_theta)
    enc = encoder_hidden_states.astype(jnp.float32)

    collected = []
    for b in range(cfg.block_size):
        resid = h
        for l in range(cfg.tts_adapter_hidden_layers):
            h = _ref_block_step(h, params["layers"][l][b], enc, cos, sin,
                                has_cross=(b == 0), cfg=cfg)
        collected.append(h)
        h = resid + h
    return jnp.concatenate(collected, axis=-1)


# ----------------------------- main ------------------------------------------
if __name__ == "__main__":
    key = jax.random.PRNGKey(0)
    k_par, k_ids, k_enc = jax.random.split(key, 3)

    T = 8        # decoder sequence length
    T_ENC = 16   # encoder sequence length

    params = init_params(k_par, CFG)
    packed = pack_params(params, CFG)
    input_ids = jax.random.randint(k_ids, (T, CFG.code_layers), 0, CFG.code_size,
                                   dtype=jnp.int32)
    positions = jnp.arange(T, dtype=jnp.int32)
    encoder_hidden_states = 0.1 * jax.random.normal(
        k_enc, (T_ENC, CFG.hidden_size), jnp.float32)

    fwd = jax.jit(tts_adapter_forward)
    out = fwd(packed, input_ids, positions, encoder_hidden_states)
    jax.block_until_ready(out)

    ref = reference_forward(params, input_ids, positions, encoder_hidden_states)
    assert out.shape == (T, CFG.tts_adapter_hidden_size * CFG.block_size)
    assert bool(jnp.all(jnp.isfinite(out)))
    max_err = float(jnp.max(jnp.abs(out - ref)))
    # bf16 MXU weights vs f32 reference: tolerance covers the cast error.
    assert max_err < 2e-2, max_err
    print("KERNEL_OK")
</pallas_src>

<mosaic_0001>
module attributes {stable_mosaic.version = 11 : i64} {
  func.func @kernel(%arg0: i32, %arg1: memref<8x3xi32, #tpu.memory_space<vmem>>, %arg2: memref<128x128xf32, #tpu.memory_space<vmem>>, %arg3: memref<16x128xf32, #tpu.memory_space<vmem>>, %arg4: memref<8x128xf32, #tpu.memory_space<vmem>>, %arg5: memref<8x128xf32, #tpu.memory_space<vmem>>, %arg6: memref<128x128xf32, #tpu.memory_space<vmem>>, %arg7: memref<2x128xf32, #tpu.memory_space<vmem>>, %arg8: memref<2x128x128xbf16, #tpu.memory_space<vmem>>, %arg9: memref<2x128x64xbf16, #tpu.memory_space<vmem>>, %arg10: memref<2x128x128xbf16, #tpu.memory_space<vmem>>, %arg11: memref<2x128xf32, #tpu.memory_space<vmem>>, %arg12: memref<2x128x128xbf16, #tpu.memory_space<vmem>>, %arg13: memref<2x128x64xbf16, #tpu.memory_space<vmem>>, %arg14: memref<2x128x128xbf16, #tpu.memory_space<vmem>>, %arg15: memref<2x128xf32, #tpu.memory_space<vmem>>, %arg16: memref<2x128x512xbf16, #tpu.memory_space<vmem>>, %arg17: memref<2x256x128xbf16, #tpu.memory_space<vmem>>, %arg18: memref<2x128xf32, #tpu.memory_space<any>>, %arg19: memref<2x128x128xbf16, #tpu.memory_space<any>>, %arg20: memref<2x128x64xbf16, #tpu.memory_space<any>>, %arg21: memref<2x128x128xbf16, #tpu.memory_space<any>>, %arg22: memref<2x128xf32, #tpu.memory_space<any>>, %arg23: memref<2x128x512xbf16, #tpu.memory_space<any>>, %arg24: memref<2x256x128xbf16, #tpu.memory_space<any>>, %arg25: memref<8x256xf32, #tpu.memory_space<vmem>>, %arg26: memref<2x128xf32, #tpu.memory_space<vmem>>, %arg27: memref<2x128x128xbf16, #tpu.memory_space<vmem>>, %arg28: memref<2x128x64xbf16, #tpu.memory_space<vmem>>, %arg29: memref<2x128x128xbf16, #tpu.memory_space<vmem>>, %arg30: memref<2x128xf32, #tpu.memory_space<vmem>>, %arg31: memref<2x128x512xbf16, #tpu.memory_space<vmem>>, %arg32: memref<2x256x128xbf16, #tpu.memory_space<vmem>>, %arg33: memref<7x!tpu.dma_semaphore, #tpu.memory_space<semaphore_mem>>) attributes {dimension_semantics = [#tpu.dimension_semantics<arbitrary>], iteration_bounds = array<i64: 1>, scalar_prefetch = 0 : i64, scratch_operands = 8 : i64, tpu.core_type = #tpu.core_type<tc>, window_params = [{pipeline_mode = #tpu.pipeline_mode<synchronous>, transform_indices = @transform_0, window_bounds = array<i64: 8, 3>}, {pipeline_mode = #tpu.pipeline_mode<synchronous>, transform_indices = @transform_1, window_bounds = array<i64: 128, 128>}, {pipeline_mode = #tpu.pipeline_mode<synchronous>, transform_indices = @transform_2, window_bounds = array<i64: 16, 128>}, {pipeline_mode = #tpu.pipeline_mode<synchronous>, transform_indices = @transform_3, window_bounds = array<i64: 8, 128>}, {pipeline_mode = #tpu.pipeline_mode<synchronous>, transform_indices = @transform_4, window_bounds = array<i64: 8, 128>}, {pipeline_mode = #tpu.pipeline_mode<synchronous>, transform_indices = @transform_5, window_bounds = array<i64: 128, 128>}, {pipeline_mode = #tpu.pipeline_mode<synchronous>, transform_indices = @transform_6, window_bounds = array<i64: 2, 128>}, {pipeline_mode = #tpu.pipeline_mode<synchronous>, transform_indices = @transform_7, window_bounds = array<i64: 2, 128, 128>}, {pipeline_mode = #tpu.pipeline_mode<synchronous>, transform_indices = @transform_8, window_bounds = array<i64: 2, 128, 64>}, {pipeline_mode = #tpu.pipeline_mode<synchronous>, transform_indices = @transform_9, window_bounds = array<i64: 2, 128, 128>}, {pipeline_mode = #tpu.pipeline_mode<synchronous>, transform_indices = @transform_10, window_bounds = array<i64: 2, 128>}, {pipeline_mode = #tpu.pipeline_mode<synchronous>, transform_indices = @transform_11, window_bounds = array<i64: 2, 128, 128>}, {pipeline_mode = #tpu.pipeline_mode<synchronous>, transform_indices = @transform_12, window_bounds = array<i64: 2, 128, 64>}, {pipeline_mode = #tpu.pipeline_mode<synchronous>, transform_indices = @transform_13, window_bounds = array<i64: 2, 128, 128>}, {pipeline_mode = #tpu.pipeline_mode<synchronous>, transform_indices = @transform_14, window_bounds = array<i64: 2, 128>}, {pipeline_mode = #tpu.pipeline_mode<synchronous>, transform_indices = @transform_15, window_bounds = array<i64: 2, 128, 512>}, {pipeline_mode = #tpu.pipeline_mode<synchronous>, transform_indices = @transform_16, window_bounds = array<i64: 2, 256, 128>}, {}, {}, {}, {}, {}, {}, {}, {pipeline_mode = #tpu.pipeline_mode<synchronous>, transform_indices = @transform_24, window_bounds = array<i64: 8, 256>}]} {
    %c0_i32 = arith.constant 0 : i32
    %0 = tpu.memref_slice %arg33[%c0_i32] : memref<7x!tpu.dma_semaphore, #tpu.memory_space<semaphore_mem>> -> memref<1x!tpu.dma_semaphore, #tpu.memory_space<semaphore_mem>>
    %1 = tpu.memref_squeeze %0 : memref<1x!tpu.dma_semaphore, #tpu.memory_space<semaphore_mem>> -> memref<!tpu.dma_semaphore, #tpu.memory_space<semaphore_mem>>
    tpu.enqueue_dma source(%arg18 : memref<2x128xf32, #tpu.memory_space<any>>) target(%arg26 : memref<2x128xf32, #tpu.memory_space<vmem>>) target_semaphore(%1 : memref<!tpu.dma_semaphore, #tpu.memory_space<semaphore_mem>>)
    %c1_i32 = arith.constant 1 : i32
    %2 = tpu.memref_slice %arg33[%c1_i32] : memref<7x!tpu.dma_semaphore, #tpu.memory_space<semaphore_mem>> -> memref<1x!tpu.dma_semaphore, #tpu.memory_space<semaphore_mem>>
    %3 = tpu.memref_squeeze %2 : memref<1x!tpu.dma_semaphore, #tpu.memory_space<semaphore_mem>> -> memref<!tpu.dma_semaphore, #tpu.memory_space<semaphore_mem>>
    tpu.enqueue_dma source(%arg19 : memref<2x128x128xbf16, #tpu.memory_space<any>>) target(%arg27 : memref<2x128x128xbf16, #tpu.memory_space<vmem>>) target_semaphore(%3 : memref<!tpu.dma_semaphore, #tpu.memory_space<semaphore_mem>>)
    %c2_i32 = arith.constant 2 : i32
    %4 = tpu.memref_slice %arg33[%c2_i32] : memref<7x!tpu.dma_semaphore, #tpu.memory_space<semaphore_mem>> -> memref<1x!tpu.dma_semaphore, #tpu.memory_space<semaphore_mem>>
    %5 = tpu.memref_squeeze %4 : memref<1x!tpu.dma_semaphore, #tpu.memory_space<semaphore_mem>> -> memref<!tpu.dma_semaphore, #tpu.memory_space<semaphore_mem>>
    tpu.enqueue_dma source(%arg20 : memref<2x128x64xbf16, #tpu.memory_space<any>>) target(%arg28 : memref<2x128x64xbf16, #tpu.memory_space<vmem>>) target_semaphore(%5 : memref<!tpu.dma_semaphore, #tpu.memory_space<semaphore_mem>>)
    %c3_i32 = arith.constant 3 : i32
    %6 = tpu.memref_slice %arg33[%c3_i32] : memref<7x!tpu.dma_semaphore, #tpu.memory_space<semaphore_mem>> -> memref<1x!tpu.dma_semaphore, #tpu.memory_space<semaphore_mem>>
    %7 = tpu.memref_squeeze %6 : memref<1x!tpu.dma_semaphore, #tpu.memory_space<semaphore_mem>> -> memref<!tpu.dma_semaphore, #tpu.memory_space<semaphore_mem>>
    tpu.enqueue_dma source(%arg21 : memref<2x128x128xbf16, #tpu.memory_space<any>>) target(%arg29 : memref<2x128x128xbf16, #tpu.memory_space<vmem>>) target_semaphore(%7 : memref<!tpu.dma_semaphore, #tpu.memory_space<semaphore_mem>>)
    %c4_i32 = arith.constant 4 : i32
    %8 = tpu.memref_slice %arg33[%c4_i32] : memref<7x!tpu.dma_semaphore, #tpu.memory_space<semaphore_mem>> -> memref<1x!tpu.dma_semaphore, #tpu.memory_space<semaphore_mem>>
    %9 = tpu.memref_squeeze %8 : memref<1x!tpu.dma_semaphore, #tpu.memory_space<semaphore_mem>> -> memref<!tpu.dma_semaphore, #tpu.memory_space<semaphore_mem>>
    tpu.enqueue_dma source(%arg22 : memref<2x128xf32, #tpu.memory_space<any>>) target(%arg30 : memref<2x128xf32, #tpu.memory_space<vmem>>) target_semaphore(%9 : memref<!tpu.dma_semaphore, #tpu.memory_space<semaphore_mem>>)
    %c5_i32 = arith.constant 5 : i32
    %10 = tpu.memref_slice %arg33[%c5_i32] : memref<7x!tpu.dma_semaphore, #tpu.memory_space<semaphore_mem>> -> memref<1x!tpu.dma_semaphore, #tpu.memory_space<semaphore_mem>>
    %11 = tpu.memref_squeeze %10 : memref<1x!tpu.dma_semaphore, #tpu.memory_space<semaphore_mem>> -> memref<!tpu.dma_semaphore, #tpu.memory_space<semaphore_mem>>
    tpu.enqueue_dma source(%arg23 : memref<2x128x512xbf16, #tpu.memory_space<any>>) target(%arg31 : memref<2x128x512xbf16, #tpu.memory_space<vmem>>) target_semaphore(%11 : memref<!tpu.dma_semaphore, #tpu.memory_space<semaphore_mem>>)
    %c6_i32 = arith.constant 6 : i32
    %12 = tpu.memref_slice %arg33[%c6_i32] : memref<7x!tpu.dma_semaphore, #tpu.memory_space<semaphore_mem>> -> memref<1x!tpu.dma_semaphore, #tpu.memory_space<semaphore_mem>>
    %13 = tpu.memref_squeeze %12 : memref<1x!tpu.dma_semaphore, #tpu.memory_space<semaphore_mem>> -> memref<!tpu.dma_semaphore, #tpu.memory_space<semaphore_mem>>
    tpu.enqueue_dma source(%arg24 : memref<2x256x128xbf16, #tpu.memory_space<any>>) target(%arg32 : memref<2x256x128xbf16, #tpu.memory_space<vmem>>) target_semaphore(%13 : memref<!tpu.dma_semaphore, #tpu.memory_space<semaphore_mem>>)
    %c0 = arith.constant 0 : index
    %c0_0 = arith.constant 0 : index
    %14 = vector.load %arg1[%c0, %c0_0] : memref<8x3xi32, #tpu.memory_space<vmem>>, vector<8x3xi32>
    %15 = tpu.iota {dimensions = array<i32: 1>} : vector<8x128xi32>
    %cst = arith.constant 0.000000e+00 : f32
    %16 = vector.broadcast %cst : f32 to vector<8x128xf32>
    %17 = vector.extract_strided_slice %14 {offsets = [0, 0], sizes = [8, 1], strides = [1, 1]} : vector<8x3xi32> to vector<8x1xi32>
    %18 = vector.broadcast %17 : vector<8x1xi32> to vector<8x128xi32>
    %19 = arith.cmpi eq, %15, %18 : vector<8x128xi32>
    %20 = arith.extui %19 : vector<8x128xi1> to vector<8x128xi32>
    %21 = arith.sitofp %20 : vector<8x128xi32> to vector<8x128xf32>
    %22 = arith.addf %16, %21 : vector<8x128xf32>
    %23 = vector.extract_strided_slice %14 {offsets = [0, 1], sizes = [8, 1], strides = [1, 1]} : vector<8x3xi32> to vector<8x1xi32>
    %24 = vector.broadcast %23 : vector<8x1xi32> to vector<8x128xi32>
    %25 = arith.cmpi eq, %15, %24 : vector<8x128xi32>
    %26 = arith.extui %25 : vector<8x128xi1> to vector<8x128xi32>
    %27 = arith.sitofp %26 : vector<8x128xi32> to vector<8x128xf32>
    %28 = arith.addf %22, %27 : vector<8x128xf32>
    %29 = vector.extract_strided_slice %14 {offsets = [0, 2], sizes = [8, 1], strides = [1, 1]} : vector<8x3xi32> to vector<8x1xi32>
    %30 = vector.broadcast %29 : vector<8x1xi32> to vector<8x128xi32>
    %31 = arith.cmpi eq, %15, %30 : vector<8x128xi32>
    %32 = arith.extui %31 : vector<8x128xi1> to vector<8x128xi32>
    %33 = arith.sitofp %32 : vector<8x128xi32> to vector<8x128xf32>
    %34 = arith.addf %28, %33 : vector<8x128xf32>
    %c0_1 = arith.constant 0 : index
    %c0_2 = arith.constant 0 : index
    %35 = vector.load %arg2[%c0_1, %c0_2] : memref<128x128xf32, #tpu.memory_space<vmem>>, vector<128x128xf32>
    %cst_3 = arith.constant dense<0.000000e+00> : vector<8x128xf32>
    %36 = tpu.matmul %34, %35, %cst_3 {dimension_numbers = #tpu.dot_dimension_numbers<[1], [0], [0], [1], [0, 0, 1, 1], [], []>} : vector<8x128xf32>, vector<128x128xf32>, vector<8x128xf32> -> vector<8x128xf32>
    %c0_4 = arith.constant 0 : index
    %c0_5 = arith.constant 0 : index
    %37 = vector.load %arg3[%c0_4, %c0_5] : memref<16x128xf32, #tpu.memory_space<vmem>>, vector<16x128xf32>
    %c0_6 = arith.constant 0 : index
    %c0_7 = arith.constant 0 : index
    %38 = vector.load %arg4[%c0_6, %c0_7] : memref<8x128xf32, #tpu.memory_space<vmem>>, vector<8x128xf32>
    %c0_8 = arith.constant 0 : index
    %c0_9 = arith.constant 0 : index
    %39 = vector.load %arg5[%c0_8, %c0_9] : memref<8x128xf32, #tpu.memory_space<vmem>>, vector<8x128xf32>
    %40 = vector.extract_strided_slice %38 {offsets = [0, 0], sizes = [8, 32], strides = [1, 1]} : vector<8x128xf32> to vector<8x32xf32>
    %41 = vector.extract_strided_slice %39 {offsets = [0, 0], sizes = [8, 32], strides = [1, 1]} : vector<8x128xf32> to vector<8x32xf32>
    %c0_10 = arith.constant 0 : index
    %c0_11 = arith.constant 0 : index
    %42 = vector.load %arg6[%c0_10, %c0_11] : memref<128x128xf32, #tpu.memory_space<vmem>>, vector<128x128xf32>
    %43 = vector.extract_strided_slice %42 {offsets = [0, 0], sizes = [32, 32], strides = [1, 1]} : vector<128x128xf32> to vector<32x32xf32>
    %c0_12 = arith.constant 0 : index
    %c0_13 = arith.constant 0 : index
    %44 = vector.load %arg7[%c0_12, %c0_13] : memref<2x128xf32, #tpu.memory_space<vmem>>, vector<1x128xf32>
    %c0_14 = arith.constant 0 : index
    %c0_15 = arith.constant 0 : index
    %c0_16 = arith.constant 0 : index
    %45 = vector.load %arg8[%c0_14, %c0_15, %c0_16] : memref<2x128x128xbf16, #tpu.memory_space<vmem>>, vector<1x128x128xbf16>
    %46 = vector.shape_cast %45 : vector<1x128x128xbf16> to vector<128x128xbf16>
    %c0_17 = arith.constant 0 : index
    %c0_18 = arith.constant 0 : index
    %c0_19 = arith.constant 0 : index
    %47 = vector.load %arg9[%c0_17, %c0_18, %c0_19] : memref<2x128x64xbf16, #tpu.memory_space<vmem>>, vector<1x128x64xbf16>
    %48 = vector.shape_cast %47 : vector<1x128x64xbf16> to vector<128x64xbf16>
    %c0_20 = arith.constant 0 : index
    %c0_21 = arith.constant 0 : index
    %c0_22 = arith.constant 0 : index
    %49 = vector.load %arg10[%c0_20, %c0_21, %c0_22] : memref<2x128x128xbf16, #tpu.memory_space<vmem>>, vector<1x128x128xbf16>
    %50 = vector.shape_cast %49 : vector<1x128x128xbf16> to vector<128x128xbf16>
    %c0_23 = arith.constant 0 : index
    %c0_24 = arith.constant 0 : index
    %51 = vector.load %arg11[%c0_23, %c0_24] : memref<2x128xf32, #tpu.memory_space<vmem>>, vector<1x128xf32>
    %c0_25 = arith.constant 0 : index
    %c0_26 = arith.constant 0 : index
    %c0_27 = arith.constant 0 : index
    %52 = vector.load %arg12[%c0_25, %c0_26, %c0_27] : memref<2x128x128xbf16, #tpu.memory_space<vmem>>, vector<1x128x128xbf16>
    %53 = vector.shape_cast %52 : vector<1x128x128xbf16> to vector<128x128xbf16>
    %c0_28 = arith.constant 0 : index
    %c0_29 = arith.constant 0 : index
    %c0_30 = arith.constant 0 : index
    %54 = vector.load %arg13[%c0_28, %c0_29, %c0_30] : memref<2x128x64xbf16, #tpu.memory_space<vmem>>, vector<1x128x64xbf16>
    %55 = vector.shape_cast %54 : vector<1x128x64xbf16> to vector<128x64xbf16>
    %c0_31 = arith.constant 0 : index
    %c0_32 = arith.constant 0 : index
    %c0_33 = arith.constant 0 : index
    %56 = vector.load %arg14[%c0_31, %c0_32, %c0_33] : memref<2x128x128xbf16, #tpu.memory_space<vmem>>, vector<1x128x128xbf16>
    %57 = vector.shape_cast %56 : vector<1x128x128xbf16> to vector<128x128xbf16>
    %c0_34 = arith.constant 0 : index
    %c0_35 = arith.constant 0 : index
    %58 = vector.load %arg15[%c0_34, %c0_35] : memref<2x128xf32, #tpu.memory_space<vmem>>, vector<1x128xf32>
    %c0_36 = arith.constant 0 : index
    %c0_37 = arith.constant 0 : index
    %c0_38 = arith.constant 0 : index
    %59 = vector.load %arg16[%c0_36, %c0_37, %c0_38] : memref<2x128x512xbf16, #tpu.memory_space<vmem>>, vector<1x128x512xbf16>
    %60 = vector.shape_cast %59 : vector<1x128x512xbf16> to vector<128x512xbf16>
    %c0_39 = arith.constant 0 : index
    %c0_40 = arith.constant 0 : index
    %c0_41 = arith.constant 0 : index
    %61 = vector.load %arg17[%c0_39, %c0_40, %c0_41] : memref<2x256x128xbf16, #tpu.memory_space<vmem>>, vector<1x256x128xbf16>
    %62 = vector.shape_cast %61 : vector<1x256x128xbf16> to vector<256x128xbf16>
    %63 = arith.mulf %36, %36 : vector<8x128xf32>
    %cst_42 = arith.constant dense<0.000000e+00> : vector<8xf32>
    %64 = vector.multi_reduction <add>, %63, %cst_42 [1] : vector<8x128xf32> to vector<8xf32>
    %65 = vector.shape_cast %64 : vector<8xf32> to vector<8x1xf32>
    %cst_43 = arith.constant 1.280000e+02 : f32
    %66 = vector.broadcast %cst_43 : f32 to vector<8x1xf32>
    %67 = arith.divf %65, %66 : vector<8x1xf32>
    %cst_44 = arith.constant 9.99999997E-7 : f32
    %68 = vector.broadcast %cst_44 : f32 to vector<8x1xf32>
    %69 = arith.addf %67, %68 : vector<8x1xf32>
    %70 = math.rsqrt %69 : vector<8x1xf32>
    %71 = vector.broadcast %70 : vector<8x1xf32> to vector<8x128xf32>
    %72 = arith.mulf %36, %71 : vector<8x128xf32>
    %73 = vector.broadcast %44 : vector<1x128xf32> to vector<8x128xf32>
    %74 = arith.mulf %72, %73 : vector<8x128xf32>
    %75 = arith.truncf %74 : vector<8x128xf32> to vector<8x128xbf16>
    %cst_45 = arith.constant dense<0.000000e+00> : vector<8x128xf32>
    %76 = tpu.matmul %75, %46, %cst_45 {dimension_numbers = #tpu.dot_dimension_numbers<[1], [0], [0], [1], [0, 0, 1, 1], [], []>} : vector<8x128xbf16>, vector<128x128xbf16>, vector<8x128xf32> -> vector<8x128xf32>
    %77 = arith.truncf %74 : vector<8x128xf32> to vector<8x128xbf16>
    %cst_46 = arith.constant dense<0.000000e+00> : vector<8x64xf32>
    %78 = tpu.matmul %77, %48, %cst_46 {dimension_numbers = #tpu.dot_dimension_numbers<[1], [0], [0], [1], [0, 0, 1, 1], [], []>} : vector<8x128xbf16>, vector<128x64xbf16>, vector<8x64xf32> -> vector<8x64xf32>
    %79 = vector.extract_strided_slice %78 {offsets = [0, 0], sizes = [8, 32], strides = [1, 1]} : vector<8x64xf32> to vector<8x32xf32>
    %80 = vector.extract_strided_slice %78 {offsets = [0, 32], sizes = [8, 32], strides = [1, 1]} : vector<8x64xf32> to vector<8x32xf32>
    %81 = arith.mulf %76, %38 : vector<8x128xf32>
    %cst_47 = arith.constant dense<0.000000e+00> : vector<8x128xf32>
    %82 = tpu.matmul %76, %42, %cst_47 {dimension_numbers = #tpu.dot_dimension_numbers<[1], [0], [0], [1], [0, 0, 1, 1], [], []>} : vector<8x128xf32>, vector<128x128xf32>, vector<8x128xf32> -> vector<8x128xf32>
    %83 = arith.mulf %82, %39 : vector<8x128xf32>
    %84 = arith.addf %81, %83 : vector<8x128xf32>
    %85 = arith.mulf %79, %40 : vector<8x32xf32>
    %cst_48 = arith.constant dense<0.000000e+00> : vector<8x32xf32>
    %86 = tpu.matmul %79, %43, %cst_48 {dimension_numbers = #tpu.dot_dimension_numbers<[1], [0], [0], [1], [0, 0, 1, 1], [], []>} : vector<8x32xf32>, vector<32x32xf32>, vector<8x32xf32> -> vector<8x32xf32>
    %87 = arith.mulf %86, %41 : vector<8x32xf32>
    %88 = arith.addf %85, %87 : vector<8x32xf32>
    %89 = vector.extract_strided_slice %84 {offsets = [0, 0], sizes = [8, 32], strides = [1, 1]} : vector<8x128xf32> to vector<8x32xf32>
    %90 = vector.extract_strided_slice %84 {offsets = [0, 32], sizes = [8, 32], strides = [1, 1]} : vector<8x128xf32> to vector<8x32xf32>
    %91 = vector.extract_strided_slice %84 {offsets = [0, 64], sizes = [8, 32], strides = [1, 1]} : vector<8x128xf32> to vector<8x32xf32>
    %92 = vector.extract_strided_slice %84 {offsets = [0, 96], sizes = [8, 32], strides = [1, 1]} : vector<8x128xf32> to vector<8x32xf32>
    %93 = tpu.concatenate %89, %90, %91, %92 in 0 : vector<8x32xf32>, vector<8x32xf32>, vector<8x32xf32>, vector<8x32xf32> -> vector<32x32xf32>
    %cst_49 = arith.constant dense<0.000000e+00> : vector<32x8xf32>
    %94 = tpu.matmul %93, %88, %cst_49 {dimension_numbers = #tpu.dot_dimension_numbers<[1], [1], [0], [0], [0, 0, 1, 0], [], []>} : vector<32x32xf32>, vector<8x32xf32>, vector<32x8xf32> -> vector<32x8xf32>
    %cst_50 = arith.constant 0.176776692 : f32
    %95 = vector.broadcast %cst_50 : f32 to vector<32x8xf32>
    %96 = arith.mulf %94, %95 : vector<32x8xf32>
    %97 = tpu.iota {dimensions = array<i32: 1>} : vector<32x8xi32>
    %98 = tpu.iota {dimensions = array<i32: 0>} : vector<8x8xi32>
    %99 = tpu.concatenate %98, %98, %98, %98 in 0 : vector<8x8xi32>, vector<8x8xi32>, vector<8x8xi32>, vector<8x8xi32> -> vector<32x8xi32>
    %100 = arith.cmpi sle, %97, %99 : vector<32x8xi32>
    %cst_51 = arith.constant -1.000000e+30 : f32
    %101 = vector.broadcast %cst_51 : f32 to vector<32x8xf32>
    %102 = arith.select %100, %96, %101 : vector<32x8xi1>, vector<32x8xf32>
    %cst_52 = arith.constant dense<0xFF800000> : vector<32xf32>
    %103 = vector.multi_reduction <maximumf>, %102, %cst_52 [1] : vector<32x8xf32> to vector<32xf32>
    %104 = vector.shape_cast %103 : vector<32xf32> to vector<32x1xf32>
    %105 = vector.broadcast %104 : vector<32x1xf32> to vector<32x8xf32>
    %106 = arith.subf %102, %105 : vector<32x8xf32>
    %107 = math.exp %106 : vector<32x8xf32>
    %cst_53 = arith.constant dense<0.000000e+00> : vector<32xf32>
    %108 = vector.multi_reduction <add>, %107, %cst_53 [1] : vector<32x8xf32> to vector<32xf32>
    %109 = vector.shape_cast %108 : vector<32xf32> to vector<32x1xf32>
    %110 = tpu.reciprocal %109 {approx = true} : vector<32x1xf32> -> vector<32x1xf32>
    %111 = vector.broadcast %110 : vector<32x1xf32> to vector<32x8xf32>
    %112 = arith.mulf %107, %111 : vector<32x8xf32>
    %cst_54 = arith.constant dense<0.000000e+00> : vector<32x32xf32>
    %113 = tpu.matmul %112, %80, %cst_54 {dimension_numbers = #tpu.dot_dimension_numbers<[1], [0], [0], [1], [0, 0, 1, 1], [], []>} : vector<32x8xf32>, vector<8x32xf32>, vector<32x32xf32> -> vector<32x32xf32>
    %114 = vector.extract_strided_slice %113 {offsets = [0, 0], sizes = [8, 32], strides = [1, 1]} : vector<32x32xf32> to vector<8x32xf32>
    %115 = vector.extract_strided_slice %113 {offsets = [8, 0], sizes = [8, 32], strides = [1, 1]} : vector<32x32xf32> to vector<8x32xf32>
    %116 = vector.extract_strided_slice %113 {offsets = [16, 0], sizes = [8, 32], strides = [1, 1]} : vector<32x32xf32> to vector<8x32xf32>
    %117 = vector.extract_strided_slice %113 {offsets = [24, 0], sizes = [8, 32], strides = [1, 1]} : vector<32x32xf32> to vector<8x32xf32>
    %118 = tpu.concatenate %114, %115, %116, %117 in 1 : vector<8x32xf32>, vector<8x32xf32>, vector<8x32xf32>, vector<8x32xf32> -> vector<8x128xf32>
    %119 = arith.truncf %118 : vector<8x128xf32> to vector<8x128xbf16>
    %cst_55 = arith.constant dense<0.000000e+00> : vector<8x128xf32>
    %120 = tpu.matmul %119, %50, %cst_55 {dimension_numbers = #tpu.dot_dimension_numbers<[1], [0], [0], [1], [0, 0, 1, 1], [], []>} : vector<8x128xbf16>, vector<128x128xbf16>, vector<8x128xf32> -> vector<8x128xf32>
    %121 = arith.addf %36, %120 : vector<8x128xf32>
    %122 = arith.mulf %121, %121 : vector<8x128xf32>
    %cst_56 = arith.constant dense<0.000000e+00> : vector<8xf32>
    %123 = vector.multi_reduction <add>, %122, %cst_56 [1] : vector<8x128xf32> to vector<8xf32>
    %124 = vector.shape_cast %123 : vector<8xf32> to vector<8x1xf32>
    %cst_57 = arith.constant 1.280000e+02 : f32
    %125 = vector.broadcast %cst_57 : f32 to vector<8x1xf32>
    %126 = arith.divf %124, %125 : vector<8x1xf32>
    %cst_58 = arith.constant 9.99999997E-7 : f32
    %127 = vector.broadcast %cst_58 : f32 to vector<8x1xf32>
    %128 = arith.addf %126, %127 : vector<8x1xf32>
    %129 = math.rsqrt %128 : vector<8x1xf32>
    %130 = vector.broadcast %129 : vector<8x1xf32> to vector<8x128xf32>
    %131 = arith.mulf %121, %130 : vector<8x128xf32>
    %132 = vector.broadcast %51 : vector<1x128xf32> to vector<8x128xf32>
    %133 = arith.mulf %131, %132 : vector<8x128xf32>
    %134 = arith.truncf %133 : vector<8x128xf32> to vector<8x128xbf16>
    %cst_59 = arith.constant dense<0.000000e+00> : vector<8x128xf32>
    %135 = tpu.matmul %134, %53, %cst_59 {dimension_numbers = #tpu.dot_dimension_numbers<[1], [0], [0], [1], [0, 0, 1, 1], [], []>} : vector<8x128xbf16>, vector<128x128xbf16>, vector<8x128xf32> -> vector<8x128xf32>
    %136 = arith.truncf %37 : vector<16x128xf32> to vector<16x128xbf16>
    %cst_60 = arith.constant dense<0.000000e+00> : vector<16x64xf32>
    %137 = tpu.matmul %136, %55, %cst_60 {dimension_numbers = #tpu.dot_dimension_numbers<[1], [0], [0], [1], [0, 0, 1, 1], [], []>} : vector<16x128xbf16>, vector<128x64xbf16>, vector<16x64xf32> -> vector<16x64xf32>
    %138 = vector.extract_strided_slice %137 {offsets = [0, 0], sizes = [16, 32], strides = [1, 1]} : vector<16x64xf32> to vector<16x32xf32>
    %139 = vector.extract_strided_slice %137 {offsets = [0, 32], sizes = [16, 32], strides = [1, 1]} : vector<16x64xf32> to vector<16x32xf32>
    %140 = vector.extract_strided_slice %135 {offsets = [0, 0], sizes = [8, 32], strides = [1, 1]} : vector<8x128xf32> to vector<8x32xf32>
    %141 = vector.extract_strided_slice %135 {offsets = [0, 32], sizes = [8, 32], strides = [1, 1]} : vector<8x128xf32> to vector<8x32xf32>
    %142 = vector.extract_strided_slice %135 {offsets = [0, 64], sizes = [8, 32], strides = [1, 1]} : vector<8x128xf32> to vector<8x32xf32>
    %143 = vector.extract_strided_slice %135 {offsets = [0, 96], sizes = [8, 32], strides = [1, 1]} : vector<8x128xf32> to vector<8x32xf32>
    %144 = tpu.concatenate %140, %141, %142, %143 in 0 : vector<8x32xf32>, vector<8x32xf32>, vector<8x32xf32>, vector<8x32xf32> -> vector<32x32xf32>
    %cst_61 = arith.constant dense<0.000000e+00> : vector<32x16xf32>
    %145 = tpu.matmul %144, %138, %cst_61 {dimension_numbers = #tpu.dot_dimension_numbers<[1], [1], [0], [0], [0, 0, 1, 0], [], []>} : vector<32x32xf32>, vector<16x32xf32>, vector<32x16xf32> -> vector<32x16xf32>
    %cst_62 = arith.constant 0.176776692 : f32
    %146 = vector.broadcast %cst_62 : f32 to vector<32x16xf32>
    %147 = arith.mulf %145, %146 : vector<32x16xf32>
    %cst_63 = arith.constant dense<0xFF800000> : vector<32xf32>
    %148 = vector.multi_reduction <maximumf>, %147, %cst_63 [1] : vector<32x16xf32> to vector<32xf32>
    %149 = vector.shape_cast %148 : vector<32xf32> to vector<32x1xf32>
    %150 = vector.broadcast %149 : vector<32x1xf32> to vector<32x16xf32>
    %151 = arith.subf %147, %150 : vector<32x16xf32>
    %152 = math.exp %151 : vector<32x16xf32>
    %cst_64 = arith.constant dense<0.000000e+00> : vector<32xf32>
    %153 = vector.multi_reduction <add>, %152, %cst_64 [1] : vector<32x16xf32> to vector<32xf32>
    %154 = vector.shape_cast %153 : vector<32xf32> to vector<32x1xf32>
    %155 = tpu.reciprocal %154 {approx = true} : vector<32x1xf32> -> vector<32x1xf32>
    %156 = vector.broadcast %155 : vector<32x1xf32> to vector<32x16xf32>
    %157 = arith.mulf %152, %156 : vector<32x16xf32>
    %cst_65 = arith.constant dense<0.000000e+00> : vector<32x32xf32>
    %158 = tpu.matmul %157, %139, %cst_65 {dimension_numbers = #tpu.dot_dimension_numbers<[1], [0], [0], [1], [0, 0, 1, 1], [], []>} : vector<32x16xf32>, vector<16x32xf32>, vector<32x32xf32> -> vector<32x32xf32>
    %159 = vector.extract_strided_slice %158 {offsets = [0, 0], sizes = [8, 32], strides = [1, 1]} : vector<32x32xf32> to vector<8x32xf32>
    %160 = vector.extract_strided_slice %158 {offsets = [8, 0], sizes = [8, 32], strides = [1, 1]} : vector<32x32xf32> to vector<8x32xf32>
    %161 = vector.extract_strided_slice %158 {offsets = [16, 0], sizes = [8, 32], strides = [1, 1]} : vector<32x32xf32> to vector<8x32xf32>
    %162 = vector.extract_strided_slice %158 {offsets = [24, 0], sizes = [8, 32], strides = [1, 1]} : vector<32x32xf32> to vector<8x32xf32>
    %163 = tpu.concatenate %159, %160, %161, %162 in 1 : vector<8x32xf32>, vector<8x32xf32>, vector<8x32xf32>, vector<8x32xf32> -> vector<8x128xf32>
    %164 = arith.truncf %163 : vector<8x128xf32> to vector<8x128xbf16>
    %cst_66 = arith.constant dense<0.000000e+00> : vector<8x128xf32>
    %165 = tpu.matmul %164, %57, %cst_66 {dimension_numbers = #tpu.dot_dimension_numbers<[1], [0], [0], [1], [0, 0, 1, 1], [], []>} : vector<8x128xbf16>, vector<128x128xbf16>, vector<8x128xf32> -> vector<8x128xf32>
    %166 = arith.addf %121, %165 : vector<8x128xf32>
    %167 = arith.mulf %166, %166 : vector<8x128xf32>
    %cst_67 = arith.constant dense<0.000000e+00> : vector<8xf32>
    %168 = vector.multi_reduction <add>, %167, %cst_67 [1] : vector<8x128xf32> to vector<8xf32>
    %169 = vector.shape_cast %168 : vector<8xf32> to vector<8x1xf32>
    %cst_68 = arith.constant 1.280000e+02 : f32
    %170 = vector.broadcast %cst_68 : f32 to vector<8x1xf32>
    %171 = arith.divf %169, %170 : vector<8x1xf32>
    %cst_69 = arith.constant 9.99999997E-7 : f32
    %172 = vector.broadcast %cst_69 : f32 to vector<8x1xf32>
    %173 = arith.addf %171, %172 : vector<8x1xf32>
    %174 = math.rsqrt %173 : vector<8x1xf32>
    %175 = vector.broadcast %174 : vector<8x1xf32> to vector<8x128xf32>
    %176 = arith.mulf %166, %175 : vector<8x128xf32>
    %177 = vector.broadcast %58 : vector<1x128xf32> to vector<8x128xf32>
    %178 = arith.mulf %176, %177 : vector<8x128xf32>
    %179 = arith.truncf %178 : vector<8x128xf32> to vector<8x128xbf16>
    %cst_70 = arith.constant dense<0.000000e+00> : vector<8x512xf32>
    %180 = tpu.matmul %179, %60, %cst_70 {dimension_numbers = #tpu.dot_dimension_numbers<[1], [0], [0], [1], [0, 0, 1, 1], [], []>} : vector<8x128xbf16>, vector<128x512xbf16>, vector<8x512xf32> -> vector<8x512xf32>
    %181 = vector.extract_strided_slice %180 {offsets = [0, 0], sizes = [8, 256], strides = [1, 1]} : vector<8x512xf32> to vector<8x256xf32>
    %182 = vector.extract_strided_slice %180 {offsets = [0, 256], sizes = [8, 256], strides = [1, 1]} : vector<8x512xf32> to vector<8x256xf32>
    %183 = arith.negf %181 : vector<8x256xf32>
    %184 = math.exp %183 : vector<8x256xf32>
    %cst_71 = arith.constant 1.000000e+00 : f32
    %185 = vector.broadcast %cst_71 : f32 to vector<8x256xf32>
    %186 = arith.addf %185, %184 : vector<8x256xf32>
    %187 = arith.divf %185, %186 : vector<8x256xf32>
    %188 = arith.mulf %181, %187 : vector<8x256xf32>
    %189 = arith.mulf %188, %182 : vector<8x256xf32>
    %190 = arith.truncf %189 : vector<8x256xf32> to vector<8x256xbf16>
    %cst_72 = arith.constant dense<0.000000e+00> : vector<8x128xf32>
    %191 = tpu.matmul %190, %62, %cst_72 {dimension_numbers = #tpu.dot_dimension_numbers<[1], [0], [0], [1], [0, 0, 1, 1], [], []>} : vector<8x256xbf16>, vector<256x128xbf16>, vector<8x128xf32> -> vector<8x128xf32>
    %192 = arith.addf %166, %191 : vector<8x128xf32>
    %c1 = arith.constant 1 : index
    %c0_73 = arith.constant 0 : index
    %193 = vector.load %arg7[%c1, %c0_73] : memref<2x128xf32, #tpu.memory_space<vmem>>, vector<1x128xf32>
    %c1_74 = arith.constant 1 : index
    %c0_75 = arith.constant 0 : index
    %c0_76 = arith.constant 0 : index
    %194 = vector.load %arg8[%c1_74, %c0_75, %c0_76] : memref<2x128x128xbf16, #tpu.memory_space<vmem>>, vector<1x128x128xbf16>
    %195 = vector.shape_cast %194 : vector<1x128x128xbf16> to vector<128x128xbf16>
    %c1_77 = arith.constant 1 : index
    %c0_78 = arith.constant 0 : index
    %c0_79 = arith.constant 0 : index
    %196 = vector.load %arg9[%c1_77, %c0_78, %c0_79] : memref<2x128x64xbf16, #tpu.memory_space<vmem>>, vector<1x128x64xbf16>
    %197 = vector.shape_cast %196 : vector<1x128x64xbf16> to vector<128x64xbf16>
    %c1_80 = arith.constant 1 : index
    %c0_81 = arith.constant 0 : index
    %c0_82 = arith.constant 0 : index
    %198 = vector.load %arg10[%c1_80, %c0_81, %c0_82] : memref<2x128x128xbf16, #tpu.memory_space<vmem>>, vector<1x128x128xbf16>
    %199 = vector.shape_cast %198 : vector<1x128x128xbf16> to vector<128x128xbf16>
    %c1_83 = arith.constant 1 : index
    %c0_84 = arith.constant 0 : index
    %200 = vector.load %arg11[%c1_83, %c0_84] : memref<2x128xf32, #tpu.memory_space<vmem>>, vector<1x128xf32>
    %c1_85 = arith.constant 1 : index
    %c0_86 = arith.constant 0 : index
    %c0_87 = arith.constant 0 : index
    %201 = vector.load %arg12[%c1_85, %c0_86, %c0_87] : memref<2x128x128xbf16, #tpu.memory_space<vmem>>, vector<1x128x128xbf16>
    %202 = vector.shape_cast %201 : vector<1x128x128xbf16> to vector<128x128xbf16>
    %c1_88 = arith.constant 1 : index
    %c0_89 = arith.constant 0 : index
    %c0_90 = arith.constant 0 : index
    %203 = vector.load %arg13[%c1_88, %c0_89, %c0_90] : memref<2x128x64xbf16, #tpu.memory_space<vmem>>, vector<1x128x64xbf16>
    %204 = vector.shape_cast %203 : vector<1x128x64xbf16> to vector<128x64xbf16>
    %c1_91 = arith.constant 1 : index
    %c0_92 = arith.constant 0 : index
    %c0_93 = arith.constant 0 : index
    %205 = vector.load %arg14[%c1_91, %c0_92, %c0_93] : memref<2x128x128xbf16, #tpu.memory_space<vmem>>, vector<1x128x128xbf16>
    %206 = vector.shape_cast %205 : vector<1x128x128xbf16> to vector<128x128xbf16>
    %c1_94 = arith.constant 1 : index
    %c0_95 = arith.constant 0 : index
    %207 = vector.load %arg15[%c1_94, %c0_95] : memref<2x128xf32, #tpu.memory_space<vmem>>, vector<1x128xf32>
    %c1_96 = arith.constant 1 : index
    %c0_97 = arith.constant 0 : index
    %c0_98 = arith.constant 0 : index
    %208 = vector.load %arg16[%c1_96, %c0_97, %c0_98] : memref<2x128x512xbf16, #tpu.memory_space<vmem>>, vector<1x128x512xbf16>
    %209 = vector.shape_cast %208 : vector<1x128x512xbf16> to vector<128x512xbf16>
    %c1_99 = arith.constant 1 : index
    %c0_100 = arith.constant 0 : index
    %c0_101 = arith.constant 0 : index
    %210 = vector.load %arg17[%c1_99, %c0_100, %c0_101] : memref<2x256x128xbf16, #tpu.memory_space<vmem>>, vector<1x256x128xbf16>
    %211 = vector.shape_cast %210 : vector<1x256x128xbf16> to vector<256x128xbf16>
    %212 = arith.mulf %192, %192 : vector<8x128xf32>
    %cst_102 = arith.constant dense<0.000000e+00> : vector<8xf32>
    %213 = vector.multi_reduction <add>, %212, %cst_102 [1] : vector<8x128xf32> to vector<8xf32>
    %214 = vector.shape_cast %213 : vector<8xf32> to vector<8x1xf32>
    %cst_103 = arith.constant 1.280000e+02 : f32
    %215 = vector.broadcast %cst_103 : f32 to vector<8x1xf32>
    %216 = arith.divf %214, %215 : vector<8x1xf32>
    %cst_104 = arith.constant 9.99999997E-7 : f32
    %217 = vector.broadcast %cst_104 : f32 to vector<8x1xf32>
    %218 = arith.addf %216, %217 : vector<8x1xf32>
    %219 = math.rsqrt %218 : vector<8x1xf32>
    %220 = vector.broadcast %219 : vector<8x1xf32> to vector<8x128xf32>
    %221 = arith.mulf %192, %220 : vector<8x128xf32>
    %222 = vector.broadcast %193 : vector<1x128xf32> to vector<8x128xf32>
    %223 = arith.mulf %221, %222 : vector<8x128xf32>
    %224 = arith.truncf %223 : vector<8x128xf32> to vector<8x128xbf16>
    %cst_105 = arith.constant dense<0.000000e+00> : vector<8x128xf32>
    %225 = tpu.matmul %224, %195, %cst_105 {dimension_numbers = #tpu.dot_dimension_numbers<[1], [0], [0], [1], [0, 0, 1, 1], [], []>} : vector<8x128xbf16>, vector<128x128xbf16>, vector<8x128xf32> -> vector<8x128xf32>
    %226 = arith.truncf %223 : vector<8x128xf32> to vector<8x128xbf16>
    %cst_106 = arith.constant dense<0.000000e+00> : vector<8x64xf32>
    %227 = tpu.matmul %226, %197, %cst_106 {dimension_numbers = #tpu.dot_dimension_numbers<[1], [0], [0], [1], [0, 0, 1, 1], [], []>} : vector<8x128xbf16>, vector<128x64xbf16>, vector<8x64xf32> -> vector<8x64xf32>
    %228 = vector.extract_strided_slice %227 {offsets = [0, 0], sizes = [8, 32], strides = [1, 1]} : vector<8x64xf32> to vector<8x32xf32>
    %229 = vector.extract_strided_slice %227 {offsets = [0, 32], sizes = [8, 32], strides = [1, 1]} : vector<8x64xf32> to vector<8x32xf32>
    %230 = arith.mulf %225, %38 : vector<8x128xf32>
    %cst_107 = arith.constant dense<0.000000e+00> : vector<8x128xf32>
    %231 = tpu.matmul %225, %42, %cst_107 {dimension_numbers = #tpu.dot_dimension_numbers<[1], [0], [0], [1], [0, 0, 1, 1], [], []>} : vector<8x128xf32>, vector<128x128xf32>, vector<8x128xf32> -> vector<8x128xf32>
    %232 = arith.mulf %231, %39 : vector<8x128xf32>
    %233 = arith.addf %230, %232 : vector<8x128xf32>
    %234 = arith.mulf %228, %40 : vector<8x32xf32>
    %cst_108 = arith.constant dense<0.000000e+00> : vector<8x32xf32>
    %235 = tpu.matmul %228, %43, %cst_108 {dimension_numbers = #tpu.dot_dimension_numbers<[1], [0], [0], [1], [0, 0, 1, 1], [], []>} : vector<8x32xf32>, vector<32x32xf32>, vector<8x32xf32> -> vector<8x32xf32>
    %236 = arith.mulf %235, %41 : vector<8x32xf32>
    %237 = arith.addf %234, %236 : vector<8x32xf32>
    %238 = vector.extract_strided_slice %233 {offsets = [0, 0], sizes = [8, 32], strides = [1, 1]} : vector<8x128xf32> to vector<8x32xf32>
    %239 = vector.extract_strided_slice %233 {offsets = [0, 32], sizes = [8, 32], strides = [1, 1]} : vector<8x128xf32> to vector<8x32xf32>
    %240 = vector.extract_strided_slice %233 {offsets = [0, 64], sizes = [8, 32], strides = [1, 1]} : vector<8x128xf32> to vector<8x32xf32>
    %241 = vector.extract_strided_slice %233 {offsets = [0, 96], sizes = [8, 32], strides = [1, 1]} : vector<8x128xf32> to vector<8x32xf32>
    %242 = tpu.concatenate %238, %239, %240, %241 in 0 : vector<8x32xf32>, vector<8x32xf32>, vector<8x32xf32>, vector<8x32xf32> -> vector<32x32xf32>
    %cst_109 = arith.constant dense<0.000000e+00> : vector<32x8xf32>
    %243 = tpu.matmul %242, %237, %cst_109 {dimension_numbers = #tpu.dot_dimension_numbers<[1], [1], [0], [0], [0, 0, 1, 0], [], []>} : vector<32x32xf32>, vector<8x32xf32>, vector<32x8xf32> -> vector<32x8xf32>
    %cst_110 = arith.constant 0.176776692 : f32
    %244 = vector.broadcast %cst_110 : f32 to vector<32x8xf32>
    %245 = arith.mulf %243, %244 : vector<32x8xf32>
    %246 = tpu.iota {dimensions = array<i32: 1>} : vector<32x8xi32>
    %247 = tpu.iota {dimensions = array<i32: 0>} : vector<8x8xi32>
    %248 = tpu.concatenate %247, %247, %247, %247 in 0 : vector<8x8xi32>, vector<8x8xi32>, vector<8x8xi32>, vector<8x8xi32> -> vector<32x8xi32>
    %249 = arith.cmpi sle, %246, %248 : vector<32x8xi32>
    %cst_111 = arith.constant -1.000000e+30 : f32
    %250 = vector.broadcast %cst_111 : f32 to vector<32x8xf32>
    %251 = arith.select %249, %245, %250 : vector<32x8xi1>, vector<32x8xf32>
    %cst_112 = arith.constant dense<0xFF800000> : vector<32xf32>
    %252 = vector.multi_reduction <maximumf>, %251, %cst_112 [1] : vector<32x8xf32> to vector<32xf32>
    %253 = vector.shape_cast %252 : vector<32xf32> to vector<32x1xf32>
    %254 = vector.broadcast %253 : vector<32x1xf32> to vector<32x8xf32>
    %255 = arith.subf %251, %254 : vector<32x8xf32>
    %256 = math.exp %255 : vector<32x8xf32>
    %cst_113 = arith.constant dense<0.000000e+00> : vector<32xf32>
    %257 = vector.multi_reduction <add>, %256, %cst_113 [1] : vector<32x8xf32> to vector<32xf32>
    %258 = vector.shape_cast %257 : vector<32xf32> to vector<32x1xf32>
    %259 = tpu.reciprocal %258 {approx = true} : vector<32x1xf32> -> vector<32x1xf32>
    %260 = vector.broadcast %259 : vector<32x1xf32> to vector<32x8xf32>
    %261 = arith.mulf %256, %260 : vector<32x8xf32>
    %cst_114 = arith.constant dense<0.000000e+00> : vector<32x32xf32>
    %262 = tpu.matmul %261, %229, %cst_114 {dimension_numbers = #tpu.dot_dimension_numbers<[1], [0], [0], [1], [0, 0, 1, 1], [], []>} : vector<32x8xf32>, vector<8x32xf32>, vector<32x32xf32> -> vector<32x32xf32>
    %263 = vector.extract_strided_slice %262 {offsets = [0, 0], sizes = [8, 32], strides = [1, 1]} : vector<32x32xf32> to vector<8x32xf32>
    %264 = vector.extract_strided_slice %262 {offsets = [8, 0], sizes = [8, 32], strides = [1, 1]} : vector<32x32xf32> to vector<8x32xf32>
    %265 = vector.extract_strided_slice %262 {offsets = [16, 0], sizes = [8, 32], strides = [1, 1]} : vector<32x32xf32> to vector<8x32xf32>
    %266 = vector.extract_strided_slice %262 {offsets = [24, 0], sizes = [8, 32], strides = [1, 1]} : vector<32x32xf32> to vector<8x32xf32>
    %267 = tpu.concatenate %263, %264, %265, %266 in 1 : vector<8x32xf32>, vector<8x32xf32>, vector<8x32xf32>, vector<8x32xf32> -> vector<8x128xf32>
    %268 = arith.truncf %267 : vector<8x128xf32> to vector<8x128xbf16>
    %cst_115 = arith.constant dense<0.000000e+00> : vector<8x128xf32>
    %269 = tpu.matmul %268, %199, %cst_115 {dimension_numbers = #tpu.dot_dimension_numbers<[1], [0], [0], [1], [0, 0, 1, 1], [], []>} : vector<8x128xbf16>, vector<128x128xbf16>, vector<8x128xf32> -> vector<8x128xf32>
    %270 = arith.addf %192, %269 : vector<8x128xf32>
    %271 = arith.mulf %270, %270 : vector<8x128xf32>
    %cst_116 = arith.constant dense<0.000000e+00> : vector<8xf32>
    %272 = vector.multi_reduction <add>, %271, %cst_116 [1] : vector<8x128xf32> to vector<8xf32>
    %273 = vector.shape_cast %272 : vector<8xf32> to vector<8x1xf32>
    %cst_117 = arith.constant 1.280000e+02 : f32
    %274 = vector.broadcast %cst_117 : f32 to vector<8x1xf32>
    %275 = arith.divf %273, %274 : vector<8x1xf32>
    %cst_118 = arith.constant 9.99999997E-7 : f32
    %276 = vector.broadcast %cst_118 : f32 to vector<8x1xf32>
    %277 = arith.addf %275, %276 : vector<8x1xf32>
    %278 = math.rsqrt %277 : vector<8x1xf32>
    %279 = vector.broadcast %278 : vector<8x1xf32> to vector<8x128xf32>
    %280 = arith.mulf %270, %279 : vector<8x128xf32>
    %281 = vector.broadcast %200 : vector<1x128xf32> to vector<8x128xf32>
    %282 = arith.mulf %280, %281 : vector<8x128xf32>
    %283 = arith.truncf %282 : vector<8x128xf32> to vector<8x128xbf16>
    %cst_119 = arith.constant dense<0.000000e+00> : vector<8x128xf32>
    %284 = tpu.matmul %283, %202, %cst_119 {dimension_numbers = #tpu.dot_dimension_numbers<[1], [0], [0], [1], [0, 0, 1, 1], [], []>} : vector<8x128xbf16>, vector<128x128xbf16>, vector<8x128xf32> -> vector<8x128xf32>
    %285 = arith.truncf %37 : vector<16x128xf32> to vector<16x128xbf16>
    %cst_120 = arith.constant dense<0.000000e+00> : vector<16x64xf32>
    %286 = tpu.matmul %285, %204, %cst_120 {dimension_numbers = #tpu.dot_dimension_numbers<[1], [0], [0], [1], [0, 0, 1, 1], [], []>} : vector<16x128xbf16>, vector<128x64xbf16>, vector<16x64xf32> -> vector<16x64xf32>
    %287 = vector.extract_strided_slice %286 {offsets = [0, 0], sizes = [16, 32], strides = [1, 1]} : vector<16x64xf32> to vector<16x32xf32>
    %288 = vector.extract_strided_slice %286 {offsets = [0, 32], sizes = [16, 32], strides = [1, 1]} : vector<16x64xf32> to vector<16x32xf32>
    %289 = vector.extract_strided_slice %284 {offsets = [0, 0], sizes = [8, 32], strides = [1, 1]} : vector<8x128xf32> to vector<8x32xf32>
    %290 = vector.extract_strided_slice %284 {offsets = [0, 32], sizes = [8, 32], strides = [1, 1]} : vector<8x128xf32> to vector<8x32xf32>
    %291 = vector.extract_strided_slice %284 {offsets = [0, 64], sizes = [8, 32], strides = [1, 1]} : vector<8x128xf32> to vector<8x32xf32>
    %292 = vector.extract_strided_slice %284 {offsets = [0, 96], sizes = [8, 32], strides = [1, 1]} : vector<8x128xf32> to vector<8x32xf32>
    %293 = tpu.concatenate %289, %290, %291, %292 in 0 : vector<8x32xf32>, vector<8x32xf32>, vector<8x32xf32>, vector<8x32xf32> -> vector<32x32xf32>
    %cst_121 = arith.constant dense<0.000000e+00> : vector<32x16xf32>
    %294 = tpu.matmul %293, %287, %cst_121 {dimension_numbers = #tpu.dot_dimension_numbers<[1], [1], [0], [0], [0, 0, 1, 0], [], []>} : vector<32x32xf32>, vector<16x32xf32>, vector<32x16xf32> -> vector<32x16xf32>
    %cst_122 = arith.constant 0.176776692 : f32
    %295 = vector.broadcast %cst_122 : f32 to vector<32x16xf32>
    %296 = arith.mulf %294, %295 : vector<32x16xf32>
    %cst_123 = arith.constant dense<0xFF800000> : vector<32xf32>
    %297 = vector.multi_reduction <maximumf>, %296, %cst_123 [1] : vector<32x16xf32> to vector<32xf32>
    %298 = vector.shape_cast %297 : vector<32xf32> to vector<32x1xf32>
    %299 = vector.broadcast %298 : vector<32x1xf32> to vector<32x16xf32>
    %300 = arith.subf %296, %299 : vector<32x16xf32>
    %301 = math.exp %300 : vector<32x16xf32>
    %cst_124 = arith.constant dense<0.000000e+00> : vector<32xf32>
    %302 = vector.multi_reduction <add>, %301, %cst_124 [1] : vector<32x16xf32> to vector<32xf32>
    %303 = vector.shape_cast %302 : vector<32xf32> to vector<32x1xf32>
    %304 = tpu.reciprocal %303 {approx = true} : vector<32x1xf32> -> vector<32x1xf32>
    %305 = vector.broadcast %304 : vector<32x1xf32> to vector<32x16xf32>
    %306 = arith.mulf %301, %305 : vector<32x16xf32>
    %cst_125 = arith.constant dense<0.000000e+00> : vector<32x32xf32>
    %307 = tpu.matmul %306, %288, %cst_125 {dimension_numbers = #tpu.dot_dimension_numbers<[1], [0], [0], [1], [0, 0, 1, 1], [], []>} : vector<32x16xf32>, vector<16x32xf32>, vector<32x32xf32> -> vector<32x32xf32>
    %308 = vector.extract_strided_slice %307 {offsets = [0, 0], sizes = [8, 32], strides = [1, 1]} : vector<32x32xf32> to vector<8x32xf32>
    %309 = vector.extract_strided_slice %307 {offsets = [8, 0], sizes = [8, 32], strides = [1, 1]} : vector<32x32xf32> to vector<8x32xf32>
    %310 = vector.extract_strided_slice %307 {offsets = [16, 0], sizes = [8, 32], strides = [1, 1]} : vector<32x32xf32> to vector<8x32xf32>
    %311 = vector.extract_strided_slice %307 {offsets = [24, 0], sizes = [8, 32], strides = [1, 1]} : vector<32x32xf32> to vector<8x32xf32>
    %312 = tpu.concatenate %308, %309, %310, %311 in 1 : vector<8x32xf32>, vector<8x32xf32>, vector<8x32xf32>, vector<8x32xf32> -> vector<8x128xf32>
    %313 = arith.truncf %312 : vector<8x128xf32> to vector<8x128xbf16>
    %cst_126 = arith.constant dense<0.000000e+00> : vector<8x128xf32>
    %314 = tpu.matmul %313, %206, %cst_126 {dimension_numbers = #tpu.dot_dimension_numbers<[1], [0], [0], [1], [0, 0, 1, 1], [], []>} : vector<8x128xbf16>, vector<128x128xbf16>, vector<8x128xf32> -> vector<8x128xf32>
    %315 = arith.addf %270, %314 : vector<8x128xf32>
    %316 = arith.mulf %315, %315 : vector<8x128xf32>
    %cst_127 = arith.constant dense<0.000000e+00> : vector<8xf32>
    %317 = vector.multi_reduction <add>, %316, %cst_127 [1] : vector<8x128xf32> to vector<8xf32>
    %318 = vector.shape_cast %317 : vector<8xf32> to vector<8x1xf32>
    %cst_128 = arith.constant 1.280000e+02 : f32
    %319 = vector.broadcast %cst_128 : f32 to vector<8x1xf32>
    %320 = arith.divf %318, %319 : vector<8x1xf32>
    %cst_129 = arith.constant 9.99999997E-7 : f32
    %321 = vector.broadcast %cst_129 : f32 to vector<8x1xf32>
    %322 = arith.addf %320, %321 : vector<8x1xf32>
    %323 = math.rsqrt %322 : vector<8x1xf32>
    %324 = vector.broadcast %323 : vector<8x1xf32> to vector<8x128xf32>
    %325 = arith.mulf %315, %324 : vector<8x128xf32>
    %326 = vector.broadcast %207 : vector<1x128xf32> to vector<8x128xf32>
    %327 = arith.mulf %325, %326 : vector<8x128xf32>
    %328 = arith.truncf %327 : vector<8x128xf32> to vector<8x128xbf16>
    %cst_130 = arith.constant dense<0.000000e+00> : vector<8x512xf32>
    %329 = tpu.matmul %328, %209, %cst_130 {dimension_numbers = #tpu.dot_dimension_numbers<[1], [0], [0], [1], [0, 0, 1, 1], [], []>} : vector<8x128xbf16>, vector<128x512xbf16>, vector<8x512xf32> -> vector<8x512xf32>
    %330 = vector.extract_strided_slice %329 {offsets = [0, 0], sizes = [8, 256], strides = [1, 1]} : vector<8x512xf32> to vector<8x256xf32>
    %331 = vector.extract_strided_slice %329 {offsets = [0, 256], sizes = [8, 256], strides = [1, 1]} : vector<8x512xf32> to vector<8x256xf32>
    %332 = arith.negf %330 : vector<8x256xf32>
    %333 = math.exp %332 : vector<8x256xf32>
    %cst_131 = arith.constant 1.000000e+00 : f32
    %334 = vector.broadcast %cst_131 : f32 to vector<8x256xf32>
    %335 = arith.addf %334, %333 : vector<8x256xf32>
    %336 = arith.divf %334, %335 : vector<8x256xf32>
    %337 = arith.mulf %330, %336 : vector<8x256xf32>
    %338 = arith.mulf %337, %331 : vector<8x256xf32>
    %339 = arith.truncf %338 : vector<8x256xf32> to vector<8x256xbf16>
    %cst_132 = arith.constant dense<0.000000e+00> : vector<8x128xf32>
    %340 = tpu.matmul %339, %211, %cst_132 {dimension_numbers = #tpu.dot_dimension_numbers<[1], [0], [0], [1], [0, 0, 1, 1], [], []>} : vector<8x256xbf16>, vector<256x128xbf16>, vector<8x128xf32> -> vector<8x128xf32>
    %341 = arith.addf %315, %340 : vector<8x128xf32>
    %c0_133 = arith.constant 0 : index
    %c0_134 = arith.constant 0 : index
    %342 = vector.load %arg25[%c0_133, %c0_134] : memref<8x256xf32, #tpu.memory_space<vmem>>, vector<8x128xf32>
    tpu.vector_store %arg25[%c0_133, %c0_134], %341 {strides = array<i32>} : memref<8x256xf32, #tpu.memory_space<vmem>>, vector<8x128xf32>,
    %343 = arith.addf %36, %341 : vector<8x128xf32>
    %c0_i32_135 = arith.constant 0 : i32
    %344 = tpu.memref_slice %arg33[%c0_i32_135] : memref<7x!tpu.dma_semaphore, #tpu.memory_space<semaphore_mem>> -> memref<1x!tpu.dma_semaphore, #tpu.memory_space<semaphore_mem>>
    %345 = tpu.memref_squeeze %344 : memref<1x!tpu.dma_semaphore, #tpu.memory_space<semaphore_mem>> -> memref<!tpu.dma_semaphore, #tpu.memory_space<semaphore_mem>>
    tpu.wait_dma2 semaphore(%345 : memref<!tpu.dma_semaphore, #tpu.memory_space<semaphore_mem>>) src(%arg18 : memref<2x128xf32, #tpu.memory_space<any>>) dst(%arg26 : memref<2x128xf32, #tpu.memory_space<vmem>>)
    %c1_i32_136 = arith.constant 1 : i32
    %346 = tpu.memref_slice %arg33[%c1_i32_136] : memref<7x!tpu.dma_semaphore, #tpu.memory_space<semaphore_mem>> -> memref<1x!tpu.dma_semaphore, #tpu.memory_space<semaphore_mem>>
    %347 = tpu.memref_squeeze %346 : memref<1x!tpu.dma_semaphore, #tpu.memory_space<semaphore_mem>> -> memref<!tpu.dma_semaphore, #tpu.memory_space<semaphore_mem>>
    tpu.wait_dma2 semaphore(%347 : memref<!tpu.dma_semaphore, #tpu.memory_space<semaphore_mem>>) src(%arg19 : memref<2x128x128xbf16, #tpu.memory_space<any>>) dst(%arg27 : memref<2x128x128xbf16, #tpu.memory_space<vmem>>)
    %c2_i32_137 = arith.constant 2 : i32
    %348 = tpu.memref_slice %arg33[%c2_i32_137] : memref<7x!tpu.dma_semaphore, #tpu.memory_space<semaphore_mem>> -> memref<1x!tpu.dma_semaphore, #tpu.memory_space<semaphore_mem>>
    %349 = tpu.memref_squeeze %348 : memref<1x!tpu.dma_semaphore, #tpu.memory_space<semaphore_mem>> -> memref<!tpu.dma_semaphore, #tpu.memory_space<semaphore_mem>>
    tpu.wait_dma2 semaphore(%349 : memref<!tpu.dma_semaphore, #tpu.memory_space<semaphore_mem>>) src(%arg20 : memref<2x128x64xbf16, #tpu.memory_space<any>>) dst(%arg28 : memref<2x128x64xbf16, #tpu.memory_space<vmem>>)
    %c3_i32_138 = arith.constant 3 : i32
    %350 = tpu.memref_slice %arg33[%c3_i32_138] : memref<7x!tpu.dma_semaphore, #tpu.memory_space<semaphore_mem>> -> memref<1x!tpu.dma_semaphore, #tpu.memory_space<semaphore_mem>>
    %351 = tpu.memref_squeeze %350 : memref<1x!tpu.dma_semaphore, #tpu.memory_space<semaphore_mem>> -> memref<!tpu.dma_semaphore, #tpu.memory_space<semaphore_mem>>
    tpu.wait_dma2 semaphore(%351 : memref<!tpu.dma_semaphore, #tpu.memory_space<semaphore_mem>>) src(%arg21 : memref<2x128x128xbf16, #tpu.memory_space<any>>) dst(%arg29 : memref<2x128x128xbf16, #tpu.memory_space<vmem>>)
    %c4_i32_139 = arith.constant 4 : i32
    %352 = tpu.memref_slice %arg33[%c4_i32_139] : memref<7x!tpu.dma_semaphore, #tpu.memory_space<semaphore_mem>> -> memref<1x!tpu.dma_semaphore, #tpu.memory_space<semaphore_mem>>
    %353 = tpu.memref_squeeze %352 : memref<1x!tpu.dma_semaphore, #tpu.memory_space<semaphore_mem>> -> memref<!tpu.dma_semaphore, #tpu.memory_space<semaphore_mem>>
    tpu.wait_dma2 semaphore(%353 : memref<!tpu.dma_semaphore, #tpu.memory_space<semaphore_mem>>) src(%arg22 : memref<2x128xf32, #tpu.memory_space<any>>) dst(%arg30 : memref<2x128xf32, #tpu.memory_space<vmem>>)
    %c5_i32_140 = arith.constant 5 : i32
    %354 = tpu.memref_slice %arg33[%c5_i32_140] : memref<7x!tpu.dma_semaphore, #tpu.memory_space<semaphore_mem>> -> memref<1x!tpu.dma_semaphore, #tpu.memory_space<semaphore_mem>>
    %355 = tpu.memref_squeeze %354 : memref<1x!tpu.dma_semaphore, #tpu.memory_space<semaphore_mem>> -> memref<!tpu.dma_semaphore, #tpu.memory_space<semaphore_mem>>
    tpu.wait_dma2 semaphore(%355 : memref<!tpu.dma_semaphore, #tpu.memory_space<semaphore_mem>>) src(%arg23 : memref<2x128x512xbf16, #tpu.memory_space<any>>) dst(%arg31 : memref<2x128x512xbf16, #tpu.memory_space<vmem>>)
    %c6_i32_141 = arith.constant 6 : i32
    %356 = tpu.memref_slice %arg33[%c6_i32_141] : memref<7x!tpu.dma_semaphore, #tpu.memory_space<semaphore_mem>> -> memref<1x!tpu.dma_semaphore, #tpu.memory_space<semaphore_mem>>
    %357 = tpu.memref_squeeze %356 : memref<1x!tpu.dma_semaphore, #tpu.memory_space<semaphore_mem>> -> memref<!tpu.dma_semaphore, #tpu.memory_space<semaphore_mem>>
    tpu.wait_dma2 semaphore(%357 : memref<!tpu.dma_semaphore, #tpu.memory_space<semaphore_mem>>) src(%arg24 : memref<2x256x128xbf16, #tpu.memory_space<any>>) dst(%arg32 : memref<2x256x128xbf16, #tpu.memory_space<vmem>>)
    %c0_142 = arith.constant 0 : index
    %c0_143 = arith.constant 0 : index
    %358 = vector.load %arg26[%c0_142, %c0_143] : memref<2x128xf32, #tpu.memory_space<vmem>>, vector<1x128xf32>
    %c0_144 = arith.constant 0 : index
    %c0_145 = arith.constant 0 : index
    %c0_146 = arith.constant 0 : index
    %359 = vector.load %arg27[%c0_144, %c0_145, %c0_146] : memref<2x128x128xbf16, #tpu.memory_space<vmem>>, vector<1x128x128xbf16>
    %360 = vector.shape_cast %359 : vector<1x128x128xbf16> to vector<128x128xbf16>
    %c0_147 = arith.constant 0 : index
    %c0_148 = arith.constant 0 : index
    %c0_149 = arith.constant 0 : index
    %361 = vector.load %arg28[%c0_147, %c0_148, %c0_149] : memref<2x128x64xbf16, #tpu.memory_space<vmem>>, vector<1x128x64xbf16>
    %362 = vector.shape_cast %361 : vector<1x128x64xbf16> to vector<128x64xbf16>
    %c0_150 = arith.constant 0 : index
    %c0_151 = arith.constant 0 : index
    %c0_152 = arith.constant 0 : index
    %363 = vector.load %arg29[%c0_150, %c0_151, %c0_152] : memref<2x128x128xbf16, #tpu.memory_space<vmem>>, vector<1x128x128xbf16>
    %364 = vector.shape_cast %363 : vector<1x128x128xbf16> to vector<128x128xbf16>
    %c0_153 = arith.constant 0 : index
    %c0_154 = arith.constant 0 : index
    %365 = vector.load %arg30[%c0_153, %c0_154] : memref<2x128xf32, #tpu.memory_space<vmem>>, vector<1x128xf32>
    %c0_155 = arith.constant 0 : index
    %c0_156 = arith.constant 0 : index
    %c0_157 = arith.constant 0 : index
    %366 = vector.load %arg31[%c0_155, %c0_156, %c0_157] : memref<2x128x512xbf16, #tpu.memory_space<vmem>>, vector<1x128x512xbf16>
    %367 = vector.shape_cast %366 : vector<1x128x512xbf16> to vector<128x512xbf16>
    %c0_158 = arith.constant 0 : index
    %c0_159 = arith.constant 0 : index
    %c0_160 = arith.constant 0 : index
    %368 = vector.load %arg32[%c0_158, %c0_159, %c0_160] : memref<2x256x128xbf16, #tpu.memory_space<vmem>>, vector<1x256x128xbf16>
    %369 = vector.shape_cast %368 : vector<1x256x128xbf16> to vector<256x128xbf16>
    %370 = arith.mulf %343, %343 : vector<8x128xf32>
    %cst_161 = arith.constant dense<0.000000e+00> : vector<8xf32>
    %371 = vector.multi_reduction <add>, %370, %cst_161 [1] : vector<8x128xf32> to vector<8xf32>
    %372 = vector.shape_cast %371 : vector<8xf32> to vector<8x1xf32>
    %cst_162 = arith.constant 1.280000e+02 : f32
    %373 = vector.broadcast %cst_162 : f32 to vector<8x1xf32>
    %374 = arith.divf %372, %373 : vector<8x1xf32>
    %cst_163 = arith.constant 9.99999997E-7 : f32
    %375 = vector.broadcast %cst_163 : f32 to vector<8x1xf32>
    %376 = arith.addf %374, %375 : vector<8x1xf32>
    %377 = math.rsqrt %376 : vector<8x1xf32>
    %378 = vector.broadcast %377 : vector<8x1xf32> to vector<8x128xf32>
    %379 = arith.mulf %343, %378 : vector<8x128xf32>
    %380 = vector.broadcast %358 : vector<1x128xf32> to vector<8x128xf32>
    %381 = arith.mulf %379, %380 : vector<8x128xf32>
    %382 = arith.truncf %381 : vector<8x128xf32> to vector<8x128xbf16>
    %cst_164 = arith.constant dense<0.000000e+00> : vector<8x128xf32>
    %383 = tpu.matmul %382, %360, %cst_164 {dimension_numbers = #tpu.dot_dimension_numbers<[1], [0], [0], [1], [0, 0, 1, 1], [], []>} : vector<8x128xbf16>, vector<128x128xbf16>, vector<8x128xf32> -> vector<8x128xf32>
    %384 = arith.truncf %381 : vector<8x128xf32> to vector<8x128xbf16>
    %cst_165 = arith.constant dense<0.000000e+00> : vector<8x64xf32>
    %385 = tpu.matmul %384, %362, %cst_165 {dimension_numbers = #tpu.dot_dimension_numbers<[1], [0], [0], [1], [0, 0, 1, 1], [], []>} : vector<8x128xbf16>, vector<128x64xbf16>, vector<8x64xf32> -> vector<8x64xf32>
    %386 = vector.extract_strided_slice %385 {offsets = [0, 0], sizes = [8, 32], strides = [1, 1]} : vector<8x64xf32> to vector<8x32xf32>
    %387 = vector.extract_strided_slice %385 {offsets = [0, 32], sizes = [8, 32], strides = [1, 1]} : vector<8x64xf32> to vector<8x32xf32>
    %388 = arith.mulf %383, %38 : vector<8x128xf32>
    %cst_166 = arith.constant dense<0.000000e+00> : vector<8x128xf32>
    %389 = tpu.matmul %383, %42, %cst_166 {dimension_numbers = #tpu.dot_dimension_numbers<[1], [0], [0], [1], [0, 0, 1, 1], [], []>} : vector<8x128xf32>, vector<128x128xf32>, vector<8x128xf32> -> vector<8x128xf32>
    %390 = arith.mulf %389, %39 : vector<8x128xf32>
    %391 = arith.addf %388, %390 : vector<8x128xf32>
    %392 = arith.mulf %386, %40 : vector<8x32xf32>
    %cst_167 = arith.constant dense<0.000000e+00> : vector<8x32xf32>
    %393 = tpu.matmul %386, %43, %cst_167 {dimension_numbers = #tpu.dot_dimension_numbers<[1], [0], [0], [1], [0, 0, 1, 1], [], []>} : vector<8x32xf32>, vector<32x32xf32>, vector<8x32xf32> -> vector<8x32xf32>
    %394 = arith.mulf %393, %41 : vector<8x32xf32>
    %395 = arith.addf %392, %394 : vector<8x32xf32>
    %396 = vector.extract_strided_slice %391 {offsets = [0, 0], sizes = [8, 32], strides = [1, 1]} : vector<8x128xf32> to vector<8x32xf32>
    %397 = vector.extract_strided_slice %391 {offsets = [0, 32], sizes = [8, 32], strides = [1, 1]} : vector<8x128xf32> to vector<8x32xf32>
    %398 = vector.extract_strided_slice %391 {offsets = [0, 64], sizes = [8, 32], strides = [1, 1]} : vector<8x128xf32> to vector<8x32xf32>
    %399 = vector.extract_strided_slice %391 {offsets = [0, 96], sizes = [8, 32], strides = [1, 1]} : vector<8x128xf32> to vector<8x32xf32>
    %400 = tpu.concatenate %396, %397, %398, %399 in 0 : vector<8x32xf32>, vector<8x32xf32>, vector<8x32xf32>, vector<8x32xf32> -> vector<32x32xf32>
    %cst_168 = arith.constant dense<0.000000e+00> : vector<32x8xf32>
    %401 = tpu.matmul %400, %395, %cst_168 {dimension_numbers = #tpu.dot_dimension_numbers<[1], [1], [0], [0], [0, 0, 1, 0], [], []>} : vector<32x32xf32>, vector<8x32xf32>, vector<32x8xf32> -> vector<32x8xf32>
    %cst_169 = arith.constant 0.176776692 : f32
    %402 = vector.broadcast %cst_169 : f32 to vector<32x8xf32>
    %403 = arith.mulf %401, %402 : vector<32x8xf32>
    %404 = tpu.iota {dimensions = array<i32: 1>} : vector<32x8xi32>
    %405 = tpu.iota {dimensions = array<i32: 0>} : vector<8x8xi32>
    %406 = tpu.concatenate %405, %405, %405, %405 in 0 : vector<8x8xi32>, vector<8x8xi32>, vector<8x8xi32>, vector<8x8xi32> -> vector<32x8xi32>
    %407 = arith.cmpi sle, %404, %406 : vector<32x8xi32>
    %cst_170 = arith.constant -1.000000e+30 : f32
    %408 = vector.broadcast %cst_170 : f32 to vector<32x8xf32>
    %409 = arith.select %407, %403, %408 : vector<32x8xi1>, vector<32x8xf32>
    %cst_171 = arith.constant dense<0xFF800000> : vector<32xf32>
    %410 = vector.multi_reduction <maximumf>, %409, %cst_171 [1] : vector<32x8xf32> to vector<32xf32>
    %411 = vector.shape_cast %410 : vector<32xf32> to vector<32x1xf32>
    %412 = vector.broadcast %411 : vector<32x1xf32> to vector<32x8xf32>
    %413 = arith.subf %409, %412 : vector<32x8xf32>
    %414 = math.exp %413 : vector<32x8xf32>
    %cst_172 = arith.constant dense<0.000000e+00> : vector<32xf32>
    %415 = vector.multi_reduction <add>, %414, %cst_172 [1] : vector<32x8xf32> to vector<32xf32>
    %416 = vector.shape_cast %415 : vector<32xf32> to vector<32x1xf32>
    %417 = tpu.reciprocal %416 {approx = true} : vector<32x1xf32> -> vector<32x1xf32>
    %418 = vector.broadcast %417 : vector<32x1xf32> to vector<32x8xf32>
    %419 = arith.mulf %414, %418 : vector<32x8xf32>
    %cst_173 = arith.constant dense<0.000000e+00> : vector<32x32xf32>
    %420 = tpu.matmul %419, %387, %cst_173 {dimension_numbers = #tpu.dot_dimension_numbers<[1], [0], [0], [1], [0, 0, 1, 1], [], []>} : vector<32x8xf32>, vector<8x32xf32>, vector<32x32xf32> -> vector<32x32xf32>
    %421 = vector.extract_strided_slice %420 {offsets = [0, 0], sizes = [8, 32], strides = [1, 1]} : vector<32x32xf32> to vector<8x32xf32>
    %422 = vector.extract_strided_slice %420 {offsets = [8, 0], sizes = [8, 32], strides = [1, 1]} : vector<32x32xf32> to vector<8x32xf32>
    %423 = vector.extract_strided_slice %420 {offsets = [16, 0], sizes = [8, 32], strides = [1, 1]} : vector<32x32xf32> to vector<8x32xf32>
    %424 = vector.extract_strided_slice %420 {offsets = [24, 0], sizes = [8, 32], strides = [1, 1]} : vector<32x32xf32> to vector<8x32xf32>
    %425 = tpu.concatenate %421, %422, %423, %424 in 1 : vector<8x32xf32>, vector<8x32xf32>, vector<8x32xf32>, vector<8x32xf32> -> vector<8x128xf32>
    %426 = arith.truncf %425 : vector<8x128xf32> to vector<8x128xbf16>
    %cst_174 = arith.constant dense<0.000000e+00> : vector<8x128xf32>
    %427 = tpu.matmul %426, %364, %cst_174 {dimension_numbers = #tpu.dot_dimension_numbers<[1], [0], [0], [1], [0, 0, 1, 1], [], []>} : vector<8x128xbf16>, vector<128x128xbf16>, vector<8x128xf32> -> vector<8x128xf32>
    %428 = arith.addf %343, %427 : vector<8x128xf32>
    %429 = arith.mulf %428, %428 : vector<8x128xf32>
    %cst_175 = arith.constant dense<0.000000e+00> : vector<8xf32>
    %430 = vector.multi_reduction <add>, %429, %cst_175 [1] : vector<8x128xf32> to vector<8xf32>
    %431 = vector.shape_cast %430 : vector<8xf32> to vector<8x1xf32>
    %cst_176 = arith.constant 1.280000e+02 : f32
    %432 = vector.broadcast %cst_176 : f32 to vector<8x1xf32>
    %433 = arith.divf %431, %432 : vector<8x1xf32>
    %cst_177 = arith.constant 9.99999997E-7 : f32
    %434 = vector.broadcast %cst_177 : f32 to vector<8x1xf32>
    %435 = arith.addf %433, %434 : vector<8x1xf32>
    %436 = math.rsqrt %435 : vector<8x1xf32>
    %437 = vector.broadcast %436 : vector<8x1xf32> to vector<8x128xf32>
    %438 = arith.mulf %428, %437 : vector<8x128xf32>
    %439 = vector.broadcast %365 : vector<1x128xf32> to vector<8x128xf32>
    %440 = arith.mulf %438, %439 : vector<8x128xf32>
    %441 = arith.truncf %440 : vector<8x128xf32> to vector<8x128xbf16>
    %cst_178 = arith.constant dense<0.000000e+00> : vector<8x512xf32>
    %442 = tpu.matmul %441, %367, %cst_178 {dimension_numbers = #tpu.dot_dimension_numbers<[1], [0], [0], [1], [0, 0, 1, 1], [], []>} : vector<8x128xbf16>, vector<128x512xbf16>, vector<8x512xf32> -> vector<8x512xf32>
    %443 = vector.extract_strided_slice %442 {offsets = [0, 0], sizes = [8, 256], strides = [1, 1]} : vector<8x512xf32> to vector<8x256xf32>
    %444 = vector.extract_strided_slice %442 {offsets = [0, 256], sizes = [8, 256], strides = [1, 1]} : vector<8x512xf32> to vector<8x256xf32>
    %445 = arith.negf %443 : vector<8x256xf32>
    %446 = math.exp %445 : vector<8x256xf32>
    %cst_179 = arith.constant 1.000000e+00 : f32
    %447 = vector.broadcast %cst_179 : f32 to vector<8x256xf32>
    %448 = arith.addf %447, %446 : vector<8x256xf32>
    %449 = arith.divf %447, %448 : vector<8x256xf32>
    %450 = arith.mulf %443, %449 : vector<8x256xf32>
    %451 = arith.mulf %450, %444 : vector<8x256xf32>
    %452 = arith.truncf %451 : vector<8x256xf32> to vector<8x256xbf16>
    %cst_180 = arith.constant dense<0.000000e+00> : vector<8x128xf32>
    %453 = tpu.matmul %452, %369, %cst_180 {dimension_numbers = #tpu.dot_dimension_numbers<[1], [0], [0], [1], [0, 0, 1, 1], [], []>} : vector<8x256xbf16>, vector<256x128xbf16>, vector<8x128xf32> -> vector<8x128xf32>
    %454 = arith.addf %428, %453 : vector<8x128xf32>
    %c1_181 = arith.constant 1 : index
    %c0_182 = arith.constant 0 : index
    %455 = vector.load %arg26[%c1_181, %c0_182] : memref<2x128xf32, #tpu.memory_space<vmem>>, vector<1x128xf32>
    %c1_183 = arith.constant 1 : index
    %c0_184 = arith.constant 0 : index
    %c0_185 = arith.constant 0 : index
    %456 = vector.load %arg27[%c1_183, %c0_184, %c0_185] : memref<2x128x128xbf16, #tpu.memory_space<vmem>>, vector<1x128x128xbf16>
    %457 = vector.shape_cast %456 : vector<1x128x128xbf16> to vector<128x128xbf16>
    %c1_186 = arith.constant 1 : index
    %c0_187 = arith.constant 0 : index
    %c0_188 = arith.constant 0 : index
    %458 = vector.load %arg28[%c1_186, %c0_187, %c0_188] : memref<2x128x64xbf16, #tpu.memory_space<vmem>>, vector<1x128x64xbf16>
    %459 = vector.shape_cast %458 : vector<1x128x64xbf16> to vector<128x64xbf16>
    %c1_189 = arith.constant 1 : index
    %c0_190 = arith.constant 0 : index
    %c0_191 = arith.constant 0 : index
    %460 = vector.load %arg29[%c1_189, %c0_190, %c0_191] : memref<2x128x128xbf16, #tpu.memory_space<vmem>>, vector<1x128x128xbf16>
    %461 = vector.shape_cast %460 : vector<1x128x128xbf16> to vector<128x128xbf16>
    %c1_192 = arith.constant 1 : index
    %c0_193 = arith.constant 0 : index
    %462 = vector.load %arg30[%c1_192, %c0_193] : memref<2x128xf32, #tpu.memory_space<vmem>>, vector<1x128xf32>
    %c1_194 = arith.constant 1 : index
    %c0_195 = arith.constant 0 : index
    %c0_196 = arith.constant 0 : index
    %463 = vector.load %arg31[%c1_194, %c0_195, %c0_196] : memref<2x128x512xbf16, #tpu.memory_space<vmem>>, vector<1x128x512xbf16>
    %464 = vector.shape_cast %463 : vector<1x128x512xbf16> to vector<128x512xbf16>
    %c1_197 = arith.constant 1 : index
    %c0_198 = arith.constant 0 : index
    %c0_199 = arith.constant 0 : index
    %465 = vector.load %arg32[%c1_197, %c0_198, %c0_199] : memref<2x256x128xbf16, #tpu.memory_space<vmem>>, vector<1x256x128xbf16>
    %466 = vector.shape_cast %465 : vector<1x256x128xbf16> to vector<256x128xbf16>
    %467 = arith.mulf %454, %454 : vector<8x128xf32>
    %cst_200 = arith.constant dense<0.000000e+00> : vector<8xf32>
    %468 = vector.multi_reduction <add>, %467, %cst_200 [1] : vector<8x128xf32> to vector<8xf32>
    %469 = vector.shape_cast %468 : vector<8xf32> to vector<8x1xf32>
    %cst_201 = arith.constant 1.280000e+02 : f32
    %470 = vector.broadcast %cst_201 : f32 to vector<8x1xf32>
    %471 = arith.divf %469, %470 : vector<8x1xf32>
    %cst_202 = arith.constant 9.99999997E-7 : f32
    %472 = vector.broadcast %cst_202 : f32 to vector<8x1xf32>
    %473 = arith.addf %471, %472 : vector<8x1xf32>
    %474 = math.rsqrt %473 : vector<8x1xf32>
    %475 = vector.broadcast %474 : vector<8x1xf32> to vector<8x128xf32>
    %476 = arith.mulf %454, %475 : vector<8x128xf32>
    %477 = vector.broadcast %455 : vector<1x128xf32> to vector<8x128xf32>
    %478 = arith.mulf %476, %477 : vector<8x128xf32>
    %479 = arith.truncf %478 : vector<8x128xf32> to vector<8x128xbf16>
    %cst_203 = arith.constant dense<0.000000e+00> : vector<8x128xf32>
    %480 = tpu.matmul %479, %457, %cst_203 {dimension_numbers = #tpu.dot_dimension_numbers<[1], [0], [0], [1], [0, 0, 1, 1], [], []>} : vector<8x128xbf16>, vector<128x128xbf16>, vector<8x128xf32> -> vector<8x128xf32>
    %481 = arith.truncf %478 : vector<8x128xf32> to vector<8x128xbf16>
    %cst_204 = arith.constant dense<0.000000e+00> : vector<8x64xf32>
    %482 = tpu.matmul %481, %459, %cst_204 {dimension_numbers = #tpu.dot_dimension_numbers<[1], [0], [0], [1], [0, 0, 1, 1], [], []>} : vector<8x128xbf16>, vector<128x64xbf16>, vector<8x64xf32> -> vector<8x64xf32>
    %483 = vector.extract_strided_slice %482 {offsets = [0, 0], sizes = [8, 32], strides = [1, 1]} : vector<8x64xf32> to vector<8x32xf32>
    %484 = vector.extract_strided_slice %482 {offsets = [0, 32], sizes = [8, 32], strides = [1, 1]} : vector<8x64xf32> to vector<8x32xf32>
    %485 = arith.mulf %480, %38 : vector<8x128xf32>
    %cst_205 = arith.constant dense<0.000000e+00> : vector<8x128xf32>
    %486 = tpu.matmul %480, %42, %cst_205 {dimension_numbers = #tpu.dot_dimension_numbers<[1], [0], [0], [1], [0, 0, 1, 1], [], []>} : vector<8x128xf32>, vector<128x128xf32>, vector<8x128xf32> -> vector<8x128xf32>
    %487 = arith.mulf %486, %39 : vector<8x128xf32>
    %488 = arith.addf %485, %487 : vector<8x128xf32>
    %489 = arith.mulf %483, %40 : vector<8x32xf32>
    %cst_206 = arith.constant dense<0.000000e+00> : vector<8x32xf32>
    %490 = tpu.matmul %483, %43, %cst_206 {dimension_numbers = #tpu.dot_dimension_numbers<[1], [0], [0], [1], [0, 0, 1, 1], [], []>} : vector<8x32xf32>, vector<32x32xf32>, vector<8x32xf32> -> vector<8x32xf32>
    %491 = arith.mulf %490, %41 : vector<8x32xf32>
    %492 = arith.addf %489, %491 : vector<8x32xf32>
    %493 = vector.extract_strided_slice %488 {offsets = [0, 0], sizes = [8, 32], strides = [1, 1]} : vector<8x128xf32> to vector<8x32xf32>
    %494 = vector.extract_strided_slice %488 {offsets = [0, 32], sizes = [8, 32], strides = [1, 1]} : vector<8x128xf32> to vector<8x32xf32>
    %495 = vector.extract_strided_slice %488 {offsets = [0, 64], sizes = [8, 32], strides = [1, 1]} : vector<8x128xf32> to vector<8x32xf32>
    %496 = vector.extract_strided_slice %488 {offsets = [0, 96], sizes = [8, 32], strides = [1, 1]} : vector<8x128xf32> to vector<8x32xf32>
    %497 = tpu.concatenate %493, %494, %495, %496 in 0 : vector<8x32xf32>, vector<8x32xf32>, vector<8x32xf32>, vector<8x32xf32> -> vector<32x32xf32>
    %cst_207 = arith.constant dense<0.000000e+00> : vector<32x8xf32>
    %498 = tpu.matmul %497, %492, %cst_207 {dimension_numbers = #tpu.dot_dimension_numbers<[1], [1], [0], [0], [0, 0, 1, 0], [], []>} : vector<32x32xf32>, vector<8x32xf32>, vector<32x8xf32> -> vector<32x8xf32>
    %cst_208 = arith.constant 0.176776692 : f32
    %499 = vector.broadcast %cst_208 : f32 to vector<32x8xf32>
    %500 = arith.mulf %498, %499 : vector<32x8xf32>
    %501 = tpu.iota {dimensions = array<i32: 1>} : vector<32x8xi32>
    %502 = tpu.iota {dimensions = array<i32: 0>} : vector<8x8xi32>
    %503 = tpu.concatenate %502, %502, %502, %502 in 0 : vector<8x8xi32>, vector<8x8xi32>, vector<8x8xi32>, vector<8x8xi32> -> vector<32x8xi32>
    %504 = arith.cmpi sle, %501, %503 : vector<32x8xi32>
    %cst_209 = arith.constant -1.000000e+30 : f32
    %505 = vector.broadcast %cst_209 : f32 to vector<32x8xf32>
    %506 = arith.select %504, %500, %505 : vector<32x8xi1>, vector<32x8xf32>
    %cst_210 = arith.constant dense<0xFF800000> : vector<32xf32>
    %507 = vector.multi_reduction <maximumf>, %506, %cst_210 [1] : vector<32x8xf32> to vector<32xf32>
    %508 = vector.shape_cast %507 : vector<32xf32> to vector<32x1xf32>
    %509 = vector.broadcast %508 : vector<32x1xf32> to vector<32x8xf32>
    %510 = arith.subf %506, %509 : vector<32x8xf32>
    %511 = math.exp %510 : vector<32x8xf32>
    %cst_211 = arith.constant dense<0.000000e+00> : vector<32xf32>
    %512 = vector.multi_reduction <add>, %511, %cst_211 [1] : vector<32x8xf32> to vector<32xf32>
    %513 = vector.shape_cast %512 : vector<32xf32> to vector<32x1xf32>
    %514 = tpu.reciprocal %513 {approx = true} : vector<32x1xf32> -> vector<32x1xf32>
    %515 = vector.broadcast %514 : vector<32x1xf32> to vector<32x8xf32>
    %516 = arith.mulf %511, %515 : vector<32x8xf32>
    %cst_212 = arith.constant dense<0.000000e+00> : vector<32x32xf32>
    %517 = tpu.matmul %516, %484, %cst_212 {dimension_numbers = #tpu.dot_dimension_numbers<[1], [0], [0], [1], [0, 0, 1, 1], [], []>} : vector<32x8xf32>, vector<8x32xf32>, vector<32x32xf32> -> vector<32x32xf32>
    %518 = vector.extract_strided_slice %517 {offsets = [0, 0], sizes = [8, 32], strides = [1, 1]} : vector<32x32xf32> to vector<8x32xf32>
    %519 = vector.extract_strided_slice %517 {offsets = [8, 0], sizes = [8, 32], strides = [1, 1]} : vector<32x32xf32> to vector<8x32xf32>
    %520 = vector.extract_strided_slice %517 {offsets = [16, 0], sizes = [8, 32], strides = [1, 1]} : vector<32x32xf32> to vector<8x32xf32>
    %521 = vector.extract_strided_slice %517 {offsets = [24, 0], sizes = [8, 32], strides = [1, 1]} : vector<32x32xf32> to vector<8x32xf32>
    %522 = tpu.concatenate %518, %519, %520, %521 in 1 : vector<8x32xf32>, vector<8x32xf32>, vector<8x32xf32>, vector<8x32xf32> -> vector<8x128xf32>
    %523 = arith.truncf %522 : vector<8x128xf32> to vector<8x128xbf16>
    %cst_213 = arith.constant dense<0.000000e+00> : vector<8x128xf32>
    %524 = tpu.matmul %523, %461, %cst_213 {dimension_numbers = #tpu.dot_dimension_numbers<[1], [0], [0], [1], [0, 0, 1, 1], [], []>} : vector<8x128xbf16>, vector<128x128xbf16>, vector<8x128xf32> -> vector<8x128xf32>
    %525 = arith.addf %454, %524 : vector<8x128xf32>
    %526 = arith.mulf %525, %525 : vector<8x128xf32>
    %cst_214 = arith.constant dense<0.000000e+00> : vector<8xf32>
    %527 = vector.multi_reduction <add>, %526, %cst_214 [1] : vector<8x128xf32> to vector<8xf32>
    %528 = vector.shape_cast %527 : vector<8xf32> to vector<8x1xf32>
    %cst_215 = arith.constant 1.280000e+02 : f32
    %529 = vector.broadcast %cst_215 : f32 to vector<8x1xf32>
    %530 = arith.divf %528, %529 : vector<8x1xf32>
    %cst_216 = arith.constant 9.99999997E-7 : f32
    %531 = vector.broadcast %cst_216 : f32 to vector<8x1xf32>
    %532 = arith.addf %530, %531 : vector<8x1xf32>
    %533 = math.rsqrt %532 : vector<8x1xf32>
    %534 = vector.broadcast %533 : vector<8x1xf32> to vector<8x128xf32>
    %535 = arith.mulf %525, %534 : vector<8x128xf32>
    %536 = vector.broadcast %462 : vector<1x128xf32> to vector<8x128xf32>
    %537 = arith.mulf %535, %536 : vector<8x128xf32>
    %538 = arith.truncf %537 : vector<8x128xf32> to vector<8x128xbf16>
    %cst_217 = arith.constant dense<0.000000e+00> : vector<8x512xf32>
    %539 = tpu.matmul %538, %464, %cst_217 {dimension_numbers = #tpu.dot_dimension_numbers<[1], [0], [0], [1], [0, 0, 1, 1], [], []>} : vector<8x128xbf16>, vector<128x512xbf16>, vector<8x512xf32> -> vector<8x512xf32>
    %540 = vector.extract_strided_slice %539 {offsets = [0, 0], sizes = [8, 256], strides = [1, 1]} : vector<8x512xf32> to vector<8x256xf32>
    %541 = vector.extract_strided_slice %539 {offsets = [0, 256], sizes = [8, 256], strides = [1, 1]} : vector<8x512xf32> to vector<8x256xf32>
    %542 = arith.negf %540 : vector<8x256xf32>
    %543 = math.exp %542 : vector<8x256xf32>
    %cst_218 = arith.constant 1.000000e+00 : f32
    %544 = vector.broadcast %cst_218 : f32 to vector<8x256xf32>
    %545 = arith.addf %544, %543 : vector<8x256xf32>
    %546 = arith.divf %544, %545 : vector<8x256xf32>
    %547 = arith.mulf %540, %546 : vector<8x256xf32>
    %548 = arith.mulf %547, %541 : vector<8x256xf32>
    %549 = arith.truncf %548 : vector<8x256xf32> to vector<8x256xbf16>
    %cst_219 = arith.constant dense<0.000000e+00> : vector<8x128xf32>
    %550 = tpu.matmul %549, %466, %cst_219 {dimension_numbers = #tpu.dot_dimension_numbers<[1], [0], [0], [1], [0, 0, 1, 1], [], []>} : vector<8x256xbf16>, vector<256x128xbf16>, vector<8x128xf32> -> vector<8x128xf32>
    %551 = arith.addf %525, %550 : vector<8x128xf32>
    %c0_220 = arith.constant 0 : index
    %c128 = arith.constant 128 : index
    %552 = vector.load %arg25[%c0_220, %c128] : memref<8x256xf32, #tpu.memory_space<vmem>>, vector<8x128xf32>
    tpu.vector_store %arg25[%c0_220, %c128], %551 {strides = array<i32>} : memref<8x256xf32, #tpu.memory_space<vmem>>, vector<8x128xf32>,
    return
  }
  func.func @transform_0(%arg0: i32) -> (i32, i32) {
    %c0_i32 = arith.constant 0 : i32
    %c0_i32_0 = arith.constant 0 : i32
    %c0_i32_1 = arith.constant 0 : i32
    return %c0_i32, %c0_i32_0 : i32, i32
  }
  func.func @transform_1(%arg0: i32) -> (i32, i32) {
    %c0_i32 = arith.constant 0 : i32
    %c0_i32_0 = arith.constant 0 : i32
    %c0_i32_1 = arith.constant 0 : i32
    return %c0_i32, %c0_i32_0 : i32, i32
  }
  func.func @transform_2(%arg0: i32) -> (i32, i32) {
    %c0_i32 = arith.constant 0 : i32
    %c0_i32_0 = arith.constant 0 : i32
    %c0_i32_1 = arith.constant 0 : i32
    return %c0_i32, %c0_i32_0 : i32, i32
  }
  func.func @transform_3(%arg0: i32) -> (i32, i32) {
    %c0_i32 = arith.constant 0 : i32
    %c0_i32_0 = arith.constant 0 : i32
    %c0_i32_1 = arith.constant 0 : i32
    return %c0_i32, %c0_i32_0 : i32, i32
  }
  func.func @transform_4(%arg0: i32) -> (i32, i32) {
    %c0_i32 = arith.constant 0 : i32
    %c0_i32_0 = arith.constant 0 : i32
    %c0_i32_1 = arith.constant 0 : i32
    return %c0_i32, %c0_i32_0 : i32, i32
  }
  func.func @transform_5(%arg0: i32) -> (i32, i32) {
    %c0_i32 = arith.constant 0 : i32
    %c0_i32_0 = arith.constant 0 : i32
    %c0_i32_1 = arith.constant 0 : i32
    return %c0_i32, %c0_i32_0 : i32, i32
  }
  func.func @transform_6(%arg0: i32) -> (i32, i32) {
    %c0_i32 = arith.constant 0 : i32
    %c0_i32_0 = arith.constant 0 : i32
    %c0_i32_1 = arith.constant 0 : i32
    return %c0_i32, %c0_i32_0 : i32, i32
  }
  func.func @transform_7(%arg0: i32) -> (i32, i32, i32) {
    %c0_i32 = arith.constant 0 : i32
    %c0_i32_0 = arith.constant 0 : i32
    %c0_i32_1 = arith.constant 0 : i32
    %c0_i32_2 = arith.constant 0 : i32
    return %c0_i32, %c0_i32_0, %c0_i32_1 : i32, i32, i32
  }
  func.func @transform_8(%arg0: i32) -> (i32, i32, i32) {
    %c0_i32 = arith.constant 0 : i32
    %c0_i32_0 = arith.constant 0 : i32
    %c0_i32_1 = arith.constant 0 : i32
    %c0_i32_2 = arith.constant 0 : i32
    return %c0_i32, %c0_i32_0, %c0_i32_1 : i32, i32, i32
  }
  func.func @transform_9(%arg0: i32) -> (i32, i32, i32) {
    %c0_i32 = arith.constant 0 : i32
    %c0_i32_0 = arith.constant 0 : i32
    %c0_i32_1 = arith.constant 0 : i32
    %c0_i32_2 = arith.constant 0 : i32
    return %c0_i32, %c0_i32_0, %c0_i32_1 : i32, i32, i32
  }
  func.func @transform_10(%arg0: i32) -> (i32, i32) {
    %c0_i32 = arith.constant 0 : i32
    %c0_i32_0 = arith.constant 0 : i32
    %c0_i32_1 = arith.constant 0 : i32
    return %c0_i32, %c0_i32_0 : i32, i32
  }
  func.func @transform_11(%arg0: i32) -> (i32, i32, i32) {
    %c0_i32 = arith.constant 0 : i32
    %c0_i32_0 = arith.constant 0 : i32
    %c0_i32_1 = arith.constant 0 : i32
    %c0_i32_2 = arith.constant 0 : i32
    return %c0_i32, %c0_i32_0, %c0_i32_1 : i32, i32, i32
  }
  func.func @transform_12(%arg0: i32) -> (i32, i32, i32) {
    %c0_i32 = arith.constant 0 : i32
    %c0_i32_0 = arith.constant 0 : i32
    %c0_i32_1 = arith.constant 0 : i32
    %c0_i32_2 = arith.constant 0 : i32
    return %c0_i32, %c0_i32_0, %c0_i32_1 : i32, i32, i32
  }
  func.func @transform_13(%arg0: i32) -> (i32, i32, i32) {
    %c0_i32 = arith.constant 0 : i32
    %c0_i32_0 = arith.constant 0 : i32
    %c0_i32_1 = arith.constant 0 : i32
    %c0_i32_2 = arith.constant 0 : i32
    return %c0_i32, %c0_i32_0, %c0_i32_1 : i32, i32, i32
  }
  func.func @transform_14(%arg0: i32) -> (i32, i32) {
    %c0_i32 = arith.constant 0 : i32
    %c0_i32_0 = arith.constant 0 : i32
    %c0_i32_1 = arith.constant 0 : i32
    return %c0_i32, %c0_i32_0 : i32, i32
  }
  func.func @transform_15(%arg0: i32) -> (i32, i32, i32) {
    %c0_i32 = arith.constant 0 : i32
    %c0_i32_0 = arith.constant 0 : i32
    %c0_i32_1 = arith.constant 0 : i32
    %c0_i32_2 = arith.constant 0 : i32
    return %c0_i32, %c0_i32_0, %c0_i32_1 : i32, i32, i32
  }
  func.func @transform_16(%arg0: i32) -> (i32, i32, i32) {
    %c0_i32 = arith.constant 0 : i32
    %c0_i32_0 = arith.constant 0 : i32
    %c0_i32_1 = arith.constant 0 : i32
    %c0_i32_2 = arith.constant 0 : i32
    return %c0_i32, %c0_i32_0, %c0_i32_1 : i32, i32, i32
  }
  func.func @transform_24(%arg0: i32) -> (i32, i32) {
    %c0_i32 = arith.constant 0 : i32
    %c0_i32_0 = arith.constant 0 : i32
    %c0_i32_1 = arith.constant 0 : i32
    return %c0_i32, %c0_i32_0 : i32, i32
  }
}

</mosaic_0001>

<llo_original>
// kernel: tile.14
$region0: #{tile.14}
  %s0 = inlined_call_operand.vmem [shape: f32[8,4,32], index: 0, kind: input, shape index: {}]
  %s1 = inlined_call_operand.vmem [shape: f32[8,128], index: 1, kind: output, shape index: {}]
  $region1: #{tile.14} parent=0
    #allocation0 [shape = 'u8[32768]{0}', space=vmem, size = 0x8000, scoped, tag = 'scoped mem for input reshape']
    %s3 = sshllo.u32 0, 4
    %s4 = smul.addr 4, 7
    %s5 = scalar_lea.vmem %s0, %s4
    %v6 = vld [vmem:[%s5] sm:%s3]
    %s7 = scalar_lea.vmem [#allocation0], 56
    %8 = vst [vmem:[%s7] sm:%s3] %v6
    %s9 = smul.addr 4, 6
    %s10 = scalar_lea.vmem %s0, %s9
    %v11 = vld [vmem:[%s10] sm:%s3]
    %s12 = scalar_lea.vmem [#allocation0], 48
    %13 = vst [vmem:[%s12] sm:%s3] %v11
    %s14 = smul.addr 4, 5
    %s15 = scalar_lea.vmem %s0, %s14
    %v16 = vld [vmem:[%s15] sm:%s3]
    %s17 = scalar_lea.vmem [#allocation0], 40
    %18 = vst [vmem:[%s17] sm:%s3] %v16
    %s19 = smul.addr 4, 4
    %s20 = scalar_lea.vmem %s0, %s19
    %v21 = vld [vmem:[%s20] sm:%s3]
    %s22 = scalar_lea.vmem [#allocation0], 32
    %23 = vst [vmem:[%s22] sm:%s3] %v21
    %s24 = smul.addr 4, 3
    %s25 = scalar_lea.vmem %s0, %s24
    %v26 = vld [vmem:[%s25] sm:%s3]
    %s27 = scalar_lea.vmem [#allocation0], 24
    %28 = vst [vmem:[%s27] sm:%s3] %v26
    %s29 = smul.addr 4, 2
    %s30 = scalar_lea.vmem %s0, %s29
    %v31 = vld [vmem:[%s30] sm:%s3]
    %s32 = scalar_lea.vmem [#allocation0], 16
    %33 = vst [vmem:[%s32] sm:%s3] %v31
    %s34 = scalar_lea.vmem %s0, 4
    %v35 = vld [vmem:[%s34] sm:%s3]
    %s36 = scalar_lea.vmem [#allocation0], 8
    %37 = vst [vmem:[%s36] sm:%s3] %v35
    %v38 = vld [vmem:[%s0] sm:%s3]
    %39 = vst [vmem:[#allocation0] sm:%s3] %v38
    %v40 = vld [vmem:[#allocation0] ss:$8 sm:$0xf]
    %v41 = vld [vmem:[#allocation0] ss:$8 sm:$0xf0]
    %vm42 = vcmask 1047556
    %v43 = vsel %vm42, %v41, %v40
    %vm44 = vcmask 261120
    %45 = vst.msk [vmem:[%s1] sm:$0xff] %vm44, %v43
    %s46 = scalar_lea.vmem [#allocation0], 3
    %v47 = vld [vmem:[%s46] ss:$8 sm:$0xf]
    %s48 = scalar_lea.vmem [#allocation0], 3
    %v49 = vld [vmem:[%s48] ss:$8 sm:$0xf0]
    %vm50 = vcmask 1047556
    %v51 = vsel %vm50, %v49, %v47
    %52 = vrot.lane.b32.xlu0 %v51, 96
    %v53 = vpop.permute.xlu0 %52
    %vm54 = vcmask 1048320
    %55 = vst.msk [vmem:[%s1] sm:$0xff] %vm54, %v53
    %s56 = scalar_lea.vmem [#allocation0], 2
    %v57 = vld [vmem:[%s56] ss:$8 sm:$0xf]
    %s58 = scalar_lea.vmem [#allocation0], 2
    %v59 = vld [vmem:[%s58] ss:$8 sm:$0xf0]
    %vm60 = vcmask 1047556
    %v61 = vsel %vm60, %v59, %v57
    %62 = vrot.lane.b32.xlu0 %v61, 64
    %v63 = vpop.permute.xlu0 %62
    %vm64 = vcmask 785920
    %65 = vst.msk [vmem:[%s1] sm:$0xff] %vm64, %v63
    %s66 = scalar_lea.vmem [#allocation0], 1
    %v67 = vld [vmem:[%s66] ss:$8 sm:$0xf]
    %s68 = scalar_lea.vmem [#allocation0], 1
    %v69 = vld [vmem:[%s68] ss:$8 sm:$0xf0]
    %vm70 = vcmask 1047556
    %v71 = vsel %vm70, %v69, %v67
    %72 = vrot.lane.b32.xlu0 %v71, 32
    %v73 = vpop.permute.xlu0 %72
    %vm74 = vcmask 523520
    %75 = vst.msk [vmem:[%s1] sm:$0xff] %vm74, %v73

// kernel: tts_adapter_forward.1
$region0: #{tts_adapter_forward.1}
  #allocation0 [shape = 'u32[]', space=smem, size = 0x4, offset = 0x4, fixed_abs, tag = 'smem constant byte address 0x4 - core index']
  #allocation1 [shape = 'u32[144,128]{1,0:T(1,128)}', space=vmem, size = 0x12000, scoped, tag = 'internal scratch']
  #allocation2 [shape = 'f32[2,128]{1,0:T(2,128)}', space=vmem, size = 0x400, scoped, tag = 'scratch operand']
  #allocation3 [shape = 'bf16[2,128,128]{2,1,0:T(16,128)(2,1)}', space=vmem, size = 0x10000, scoped, tag = 'scratch operand']
  #allocation4 [shape = 'bf16[2,128,64]{2,1,0:T(16,128)(2,1)}', space=vmem, size = 0x10000, scoped, tag = 'scratch operand']
  #allocation5 [shape = 'bf16[2,128,128]{2,1,0:T(16,128)(2,1)}', space=vmem, size = 0x10000, scoped, tag = 'scratch operand']
  #allocation6 [shape = 'f32[2,128]{1,0:T(2,128)}', space=vmem, size = 0x400, scoped, tag = 'scratch operand']
  #allocation7 [shape = 'bf16[2,128,512]{2,1,0:T(16,128)(2,1)}', space=vmem, size = 0x40000, scoped, tag = 'scratch operand']
  #allocation8 [shape = 'bf16[2,256,128]{2,1,0:T(16,128)(2,1)}', space=vmem, size = 0x20000, scoped, tag = 'scratch operand']
  #allocation9 [shape = 's32[7]{0}', space=sflag, size = 0x1c, scoped, tag = 'scratch operand']
  #allocation25 [shape = 's32[]', space=sflag, size = 0x4, offset = 0, fixed_abs, tag = 'sflag constant byte address 0x0 - dummy sync flag']
  #allocation26 [shape = 's32[]', space=sflag, size = 0x4, offset = 0, fixed_abs, tag = 'sflag constant byte address 0x0 - dummy sync flag']
  #allocation27 [shape = 'u32[]', space=smem, size = 0x4, offset = 0x44, fixed_abs, tag = 'smem constant byte address 0x44 - assertion arg 0']
  #allocation28 [shape = 'u32[]', space=smem, size = 0x4, offset = 0x48, fixed_abs, tag = 'smem constant byte address 0x48 - assertion arg 1']
  #allocation29 [shape = 's32[]', space=sflag, size = 0x4, offset = 0, fixed_abs, tag = 'sflag constant byte address 0x0 - dummy sync flag']
  #allocation30 [shape = 's32[]', space=sflag, size = 0x4, offset = 0, fixed_abs, tag = 'sflag constant byte address 0x0 - dummy sync flag']
  #allocation31 [shape = 's32[]', space=sflag, size = 0x4, offset = 0, fixed_abs, tag = 'sflag constant byte address 0x0 - dummy sync flag']
  #allocation32 [shape = 's32[]', space=sflag, size = 0x4, offset = 0, fixed_abs, tag = 'sflag constant byte address 0x0 - dummy sync flag']
  #allocation33 [shape = 's32[]', space=sflag, size = 0x4, offset = 0, fixed_abs, tag = 'sflag constant byte address 0x0 - dummy sync flag']
  #allocation34 [shape = 's32[]', space=sflag, size = 0x4, offset = 0, fixed_abs, tag = 'sflag constant byte address 0x0 - dummy sync flag']
  #allocation35 [shape = 's32[]', space=sflag, size = 0x4, offset = 0, fixed_abs, tag = 'sflag constant byte address 0x0 - dummy sync flag']
  #allocation37 [shape = 's32[]', space=sflag, size = 0x4, offset = 0, fixed_abs, tag = 'sflag constant byte address 0x0 - dummy sync flag']
  #allocation38 [shape = 's32[]', space=sflag, size = 0x4, offset = 0, fixed_abs, tag = 'sflag constant byte address 0x0 - dummy sync flag']
  %s0 = inlined_call_operand.vmem [shape: s32[8,3], index: 0, kind: input, shape index: {}]
  %s1 = inlined_call_operand.hbm [shape: f32[128,128], index: 1, kind: input, shape index: {}]
  %s2 = inlined_call_operand.vmem [shape: f32[16,128], index: 2, kind: input, shape index: {}]
  %s3 = inlined_call_operand.vmem [shape: f32[8,128], index: 3, kind: input, shape index: {}]
  %s4 = inlined_call_operand.vmem [shape: f32[8,128], index: 4, kind: input, shape index: {}]
  %s5 = inlined_call_operand.hbm [shape: f32[128,128], index: 5, kind: input, shape index: {}]
  %s6 = inlined_call_operand.vmem [shape: f32[2,128], index: 6, kind: input, shape index: {}]
  %s7 = inlined_call_operand.hbm [shape: bf16[2,128,128], index: 7, kind: input, shape index: {}]
  %s8 = inlined_call_operand.vmem [shape: bf16[2,128,64], index: 8, kind: input, shape index: {}]
  %s9 = inlined_call_operand.hbm [shape: bf16[2,128,128], index: 9, kind: input, shape index: {}]
  %s10 = inlined_call_operand.hbm [shape: f32[2,128], index: 10, kind: input, shape index: {}]
  %s11 = inlined_call_operand.hbm [shape: bf16[2,128,128], index: 11, kind: input, shape index: {}]
  %s12 = inlined_call_operand.vmem [shape: bf16[2,128,64], index: 12, kind: input, shape index: {}]
  %s13 = inlined_call_operand.hbm [shape: bf16[2,128,128], index: 13, kind: input, shape index: {}]
  %s14 = inlined_call_operand.hbm [shape: f32[2,128], index: 14, kind: input, shape index: {}]
  %s15 = inlined_call_operand.vmem [shape: bf16[2,128,512], index: 15, kind: input, shape index: {}]
  %s16 = inlined_call_operand.vmem [shape: bf16[2,256,128], index: 16, kind: input, shape index: {}]
  %s17 = inlined_call_operand.hbm [shape: f32[2,128], index: 17, kind: input, shape index: {}]
  %s18 = inlined_call_operand.hbm [shape: bf16[2,128,128], index: 18, kind: input, shape index: {}]
  %s19 = inlined_call_operand.vmem [shape: bf16[2,128,64], index: 19, kind: input, shape index: {}]
  %s20 = inlined_call_operand.vmem [shape: bf16[2,128,128], index: 20, kind: input, shape index: {}]
  %s21 = inlined_call_operand.hbm [shape: f32[2,128], index: 21, kind: input, shape index: {}]
  %s22 = inlined_call_operand.hbm [shape: bf16[2,128,512], index: 22, kind: input, shape index: {}]
  %s23 = inlined_call_operand.hbm [shape: bf16[2,256,128], index: 23, kind: input, shape index: {}]
  %s24 = inlined_call_operand.hbm [shape: f32[8,256], index: 24, kind: output, shape index: {}]
  %s25 = sld [smem:[#allocation0]]
  $region194: #{tts_adapter_forward.1} parent=0
    _
  %s27 = ssub.s32 1, %s25
  %s28 = scalar_select 0, %s27, %s25
  $region1: #{tts_adapter_forward.1} parent=0
    #allocation10 [shape = 'u8[65536]{0}', space=vmem, size = 0x10000, scoped, tag = 'input window, operand 1, single buffered']
    #allocation11 [shape = 's32[1]{0}', space=sflag, size = 0x4, scoped, tag = 'scoped memory for tts_adapter_forward.1']
    #allocation12 [shape = 's32[1]{0}', space=sflag, size = 0x4, scoped, tag = 'scoped memory for tts_adapter_forward.1']
    #allocation13 [shape = 'u8[65536]{0}', space=vmem, size = 0x10000, scoped, tag = 'input window, operand 5, single buffered']
    #allocation14 [shape = 's32[1]{0}', space=sflag, size = 0x4, scoped, tag = 'scoped memory for tts_adapter_forward.1']
    #allocation15 [shape = 'u8[65536]{0}', space=vmem, size = 0x10000, scoped, tag = 'input window, operand 7, single buffered']
    #allocation16 [shape = 'u8[65536]{0}', space=vmem, size = 0x10000, scoped, tag = 'input window, operand 9, single buffered']
    #allocation17 [shape = 's32[1]{0}', space=sflag, size = 0x4, scoped, tag = 'scoped memory for tts_adapter_forward.1']
    #allocation18 [shape = 'u8[1024]{0}', space=vmem, size = 0x400, scoped, tag = 'input window, operand 10, single buffered']
    #allocation19 [shape = 'u8[65536]{0}', space=vmem, size = 0x10000, scoped, tag = 'input window, operand 11, single buffered']
    #allocation20 [shape = 's32[1]{0}', space=sflag, size = 0x4, scoped, tag = 'scoped memory for tts_adapter_forward.1']
    #allocation21 [shape = 'u8[65536]{0}', space=vmem, size = 0x10000, scoped, tag = 'input window, operand 13, single buffered']
    #allocation22 [shape = 'u8[1024]{0}', space=vmem, size = 0x400, scoped, tag = 'input window, operand 14, single buffered']
    #allocation23 [shape = 's32[1]{0}', space=sflag, size = 0x4, scoped, tag = 'scoped memory for tts_adapter_forward.1']
    #allocation24 [shape = 'u8[8192]{0}', space=vmem, size = 0x2000, scoped, tag = 'output window, operand 0, single buffered']
    #allocation36 [shape = 'u32[9]{0}', space=smem, size = 0x24, scoped, tag = 'DMA stride descriptor']
    %29 = vsyncpa [#allocation11], 0
    %30 = vsyncpa [#allocation14], 0
    %31 = vsyncpa [#allocation17], 0
    %32 = vsyncpa [#allocation20], 0
    %33 = vsyncpa [#allocation23], 0
    %34 = vsyncpa [#allocation12], 0
    // Predicated region
    $region2: #{tts_adapter_forward.1} parent=1 // pred_check
      _
    $region3: #{tts_adapter_forward.1} parent=1 // pred_check_branch
      %36 = sbr.rel (0) target = $region5
    $region4: #{tts_adapter_forward.1} parent=1 // pred_region
      _
    $region5: #{tts_adapter_forward.1} parent=1 // pred_fallthru
      _
    // Predicated region
    $region6: #{tts_adapter_forward.1} parent=1 // pred_check
      _
    $region7: #{tts_adapter_forward.1} parent=1 // pred_check_branch
      %38 = sbr.rel (0) target = $region9
    $region8: #{tts_adapter_forward.1} parent=1 // pred_region
      %s40 = ssub.s32 2048, 2048
      %41 = vsyncadd [#allocation11], %s40
      %s42 = sshll.u32 [#allocation10], 4
      %s43 = int_to_ptr.vmem [resolvable:$true] %s42
      %48 = dma.hbm_to_vmem [thread:$0]  %s1, 2048, %s43, [#allocation11], 128, 128, 8
    $region9: #{tts_adapter_forward.1} parent=1 // pred_fallthru
      _
    // Predicated region
    $region10: #{tts_adapter_forward.1} parent=1 // pred_check
      _
    $region11: #{tts_adapter_forward.1} parent=1 // pred_check_branch
      %50 = sbr.rel (0) target = $region13
    $region12: #{tts_adapter_forward.1} parent=1 // pred_region
      _
    $region13: #{tts_adapter_forward.1} parent=1 // pred_fallthru
      _
    // Predicated region
    $region14: #{tts_adapter_forward.1} parent=1 // pred_check
      _
    $region15: #{tts_adapter_forward.1} parent=1 // pred_check_branch
      %52 = sbr.rel (0) target = $region17
    $region16: #{tts_adapter_forward.1} parent=1 // pred_region
      _
    $region17: #{tts_adapter_forward.1} parent=1 // pred_fallthru
      _
    // Predicated region
    $region18: #{tts_adapter_forward.1} parent=1 // pred_check
      _
    $region19: #{tts_adapter_forward.1} parent=1 // pred_check_branch
      %54 = sbr.rel (0) target = $region21
    $region20: #{tts_adapter_forward.1} parent=1 // pred_region
      _
    $region21: #{tts_adapter_forward.1} parent=1 // pred_fallthru
      _
    // Predicated region
    $region22: #{tts_adapter_forward.1} parent=1 // pred_check
      _
    $region23: #{tts_adapter_forward.1} parent=1 // pred_check_branch
      %56 = sbr.rel (0) target = $region25
    $region24: #{tts_adapter_forward.1} parent=1 // pred_region
      %s58 = ssub.s32 2048, 2048
      %59 = vsyncadd [#allocation14], %s58
      %s60 = sshll.u32 [#allocation13], 4
      %s61 = int_to_ptr.vmem [resolvable:$true] %s60
      %66 = dma.hbm_to_vmem [thread:$0]  %s5, 2048, %s61, [#allocation14], 128, 128, 8
    $region25: #{tts_adapter_forward.1} parent=1 // pred_fallthru
      _
    // Predicated region
    $region26: #{tts_adapter_forward.1} parent=1 // pred_check
      _
    $region27: #{tts_adapter_forward.1} parent=1 // pred_check_branch
      %68 = sbr.rel (0) target = $region29
    $region28: #{tts_adapter_forward.1} parent=1 // pred_region
      _
    $region29: #{tts_adapter_forward.1} parent=1 // pred_fallthru
      _
    // Predicated region
    $region30: #{tts_adapter_forward.1} parent=1 // pred_check
      _
    $region31: #{tts_adapter_forward.1} parent=1 // pred_check_branch
      %70 = sbr.rel (0) target = $region33
    $region32: #{tts_adapter_forward.1} parent=1 // pred_region
      %s72 = ssub.s32 2048, 2048
      %73 = vsyncadd [#allocation14], %s72
      %s74 = sshll.u32 [#allocation15], 4
      %s75 = int_to_ptr.vmem [resolvable:$true] %s74
      %80 = dma.hbm_to_vmem [thread:$0]  %s7, 2048, %s75, [#allocation14], 64, 64, 4
    $region33: #{tts_adapter_forward.1} parent=1 // pred_fallthru
      _
    // Predicated region
    $region34: #{tts_adapter_forward.1} parent=1 // pred_check
      _
    $region35: #{tts_adapter_forward.1} parent=1 // pred_check_branch
      %82 = sbr.rel (0) target = $region37
    $region36: #{tts_adapter_forward.1} parent=1 // pred_region
      _
    $region37: #{tts_adapter_forward.1} parent=1 // pred_fallthru
      _
    // Predicated region
    $region38: #{tts_adapter_forward.1} parent=1 // pred_check
      _
    $region39: #{tts_adapter_forward.1} parent=1 // pred_check_branch
      %84 = sbr.rel (0) target = $region41
    $region40: #{tts_adapter_forward.1} parent=1 // pred_region
      %s86 = ssub.s32 2048, 2048
      %87 = vsyncadd [#allocation17], %s86
      %s88 = sshll.u32 [#allocation16], 4
      %s89 = int_to_ptr.vmem [resolvable:$true] %s88
      %94 = dma.hbm_to_vmem [thread:$0]  %s9, 2048, %s89, [#allocation17], 64, 64, 4
    $region41: #{tts_adapter_forward.1} parent=1 // pred_fallthru
      _
    // Predicated region
    $region42: #{tts_adapter_forward.1} parent=1 // pred_check
      _
    $region43: #{tts_adapter_forward.1} parent=1 // pred_check_branch
      %96 = sbr.rel (0) target = $region45
    $region44: #{tts_adapter_forward.1} parent=1 // pred_region
      %s98 = ssub.s32 32, 32
      %99 = vsyncadd [#allocation17], %s98
      %s101 = sshll.u32 [#allocation18], 4
      %s102 = int_to_ptr.vmem [resolvable:$true] %s101
      %104 = dma.hbm_to_vmem [thread:$0]  %s10, 32, %s102, [#allocation17]
    $region45: #{tts_adapter_forward.1} parent=1 // pred_fallthru
      _
    // Predicated region
    $region46: #{tts_adapter_forward.1} parent=1 // pred_check
      _
    $region47: #{tts_adapter_forward.1} parent=1 // pred_check_branch
      %106 = sbr.rel (0) target = $region49
    $region48: #{tts_adapter_forward.1} parent=1 // pred_region
      %s108 = ssub.s32 2048, 2048
      %109 = vsyncadd [#allocation20], %s108
      %s110 = sshll.u32 [#allocation19], 4
      %s111 = int_to_ptr.vmem [resolvable:$true] %s110
      %116 = dma.hbm_to_vmem [thread:$0]  %s11, 2048, %s111, [#allocation20], 64, 64, 4
    $region49: #{tts_adapter_forward.1} parent=1 // pred_fallthru
      _
    // Predicated region
    $region50: #{tts_adapter_forward.1} parent=1 // pred_check
      _
    $region51: #{tts_adapter_forward.1} parent=1 // pred_check_branch
      %118 = sbr.rel (0) target = $region53
    $region52: #{tts_adapter_forward.1} parent=1 // pred_region
      _
    $region53: #{tts_adapter_forward.1} parent=1 // pred_fallthru
      _
    // Predicated region
    $region54: #{tts_adapter_forward.1} parent=1 // pred_check
      _
    $region55: #{tts_adapter_forward.1} parent=1 // pred_check_branch
      %120 = sbr.rel (0) target = $region57
    $region56: #{tts_adapter_forward.1} parent=1 // pred_region
      %s122 = ssub.s32 2048, 2048
      %123 = vsyncadd [#allocation20], %s122
      %s124 = sshll.u32 [#allocation21], 4
      %s125 = int_to_ptr.vmem [resolvable:$true] %s124
      %130 = dma.hbm_to_vmem [thread:$0]  %s13, 2048, %s125, [#allocation20], 64, 64, 4
    $region57: #{tts_adapter_forward.1} parent=1 // pred_fallthru
      _
    // Predicated region
    $region58: #{tts_adapter_forward.1} parent=1 // pred_check
      _
    $region59: #{tts_adapter_forward.1} parent=1 // pred_check_branch
      %132 = sbr.rel (0) target = $region61
    $region60: #{tts_adapter_forward.1} parent=1 // pred_region
      %s134 = ssub.s32 32, 32
      %135 = vsyncadd [#allocation23], %s134
      %s137 = sshll.u32 [#allocation22], 4
      %s138 = int_to_ptr.vmem [resolvable:$true] %s137
      %140 = dma.hbm_to_vmem [thread:$0]  %s14, 32, %s138, [#allocation23]
    $region61: #{tts_adapter_forward.1} parent=1 // pred_fallthru
      _
    // Predicated region
    $region62: #{tts_adapter_forward.1} parent=1 // pred_check
      _
    $region63: #{tts_adapter_forward.1} parent=1 // pred_check_branch
      %142 = sbr.rel (0) target = $region65
    $region64: #{tts_adapter_forward.1} parent=1 // pred_region
      _
    $region65: #{tts_adapter_forward.1} parent=1 // pred_fallthru
      _
    // Predicated region
    $region66: #{tts_adapter_forward.1} parent=1 // pred_check
      _
    $region67: #{tts_adapter_forward.1} parent=1 // pred_check_branch
      %144 = sbr.rel (0) target = $region69
    $region68: #{tts_adapter_forward.1} parent=1 // pred_region
      _
    $region69: #{tts_adapter_forward.1} parent=1 // pred_fallthru
      _
    // Predicated region
    $region70: #{tts_adapter_forward.1} parent=1 // pred_check
      _
    $region71: #{tts_adapter_forward.1} parent=1 // pred_check_branch
      %146 = sbr.rel (0) target = $region73
    $region72: #{tts_adapter_forward.1} parent=1 // pred_region
      %147 = dma.done [#allocation11], 2048
    $region73: #{tts_adapter_forward.1} parent=1 // pred_fallthru
      _
    // Predicated region
    $region74: #{tts_adapter_forward.1} parent=1 // pred_check
      _
    $region75: #{tts_adapter_forward.1} parent=1 // pred_check_branch
      %149 = sbr.rel (0) target = $region77
    $region76: #{tts_adapter_forward.1} parent=1 // pred_region
      %150 = dma.done [#allocation14], 2048
    $region77: #{tts_adapter_forward.1} parent=1 // pred_fallthru
      _
    // Predicated region
    $region78: #{tts_adapter_forward.1} parent=1 // pred_check
      _
    $region79: #{tts_adapter_forward.1} parent=1 // pred_check_branch
      %152 = sbr.rel (0) target = $region81
    $region80: #{tts_adapter_forward.1} parent=1 // pred_region
      %153 = dma.done [#allocation14], 2048
    $region81: #{tts_adapter_forward.1} parent=1 // pred_fallthru
      _
    // Predicated region
    $region82: #{tts_adapter_forward.1} parent=1 // pred_check
      _
    $region83: #{tts_adapter_forward.1} parent=1 // pred_check_branch
      %155 = sbr.rel (0) target = $region85
    $region84: #{tts_adapter_forward.1} parent=1 // pred_region
      %156 = dma.done [#allocation17], 2048
    $region85: #{tts_adapter_forward.1} parent=1 // pred_fallthru
      _
    // Predicated region
    $region86: #{tts_adapter_forward.1} parent=1 // pred_check
      _
    $region87: #{tts_adapter_forward.1} parent=1 // pred_check_branch
      %158 = sbr.rel (0) target = $region89
    $region88: #{tts_adapter_forward.1} parent=1 // pred_region
      %159 = dma.done [#allocation17], 32
    $region89: #{tts_adapter_forward.1} parent=1 // pred_fallthru
      _
    // Predicated region
    $region90: #{tts_adapter_forward.1} parent=1 // pred_check
      _
    $region91: #{tts_adapter_forward.1} parent=1 // pred_check_branch
      %161 = sbr.rel (0) target = $region93
    $region92: #{tts_adapter_forward.1} parent=1 // pred_region
      %162 = dma.done [#allocation20], 2048
    $region93: #{tts_adapter_forward.1} parent=1 // pred_fallthru
      _
    // Predicated region
    $region94: #{tts_adapter_forward.1} parent=1 // pred_check
      _
    $region95: #{tts_adapter_forward.1} parent=1 // pred_check_branch
      %164 = sbr.rel (0) target = $region97
    $region96: #{tts_adapter_forward.1} parent=1 // pred_region
      %165 = dma.done [#allocation20], 2048
    $region97: #{tts_adapter_forward.1} parent=1 // pred_fallthru
      _
    // Predicated region
    $region98: #{tts_adapter_forward.1} parent=1 // pred_check
      _
    $region99: #{tts_adapter_forward.1} parent=1 // pred_check_branch
      %167 = sbr.rel (0) target = $region101
    $region100: #{tts_adapter_forward.1} parent=1 // pred_region
      %168 = dma.done [#allocation23], 32
    $region101: #{tts_adapter_forward.1} parent=1 // pred_fallthru
      _
    // Predicated region
    $region102: #{tts_adapter_forward.1} parent=1 // pred_check
      _
    $region103: #{tts_adapter_forward.1} parent=1 // pred_check_branch
      %171 = sbr.rel target = $region105
    $region104: #{tts_adapter_forward.1} parent=1 // pred_region
      %172 = sst [smem:[#allocation27]] [#allocation26]
      %173 = sst [smem:[#allocation28]] [#allocation25]
    $region105: #{tts_adapter_forward.1} parent=1 // pred_fallthru
      _
    %175 = shalt.err (0)
    %s177 = sshll.u32 [#allocation2], 4
    %s178 = int_to_ptr.vmem [resolvable:$true] %s177
    %180 = dma.hbm_to_vmem [thread:$0]  %s17, 32, %s178, [#allocation9]
    %s181 = scalar_lea.sflag [#allocation9], 1
    // Predicated region
    $region106: #{tts_adapter_forward.1} parent=1 // pred_check
      _
    $region107: #{tts_adapter_forward.1} parent=1 // pred_check_branch
      %183 = sbr.rel target = $region109
    $region108: #{tts_adapter_forward.1} parent=1 // pred_region
      %184 = sst [smem:[#allocation27]] [#allocation30]
      %185 = sst [smem:[#allocation28]] [#allocation29]
    $region109: #{tts_adapter_forward.1} parent=1 // pred_fallthru
      _
    %187 = shalt.err (0)
    %s189 = sshll.u32 [#allocation3], 4
    %s190 = int_to_ptr.vmem [resolvable:$true] %s189
    %192 = dma.hbm_to_vmem [thread:$0]  %s18, 2048, %s190, %s181
    %s193 = scalar_lea.sflag [#allocation9], 2
    %p195 = scmp.lt.u32.totalorder 128, 8
    %p196 = pneg %p195
    // Predicated region
    $region110: #{tts_adapter_forward.1} parent=1 // pred_check
      _
    $region111: #{tts_adapter_forward.1} parent=1 // pred_check_branch
      %198 = sbr.rel (%p195) target = $region113
    $region112: #{tts_adapter_forward.1} parent=1 // pred_region
      %s213 = sand.u32 128, 7
      %p214 = scmp.eq.s32.totalorder %s213, 0
      // Predicated region
      $region125: #{tts_adapter_forward.1} parent=112 // pred_check
        %p215 = pneg %p214
      $region126: #{tts_adapter_forward.1} parent=112 // pred_check_branch
        %217 = sbr.rel (%p215) target = $region128
      $region127: #{tts_adapter_forward.1} parent=112 // pred_region
        loop: start=0, step=1, limit=1
        $region129: #{tts_adapter_forward.1} parent=127 // loop_pre_header
          _
        $region130: #{tts_adapter_forward.1} parent=127 // loop_header
          %s219 = sphi 0, %s223
          %p220 = scmp.ge.s32.totalorder %s219, 1
          %s224 = sphi %s19, %s19
          %s225 = sphi [#allocation4], [#allocation4]
        $region131: #{tts_adapter_forward.1} parent=127 // loop_header_branch
          %222 = sbr.rel (%p220) target = $region135
        $region132: #{tts_adapter_forward.1} parent=127 // loop_body
          %v226 = vld [vmem:[%s224] sm:$0xff]
          %227 = vst [vmem:[%s225] sm:$0xff] %v226
          %v228 = vld [vmem:[%s224 + $0x8] sm:$0xff]
          %229 = vst [vmem:[%s225 + $0x8] sm:$0xff] %v228
          %v230 = vld [vmem:[%s224 + $0x10] sm:$0xff]
          %231 = vst [vmem:[%s225 + $0x10] sm:$0xff] %v230
          %v232 = vld [vmem:[%s224 + $0x18] sm:$0xff]
          %233 = vst [vmem:[%s225 + $0x18] sm:$0xff] %v232
          %v234 = vld [vmem:[%s224 + $0x20] sm:$0xff]
          %235 = vst [vmem:[%s225 + $0x20] sm:$0xff] %v234
          %v236 = vld [vmem:[%s224 + $0x28] sm:$0xff]
          %237 = vst [vmem:[%s225 + $0x28] sm:$0xff] %v236
          %v238 = vld [vmem:[%s224 + $0x30] sm:$0xff]
          %239 = vst [vmem:[%s225 + $0x30] sm:$0xff] %v238
          %v240 = vld [vmem:[%s224 + $0x38] sm:$0xff]
          %241 = vst [vmem:[%s225 + $0x38] sm:$0xff] %v240
          %v242 = vld [vmem:[%s224 + $0x40] sm:$0xff]
          %243 = vst [vmem:[%s225 + $0x40] sm:$0xff] %v242
          %v244 = vld [vmem:[%s224 + $0x48] sm:$0xff]
          %245 = vst [vmem:[%s225 + $0x48] sm:$0xff] %v244
          %v246 = vld [vmem:[%s224 + $0x50] sm:$0xff]
          %247 = vst [vmem:[%s225 + $0x50] sm:$0xff] %v246
          %v248 = vld [vmem:[%s224 + $0x58] sm:$0xff]
          %249 = vst [vmem:[%s225 + $0x58] sm:$0xff] %v248
          %v250 = vld [vmem:[%s224 + $0x60] sm:$0xff]
          %251 = vst [vmem:[%s225 + $0x60] sm:$0xff] %v250
          %v252 = vld [vmem:[%s224 + $0x68] sm:$0xff]
          %253 = vst [vmem:[%s225 + $0x68] sm:$0xff] %v252
          %v254 = vld [vmem:[%s224 + $0x70] sm:$0xff]
          %255 = vst [vmem:[%s225 + $0x70] sm:$0xff] %v254
          %v256 = vld [vmem:[%s224 + $0x78] sm:$0xff]
          %257 = vst [vmem:[%s225 + $0x78] sm:$0xff] %v256
        $region133: #{tts_adapter_forward.1} parent=127 // loop_footer
          %s223 = sadd.s32 1, %s219
        $region134: #{tts_adapter_forward.1} parent=127 // loop_footer_branch
          %218 = sbr.rel target = $region130
        $region135: #{tts_adapter_forward.1} parent=127 // loop_exit
          _
      $region128: #{tts_adapter_forward.1} parent=112 // pred_fallthru
        _
      %p258 = pneg %p214
      // Predicated region
      $region136: #{tts_adapter_forward.1} parent=112 // pred_check
        _
      $region137: #{tts_adapter_forward.1} parent=112 // pred_check_branch
        %260 = sbr.rel (%p214) target = $region139
      $region138: #{tts_adapter_forward.1} parent=112 // pred_region
        %s261 = sand.u32 128, 7
      $region139: #{tts_adapter_forward.1} parent=112 // pred_fallthru
        _
    $region113: #{tts_adapter_forward.1} parent=1 // pred_fallthru
      _
    // Predicated region
    $region114: #{tts_adapter_forward.1} parent=1 // pred_check
      %p199 = pneg %p195
    $region115: #{tts_adapter_forward.1} parent=1 // pred_check_branch
      %201 = sbr.rel (%p199) target = $region117
    $region116: #{tts_adapter_forward.1} parent=1 // pred_region
      %s202 = sshllo.u32 0, 128
      loop: start=0, step=1, limit=1
      $region118: #{tts_adapter_forward.1} parent=116 // loop_pre_header
        _
      $region119: #{tts_adapter_forward.1} parent=116 // loop_header
        %s204 = sphi 0, %s208
        %p205 = scmp.ge.s32.totalorder %s204, 1
        %s209 = sphi %s19, %s19
        %s210 = sphi [#allocation4], [#allocation4]
      $region120: #{tts_adapter_forward.1} parent=116 // loop_header_branch
        %207 = sbr.rel (%p205) target = $region124
      $region121: #{tts_adapter_forward.1} parent=116 // loop_body
        %v211 = vld [vmem:[%s209] sm:%s202]
        %212 = vst [vmem:[%s210] sm:%s202] %v211
      $region122: #{tts_adapter_forward.1} parent=116 // loop_footer
        %s208 = sadd.s32 1, %s204
      $region123: #{tts_adapter_forward.1} parent=116 // loop_footer_branch
        %203 = sbr.rel target = $region119
      $region124: #{tts_adapter_forward.1} parent=116 // loop_exit
        _
    $region117: #{tts_adapter_forward.1} parent=1 // pred_fallthru
      _
    // Predicated region
    $region140: #{tts_adapter_forward.1} parent=1 // pred_check
      _
    $region141: #{tts_adapter_forward.1} parent=1 // pred_check_branch
      %264 = sbr.rel (0) target = $region143
    $region142: #{tts_adapter_forward.1} parent=1 // pred_region
      %265 = vsyncadd %s193, 2048
    $region143: #{tts_adapter_forward.1} parent=1 // pred_fallthru
      _
    %s266 = scalar_lea.sflag [#allocation9], 3
    %p268 = scmp.lt.u32.totalorder 128, 8
    %p269 = pneg %p268
    // Predicated region
    $region144: #{tts_adapter_forward.1} parent=1 // pred_check
      _
    $region145: #{tts_adapter_forward.1} parent=1 // pred_check_branch
      %271 = sbr.rel (%p268) target = $region147
    $region146: #{tts_adapter_forward.1} parent=1 // pred_region
      %s286 = sand.u32 128, 7
      %p287 = scmp.eq.s32.totalorder %s286, 0
      // Predicated region
      $region159: #{tts_adapter_forward.1} parent=146 // pred_check
        %p288 = pneg %p287
      $region160: #{tts_adapter_forward.1} parent=146 // pred_check_branch
        %290 = sbr.rel (%p288) target = $region162
      $region161: #{tts_adapter_forward.1} parent=146 // pred_region
        loop: start=0, step=1, limit=1
        $region163: #{tts_adapter_forward.1} parent=161 // loop_pre_header
          _
        $region164: #{tts_adapter_forward.1} parent=161 // loop_header
          %s292 = sphi 0, %s296
          %p293 = scmp.ge.s32.totalorder %s292, 1
          %s297 = sphi %s20, %s20
          %s298 = sphi [#allocation5], [#allocation5]
        $region165: #{tts_adapter_forward.1} parent=161 // loop_header_branch
          %295 = sbr.rel (%p293) target = $region169
        $region166: #{tts_adapter_forward.1} parent=161 // loop_body
          %v299 = vld [vmem:[%s297] sm:$0xff]
          %300 = vst [vmem:[%s298] sm:$0xff] %v299
          %v301 = vld [vmem:[%s297 + $0x8] sm:$0xff]
          %302 = vst [vmem:[%s298 + $0x8] sm:$0xff] %v301
          %v303 = vld [vmem:[%s297 + $0x10] sm:$0xff]
          %304 = vst [vmem:[%s298 + $0x10] sm:$0xff] %v303
          %v305 = vld [vmem:[%s297 + $0x18] sm:$0xff]
          %306 = vst [vmem:[%s298 + $0x18] sm:$0xff] %v305
          %v307 = vld [vmem:[%s297 + $0x20] sm:$0xff]
          %308 = vst [vmem:[%s298 + $0x20] sm:$0xff] %v307
          %v309 = vld [vmem:[%s297 + $0x28] sm:$0xff]
          %310 = vst [vmem:[%s298 + $0x28] sm:$0xff] %v309
          %v311 = vld [vmem:[%s297 + $0x30] sm:$0xff]
          %312 = vst [vmem:[%s298 + $0x30] sm:$0xff] %v311
          %v313 = vld [vmem:[%s297 + $0x38] sm:$0xff]
          %314 = vst [vmem:[%s298 + $0x38] sm:$0xff] %v313
          %v315 = vld [vmem:[%s297 + $0x40] sm:$0xff]
          %316 = vst [vmem:[%s298 + $0x40] sm:$0xff] %v315
          %v317 = vld [vmem:[%s297 + $0x48] sm:$0xff]
          %318 = vst [vmem:[%s298 + $0x48] sm:$0xff] %v317
          %v319 = vld [vmem:[%s297 + $0x50] sm:$0xff]
          %320 = vst [vmem:[%s298 + $0x50] sm:$0xff] %v319
          %v321 = vld [vmem:[%s297 + $0x58] sm:$0xff]
          %322 = vst [vmem:[%s298 + $0x58] sm:$0xff] %v321
          %v323 = vld [vmem:[%s297 + $0x60] sm:$0xff]
          %324 = vst [vmem:[%s298 + $0x60] sm:$0xff] %v323
          %v325 = vld [vmem:[%s297 + $0x68] sm:$0xff]
          %326 = vst [vmem:[%s298 + $0x68] sm:$0xff] %v325
          %v327 = vld [vmem:[%s297 + $0x70] sm:$0xff]
          %328 = vst [vmem:[%s298 + $0x70] sm:$0xff] %v327
          %v329 = vld [vmem:[%s297 + $0x78] sm:$0xff]
          %330 = vst [vmem:[%s298 + $0x78] sm:$0xff] %v329
        $region167: #{tts_adapter_forward.1} parent=161 // loop_footer
          %s296 = sadd.s32 1, %s292
        $region168: #{tts_adapter_forward.1} parent=161 // loop_footer_branch
          %291 = sbr.rel target = $region164
        $region169: #{tts_adapter_forward.1} parent=161 // loop_exit
          _
      $region162: #{tts_adapter_forward.1} parent=146 // pred_fallthru
        _
      %p331 = pneg %p287
      // Predicated region
      $region170: #{tts_adapter_forward.1} parent=146 // pred_check
        _
      $region171: #{tts_adapter_forward.1} parent=146 // pred_check_branch
        %333 = sbr.rel (%p287) target = $region173
      $region172: #{tts_adapter_forward.1} parent=146 // pred_region
        %s334 = sand.u32 128, 7
      $region173: #{tts_adapter_forward.1} parent=146 // pred_fallthru
        _
    $region147: #{tts_adapter_forward.1} parent=1 // pred_fallthru
      _
    // Predicated region
    $region148: #{tts_adapter_forward.1} parent=1 // pred_check
      %p272 = pneg %p268
    $region149: #{tts_adapter_forward.1} parent=1 // pred_check_branch
      %274 = sbr.rel (%p272) target = $region151
    $region150: #{tts_adapter_forward.1} parent=1 // pred_region
      %s275 = sshllo.u32 0, 128
      loop: start=0, step=1, limit=1
      $region152: #{tts_adapter_forward.1} parent=150 // loop_pre_header
        _
      $region153: #{tts_adapter_forward.1} parent=150 // loop_header
        %s277 = sphi 0, %s281
        %p278 = scmp.ge.s32.totalorder %s277, 1
        %s282 = sphi %s20, %s20
        %s283 = sphi [#allocation5], [#allocation5]
      $region154: #{tts_adapter_forward.1} parent=150 // loop_header_branch
        %280 = sbr.rel (%p278) target = $region158
      $region155: #{tts_adapter_forward.1} parent=150 // loop_body
        %v284 = vld [vmem:[%s282] sm:%s275]
        %285 = vst [vmem:[%s283] sm:%s275] %v284
      $region156: #{tts_adapter_forward.1} parent=150 // loop_footer
        %s281 = sadd.s32 1, %s277
      $region157: #{tts_adapter_forward.1} parent=150 // loop_footer_branch
        %276 = sbr.rel target = $region153
      $region158: #{tts_adapter_forward.1} parent=150 // loop_exit
        _
    $region151: #{tts_adapter_forward.1} parent=1 // pred_fallthru
      _
    // Predicated region
    $region174: #{tts_adapter_forward.1} parent=1 // pred_check
      _
    $region175: #{tts_adapter_forward.1} parent=1 // pred_check_branch
      %337 = sbr.rel (0) target = $region177
    $region176: #{tts_adapter_forward.1} parent=1 // pred_region
      %338 = vsyncadd %s266, 2048
    $region177: #{tts_adapter_forward.1} parent=1 // pred_fallthru
      _
    %s339 = scalar_lea.sflag [#allocation9], 4
    // Predicated region
    $region178: #{tts_adapter_forward.1} parent=1 // pred_check
      _
    $region179: #{tts_adapter_forward.1} parent=1 // pred_check_branch
      %341 = sbr.rel target = $region181
    $region180: #{tts_adapter_forward.1} parent=1 // pred_region
      %342 = sst [smem:[#allocation27]] [#allocation34]
      %343 = sst [smem:[#allocation28]] [#allocation33]
    $region181: #{tts_adapter_forward.1} parent=1 // pred_fallthru
      _
    %345 = shalt.err (0)
    %s347 = sshll.u32 [#allocation6], 4
    %s348 = int_to_ptr.vmem [resolvable:$true] %s347
    %350 = dma.hbm_to_vmem [thread:$0]  %s21, 32, %s348, %s339
    %s351 = scalar_lea.sflag [#allocation9], 5
    %s353 = sshll.u32 1, 14
    %s354 = sxor.u32 4294967295, %s353
    %s356 = sld [smem:[#allocation0]]
    %s357 = sadd.s32 2, %s356
    %s359 = sshll.u32 7, 26
    %s360 = sxor.u32 4294967295, %s359
    %s361 = sand.u32 0, %s360
    %s362 = sshll.u32 %s357, 26
    %s363 = sor.u32 %s361, %s362
    %s364 = sshll.u32 [#allocation7], 4
    %s365 = int_to_ptr.vmem [resolvable:$true] %s364
    %368 = sst [smem:[#allocation36]] 512
    %s369 = scalar_lea.smem [#allocation36], 1
    %370 = sst [smem:[%s369]] 512
    %s371 = scalar_lea.smem [#allocation36], 2
    %372 = sst [smem:[%s371]] 4
    %s373 = scalar_lea.smem [#allocation36], 3
    %374 = sst [smem:[%s373]] 64
    %s375 = scalar_lea.smem [#allocation36], 4
    %376 = sst [smem:[%s375]] 128
    %s377 = scalar_lea.smem [#allocation36], 5
    %378 = sst [smem:[%s377]] 2
    %s379 = scalar_lea.smem [#allocation36], 6
    %380 = sst [smem:[%s379]] 256
    %s381 = scalar_lea.smem [#allocation36], 7
    %382 = sst [smem:[%s381]] 64
    %s383 = scalar_lea.smem [#allocation36], 8
    %384 = sst [smem:[%s383]] 4
    %386 = dma.general %s22, 8192, %s365, %s351, [#allocation35], [#allocation36], %s363, 0
    %s387 = scalar_lea.sflag [#allocation9], 6
    // Predicated region
    $region182: #{tts_adapter_forward.1} parent=1 // pred_check
      _
    $region183: #{tts_adapter_forward.1} parent=1 // pred_check_branch
      %389 = sbr.rel target = $region185
    $region184: #{tts_adapter_forward.1} parent=1 // pred_region
      %390 = sst [smem:[#allocation27]] [#allocation38]
      %391 = sst [smem:[#allocation28]] [#allocation37]
    $region185: #{tts_adapter_forward.1} parent=1 // pred_fallthru
      _
    %393 = shalt.err (0)
    %s395 = sshll.u32 [#allocation8], 4
    %s396 = int_to_ptr.vmem [resolvable:$true] %s395
    %398 = dma.hbm_to_vmem [thread:$0]  %s23, 4096, %s396, %s387
    %v399 = vld [vmem:[%s0] sm:$0xff]
    %v400 = vlaneseq
    %v401 = vand.u32 %v400, 127
    %402 = vset.pattern.permute.xlu0 0
    %403 = vperm.xlu0 %402, %v399
    %v404 = vpop.permute.xlu0 %403
    %vm405 = vcmp.eq.s32.totalorder %v401, %v404
    %v406 = vsel %vm405, 1, 0
    %v407 = vcvt.s32.f32 %v406
    %v408 = vadd.f32 %v407, 0.0
    %409 = vset.pattern.permute.xlu0 1
    %410 = vperm.xlu0 %409, %v399
    %v411 = vpop.permute.xlu0 %410
    %vm412 = vcmp.eq.s32.totalorder %v401, %v411
    %v413 = vsel %vm412, 1, 0
    %v414 = vcvt.s32.f32 %v413
    %v415 = vadd.f32 %v408, %v414
    %416 = vset.pattern.permute.xlu0 2
    %417 = vperm.xlu0 %416, %v399
    %v418 = vpop.permute.xlu0 %417
    %vm419 = vcmp.eq.s32.totalorder %v401, %v418
    %v420 = vsel %vm419, 1, 0
    %v421 = vcvt.s32.f32 %v420
    %v422 = vadd.f32 %v415, %v421
    %v423 = vld [vmem:[#allocation10] sm:$0xff]
    %v424 = vld [vmem:[#allocation10 + $0x8] sm:$0xff]
    %v425 = vld [vmem:[#allocation10 + $0x10] sm:$0xff]
    %v426 = vld [vmem:[#allocation10 + $0x18] sm:$0xff]
    %v427 = vld [vmem:[#allocation10 + $0x20] sm:$0xff]
    %v428 = vld [vmem:[#allocation10 + $0x28] sm:$0xff]
    %v429 = vld [vmem:[#allocation10 + $0x30] sm:$0xff]
    %v430 = vld [vmem:[#allocation10 + $0x38] sm:$0xff]
    %v431 = vld [vmem:[#allocation10 + $0x40] sm:$0xff]
    %v432 = vld [vmem:[#allocation10 + $0x48] sm:$0xff]
    %v433 = vld [vmem:[#allocation10 + $0x50] sm:$0xff]
    %v434 = vld [vmem:[#allocation10 + $0x58] sm:$0xff]
    %v435 = vld [vmem:[#allocation10 + $0x60] sm:$0xff]
    %v436 = vld [vmem:[#allocation10 + $0x68] sm:$0xff]
    %v437 = vld [vmem:[#allocation10 + $0x70] sm:$0xff]
    %v438 = vld [vmem:[#allocation10 + $0x78] sm:$0xff]
    %439 = vmatprep.subr.mxu0 0.0
    %440 = vmatpush1.msra.mxu0 %v423
    %441 = vmatprep.subr.mxu0 0.0
    %442 = vmatpush1.msra.mxu0 %v424
    %443 = vmatprep.subr.mxu0 0.0
    %444 = vmatpush1.msra.mxu0 %v425
    %445 = vmatprep.subr.mxu0 0.0
    %446 = vmatpush1.msra.mxu0 %v426
    %447 = vmatprep.subr.mxu0 0.0
    %448 = vmatpush1.msra.mxu0 %v427
    %449 = vmatprep.subr.mxu0 0.0
    %450 = vmatpush1.msra.mxu0 %v428
    %451 = vmatprep.subr.mxu0 0.0
    %452 = vmatpush1.msra.mxu0 %v429
    %453 = vmatprep.subr.mxu0 0.0
    %454 = vmatpush1.msra.mxu0 %v430
    %455 = vmatprep.subr.mxu0 0.0
    %456 = vmatpush1.msra.mxu0 %v431
    %457 = vmatprep.subr.mxu0 0.0
    %458 = vmatpush1.msra.mxu0 %v432
    %459 = vmatprep.subr.mxu0 0.0
    %460 = vmatpush1.msra.mxu0 %v433
    %461 = vmatprep.subr.mxu0 0.0
    %462 = vmatpush1.msra.mxu0 %v434
    %463 = vmatprep.subr.mxu0 0.0
    %464 = vmatpush1.msra.mxu0 %v435
    %465 = vmatprep.subr.mxu0 0.0
    %466 = vmatpush1.msra.mxu0 %v436
    %467 = vmatprep.subr.mxu0 0.0
    %468 = vmatpush1.msra.mxu0 %v437
    %469 = vmatprep.subr.mxu0 0.0
    %470 = vmatpush1.msra.mxu0 %v438
    %471 = vmatprep.subr.mxu0 0.0
    %472 = vmatpush1.msra.mxu0 0.0
    %473 = vmatprep.subr.mxu0 0.0
    %474 = vmatpush1.msra.mxu0 0.0
    %475 = vmatprep.subr.mxu0 0.0
    %476 = vmatpush1.msra.mxu0 0.0
    %477 = vmatprep.subr.mxu0 0.0
    %478 = vmatpush1.msra.mxu0 0.0
    %479 = vmatprep.subr.mxu0 0.0
    %480 = vmatpush1.msra.mxu0 0.0
    %481 = vmatprep.subr.mxu0 0.0
    %482 = vmatpush1.msra.mxu0 0.0
    %483 = vmatprep.subr.mxu0 0.0
    %484 = vmatpush1.msra.mxu0 0.0
    %485 = vmatprep.subr.mxu0 0.0
    %486 = vmatpush1.msra.mxu0 0.0
    %487 = vmatprep.subr.mxu0 0.0
    %488 = vmatpush1.msra.mxu0 0.0
    %489 = vmatprep.subr.mxu0 0.0
    %490 = vmatpush1.msra.mxu0 0.0
    %491 = vmatprep.subr.mxu0 0.0
    %492 = vmatpush1.msra.mxu0 0.0
    %493 = vmatprep.subr.mxu0 0.0
    %494 = vmatpush1.msra.mxu0 0.0
    %495 = vmatprep.subr.mxu0 0.0
    %496 = vmatpush1.msra.mxu0 0.0
    %497 = vmatprep.subr.mxu0 0.0
    %498 = vmatpush1.msra.mxu0 0.0
    %499 = vmatprep.subr.mxu0 0.0
    %500 = vmatpush1.msra.mxu0 0.0
    %501 = vmatprep.subr.mxu0 0.0
    %502 = vmatpush1.msra.mxu0 0.0
    %503 = vmatprep.mubr.f32.mxu0 0.0
    %504 = vmatmul.mubr.f32.gmra.mrb[0].mxu0 %v422
    %v505 = vpop.f32.mrb[0].mxu0
    %v506 = vadd.f32 0.0, %v505
    %v507 = vpop.f32.mrb[0].mxu0
    %508 = vdwg.mxu0
    %v509 = vld [vmem:[%s2] sm:$0xff]
    %v510 = vld [vmem:[%s2 + $0x8] sm:$0xff]
    %v511 = vld [vmem:[%s3] sm:$0xff]
    %v512 = vld [vmem:[%s4] sm:$0xff]
    %v513 = vld [vmem:[#allocation13] sm:$0xff]
    %v514 = vld [vmem:[#allocation13 + $0x8] sm:$0xff]
    %v515 = vld [vmem:[#allocation13 + $0x10] sm:$0xff]
    %v516 = vld [vmem:[#allocation13 + $0x18] sm:$0xff]
    %v517 = vld [vmem:[#allocation13 + $0x20] sm:$0xff]
    %v518 = vld [vmem:[#allocation13 + $0x28] sm:$0xff]
    %v519 = vld [vmem:[#allocation13 + $0x30] sm:$0xff]
    %v520 = vld [vmem:[#allocation13 + $0x38] sm:$0xff]
    %v521 = vld [vmem:[#allocation13 + $0x40] sm:$0xff]
    %v522 = vld [vmem:[#allocation13 + $0x48] sm:$0xff]
    %v523 = vld [vmem:[#allocation13 + $0x50] sm:$0xff]
    %v524 = vld [vmem:[#allocation13 + $0x58] sm:$0xff]
    %v525 = vld [vmem:[#allocation13 + $0x60] sm:$0xff]
    %v526 = vld [vmem:[#allocation13 + $0x68] sm:$0xff]
    %v527 = vld [vmem:[#allocation13 + $0x70] sm:$0xff]
    %v528 = vld [vmem:[#allocation13 + $0x78] sm:$0xff]
    %v529 = vld [vmem:[%s6] sm:$0x1]
    %v530 = vld [vmem:[#allocation15] sm:$0xf]
    %v531 = vld [vmem:[#allocation15 + $0x4] sm:$0xf]
    %v532 = vld [vmem:[#allocation15 + $0x8] sm:$0xf]
    %v533 = vld [vmem:[#allocation15 + $0xc] sm:$0xf]
    %v534 = vld [vmem:[#allocation15 + $0x10] sm:$0xf]
    %v535 = vld [vmem:[#allocation15 + $0x14] sm:$0xf]
    %v536 = vld [vmem:[#allocation15 + $0x18] sm:$0xf]
    %v537 = vld [vmem:[#allocation15 + $0x1c] sm:$0xf]
    %v538 = vld [vmem:[#allocation15 + $0x20] sm:$0xf]
    %v539 = vld [vmem:[#allocation15 + $0x24] sm:$0xf]
    %v540 = vld [vmem:[#allocation15 + $0x28] sm:$0xf]
    %v541 = vld [vmem:[#allocation15 + $0x2c] sm:$0xf]
    %v542 = vld [vmem:[#allocation15 + $0x30] sm:$0xf]
    %v543 = vld [vmem:[#allocation15 + $0x34] sm:$0xf]
    %v544 = vld [vmem:[#allocation15 + $0x38] sm:$0xf]
    %v545 = vld [vmem:[#allocation15 + $0x3c] sm:$0xf]
    %v546 = vld [vmem:[%s8] sm:$0xf]
    %v547 = vld [vmem:[%s8 + $0x4] sm:$0xf]
    %v548 = vld [vmem:[%s8 + $0x8] sm:$0xf]
    %v549 = vld [vmem:[%s8 + $0xc] sm:$0xf]
    %v550 = vld [vmem:[%s8 + $0x10] sm:$0xf]
    %v551 = vld [vmem:[%s8 + $0x14] sm:$0xf]
    %v552 = vld [vmem:[%s8 + $0x18] sm:$0xf]
    %v553 = vld [vmem:[%s8 + $0x1c] sm:$0xf]
    %v554 = vld [vmem:[%s8 + $0x20] sm:$0xf]
    %v555 = vld [vmem:[%s8 + $0x24] sm:$0xf]
    %v556 = vld [vmem:[%s8 + $0x28] sm:$0xf]
    %v557 = vld [vmem:[%s8 + $0x2c] sm:$0xf]
    %v558 = vld [vmem:[%s8 + $0x30] sm:$0xf]
    %v559 = vld [vmem:[%s8 + $0x34] sm:$0xf]
    %v560 = vld [vmem:[%s8 + $0x38] sm:$0xf]
    %v561 = vld [vmem:[%s8 + $0x3c] sm:$0xf]
    %v562 = vld [vmem:[#allocation16] sm:$0xf]
    %v563 = vld [vmem:[#allocation16 + $0x4] sm:$0xf]
    %v564 = vld [vmem:[#allocation16 + $0x8] sm:$0xf]
    %v565 = vld [vmem:[#allocation16 + $0xc] sm:$0xf]
    %v566 = vld [vmem:[#allocation16 + $0x10] sm:$0xf]
    %v567 = vld [vmem:[#allocation16 + $0x14] sm:$0xf]
    %v568 = vld [vmem:[#allocation16 + $0x18] sm:$0xf]
    %v569 = vld [vmem:[#allocation16 + $0x1c] sm:$0xf]
    %v570 = vld [vmem:[#allocation16 + $0x20] sm:$0xf]
    %v571 = vld [vmem:[#allocation16 + $0x24] sm:$0xf]
    %v572 = vld [vmem:[#allocation16 + $0x28] sm:$0xf]
    %v573 = vld [vmem:[#allocation16 + $0x2c] sm:$0xf]
    %v574 = vld [vmem:[#allocation16 + $0x30] sm:$0xf]
    %v575 = vld [vmem:[#allocation16 + $0x34] sm:$0xf]
    %v576 = vld [vmem:[#allocation16 + $0x38] sm:$0xf]
    %v577 = vld [vmem:[#allocation16 + $0x3c] sm:$0xf]
    %v578 = vld [vmem:[#allocation18] sm:$0x1]
    %v579 = vld [vmem:[#allocation19] sm:$0xf]
    %v580 = vld [vmem:[#allocation19 + $0x4] sm:$0xf]
    %v581 = vld [vmem:[#allocation19 + $0x8] sm:$0xf]
    %v582 = vld [vmem:[#allocation19 + $0xc] sm:$0xf]
    %v583 = vld [vmem:[#allocation19 + $0x10] sm:$0xf]
    %v584 = vld [vmem:[#allocation19 + $0x14] sm:$0xf]
    %v585 = vld [vmem:[#allocation19 + $0x18] sm:$0xf]
    %v586 = vld [vmem:[#allocation19 + $0x1c] sm:$0xf]
    %v587 = vld [vmem:[#allocation19 + $0x20] sm:$0xf]
    %v588 = vld [vmem:[#allocation19 + $0x24] sm:$0xf]
    %v589 = vld [vmem:[#allocation19 + $0x28] sm:$0xf]
    %v590 = vld [vmem:[#allocation19 + $0x2c] sm:$0xf]
    %v591 = vld [vmem:[#allocation19 + $0x30] sm:$0xf]
    %v592 = vld [vmem:[#allocation19 + $0x34] sm:$0xf]
    %v593 = vld [vmem:[#allocation19 + $0x38] sm:$0xf]
    %v594 = vld [vmem:[#allocation19 + $0x3c] sm:$0xf]
    %v595 = vld [vmem:[%s12] sm:$0xf]
    %v596 = vld [vmem:[%s12 + $0x4] sm:$0xf]
    %v597 = vld [vmem:[%s12 + $0x8] sm:$0xf]
    %v598 = vld [vmem:[%s12 + $0xc] sm:$0xf]
    %v599 = vld [vmem:[%s12 + $0x10] sm:$0xf]
    %v600 = vld [vmem:[%s12 + $0x14] sm:$0xf]
    %v601 = vld [vmem:[%s12 + $0x18] sm:$0xf]
    %v602 = vld [vmem:[%s12 + $0x1c] sm:$0xf]
    %v603 = vld [vmem:[%s12 + $0x20] sm:$0xf]
    %v604 = vld [vmem:[%s12 + $0x24] sm:$0xf]
    %v605 = vld [vmem:[%s12 + $0x28] sm:$0xf]
    %v606 = vld [vmem:[%s12 + $0x2c] sm:$0xf]
    %v607 = vld [vmem:[%s12 + $0x30] sm:$0xf]
    %v608 = vld [vmem:[%s12 + $0x34] sm:$0xf]
    %v609 = vld [vmem:[%s12 + $0x38] sm:$0xf]
    %v610 = vld [vmem:[%s12 + $0x3c] sm:$0xf]
    %v611 = vld [vmem:[#allocation21] sm:$0xf]
    %v612 = vld [vmem:[#allocation21 + $0x4] sm:$0xf]
    %v613 = vld [vmem:[#allocation21 + $0x8] sm:$0xf]
    %v614 = vld [vmem:[#allocation21 + $0xc] sm:$0xf]
    %v615 = vld [vmem:[#allocation21 + $0x10] sm:$0xf]
    %v616 = vld [vmem:[#allocation21 + $0x14] sm:$0xf]
    %v617 = vld [vmem:[#allocation21 + $0x18] sm:$0xf]
    %v618 = vld [vmem:[#allocation21 + $0x1c] sm:$0xf]
    %v619 = vld [vmem:[#allocation21 + $0x20] sm:$0xf]
    %v620 = vld [vmem:[#allocation21 + $0x24] sm:$0xf]
    %v621 = vld [vmem:[#allocation21 + $0x28] sm:$0xf]
    %v622 = vld [vmem:[#allocation21 + $0x2c] sm:$0xf]
    %v623 = vld [vmem:[#allocation21 + $0x30] sm:$0xf]
    %v624 = vld [vmem:[#allocation21 + $0x34] sm:$0xf]
    %v625 = vld [vmem:[#allocation21 + $0x38] sm:$0xf]
    %v626 = vld [vmem:[#allocation21 + $0x3c] sm:$0xf]
    %v627 = vld [vmem:[#allocation22] sm:$0x1]
    %v628 = vld [vmem:[%s15] sm:$0xff]
    %v629 = vld [vmem:[%s15 + $0x8] sm:$0xff]
    %v630 = vld [vmem:[%s15 + $0x10] sm:$0xff]
    %v631 = vld [vmem:[%s15 + $0x18] sm:$0xff]
    %v632 = vld [vmem:[%s15 + $0x20] sm:$0xff]
    %v633 = vld [vmem:[%s15 + $0x28] sm:$0xff]
    %v634 = vld [vmem:[%s15 + $0x30] sm:$0xff]
    %v635 = vld [vmem:[%s15 + $0x38] sm:$0xff]
    %v636 = vld [vmem:[%s15 + $0x40] sm:$0xff]
    %v637 = vld [vmem:[%s15 + $0x48] sm:$0xff]
    %v638 = vld [vmem:[%s15 + $0x50] sm:$0xff]
    %v639 = vld [vmem:[%s15 + $0x58] sm:$0xff]
    %v640 = vld [vmem:[%s15 + $0x60] sm:$0xff]
    %v641 = vld [vmem:[%s15 + $0x68] sm:$0xff]
    %v642 = vld [vmem:[%s15 + $0x70] sm:$0xff]
    %v643 = vld [vmem:[%s15 + $0x78] sm:$0xff]
    %v644 = vld [vmem:[%s15 + $0x80] sm:$0xff]
    %v645 = vld [vmem:[%s15 + $0x88] sm:$0xff]
    %v646 = vld [vmem:[%s15 + $0x90] sm:$0xff]
    %v647 = vld [vmem:[%s15 + $0x98] sm:$0xff]
    %v648 = vld [vmem:[%s15 + $0xa0] sm:$0xff]
    %v649 = vld [vmem:[%s15 + $0xa8] sm:$0xff]
    %v650 = vld [vmem:[%s15 + $0xb0] sm:$0xff]
    %v651 = vld [vmem:[%s15 + $0xb8] sm:$0xff]
    %v652 = vld [vmem:[%s15 + $0xc0] sm:$0xff]
    %v653 = vld [vmem:[%s15 + $0xc8] sm:$0xff]
    %v654 = vld [vmem:[%s15 + $0xd0] sm:$0xff]
    %v655 = vld [vmem:[%s15 + $0xd8] sm:$0xff]
    %v656 = vld [vmem:[%s15 + $0xe0] sm:$0xff]
    %v657 = vld [vmem:[%s15 + $0xe8] sm:$0xff]
    %v658 = vld [vmem:[%s15 + $0xf0] sm:$0xff]
    %v659 = vld [vmem:[%s15 + $0xf8] sm:$0xff]
    %v660 = vld [vmem:[%s16] sm:$0xf]
    %v661 = vld [vmem:[%s16 + $0x4] sm:$0xf]
    %v662 = vld [vmem:[%s16 + $0x8] sm:$0xf]
    %v663 = vld [vmem:[%s16 + $0xc] sm:$0xf]
    %v664 = vld [vmem:[%s16 + $0x10] sm:$0xf]
    %v665 = vld [vmem:[%s16 + $0x14] sm:$0xf]
    %v666 = vld [vmem:[%s16 + $0x18] sm:$0xf]
    %v667 = vld [vmem:[%s16 + $0x1c] sm:$0xf]
    %v668 = vld [vmem:[%s16 + $0x20] sm:$0xf]
    %v669 = vld [vmem:[%s16 + $0x24] sm:$0xf]
    %v670 = vld [vmem:[%s16 + $0x28] sm:$0xf]
    %v671 = vld [vmem:[%s16 + $0x2c] sm:$0xf]
    %v672 = vld [vmem:[%s16 + $0x30] sm:$0xf]
    %v673 = vld [vmem:[%s16 + $0x34] sm:$0xf]
    %v674 = vld [vmem:[%s16 + $0x38] sm:$0xf]
    %v675 = vld [vmem:[%s16 + $0x3c] sm:$0xf]
    %v676 = vld [vmem:[%s16 + $0x40] sm:$0xf]
    %v677 = vld [vmem:[%s16 + $0x44] sm:$0xf]
    %v678 = vld [vmem:[%s16 + $0x48] sm:$0xf]
    %v679 = vld [vmem:[%s16 + $0x4c] sm:$0xf]
    %v680 = vld [vmem:[%s16 + $0x50] sm:$0xf]
    %v681 = vld [vmem:[%s16 + $0x54] sm:$0xf]
    %v682 = vld [vmem:[%s16 + $0x58] sm:$0xf]
    %v683 = vld [vmem:[%s16 + $0x5c] sm:$0xf]
    %v684 = vld [vmem:[%s16 + $0x60] sm:$0xf]
    %v685 = vld [vmem:[%s16 + $0x64] sm:$0xf]
    %v686 = vld [vmem:[%s16 + $0x68] sm:$0xf]
    %v687 = vld [vmem:[%s16 + $0x6c] sm:$0xf]
    %v688 = vld [vmem:[%s16 + $0x70] sm:$0xf]
    %v689 = vld [vmem:[%s16 + $0x74] sm:$0xf]
    %v690 = vld [vmem:[%s16 + $0x78] sm:$0xf]
    %v691 = vld [vmem:[%s16 + $0x7c] sm:$0xf]
    %v692 = vmul.f32 %v506, %v506
    %693 = vadd.xlane.f32.xlu0 %v692
    %v694 = vpop.xlane.xlu0 %693
    %v695 = vrcp.pop 128.0
    %v696 = vmul.f32 %v694, %v695
    %v697 = vadd.f32 %v696, 1e-06
    %v698 = vrsqrt.pop %v697
    %v699 = vmul.f32 %v506, %v698
    %v700 = vlaneseq
    %v701 = vshrl.u32 %v700, 7
    %v702 = vsub.s32 0, %v701
    %v703 = vrot.slane %v529, %v702
    %v704 = vmul.f32 %v699, %v703
    %v705 = vpack.c.bf16 %v704, %v704
    %v722 = vunpack.c.l.b16 %v530
    %v723 = vunpack.c.l.b16 %v531
    %v724 = vunpack.c.l.b16 %v532
    %v725 = vunpack.c.l.b16 %v533
    %v726 = vunpack.c.l.b16 %v534
    %v727 = vunpack.c.l.b16 %v535
    %v728 = vunpack.c.l.b16 %v536
    %v729 = vunpack.c.l.b16 %v537
    %v730 = vunpack.c.l.b16 %v538
    %v731 = vunpack.c.l.b16 %v539
    %v732 = vunpack.c.l.b16 %v540
    %v733 = vunpack.c.l.b16 %v541
    %v734 = vunpack.c.l.b16 %v542
    %v735 = vunpack.c.l.b16 %v543
    %v736 = vunpack.c.l.b16 %v544
    %v737 = vunpack.c.l.b16 %v545
    %v738 = vpack.c.b16 %v723, %v722
    %v739 = vpack.c.b16 %v725, %v724
    %v740 = vpack.c.b16 %v727, %v726
    %v741 = vpack.c.b16 %v729, %v728
    %v742 = vpack.c.b16 %v731, %v730
    %v743 = vpack.c.b16 %v733, %v732
    %v744 = vpack.c.b16 %v735, %v734
    %v745 = vpack.c.b16 %v737, %v736
    %754 = vmatprep.subr.bf16.mxu0 0
    %755 = vmatpush1.bf16.msra.mxu0 %v738
    %756 = vmatprep.subr.bf16.mxu0 0
    %757 = vmatpush1.bf16.msra.mxu0 %v739
    %758 = vmatprep.subr.bf16.mxu0 0
    %759 = vmatpush1.bf16.msra.mxu0 %v740
    %760 = vmatprep.subr.bf16.mxu0 0
    %761 = vmatpush1.bf16.msra.mxu0 %v741
    %762 = vmatprep.subr.bf16.mxu0 0
    %763 = vmatpush1.bf16.msra.mxu0 %v742
    %764 = vmatprep.subr.bf16.mxu0 0
    %765 = vmatpush1.bf16.msra.mxu0 %v743
    %766 = vmatprep.subr.bf16.mxu0 0
    %767 = vmatpush1.bf16.msra.mxu0 %v744
    %768 = vmatprep.subr.bf16.mxu0 0
    %769 = vmatpush1.bf16.msra.mxu0 %v745
    %770 = vmatprep.subr.bf16.mxu0 0
    %771 = vmatpush1.bf16.msra.mxu0 0
    %772 = vmatprep.subr.bf16.mxu0 0
    %773 = vmatpush1.bf16.msra.mxu0 0
    %774 = vmatprep.subr.bf16.mxu0 0
    %775 = vmatpush1.bf16.msra.mxu0 0
    %776 = vmatprep.subr.bf16.mxu0 0
    %777 = vmatpush1.bf16.msra.mxu0 0
    %778 = vmatprep.subr.bf16.mxu0 0
    %779 = vmatpush1.bf16.msra.mxu0 0
    %780 = vmatprep.subr.bf16.mxu0 0
    %781 = vmatpush1.bf16.msra.mxu0 0
    %782 = vmatprep.subr.bf16.mxu0 0
    %783 = vmatpush1.bf16.msra.mxu0 0
    %784 = vmatprep.subr.bf16.mxu0 0
    %785 = vmatpush1.bf16.msra.mxu0 0
    %786 = vmatprep.mubr.bf16.mxu0 0
    %787 = vmatmul.mubr.bf16.gmra.mrb[0].mxu0 %v705
    %v788 = vpop.f32.mrb[0].mxu0
    %v789 = vadd.f32 0.0, %v788
    %v790 = vpop.f32.mrb[0].mxu0
    %v791 = vpop.f32.mrb[0].mxu0
    %v792 = vpop.f32.mrb[0].mxu0
    %793 = vdwg.mxu0
    %v810 = vunpack.c.l.b16 %v546
    %v811 = vunpack.c.l.b16 %v547
    %v812 = vunpack.c.l.b16 %v548
    %v813 = vunpack.c.l.b16 %v549
    %v814 = vunpack.c.l.b16 %v550
    %v815 = vunpack.c.l.b16 %v551
    %v816 = vunpack.c.l.b16 %v552
    %v817 = vunpack.c.l.b16 %v553
    %v818 = vunpack.c.l.b16 %v554
    %v819 = vunpack.c.l.b16 %v555
    %v820 = vunpack.c.l.b16 %v556
    %v821 = vunpack.c.l.b16 %v557
    %v822 = vunpack.c.l.b16 %v558
    %v823 = vunpack.c.l.b16 %v559
    %v824 = vunpack.c.l.b16 %v560
    %v825 = vunpack.c.l.b16 %v561
    %v826 = vpack.c.b16 %v811, %v810
    %v827 = vpack.c.b16 %v813, %v812
    %v828 = vpack.c.b16 %v815, %v814
    %v829 = vpack.c.b16 %v817, %v816
    %v830 = vpack.c.b16 %v819, %v818
    %v831 = vpack.c.b16 %v821, %v820
    %v832 = vpack.c.b16 %v823, %v822
    %v833 = vpack.c.b16 %v825, %v824
    %842 = vmatprep.subr.bf16.mxu0 0
    %843 = vmatpush1.bf16.msra.mxu0 %v826
    %844 = vmatprep.subr.bf16.mxu0 0
    %845 = vmatpush1.bf16.msra.mxu0 %v827
    %846 = vmatprep.subr.bf16.mxu0 0
    %847 = vmatpush1.bf16.msra.mxu0 %v828
    %848 = vmatprep.subr.bf16.mxu0 0
    %849 = vmatpush1.bf16.msra.mxu0 %v829
    %850 = vmatprep.subr.bf16.mxu0 0
    %851 = vmatpush1.bf16.msra.mxu0 %v830
    %852 = vmatprep.subr.bf16.mxu0 0
    %853 = vmatpush1.bf16.msra.mxu0 %v831
    %854 = vmatprep.subr.bf16.mxu0 0
    %855 = vmatpush1.bf16.msra.mxu0 %v832
    %856 = vmatprep.subr.bf16.mxu0 0
    %857 = vmatpush1.bf16.msra.mxu0 %v833
    %858 = vmatprep.subr.bf16.mxu0 0
    %859 = vmatpush1.bf16.msra.mxu0 0
    %860 = vmatprep.subr.bf16.mxu0 0
    %861 = vmatpush1.bf16.msra.mxu0 0
    %862 = vmatprep.subr.bf16.mxu0 0
    %863 = vmatpush1.bf16.msra.mxu0 0
    %864 = vmatprep.subr.bf16.mxu0 0
    %865 = vmatpush1.bf16.msra.mxu0 0
    %866 = vmatprep.subr.bf16.mxu0 0
    %867 = vmatpush1.bf16.msra.mxu0 0
    %868 = vmatprep.subr.bf16.mxu0 0
    %869 = vmatpush1.bf16.msra.mxu0 0
    %870 = vmatprep.subr.bf16.mxu0 0
    %871 = vmatpush1.bf16.msra.mxu0 0
    %872 = vmatprep.subr.bf16.mxu0 0
    %873 = vmatpush1.bf16.msra.mxu0 0
    %874 = vmatprep.mubr.bf16.mxu0 0
    %875 = vmatmul.mubr.bf16.gmra.mrb[0].mxu0 %v705
    %v876 = vpop.f32.mrb[0].mxu0
    %v877 = vadd.f32 0.0, %v876
    %v878 = vpop.f32.mrb[0].mxu0
    %v879 = vpop.f32.mrb[0].mxu0
    %v880 = vpop.f32.mrb[0].mxu0
    %881 = vdwg.mxu0
    %v882 = vmul.f32 %v789, %v511
    %883 = vmatprep.subr.mxu0 0.0
    %884 = vmatpush1.msra.mxu0 %v513
    %885 = vmatprep.subr.mxu0 0.0
    %886 = vmatpush1.msra.mxu0 %v514
    %887 = vmatprep.subr.mxu0 0.0
    %888 = vmatpush1.msra.mxu0 %v515
    %889 = vmatprep.subr.mxu0 0.0
    %890 = vmatpush1.msra.mxu0 %v516
    %891 = vmatprep.subr.mxu0 0.0
    %892 = vmatpush1.msra.mxu0 %v517
    %893 = vmatprep.subr.mxu0 0.0
    %894 = vmatpush1.msra.mxu0 %v518
    %895 = vmatprep.subr.mxu0 0.0
    %896 = vmatpush1.msra.mxu0 %v519
    %897 = vmatprep.subr.mxu0 0.0
    %898 = vmatpush1.msra.mxu0 %v520
    %899 = vmatprep.subr.mxu0 0.0
    %900 = vmatpush1.msra.mxu0 %v521
    %901 = vmatprep.subr.mxu0 0.0
    %902 = vmatpush1.msra.mxu0 %v522
    %903 = vmatprep.subr.mxu0 0.0
    %904 = vmatpush1.msra.mxu0 %v523
    %905 = vmatprep.subr.mxu0 0.0
    %906 = vmatpush1.msra.mxu0 %v524
    %907 = vmatprep.subr.mxu0 0.0
    %908 = vmatpush1.msra.mxu0 %v525
    %909 = vmatprep.subr.mxu0 0.0
    %910 = vmatpush1.msra.mxu0 %v526
    %911 = vmatprep.subr.mxu0 0.0
    %912 = vmatpush1.msra.mxu0 %v527
    %913 = vmatprep.subr.mxu0 0.0
    %914 = vmatpush1.msra.mxu0 %v528
    %915 = vmatprep.subr.mxu0 0.0
    %916 = vmatpush1.msra.mxu0 0.0
    %917 = vmatprep.subr.mxu0 0.0
    %918 = vmatpush1.msra.mxu0 0.0
    %919 = vmatprep.subr.mxu0 0.0
    %920 = vmatpush1.msra.mxu0 0.0
    %921 = vmatprep.subr.mxu0 0.0
    %922 = vmatpush1.msra.mxu0 0.0
    %923 = vmatprep.subr.mxu0 0.0
    %924 = vmatpush1.msra.mxu0 0.0
    %925 = vmatprep.subr.mxu0 0.0
    %926 = vmatpush1.msra.mxu0 0.0
    %927 = vmatprep.subr.mxu0 0.0
    %928 = vmatpush1.msra.mxu0 0.0
    %929 = vmatprep.subr.mxu0 0.0
    %930 = vmatpush1.msra.mxu0 0.0
    %931 = vmatprep.subr.mxu0 0.0
    %932 = vmatpush1.msra.mxu0 0.0
    %933 = vmatprep.subr.mxu0 0.0
    %934 = vmatpush1.msra.mxu0 0.0
    %935 = vmatprep.subr.mxu0 0.0
    %936 = vmatpush1.msra.mxu0 0.0
    %937 = vmatprep.subr.mxu0 0.0
    %938 = vmatpush1.msra.mxu0 0.0
    %939 = vmatprep.subr.mxu0 0.0
    %940 = vmatpush1.msra.mxu0 0.0
    %941 = vmatprep.subr.mxu0 0.0
    %942 = vmatpush1.msra.mxu0 0.0
    %943 = vmatprep.subr.mxu0 0.0
    %944 = vmatpush1.msra.mxu0 0.0
    %945 = vmatprep.subr.mxu0 0.0
    %946 = vmatpush1.msra.mxu0 0.0
    %947 = vmatprep.mubr.f32.mxu0 0.0
    %948 = vmatmul.mubr.f32.gmra.mrb[0].mxu0 %v789
    %v949 = vpop.f32.mrb[0].mxu0
    %v950 = vadd.f32 0.0, %v949
    %v951 = vpop.f32.mrb[0].mxu0
    %952 = vdwg.mxu0
    %v953 = vmul.f32 %v950, %v512
    %v954 = vadd.f32 %v882, %v953
    %v955 = vmul.f32 %v877, %v511
    %vm956 = vcmask 261120
    %v958 = vsel %vm956, %v877, 0
    %960 = vmatprep.subr.mxu0 0.0
    %961 = vmatpush1.msra.mxu0 %v513
    %962 = vmatprep.subr.mxu0 0.0
    %963 = vmatpush1.msra.mxu0 %v514
    %964 = vmatprep.subr.mxu0 0.0
    %965 = vmatpush1.msra.mxu0 %v515
    %966 = vmatprep.subr.mxu0 0.0
    %967 = vmatpush1.msra.mxu0 %v516
    %968 = vmatprep.subr.mxu0 0.0
    %969 = vmatpush1.msra.mxu0 0.0
    %970 = vmatprep.subr.mxu0 0.0
    %971 = vmatpush1.msra.mxu0 0.0
    %972 = vmatprep.subr.mxu0 0.0
    %973 = vmatpush1.msra.mxu0 0.0
    %974 = vmatprep.subr.mxu0 0.0
    %975 = vmatpush1.msra.mxu0 0.0
    %976 = vmatprep.subr.mxu0 0.0
    %977 = vmatpush1.msra.mxu0 0.0
    %978 = vmatprep.subr.mxu0 0.0
    %979 = vmatpush1.msra.mxu0 0.0
    %980 = vmatprep.subr.mxu0 0.0
    %981 = vmatpush1.msra.mxu0 0.0
    %982 = vmatprep.subr.mxu0 0.0
    %983 = vmatpush1.msra.mxu0 0.0
    %984 = vmatprep.subr.mxu0 0.0
    %985 = vmatpush1.msra.mxu0 0.0
    %986 = vmatprep.subr.mxu0 0.0
    %987 = vmatpush1.msra.mxu0 0.0
    %988 = vmatprep.subr.mxu0 0.0
    %989 = vmatpush1.msra.mxu0 0.0
    %990 = vmatprep.subr.mxu0 0.0
    %991 = vmatpush1.msra.mxu0 0.0
    %992 = vmatprep.subr.mxu0 0.0
    %993 = vmatpush1.msra.mxu0 0.0
    %994 = vmatprep.subr.mxu0 0.0
    %995 = vmatpush1.msra.mxu0 0.0
    %996 = vmatprep.subr.mxu0 0.0
    %997 = vmatpush1.msra.mxu0 0.0
    %998 = vmatprep.subr.mxu0 0.0
    %999 = vmatpush1.msra.mxu0 0.0
    %1000 = vmatprep.subr.mxu0 0.0
    %1001 = vmatpush1.msra.mxu0 0.0
    %1002 = vmatprep.subr.mxu0 0.0
    %1003 = vmatpush1.msra.mxu0 0.0
    %1004 = vmatprep.subr.mxu0 0.0
    %1005 = vmatpush1.msra.mxu0 0.0
    %1006 = vmatprep.subr.mxu0 0.0
    %1007 = vmatpush1.msra.mxu0 0.0
    %1008 = vmatprep.subr.mxu0 0.0
    %1009 = vmatpush1.msra.mxu0 0.0
    %1010 = vmatprep.subr.mxu0 0.0
    %1011 = vmatpush1.msra.mxu0 0.0
    %1012 = vmatprep.subr.mxu0 0.0
    %1013 = vmatpush1.msra.mxu0 0.0
    %1014 = vmatprep.subr.mxu0 0.0
    %1015 = vmatpush1.msra.mxu0 0.0
    %1016 = vmatprep.subr.mxu0 0.0
    %1017 = vmatpush1.msra.mxu0 0.0
    %1018 = vmatprep.subr.mxu0 0.0
    %1019 = vmatpush1.msra.mxu0 0.0
    %1020 = vmatprep.subr.mxu0 0.0
    %1021 = vmatpush1.msra.mxu0 0.0
    %1022 = vmatprep.subr.mxu0 0.0
    %1023 = vmatpush1.msra.mxu0 0.0
    %1024 = vmatprep.mubr.f32.mxu0 0.0
    %1025 = vmatmul.mubr.f32.gmra.mrb[0].mxu0 %v958
    %v1026 = vpop.f32.mrb[0].mxu0
    %v1027 = vadd.f32 0.0, %v1026
    %v1028 = vpop.f32.mrb[0].mxu0
    %1029 = vdwg.mxu0
    %v1030 = vmul.f32 %v1027, %v512
    %v1031 = vadd.f32 %v955, %v1030
    %1033 = vrot.lane.b32.xlu0 %v954, 96
    %v1034 = vpop.permute.xlu0 %1033
    %1035 = vrot.lane.b32.xlu0 %v954, 64
    %v1036 = vpop.permute.xlu0 %1035
    %1037 = vrot.lane.b32.xlu0 %v954, 32
    %v1038 = vpop.permute.xlu0 %1037
    %v1039 = vsel %vm956, %v954, 0
    %v1041 = vsel %vm956, %v1034, 0
    %v1043 = vsel %vm956, %v1036, 0
    %v1045 = vsel %vm956, %v1038, 0
    %v1048 = vsel %vm956, %v1031, 0
    %1050 = vmatprep.subr.mxu0 0.0
    %1051 = vmatpush1.xpose.msra.mxu0 %v1048
    %1052 = vmatprep.subr.mxu0 0.0
    %1053 = vmatpush1.xpose.msra.mxu0 0.0
    %1054 = vmatprep.subr.mxu0 0.0
    %1055 = vmatpush1.xpose.msra.mxu0 0.0
    %1056 = vmatprep.subr.mxu0 0.0
    %1057 = vmatpush1.xpose.msra.mxu0 0.0
    %1058 = vmatprep.subr.mxu0 0.0
    %1059 = vmatpush1.xpose.msra.mxu0 0.0
    %1060 = vmatprep.subr.mxu0 0.0
    %1061 = vmatpush1.xpose.msra.mxu0 0.0
    %1062 = vmatprep.subr.mxu0 0.0
    %1063 = vmatpush1.xpose.msra.mxu0 0.0
    %1064 = vmatprep.subr.mxu0 0.0
    %1065 = vmatpush1.xpose.msra.mxu0 0.0
    %1066 = vmatprep.subr.mxu0 0.0
    %1067 = vmatpush1.xpose.msra.mxu0 0.0
    %1068 = vmatprep.subr.mxu0 0.0
    %1069 = vmatpush1.xpose.msra.mxu0 0.0
    %1070 = vmatprep.subr.mxu0 0.0
    %1071 = vmatpush1.xpose.msra.mxu0 0.0
    %1072 = vmatprep.subr.mxu0 0.0
    %1073 = vmatpush1.xpose.msra.mxu0 0.0
    %1074 = vmatprep.subr.mxu0 0.0
    %1075 = vmatpush1.xpose.msra.mxu0 0.0
    %1076 = vmatprep.subr.mxu0 0.0
    %1077 = vmatpush1.xpose.msra.mxu0 0.0
    %1078 = vmatprep.subr.mxu0 0.0
    %1079 = vmatpush1.xpose.msra.mxu0 0.0
    %1080 = vmatprep.subr.mxu0 0.0
    %1081 = vmatpush1.xpose.msra.mxu0 0.0
    %1082 = vmatprep.subr.mxu0 0.0
    %1083 = vmatpush1.xpose.msra.mxu0 0.0
    %1084 = vmatprep.subr.mxu0 0.0
    %1085 = vmatpush1.xpose.msra.mxu0 0.0
    %1086 = vmatprep.subr.mxu0 0.0
    %1087 = vmatpush1.xpose.msra.mxu0 0.0
    %1088 = vmatprep.subr.mxu0 0.0
    %1089 = vmatpush1.xpose.msra.mxu0 0.0
    %1090 = vmatprep.subr.mxu0 0.0
    %1091 = vmatpush1.xpose.msra.mxu0 0.0
    %1092 = vmatprep.subr.mxu0 0.0
    %1093 = vmatpush1.xpose.msra.mxu0 0.0
    %1094 = vmatprep.subr.mxu0 0.0
    %1095 = vmatpush1.xpose.msra.mxu0 0.0
    %1096 = vmatprep.subr.mxu0 0.0
    %1097 = vmatpush1.xpose.msra.mxu0 0.0
    %1098 = vmatprep.subr.mxu0 0.0
    %1099 = vmatpush1.xpose.msra.mxu0 0.0
    %1100 = vmatprep.subr.mxu0 0.0
    %1101 = vmatpush1.xpose.msra.mxu0 0.0
    %1102 = vmatprep.subr.mxu0 0.0
    %1103 = vmatpush1.xpose.msra.mxu0 0.0
    %1104 = vmatprep.subr.mxu0 0.0
    %1105 = vmatpush1.xpose.msra.mxu0 0.0
    %1106 = vmatprep.subr.mxu0 0.0
    %1107 = vmatpush1.xpose.msra.mxu0 0.0
    %1108 = vmatprep.subr.mxu0 0.0
    %1109 = vmatpush1.xpose.msra.mxu0 0.0
    %1110 = vmatprep.subr.mxu0 0.0
    %1111 = vmatpush1.xpose.msra.mxu0 0.0
    %1112 = vmatprep.subr.mxu0 0.0
    %1113 = vmatpush1.xpose.msra.mxu0 0.0
    %1114 = vmatprep.mubr.f32.mxu0 0.0
    %1115 = vmatmul.mubr.f32.gmra.mrb[0].mxu0 %v1039
    %v1116 = vpop.f32.mrb[0].mxu0
    %v1117 = vadd.f32 0.0, %v1116
    %v1118 = vpop.f32.mrb[0].mxu0
    %1119 = vmatprep.mubr.f32.mxu0 0.0
    %1120 = vmatmul.mubr.f32.gmra.mrb[0].mxu0 %v1041
    %v1121 = vpop.f32.mrb[0].mxu0
    %v1122 = vadd.f32 0.0, %v1121
    %v1123 = vpop.f32.mrb[0].mxu0
    %1124 = vmatprep.mubr.f32.mxu0 0.0
    %1125 = vmatmul.mubr.f32.gmra.mrb[0].mxu0 %v1043
    %v1126 = vpop.f32.mrb[0].mxu0
    %v1127 = vadd.f32 0.0, %v1126
    %v1128 = vpop.f32.mrb[0].mxu0
    %1129 = vmatprep.mubr.f32.mxu0 0.0
    %1130 = vmatmul.mubr.f32.gmra.mrb[0].mxu0 %v1045
    %v1131 = vpop.f32.mrb[0].mxu0
    %v1132 = vadd.f32 0.0, %v1131
    %v1133 = vpop.f32.mrb[0].mxu0
    %1134 = vdwg.mxu0
    %v1135 = vmul.f32 %v1117, 0.17677669
    %v1136 = vmul.f32 %v1122, 0.17677669
    %v1137 = vmul.f32 %v1127, 0.17677669
    %v1138 = vmul.f32 %v1132, 0.17677669
    %v1139 = vlaneseq
    %v1140 = vshrl.u32 %v1139, 7
    %vm1141 = vcmp.le.s32.totalorder %v401, %v1140
    %v1142 = vsel %vm1141, %v1135, -1e+30
    %v1143 = vsel %vm1141, %v1136, -1e+30
    %v1144 = vsel %vm1141, %v1137, -1e+30
    %v1145 = vsel %vm1141, %v1138, -1e+30
    %vm1146 = vcmask 64512
    %v1147 = vsel %vm1146, %v1142, -inf
    %1148 = vmax.xlane.f32.xlu0 %v1147
    %v1149 = vpop.xlane.xlu0 %1148
    %v1150 = vsel %vm1146, %v1143, -inf
    %1151 = vmax.xlane.f32.xlu0 %v1150
    %v1152 = vpop.xlane.xlu0 %1151
    %v1153 = vsel %vm1146, %v1144, -inf
    %1154 = vmax.xlane.f32.xlu0 %v1153
    %v1155 = vpop.xlane.xlu0 %1154
    %v1156 = vsel %vm1146, %v1145, -inf
    %1157 = vmax.xlane.f32.xlu0 %v1156
    %v1158 = vpop.xlane.xlu0 %1157
    %v1159 = vsub.f32 %v1142, %v1149
    %v1160 = vsub.f32 %v1143, %v1152
    %v1161 = vsub.f32 %v1144, %v1155
    %v1162 = vsub.f32 %v1145, %v1158
    %v1163 = vmul.f32 %v1159, 1.442695
    %v1164 = vpow.pop %v1163
    %v1165 = vmul.f32 %v1160, 1.442695
    %v1166 = vpow.pop %v1165
    %v1167 = vmul.f32 %v1161, 1.442695
    %v1168 = vpow.pop %v1167
    %v1169 = vmul.f32 %v1162, 1.442695
    %v1170 = vpow.pop %v1169
    %v1171 = vsel %vm1146, %v1164, 0.0
    %1172 = vadd.xlane.f32.xlu0 %v1171
    %v1173 = vpop.xlane.xlu0 %1172
    %v1174 = vsel %vm1146, %v1166, 0.0
    %1175 = vadd.xlane.f32.xlu0 %v1174
    %v1176 = vpop.xlane.xlu0 %1175
    %v1177 = vsel %vm1146, %v1168, 0.0
    %1178 = vadd.xlane.f32.xlu0 %v1177
    %v1179 = vpop.xlane.xlu0 %1178
    %v1180 = vsel %vm1146, %v1170, 0.0
    %1181 = vadd.xlane.f32.xlu0 %v1180
    %v1182 = vpop.xlane.xlu0 %1181
    %v1183 = vrcp.pop %v1173
    %v1184 = vrcp.pop %v1176
    %v1185 = vrcp.pop %v1179
    %v1186 = vrcp.pop %v1182
    %v1187 = vmul.f32 %v1164, %v1183
    %v1188 = vmul.f32 %v1166, %v1184
    %v1189 = vmul.f32 %v1168, %v1185
    %v1190 = vmul.f32 %v1170, %v1186
    %1191 = vrot.lane.b32.xlu0 %v877, 96
    %v1192 = vpop.permute.xlu0 %1191
    %v1195 = vsel %vm1146, %v1187, 0
    %v1198 = vsel %vm1146, %v1188, 0
    %v1201 = vsel %vm1146, %v1189, 0
    %v1204 = vsel %vm1146, %v1190, 0
    %1206 = vmatprep.subr.mxu0 0.0
    %1207 = vmatpush1.msra.mxu0 %v1192
    %1208 = vmatprep.subr.mxu0 0.0
    %1209 = vmatpush1.msra.mxu0 0.0
    %1210 = vmatprep.subr.mxu0 0.0
    %1211 = vmatpush1.msra.mxu0 0.0
    %1212 = vmatprep.subr.mxu0 0.0
    %1213 = vmatpush1.msra.mxu0 0.0
    %1214 = vmatprep.subr.mxu0 0.0
    %1215 = vmatpush1.msra.mxu0 0.0
    %1216 = vmatprep.subr.mxu0 0.0
    %1217 = vmatpush1.msra.mxu0 0.0
    %1218 = vmatprep.subr.mxu0 0.0
    %1219 = vmatpush1.msra.mxu0 0.0
    %1220 = vmatprep.subr.mxu0 0.0
    %1221 = vmatpush1.msra.mxu0 0.0
    %1222 = vmatprep.subr.mxu0 0.0
    %1223 = vmatpush1.msra.mxu0 0.0
    %1224 = vmatprep.subr.mxu0 0.0
    %1225 = vmatpush1.msra.mxu0 0.0
    %1226 = vmatprep.subr.mxu0 0.0
    %1227 = vmatpush1.msra.mxu0 0.0
    %1228 = vmatprep.subr.mxu0 0.0
    %1229 = vmatpush1.msra.mxu0 0.0
    %1230 = vmatprep.subr.mxu0 0.0
    %1231 = vmatpush1.msra.mxu0 0.0
    %1232 = vmatprep.subr.mxu0 0.0
    %1233 = vmatpush1.msra.mxu0 0.0
    %1234 = vmatprep.subr.mxu0 0.0
    %1235 = vmatpush1.msra.mxu0 0.0
    %1236 = vmatprep.subr.mxu0 0.0
    %1237 = vmatpush1.msra.mxu0 0.0
    %1238 = vmatprep.subr.mxu0 0.0
    %1239 = vmatpush1.msra.mxu0 0.0
    %1240 = vmatprep.subr.mxu0 0.0
    %1241 = vmatpush1.msra.mxu0 0.0
    %1242 = vmatprep.subr.mxu0 0.0
    %1243 = vmatpush1.msra.mxu0 0.0
    %1244 = vmatprep.subr.mxu0 0.0
    %1245 = vmatpush1.msra.mxu0 0.0
    %1246 = vmatprep.subr.mxu0 0.0
    %1247 = vmatpush1.msra.mxu0 0.0
    %1248 = vmatprep.subr.mxu0 0.0
    %1249 = vmatpush1.msra.mxu0 0.0
    %1250 = vmatprep.subr.mxu0 0.0
    %1251 = vmatpush1.msra.mxu0 0.0
    %1252 = vmatprep.subr.mxu0 0.0
    %1253 = vmatpush1.msra.mxu0 0.0
    %1254 = vmatprep.subr.mxu0 0.0
    %1255 = vmatpush1.msra.mxu0 0.0
    %1256 = vmatprep.subr.mxu0 0.0
    %1257 = vmatpush1.msra.mxu0 0.0
    %1258 = vmatprep.subr.mxu0 0.0
    %1259 = vmatpush1.msra.mxu0 0.0
    %1260 = vmatprep.subr.mxu0 0.0
    %1261 = vmatpush1.msra.mxu0 0.0
    %1262 = vmatprep.subr.mxu0 0.0
    %1263 = vmatpush1.msra.mxu0 0.0
    %1264 = vmatprep.subr.mxu0 0.0
    %1265 = vmatpush1.msra.mxu0 0.0
    %1266 = vmatprep.subr.mxu0 0.0
    %1267 = vmatpush1.msra.mxu0 0.0
    %1268 = vmatprep.subr.mxu0 0.0
    %1269 = vmatpush1.msra.mxu0 0.0
    %1270 = vmatprep.mubr.f32.mxu0 0.0
    %1271 = vmatmul.mubr.f32.gmra.mrb[0].mxu0 %v1195
    %v1272 = vpop.f32.mrb[0].mxu0
    %v1273 = vadd.f32 0.0, %v1272
    %v1274 = vpop.f32.mrb[0].mxu0
    %1275 = vmatprep.mubr.f32.mxu0 0.0
    %1276 = vmatmul.mubr.f32.gmra.mrb[0].mxu0 %v1198
    %v1277 = vpop.f32.mrb[0].mxu0
    %v1278 = vadd.f32 0.0, %v1277
    %v1279 = vpop.f32.mrb[0].mxu0
    %1280 = vmatprep.mubr.f32.mxu0 0.0
    %1281 = vmatmul.mubr.f32.gmra.mrb[0].mxu0 %v1201
    %v1282 = vpop.f32.mrb[0].mxu0
    %v1283 = vadd.f32 0.0, %v1282
    %v1284 = vpop.f32.mrb[0].mxu0
    %1285 = vmatprep.mubr.f32.mxu0 0.0
    %1286 = vmatmul.mubr.f32.gmra.mrb[0].mxu0 %v1204
    %v1287 = vpop.f32.mrb[0].mxu0
    %v1288 = vadd.f32 0.0, %v1287
    %v1289 = vpop.f32.mrb[0].mxu0
    %1290 = vdwg.mxu0
    %1292 = vrot.lane.b32.xlu0 %v1278, 32
    %v1293 = vpop.permute.xlu0 %1292
    %1296 = vrot.lane.b32.xlu0 %v1283, 64
    %v1297 = vpop.permute.xlu0 %1296
    %1300 = vrot.lane.b32.xlu0 %v1288, 96
    %v1301 = vpop.permute.xlu0 %1300
    %v1303 = vsel %vm956, %v1273, %v1293
    %vm1304 = vcmask 523264
    %v1305 = vsel %vm1304, %v1303, %v1297
    %vm1306 = vcmask 785408
    %v1307 = vsel %vm1306, %v1305, %v1301
    %v1308 = vpack.c.bf16 %v1307, %v1307
    %v1325 = vunpack.c.l.b16 %v562
    %v1326 = vunpack.c.l.b16 %v563
    %v1327 = vunpack.c.l.b16 %v564
    %v1328 = vunpack.c.l.b16 %v565
    %v1329 = vunpack.c.l.b16 %v566
    %v1330 = vunpack.c.l.b16 %v567
    %v1331 = vunpack.c.l.b16 %v568
    %v1332 = vunpack.c.l.b16 %v569
    %v1333 = vunpack.c.l.b16 %v570
    %v1334 = vunpack.c.l.b16 %v571
    %v1335 = vunpack.c.l.b16 %v572
    %v1336 = vunpack.c.l.b16 %v573
    %v1337 = vunpack.c.l.b16 %v574
    %v1338 = vunpack.c.l.b16 %v575
    %v1339 = vunpack.c.l.b16 %v576
    %v1340 = vunpack.c.l.b16 %v577
    %v1341 = vpack.c.b16 %v1326, %v1325
    %v1342 = vpack.c.b16 %v1328, %v1327
    %v1343 = vpack.c.b16 %v1330, %v1329
    %v1344 = vpack.c.b16 %v1332, %v1331
    %v1345 = vpack.c.b16 %v1334, %v1333
    %v1346 = vpack.c.b16 %v1336, %v1335
    %v1347 = vpack.c.b16 %v1338, %v1337
    %v1348 = vpack.c.b16 %v1340, %v1339
    %1357 = vmatprep.subr.bf16.mxu0 0
    %1358 = vmatpush1.bf16.msra.mxu0 %v1341
    %1359 = vmatprep.subr.bf16.mxu0 0
    %1360 = vmatpush1.bf16.msra.mxu0 %v1342
    %1361 = vmatprep.subr.bf16.mxu0 0
    %1362 = vmatpush1.bf16.msra.mxu0 %v1343
    %1363 = vmatprep.subr.bf16.mxu0 0
    %1364 = vmatpush1.bf16.msra.mxu0 %v1344
    %1365 = vmatprep.subr.bf16.mxu0 0
    %1366 = vmatpush1.bf16.msra.mxu0 %v1345
    %1367 = vmatprep.subr.bf16.mxu0 0
    %1368 = vmatpush1.bf16.msra.mxu0 %v1346
    %1369 = vmatprep.subr.bf16.mxu0 0
    %1370 = vmatpush1.bf16.msra.mxu0 %v1347
    %1371 = vmatprep.subr.bf16.mxu0 0
    %1372 = vmatpush1.bf16.msra.mxu0 %v1348
    %1373 = vmatprep.subr.bf16.mxu0 0
    %1374 = vmatpush1.bf16.msra.mxu0 0
    %1375 = vmatprep.subr.bf16.mxu0 0
    %1376 = vmatpush1.bf16.msra.mxu0 0
    %1377 = vmatprep.subr.bf16.mxu0 0
    %1378 = vmatpush1.bf16.msra.mxu0 0
    %1379 = vmatprep.subr.bf16.mxu0 0
    %1380 = vmatpush1.bf16.msra.mxu0 0
    %1381 = vmatprep.subr.bf16.mxu0 0
    %1382 = vmatpush1.bf16.msra.mxu0 0
    %1383 = vmatprep.subr.bf16.mxu0 0
    %1384 = vmatpush1.bf16.msra.mxu0 0
    %1385 = vmatprep.subr.bf16.mxu0 0
    %1386 = vmatpush1.bf16.msra.mxu0 0
    %1387 = vmatprep.subr.bf16.mxu0 0
    %1388 = vmatpush1.bf16.msra.mxu0 0
    %1389 = vmatprep.mubr.bf16.mxu0 0
    %1390 = vmatmul.mubr.bf16.gmra.mrb[0].mxu0 %v1308
    %v1391 = vpop.f32.mrb[0].mxu0
    %v1392 = vadd.f32 0.0, %v1391
    %v1393 = vpop.f32.mrb[0].mxu0
    %v1394 = vpop.f32.mrb[0].mxu0
    %v1395 = vpop.f32.mrb[0].mxu0
    %1396 = vdwg.mxu0
    %v1397 = vadd.f32 %v506, %v1392
    %v1398 = vmul.f32 %v1397, %v1397
    %1399 = vadd.xlane.f32.xlu0 %v1398
    %v1400 = vpop.xlane.xlu0 %1399
    %v1401 = vmul.f32 %v1400, %v695
    %v1402 = vadd.f32 %v1401, 1e-06
    %v1403 = vrsqrt.pop %v1402
    %v1404 = vmul.f32 %v1397, %v1403
    %v1405 = vlaneseq
    %v1406 = vshrl.u32 %v1405, 7
    %v1407 = vsub.s32 0, %v1406
    %v1408 = vrot.slane %v578, %v1407
    %v1409 = vmul.f32 %v1404, %v1408
    %v1410 = vpack.c.bf16 %v1409, %v1409
    %v1427 = vunpack.c.l.b16 %v579
    %v1428 = vunpack.c.l.b16 %v580
    %v1429 = vunpack.c.l.b16 %v581
    %v1430 = vunpack.c.l.b16 %v582
    %v1431 = vunpack.c.l.b16 %v583
    %v1432 = vunpack.c.l.b16 %v584
    %v1433 = vunpack.c.l.b16 %v585
    %v1434 = vunpack.c.l.b16 %v586
    %v1435 = vunpack.c.l.b16 %v587
    %v1436 = vunpack.c.l.b16 %v588
    %v1437 = vunpack.c.l.b16 %v589
    %v1438 = vunpack.c.l.b16 %v590
    %v1439 = vunpack.c.l.b16 %v591
    %v1440 = vunpack.c.l.b16 %v592
    %v1441 = vunpack.c.l.b16 %v593
    %v1442 = vunpack.c.l.b16 %v594
    %v1443 = vpack.c.b16 %v1428, %v1427
    %v1444 = vpack.c.b16 %v1430, %v1429
    %v1445 = vpack.c.b16 %v1432, %v1431
    %v1446 = vpack.c.b16 %v1434, %v1433
    %v1447 = vpack.c.b16 %v1436, %v1435
    %v1448 = vpack.c.b16 %v1438, %v1437
    %v1449 = vpack.c.b16 %v1440, %v1439
    %v1450 = vpack.c.b16 %v1442, %v1441
    %1459 = vmatprep.subr.bf16.mxu0 0
    %1460 = vmatpush1.bf16.msra.mxu0 %v1443
    %1461 = vmatprep.subr.bf16.mxu0 0
    %1462 = vmatpush1.bf16.msra.mxu0 %v1444
    %1463 = vmatprep.subr.bf16.mxu0 0
    %1464 = vmatpush1.bf16.msra.mxu0 %v1445
    %1465 = vmatprep.subr.bf16.mxu0 0
    %1466 = vmatpush1.bf16.msra.mxu0 %v1446
    %1467 = vmatprep.subr.bf16.mxu0 0
    %1468 = vmatpush1.bf16.msra.mxu0 %v1447
    %1469 = vmatprep.subr.bf16.mxu0 0
    %1470 = vmatpush1.bf16.msra.mxu0 %v1448
    %1471 = vmatprep.subr.bf16.mxu0 0
    %1472 = vmatpush1.bf16.msra.mxu0 %v1449
    %1473 = vmatprep.subr.bf16.mxu0 0
    %1474 = vmatpush1.bf16.msra.mxu0 %v1450
    %1475 = vmatprep.subr.bf16.mxu0 0
    %1476 = vmatpush1.bf16.msra.mxu0 0
    %1477 = vmatprep.subr.bf16.mxu0 0
    %1478 = vmatpush1.bf16.msra.mxu0 0
    %1479 = vmatprep.subr.bf16.mxu0 0
    %1480 = vmatpush1.bf16.msra.mxu0 0
    %1481 = vmatprep.subr.bf16.mxu0 0
    %1482 = vmatpush1.bf16.msra.mxu0 0
    %1483 = vmatprep.subr.bf16.mxu0 0
    %1484 = vmatpush1.bf16.msra.mxu0 0
    %1485 = vmatprep.subr.bf16.mxu0 0
    %1486 = vmatpush1.bf16.msra.mxu0 0
    %1487 = vmatprep.subr.bf16.mxu0 0
    %1488 = vmatpush1.bf16.msra.mxu0 0
    %1489 = vmatprep.subr.bf16.mxu0 0
    %1490 = vmatpush1.bf16.msra.mxu0 0
    %1491 = vmatprep.mubr.bf16.mxu0 0
    %1492 = vmatmul.mubr.bf16.gmra.mrb[0].mxu0 %v1410
    %v1493 = vpop.f32.mrb[0].mxu0
    %v1494 = vadd.f32 0.0, %v1493
    %v1495 = vpop.f32.mrb[0].mxu0
    %v1496 = vpop.f32.mrb[0].mxu0
    %v1497 = vpop.f32.mrb[0].mxu0
    %1498 = vdwg.mxu0
    %v1499 = vpack.c.bf16 %v510, %v509
    %v1516 = vunpack.c.l.b16 %v595
    %v1517 = vunpack.c.l.b16 %v596
    %v1518 = vunpack.c.l.b16 %v597
    %v1519 = vunpack.c.l.b16 %v598
    %v1520 = vunpack.c.l.b16 %v599
    %v1521 = vunpack.c.l.b16 %v600
    %v1522 = vunpack.c.l.b16 %v601
    %v1523 = vunpack.c.l.b16 %v602
    %v1524 = vunpack.c.l.b16 %v603
    %v1525 = vunpack.c.l.b16 %v604
    %v1526 = vunpack.c.l.b16 %v605
    %v1527 = vunpack.c.l.b16 %v606
    %v1528 = vunpack.c.l.b16 %v607
    %v1529 = vunpack.c.l.b16 %v608
    %v1530 = vunpack.c.l.b16 %v609
    %v1531 = vunpack.c.l.b16 %v610
    %v1532 = vpack.c.b16 %v1517, %v1516
    %v1533 = vpack.c.b16 %v1519, %v1518
    %v1534 = vpack.c.b16 %v1521, %v1520
    %v1535 = vpack.c.b16 %v1523, %v1522
    %v1536 = vpack.c.b16 %v1525, %v1524
    %v1537 = vpack.c.b16 %v1527, %v1526
    %v1538 = vpack.c.b16 %v1529, %v1528
    %v1539 = vpack.c.b16 %v1531, %v1530
    %1548 = vmatprep.subr.bf16.mxu0 0
    %1549 = vmatpush1.bf16.msra.mxu0 %v1532
    %1550 = vmatprep.subr.bf16.mxu0 0
    %1551 = vmatpush1.bf16.msra.mxu0 %v1533
    %1552 = vmatprep.subr.bf16.mxu0 0
    %1553 = vmatpush1.bf16.msra.mxu0 %v1534
    %1554 = vmatprep.subr.bf16.mxu0 0
    %1555 = vmatpush1.bf16.msra.mxu0 %v1535
    %1556 = vmatprep.subr.bf16.mxu0 0
    %1557 = vmatpush1.bf16.msra.mxu0 %v1536
    %1558 = vmatprep.subr.bf16.mxu0 0
    %1559 = vmatpush1.bf16.msra.mxu0 %v1537
    %1560 = vmatprep.subr.bf16.mxu0 0
    %1561 = vmatpush1.bf16.msra.mxu0 %v1538
    %1562 = vmatprep.subr.bf16.mxu0 0
    %1563 = vmatpush1.bf16.msra.mxu0 %v1539
    %1564 = vmatprep.subr.bf16.mxu0 0
    %1565 = vmatpush1.bf16.msra.mxu0 0
    %1566 = vmatprep.subr.bf16.mxu0 0
    %1567 = vmatpush1.bf16.msra.mxu0 0
    %1568 = vmatprep.subr.bf16.mxu0 0
    %1569 = vmatpush1.bf16.msra.mxu0 0
    %1570 = vmatprep.subr.bf16.mxu0 0
    %1571 = vmatpush1.bf16.msra.mxu0 0
    %1572 = vmatprep.subr.bf16.mxu0 0
    %1573 = vmatpush1.bf16.msra.mxu0 0
    %1574 = vmatprep.subr.bf16.mxu0 0
    %1575 = vmatpush1.bf16.msra.mxu0 0
    %1576 = vmatprep.subr.bf16.mxu0 0
    %1577 = vmatpush1.bf16.msra.mxu0 0
    %1578 = vmatprep.subr.bf16.mxu0 0
    %1579 = vmatpush1.bf16.msra.mxu0 0
    %1580 = vmatprep.mubr.bf16.mxu0 0
    %1581 = vmatmul.mubr.bf16.gmra.mrb[0].mxu0 %v1499
    %v1582 = vpop.f32.mrb[0].mxu0
    %v1583 = vadd.f32 0.0, %v1582
    %v1584 = vpop.f32.mrb[0].mxu0
    %v1585 = vpop.f32.mrb[0].mxu0
    %v1586 = vadd.f32 0.0, %v1585
    %v1587 = vpop.f32.mrb[0].mxu0
    %1588 = vdwg.mxu0
    %1590 = vrot.lane.b32.xlu0 %v1494, 96
    %v1591 = vpop.permute.xlu0 %1590
    %1592 = vrot.lane.b32.xlu0 %v1494, 64
    %v1593 = vpop.permute.xlu0 %1592
    %1594 = vrot.lane.b32.xlu0 %v1494, 32
    %v1595 = vpop.permute.xlu0 %1594
    %v1596 = vsel %vm956, %v1494, 0
    %v1598 = vsel %vm956, %v1591, 0
    %v1600 = vsel %vm956, %v1593, 0
    %v1602 = vsel %vm956, %v1595, 0
    %v1605 = vsel %vm956, %v1583, 0
    %v1608 = vsel %vm956, %v1586, 0
    %1610 = vmatprep.subr.mxu0 0.0
    %1611 = vmatpush1.xpose.msra.mxu0 %v1605
    %1612 = vmatprep.subr.mxu0 0.0
    %1613 = vmatpush1.xpose.msra.mxu0 %v1608
    %1614 = vmatprep.subr.mxu0 0.0
    %1615 = vmatpush1.xpose.msra.mxu0 0.0
    %1616 = vmatprep.subr.mxu0 0.0
    %1617 = vmatpush1.xpose.msra.mxu0 0.0
    %1618 = vmatprep.subr.mxu0 0.0
    %1619 = vmatpush1.xpose.msra.mxu0 0.0
    %1620 = vmatprep.subr.mxu0 0.0
    %1621 = vmatpush1.xpose.msra.mxu0 0.0
    %1622 = vmatprep.subr.mxu0 0.0
    %1623 = vmatpush1.xpose.msra.mxu0 0.0
    %1624 = vmatprep.subr.mxu0 0.0
    %1625 = vmatpush1.xpose.msra.mxu0 0.0
    %1626 = vmatprep.subr.mxu0 0.0
    %1627 = vmatpush1.xpose.msra.mxu0 0.0
    %1628 = vmatprep.subr.mxu0 0.0
    %1629 = vmatpush1.xpose.msra.mxu0 0.0
    %1630 = vmatprep.subr.mxu0 0.0
    %1631 = vmatpush1.xpose.msra.mxu0 0.0
    %1632 = vmatprep.subr.mxu0 0.0
    %1633 = vmatpush1.xpose.msra.mxu0 0.0
    %1634 = vmatprep.subr.mxu0 0.0
    %1635 = vmatpush1.xpose.msra.mxu0 0.0
    %1636 = vmatprep.subr.mxu0 0.0
    %1637 = vmatpush1.xpose.msra.mxu0 0.0
    %1638 = vmatprep.subr.mxu0 0.0
    %1639 = vmatpush1.xpose.msra.mxu0 0.0
    %1640 = vmatprep.subr.mxu0 0.0
    %1641 = vmatpush1.xpose.msra.mxu0 0.0
    %1642 = vmatprep.subr.mxu0 0.0
    %1643 = vmatpush1.xpose.msra.mxu0 0.0
    %1644 = vmatprep.subr.mxu0 0.0
    %1645 = vmatpush1.xpose.msra.mxu0 0.0
    %1646 = vmatprep.subr.mxu0 0.0
    %1647 = vmatpush1.xpose.msra.mxu0 0.0
    %1648 = vmatprep.subr.mxu0 0.0
    %1649 = vmatpush1.xpose.msra.mxu0 0.0
    %1650 = vmatprep.subr.mxu0 0.0
    %1651 = vmatpush1.xpose.msra.mxu0 0.0
    %1652 = vmatprep.subr.mxu0 0.0
    %1653 = vmatpush1.xpose.msra.mxu0 0.0
    %1654 = vmatprep.subr.mxu0 0.0
    %1655 = vmatpush1.xpose.msra.mxu0 0.0
    %1656 = vmatprep.subr.mxu0 0.0
    %1657 = vmatpush1.xpose.msra.mxu0 0.0
    %1658 = vmatprep.subr.mxu0 0.0
    %1659 = vmatpush1.xpose.msra.mxu0 0.0
    %1660 = vmatprep.subr.mxu0 0.0
    %1661 = vmatpush1.xpose.msra.mxu0 0.0
    %1662 = vmatprep.subr.mxu0 0.0
    %1663 = vmatpush1.xpose.msra.mxu0 0.0
    %1664 = vmatprep.subr.mxu0 0.0
    %1665 = vmatpush1.xpose.msra.mxu0 0.0
    %1666 = vmatprep.subr.mxu0 0.0
    %1667 = vmatpush1.xpose.msra.mxu0 0.0
    %1668 = vmatprep.subr.mxu0 0.0
    %1669 = vmatpush1.xpose.msra.mxu0 0.0
    %1670 = vmatprep.subr.mxu0 0.0
    %1671 = vmatpush1.xpose.msra.mxu0 0.0
    %1672 = vmatprep.subr.mxu0 0.0
    %1673 = vmatpush1.xpose.msra.mxu0 0.0
    %1674 = vmatprep.mubr.f32.mxu0 0.0
    %1675 = vmatmul.mubr.f32.gmra.mrb[0].mxu0 %v1596
    %v1676 = vpop.f32.mrb[0].mxu0
    %v1677 = vadd.f32 0.0, %v1676
    %v1678 = vpop.f32.mrb[0].mxu0
    %1679 = vmatprep.mubr.f32.mxu0 0.0
    %1680 = vmatmul.mubr.f32.gmra.mrb[0].mxu0 %v1598
    %v1681 = vpop.f32.mrb[0].mxu0
    %v1682 = vadd.f32 0.0, %v1681
    %v1683 = vpop.f32.mrb[0].mxu0
    %1684 = vmatprep.mubr.f32.mxu0 0.0
    %1685 = vmatmul.mubr.f32.gmra.mrb[0].mxu0 %v1600
    %v1686 = vpop.f32.mrb[0].mxu0
    %v1687 = vadd.f32 0.0, %v1686
    %v1688 = vpop.f32.mrb[0].mxu0
    %1689 = vmatprep.mubr.f32.mxu0 0.0
    %1690 = vmatmul.mubr.f32.gmra.mrb[0].mxu0 %v1602
    %v1691 = vpop.f32.mrb[0].mxu0
    %v1692 = vadd.f32 0.0, %v1691
    %v1693 = vpop.f32.mrb[0].mxu0
    %1694 = vdwg.mxu0
    %v1695 = vmul.f32 %v1677, 0.17677669
    %v1696 = vmul.f32 %v1682, 0.17677669
    %v1697 = vmul.f32 %v1687, 0.17677669
    %v1698 = vmul.f32 %v1692, 0.17677669
    %vm1699 = vcmask 130048
    %v1700 = vsel %vm1699, %v1695, -inf
    %1701 = vmax.xlane.f32.xlu0 %v1700
    %v1702 = vpop.xlane.xlu0 %1701
    %v1703 = vsel %vm1699, %v1696, -inf
    %1704 = vmax.xlane.f32.xlu0 %v1703
    %v1705 = vpop.xlane.xlu0 %1704
    %v1706 = vsel %vm1699, %v1697, -inf
    %1707 = vmax.xlane.f32.xlu0 %v1706
    %v1708 = vpop.xlane.xlu0 %1707
    %v1709 = vsel %vm1699, %v1698, -inf
    %1710 = vmax.xlane.f32.xlu0 %v1709
    %v1711 = vpop.xlane.xlu0 %1710
    %v1712 = vsub.f32 %v1695, %v1702
    %v1713 = vsub.f32 %v1696, %v1705
    %v1714 = vsub.f32 %v1697, %v1708
    %v1715 = vsub.f32 %v1698, %v1711
    %v1716 = vmul.f32 %v1712, 1.442695
    %v1717 = vpow.pop %v1716
    %v1718 = vmul.f32 %v1713, 1.442695
    %v1719 = vpow.pop %v1718
    %v1720 = vmul.f32 %v1714, 1.442695
    %v1721 = vpow.pop %v1720
    %v1722 = vmul.f32 %v1715, 1.442695
    %v1723 = vpow.pop %v1722
    %v1724 = vsel %vm1699, %v1717, 0.0
    %1725 = vadd.xlane.f32.xlu0 %v1724
    %v1726 = vpop.xlane.xlu0 %1725
    %v1727 = vsel %vm1699, %v1719, 0.0
    %1728 = vadd.xlane.f32.xlu0 %v1727
    %v1729 = vpop.xlane.xlu0 %1728
    %v1730 = vsel %vm1699, %v1721, 0.0
    %1731 = vadd.xlane.f32.xlu0 %v1730
    %v1732 = vpop.xlane.xlu0 %1731
    %v1733 = vsel %vm1699, %v1723, 0.0
    %1734 = vadd.xlane.f32.xlu0 %v1733
    %v1735 = vpop.xlane.xlu0 %1734
    %v1736 = vrcp.pop %v1726
    %v1737 = vrcp.pop %v1729
    %v1738 = vrcp.pop %v1732
    %v1739 = vrcp.pop %v1735
    %v1740 = vmul.f32 %v1717, %v1736
    %v1741 = vmul.f32 %v1719, %v1737
    %v1742 = vmul.f32 %v1721, %v1738
    %v1743 = vmul.f32 %v1723, %v1739
    %1744 = vrot.lane.b32.xlu0 %v1583, 96
    %v1745 = vpop.permute.xlu0 %1744
    %1746 = vrot.lane.b32.xlu0 %v1586, 96
    %v1747 = vpop.permute.xlu0 %1746
    %v1751 = vsel %vm1699, %v1740, 0
    %v1754 = vsel %vm1699, %v1741, 0
    %v1757 = vsel %vm1699, %v1742, 0
    %v1760 = vsel %vm1699, %v1743, 0
    %1762 = vmatprep.subr.mxu0 0.0
    %1763 = vmatpush1.msra.mxu0 %v1745
    %1764 = vmatprep.subr.mxu0 0.0
    %1765 = vmatpush1.msra.mxu0 %v1747
    %1766 = vmatprep.subr.mxu0 0.0
    %1767 = vmatpush1.msra.mxu0 0.0
    %1768 = vmatprep.subr.mxu0 0.0
    %1769 = vmatpush1.msra.mxu0 0.0
    %1770 = vmatprep.subr.mxu0 0.0
    %1771 = vmatpush1.msra.mxu0 0.0
    %1772 = vmatprep.subr.mxu0 0.0
    %1773 = vmatpush1.msra.mxu0 0.0
    %1774 = vmatprep.subr.mxu0 0.0
    %1775 = vmatpush1.msra.mxu0 0.0
    %1776 = vmatprep.subr.mxu0 0.0
    %1777 = vmatpush1.msra.mxu0 0.0
    %1778 = vmatprep.subr.mxu0 0.0
    %1779 = vmatpush1.msra.mxu0 0.0
    %1780 = vmatprep.subr.mxu0 0.0
    %1781 = vmatpush1.msra.mxu0 0.0
    %1782 = vmatprep.subr.mxu0 0.0
    %1783 = vmatpush1.msra.mxu0 0.0
    %1784 = vmatprep.subr.mxu0 0.0
    %1785 = vmatpush1.msra.mxu0 0.0
    %1786 = vmatprep.subr.mxu0 0.0
    %1787 = vmatpush1.msra.mxu0 0.0
    %1788 = vmatprep.subr.mxu0 0.0
    %1789 = vmatpush1.msra.mxu0 0.0
    %1790 = vmatprep.subr.mxu0 0.0
    %1791 = vmatpush1.msra.mxu0 0.0
    %1792 = vmatprep.subr.mxu0 0.0
    %1793 = vmatpush1.msra.mxu0 0.0
    %1794 = vmatprep.subr.mxu0 0.0
    %1795 = vmatpush1.msra.mxu0 0.0
    %1796 = vmatprep.subr.mxu0 0.0
    %1797 = vmatpush1.msra.mxu0 0.0
    %1798 = vmatprep.subr.mxu0 0.0
    %1799 = vmatpush1.msra.mxu0 0.0
    %1800 = vmatprep.subr.mxu0 0.0
    %1801 = vmatpush1.msra.mxu0 0.0
    %1802 = vmatprep.subr.mxu0 0.0
    %1803 = vmatpush1.msra.mxu0 0.0
    %1804 = vmatprep.subr.mxu0 0.0
    %1805 = vmatpush1.msra.mxu0 0.0
    %1806 = vmatprep.subr.mxu0 0.0
    %1807 = vmatpush1.msra.mxu0 0.0
    %1808 = vmatprep.subr.mxu0 0.0
    %1809 = vmatpush1.msra.mxu0 0.0
    %1810 = vmatprep.subr.mxu0 0.0
    %1811 = vmatpush1.msra.mxu0 0.0
    %1812 = vmatprep.subr.mxu0 0.0
    %1813 = vmatpush1.msra.mxu0 0.0
    %1814 = vmatprep.subr.mxu0 0.0
    %1815 = vmatpush1.msra.mxu0 0.0
    %1816 = vmatprep.subr.mxu0 0.0
    %1817 = vmatpush1.msra.mxu0 0.0
    %1818 = vmatprep.subr.mxu0 0.0
    %1819 = vmatpush1.msra.mxu0 0.0
    %1820 = vmatprep.subr.mxu0 0.0
    %1821 = vmatpush1.msra.mxu0 0.0
    %1822 = vmatprep.subr.mxu0 0.0
    %1823 = vmatpush1.msra.mxu0 0.0
    %1824 = vmatprep.subr.mxu0 0.0
    %1825 = vmatpush1.msra.mxu0 0.0
    %1826 = vmatprep.mubr.f32.mxu0 0.0
    %1827 = vmatmul.mubr.f32.gmra.mrb[0].mxu0 %v1751
    %v1828 = vpop.f32.mrb[0].mxu0
    %v1829 = vadd.f32 0.0, %v1828
    %v1830 = vpop.f32.mrb[0].mxu0
    %1831 = vmatprep.mubr.f32.mxu0 0.0
    %1832 = vmatmul.mubr.f32.gmra.mrb[0].mxu0 %v1754
    %v1833 = vpop.f32.mrb[0].mxu0
    %v1834 = vadd.f32 0.0, %v1833
    %v1835 = vpop.f32.mrb[0].mxu0
    %1836 = vmatprep.mubr.f32.mxu0 0.0
    %1837 = vmatmul.mubr.f32.gmra.mrb[0].mxu0 %v1757
    %v1838 = vpop.f32.mrb[0].mxu0
    %v1839 = vadd.f32 0.0, %v1838
    %v1840 = vpop.f32.mrb[0].mxu0
    %1841 = vmatprep.mubr.f32.mxu0 0.0
    %1842 = vmatmul.mubr.f32.gmra.mrb[0].mxu0 %v1760
    %v1843 = vpop.f32.mrb[0].mxu0
    %v1844 = vadd.f32 0.0, %v1843
    %v1845 = vpop.f32.mrb[0].mxu0
    %1846 = vdwg.mxu0
    %1848 = vrot.lane.b32.xlu0 %v1834, 32
    %v1849 = vpop.permute.xlu0 %1848
    %1852 = vrot.lane.b32.xlu0 %v1839, 64
    %v1853 = vpop.permute.xlu0 %1852
    %1856 = vrot.lane.b32.xlu0 %v1844, 96
    %v1857 = vpop.permute.xlu0 %1856
    %v1859 = vsel %vm956, %v1829, %v1849
    %v1860 = vsel %vm1304, %v1859, %v1853
    %v1861 = vsel %vm1306, %v1860, %v1857
    %v1862 = vpack.c.bf16 %v1861, %v1861
    %v1879 = vunpack.c.l.b16 %v611
    %v1880 = vunpack.c.l.b16 %v612
    %v1881 = vunpack.c.l.b16 %v613
    %v1882 = vunpack.c.l.b16 %v614
    %v1883 = vunpack.c.l.b16 %v615
    %v1884 = vunpack.c.l.b16 %v616
    %v1885 = vunpack.c.l.b16 %v617
    %v1886 = vunpack.c.l.b16 %v618
    %v1887 = vunpack.c.l.b16 %v619
    %v1888 = vunpack.c.l.b16 %v620
    %v1889 = vunpack.c.l.b16 %v621
    %v1890 = vunpack.c.l.b16 %v622
    %v1891 = vunpack.c.l.b16 %v623
    %v1892 = vunpack.c.l.b16 %v624
    %v1893 = vunpack.c.l.b16 %v625
    %v1894 = vunpack.c.l.b16 %v626
    %v1895 = vpack.c.b16 %v1880, %v1879
    %v1896 = vpack.c.b16 %v1882, %v1881
    %v1897 = vpack.c.b16 %v1884, %v1883
    %v1898 = vpack.c.b16 %v1886, %v1885
    %v1899 = vpack.c.b16 %v1888, %v1887
    %v1900 = vpack.c.b16 %v1890, %v1889
    %v1901 = vpack.c.b16 %v1892, %v1891
    %v1902 = vpack.c.b16 %v1894, %v1893
    %1911 = vmatprep.subr.bf16.mxu0 0
    %1912 = vmatpush1.bf16.msra.mxu0 %v1895
    %1913 = vmatprep.subr.bf16.mxu0 0
    %1914 = vmatpush1.bf16.msra.mxu0 %v1896
    %1915 = vmatprep.subr.bf16.mxu0 0
    %1916 = vmatpush1.bf16.msra.mxu0 %v1897
    %1917 = vmatprep.subr.bf16.mxu0 0
    %1918 = vmatpush1.bf16.msra.mxu0 %v1898
    %1919 = vmatprep.subr.bf16.mxu0 0
    %1920 = vmatpush1.bf16.msra.mxu0 %v1899
    %1921 = vmatprep.subr.bf16.mxu0 0
    %1922 = vmatpush1.bf16.msra.mxu0 %v1900
    %1923 = vmatprep.subr.bf16.mxu0 0
    %1924 = vmatpush1.bf16.msra.mxu0 %v1901
    %1925 = vmatprep.subr.bf16.mxu0 0
    %1926 = vmatpush1.bf16.msra.mxu0 %v1902
    %1927 = vmatprep.subr.bf16.mxu0 0
    %1928 = vmatpush1.bf16.msra.mxu0 0
    %1929 = vmatprep.subr.bf16.mxu0 0
    %1930 = vmatpush1.bf16.msra.mxu0 0
    %1931 = vmatprep.subr.bf16.mxu0 0
    %1932 = vmatpush1.bf16.msra.mxu0 0
    %1933 = vmatprep.subr.bf16.mxu0 0
    %1934 = vmatpush1.bf16.msra.mxu0 0
    %1935 = vmatprep.subr.bf16.mxu0 0
    %1936 = vmatpush1.bf16.msra.mxu0 0
    %1937 = vmatprep.subr.bf16.mxu0 0
    %1938 = vmatpush1.bf16.msra.mxu0 0
    %1939 = vmatprep.subr.bf16.mxu0 0
    %1940 = vmatpush1.bf16.msra.mxu0 0
    %1941 = vmatprep.subr.bf16.mxu0 0
    %1942 = vmatpush1.bf16.msra.mxu0 0
    %1943 = vmatprep.mubr.bf16.mxu0 0
    %1944 = vmatmul.mubr.bf16.gmra.mrb[0].mxu0 %v1862
    %v1945 = vpop.f32.mrb[0].mxu0
    %v1946 = vadd.f32 0.0, %v1945
    %v1947 = vpop.f32.mrb[0].mxu0
    %v1948 = vpop.f32.mrb[0].mxu0
    %v1949 = vpop.f32.mrb[0].mxu0
    %1950 = vdwg.mxu0
    %v1951 = vadd.f32 %v1397, %v1946
    %v1952 = vmul.f32 %v1951, %v1951
    %1953 = vadd.xlane.f32.xlu0 %v1952
    %v1954 = vpop.xlane.xlu0 %1953
    %v1955 = vmul.f32 %v1954, %v695
    %v1956 = vadd.f32 %v1955, 1e-06
    %v1957 = vrsqrt.pop %v1956
    %v1958 = vmul.f32 %v1951, %v1957
    %v1959 = vlaneseq
    %v1960 = vshrl.u32 %v1959, 7
    %v1961 = vsub.s32 0, %v1960
    %v1962 = vrot.slane %v627, %v1961
    %v1963 = vmul.f32 %v1958, %v1962
    %v1964 = vpack.c.bf16 %v1963, %v1963
    %v1997 = vunpack.c.l.b16 %v628
    %v1998 = vunpack.c.h.b16 %v628
    %v1999 = vunpack.c.l.b16 %v629
    %v2000 = vunpack.c.h.b16 %v629
    %v2001 = vunpack.c.l.b16 %v630
    %v2002 = vunpack.c.h.b16 %v630
    %v2003 = vunpack.c.l.b16 %v631
    %v2004 = vunpack.c.h.b16 %v631
    %v2005 = vunpack.c.l.b16 %v632
    %v2006 = vunpack.c.h.b16 %v632
    %v2007 = vunpack.c.l.b16 %v633
    %v2008 = vunpack.c.h.b16 %v633
    %v2009 = vunpack.c.l.b16 %v634
    %v2010 = vunpack.c.h.b16 %v634
    %v2011 = vunpack.c.l.b16 %v635
    %v2012 = vunpack.c.h.b16 %v635
    %v2013 = vunpack.c.l.b16 %v636
    %v2014 = vunpack.c.h.b16 %v636
    %v2015 = vunpack.c.l.b16 %v637
    %v2016 = vunpack.c.h.b16 %v637
    %v2017 = vunpack.c.l.b16 %v638
    %v2018 = vunpack.c.h.b16 %v638
    %v2019 = vunpack.c.l.b16 %v639
    %v2020 = vunpack.c.h.b16 %v639
    %v2021 = vunpack.c.l.b16 %v640
    %v2022 = vunpack.c.h.b16 %v640
    %v2023 = vunpack.c.l.b16 %v641
    %v2024 = vunpack.c.h.b16 %v641
    %v2025 = vunpack.c.l.b16 %v642
    %v2026 = vunpack.c.h.b16 %v642
    %v2027 = vunpack.c.l.b16 %v643
    %v2028 = vunpack.c.h.b16 %v643
    %v2029 = vunpack.c.l.b16 %v644
    %v2030 = vunpack.c.h.b16 %v644
    %v2031 = vunpack.c.l.b16 %v645
    %v2032 = vunpack.c.h.b16 %v645
    %v2033 = vunpack.c.l.b16 %v646
    %v2034 = vunpack.c.h.b16 %v646
    %v2035 = vunpack.c.l.b16 %v647
    %v2036 = vunpack.c.h.b16 %v647
    %v2037 = vunpack.c.l.b16 %v648
    %v2038 = vunpack.c.h.b16 %v648
    %v2039 = vunpack.c.l.b16 %v649
    %v2040 = vunpack.c.h.b16 %v649
    %v2041 = vunpack.c.l.b16 %v650
    %v2042 = vunpack.c.h.b16 %v650
    %v2043 = vunpack.c.l.b16 %v651
    %v2044 = vunpack.c.h.b16 %v651
    %v2045 = vunpack.c.l.b16 %v652
    %v2046 = vunpack.c.h.b16 %v652
    %v2047 = vunpack.c.l.b16 %v653
    %v2048 = vunpack.c.h.b16 %v653
    %v2049 = vunpack.c.l.b16 %v654
    %v2050 = vunpack.c.h.b16 %v654
    %v2051 = vunpack.c.l.b16 %v655
    %v2052 = vunpack.c.h.b16 %v655
    %v2053 = vunpack.c.l.b16 %v656
    %v2054 = vunpack.c.h.b16 %v656
    %v2055 = vunpack.c.l.b16 %v657
    %v2056 = vunpack.c.h.b16 %v657
    %v2057 = vunpack.c.l.b16 %v658
    %v2058 = vunpack.c.h.b16 %v658
    %v2059 = vunpack.c.l.b16 %v659
    %v2060 = vunpack.c.h.b16 %v659
    %v2061 = vpack.c.b16 %v2001, %v1997
    %v2062 = vpack.c.b16 %v2002, %v1998
    %v2063 = vpack.c.b16 %v2003, %v1999
    %v2064 = vpack.c.b16 %v2004, %v2000
    %v2065 = vpack.c.b16 %v2009, %v2005
    %v2066 = vpack.c.b16 %v2010, %v2006
    %v2067 = vpack.c.b16 %v2011, %v2007
    %v2068 = vpack.c.b16 %v2012, %v2008
    %v2069 = vpack.c.b16 %v2017, %v2013
    %v2070 = vpack.c.b16 %v2018, %v2014
    %v2071 = vpack.c.b16 %v2019, %v2015
    %v2072 = vpack.c.b16 %v2020, %v2016
    %v2073 = vpack.c.b16 %v2025, %v2021
    %v2074 = vpack.c.b16 %v2026, %v2022
    %v2075 = vpack.c.b16 %v2027, %v2023
    %v2076 = vpack.c.b16 %v2028, %v2024
    %v2077 = vpack.c.b16 %v2033, %v2029
    %v2078 = vpack.c.b16 %v2034, %v2030
    %v2079 = vpack.c.b16 %v2035, %v2031
    %v2080 = vpack.c.b16 %v2036, %v2032
    %v2081 = vpack.c.b16 %v2041, %v2037
    %v2082 = vpack.c.b16 %v2042, %v2038
    %v2083 = vpack.c.b16 %v2043, %v2039
    %v2084 = vpack.c.b16 %v2044, %v2040
    %v2085 = vpack.c.b16 %v2049, %v2045
    %v2086 = vpack.c.b16 %v2050, %v2046
    %v2087 = vpack.c.b16 %v2051, %v2047
    %v2088 = vpack.c.b16 %v2052, %v2048
    %v2089 = vpack.c.b16 %v2057, %v2053
    %v2090 = vpack.c.b16 %v2058, %v2054
    %v2091 = vpack.c.b16 %v2059, %v2055
    %v2092 = vpack.c.b16 %v2060, %v2056
    %2125 = vmatprep.subr.bf16.mxu0 %v2062
    %2126 = vmatpush1.bf16.msra.mxu0 %v2061
    %2127 = vmatprep.subr.bf16.mxu0 %v2066
    %2128 = vmatpush1.bf16.msra.mxu0 %v2065
    %2129 = vmatprep.subr.bf16.mxu0 %v2070
    %2130 = vmatpush1.bf16.msra.mxu0 %v2069
    %2131 = vmatprep.subr.bf16.mxu0 %v2074
    %2132 = vmatpush1.bf16.msra.mxu0 %v2073
    %2133 = vmatprep.subr.bf16.mxu0 %v2078
    %2134 = vmatpush1.bf16.msra.mxu0 %v2077
    %2135 = vmatprep.subr.bf16.mxu0 %v2082
    %2136 = vmatpush1.bf16.msra.mxu0 %v2081
    %2137 = vmatprep.subr.bf16.mxu0 %v2086
    %2138 = vmatpush1.bf16.msra.mxu0 %v2085
    %2139 = vmatprep.subr.bf16.mxu0 %v2090
    %2140 = vmatpush1.bf16.msra.mxu0 %v2089
    %2141 = vmatprep.subr.bf16.mxu0 0
    %2142 = vmatpush1.bf16.msra.mxu0 0
    %2143 = vmatprep.subr.bf16.mxu0 0
    %2144 = vmatpush1.bf16.msra.mxu0 0
    %2145 = vmatprep.subr.bf16.mxu0 0
    %2146 = vmatpush1.bf16.msra.mxu0 0
    %2147 = vmatprep.subr.bf16.mxu0 0
    %2148 = vmatpush1.bf16.msra.mxu0 0
    %2149 = vmatprep.subr.bf16.mxu0 0
    %2150 = vmatpush1.bf16.msra.mxu0 0
    %2151 = vmatprep.subr.bf16.mxu0 0
    %2152 = vmatpush1.bf16.msra.mxu0 0
    %2153 = vmatprep.subr.bf16.mxu0 0
    %2154 = vmatpush1.bf16.msra.mxu0 0
    %2155 = vmatprep.subr.bf16.mxu0 0
    %2156 = vmatpush1.bf16.msra.mxu0 0
    %2157 = vmatprep.mubr.bf16.mxu0 0
    %2158 = vmatmul.mubr.bf16.gmra.mrb[0].mxu0 %v1964
    %v2159 = vpop.f32.mrb[0].mxu0
    %v2160 = vadd.f32 0.0, %v2159
    %v2161 = vpop.f32.mrb[0].mxu0
    %v2162 = vadd.f32 0.0, %v2161
    %v2163 = vpop.f32.mrb[0].mxu0
    %v2164 = vpop.f32.mrb[0].mxu0
    %2165 = vdwg.mxu0
    %2166 = vmatprep.subr.bf16.mxu0 %v2064
    %2167 = vmatpush1.bf16.msra.mxu0 %v2063
    %2168 = vmatprep.subr.bf16.mxu0 %v2068
    %2169 = vmatpush1.bf16.msra.mxu0 %v2067
    %2170 = vmatprep.subr.bf16.mxu0 %v2072
    %2171 = vmatpush1.bf16.msra.mxu0 %v2071
    %2172 = vmatprep.subr.bf16.mxu0 %v2076
    %2173 = vmatpush1.bf16.msra.mxu0 %v2075
    %2174 = vmatprep.subr.bf16.mxu0 %v2080
    %2175 = vmatpush1.bf16.msra.mxu0 %v2079
    %2176 = vmatprep.subr.bf16.mxu0 %v2084
    %2177 = vmatpush1.bf16.msra.mxu0 %v2083
    %2178 = vmatprep.subr.bf16.mxu0 %v2088
    %2179 = vmatpush1.bf16.msra.mxu0 %v2087
    %2180 = vmatprep.subr.bf16.mxu0 %v2092
    %2181 = vmatpush1.bf16.msra.mxu0 %v2091
    %2182 = vmatprep.subr.bf16.mxu0 0
    %2183 = vmatpush1.bf16.msra.mxu0 0
    %2184 = vmatprep.subr.bf16.mxu0 0
    %2185 = vmatpush1.bf16.msra.mxu0 0
    %2186 = vmatprep.subr.bf16.mxu0 0
    %2187 = vmatpush1.bf16.msra.mxu0 0
    %2188 = vmatprep.subr.bf16.mxu0 0
    %2189 = vmatpush1.bf16.msra.mxu0 0
    %2190 = vmatprep.subr.bf16.mxu0 0
    %2191 = vmatpush1.bf16.msra.mxu0 0
    %2192 = vmatprep.subr.bf16.mxu0 0
    %2193 = vmatpush1.bf16.msra.mxu0 0
    %2194 = vmatprep.subr.bf16.mxu0 0
    %2195 = vmatpush1.bf16.msra.mxu0 0
    %2196 = vmatprep.subr.bf16.mxu0 0
    %2197 = vmatpush1.bf16.msra.mxu0 0
    %2198 = vmatprep.mubr.bf16.mxu0 0
    %2199 = vmatmul.mubr.bf16.gmra.mrb[0].mxu0 %v1964
    %v2200 = vpop.f32.mrb[0].mxu0
    %v2201 = vadd.f32 0.0, %v2200
    %v2202 = vpop.f32.mrb[0].mxu0
    %v2203 = vadd.f32 0.0, %v2202
    %v2204 = vpop.f32.mrb[0].mxu0
    %v2205 = vpop.f32.mrb[0].mxu0
    %2206 = vdwg.mxu0
    %v2207 = vxor.u32 %v2160, 2147483648
    %v2208 = vxor.u32 %v2162, 2147483648
    %v2209 = vmul.f32 %v2207, 1.442695
    %v2210 = vpow.pop %v2209
    %v2211 = vmul.f32 %v2208, 1.442695
    %v2212 = vpow.pop %v2211
    %v2213 = vadd.f32 %v2210, 1.0
    %v2214 = vadd.f32 %v2212, 1.0
    %v2215 = vrcp.pop %v2213
    %v2216 = vmul.f32 1.0, %v2215
    %v2217 = vrcp.pop %v2214
    %v2218 = vmul.f32 1.0, %v2217
    %v2219 = vmul.f32 %v2160, %v2216
    %v2220 = vmul.f32 %v2162, %v2218
    %v2221 = vmul.f32 %v2219, %v2201
    %v2222 = vmul.f32 %v2220, %v2203
    %v2223 = vpack.c.bf16 %v2221, %v2221
    %v2224 = vpack.c.bf16 %v2222, %v2222
    %v2257 = vunpack.c.l.b16 %v660
    %v2258 = vunpack.c.l.b16 %v661
    %v2259 = vunpack.c.l.b16 %v662
    %v2260 = vunpack.c.l.b16 %v663
    %v2261 = vunpack.c.l.b16 %v664
    %v2262 = vunpack.c.l.b16 %v665
    %v2263 = vunpack.c.l.b16 %v666
    %v2264 = vunpack.c.l.b16 %v667
    %v2265 = vunpack.c.l.b16 %v668
    %v2266 = vunpack.c.l.b16 %v669
    %v2267 = vunpack.c.l.b16 %v670
    %v2268 = vunpack.c.l.b16 %v671
    %v2269 = vunpack.c.l.b16 %v672
    %v2270 = vunpack.c.l.b16 %v673
    %v2271 = vunpack.c.l.b16 %v674
    %v2272 = vunpack.c.l.b16 %v675
    %v2273 = vunpack.c.l.b16 %v676
    %v2274 = vunpack.c.l.b16 %v677
    %v2275 = vunpack.c.l.b16 %v678
    %v2276 = vunpack.c.l.b16 %v679
    %v2277 = vunpack.c.l.b16 %v680
    %v2278 = vunpack.c.l.b16 %v681
    %v2279 = vunpack.c.l.b16 %v682
    %v2280 = vunpack.c.l.b16 %v683
    %v2281 = vunpack.c.l.b16 %v684
    %v2282 = vunpack.c.l.b16 %v685
    %v2283 = vunpack.c.l.b16 %v686
    %v2284 = vunpack.c.l.b16 %v687
    %v2285 = vunpack.c.l.b16 %v688
    %v2286 = vunpack.c.l.b16 %v689
    %v2287 = vunpack.c.l.b16 %v690
    %v2288 = vunpack.c.l.b16 %v691
    %v2289 = vpack.c.b16 %v2258, %v2257
    %v2290 = vpack.c.b16 %v2260, %v2259
    %v2291 = vpack.c.b16 %v2262, %v2261
    %v2292 = vpack.c.b16 %v2264, %v2263
    %v2293 = vpack.c.b16 %v2266, %v2265
    %v2294 = vpack.c.b16 %v2268, %v2267
    %v2295 = vpack.c.b16 %v2270, %v2269
    %v2296 = vpack.c.b16 %v2272, %v2271
    %v2297 = vpack.c.b16 %v2274, %v2273
    %v2298 = vpack.c.b16 %v2276, %v2275
    %v2299 = vpack.c.b16 %v2278, %v2277
    %v2300 = vpack.c.b16 %v2280, %v2279
    %v2301 = vpack.c.b16 %v2282, %v2281
    %v2302 = vpack.c.b16 %v2284, %v2283
    %v2303 = vpack.c.b16 %v2286, %v2285
    %v2304 = vpack.c.b16 %v2288, %v2287
    %2321 = vmatprep.subr.bf16.mxu0 0
    %2322 = vmatpush1.bf16.msra.mxu0 %v2289
    %2323 = vmatprep.subr.bf16.mxu0 0
    %2324 = vmatpush1.bf16.msra.mxu0 %v2290
    %2325 = vmatprep.subr.bf16.mxu0 0
    %2326 = vmatpush1.bf16.msra.mxu0 %v2291
    %2327 = vmatprep.subr.bf16.mxu0 0
    %2328 = vmatpush1.bf16.msra.mxu0 %v2292
    %2329 = vmatprep.subr.bf16.mxu0 0
    %2330 = vmatpush1.bf16.msra.mxu0 %v2293
    %2331 = vmatprep.subr.bf16.mxu0 0
    %2332 = vmatpush1.bf16.msra.mxu0 %v2294
    %2333 = vmatprep.subr.bf16.mxu0 0
    %2334 = vmatpush1.bf16.msra.mxu0 %v2295
    %2335 = vmatprep.subr.bf16.mxu0 0
    %2336 = vmatpush1.bf16.msra.mxu0 %v2296
    %2337 = vmatprep.subr.bf16.mxu0 0
    %2338 = vmatpush1.bf16.msra.mxu0 %v2297
    %2339 = vmatprep.subr.bf16.mxu0 0
    %2340 = vmatpush1.bf16.msra.mxu0 %v2298
    %2341 = vmatprep.subr.bf16.mxu0 0
    %2342 = vmatpush1.bf16.msra.mxu0 %v2299
    %2343 = vmatprep.subr.bf16.mxu0 0
    %2344 = vmatpush1.bf16.msra.mxu0 %v2300
    %2345 = vmatprep.subr.bf16.mxu0 0
    %2346 = vmatpush1.bf16.msra.mxu0 %v2301
    %2347 = vmatprep.subr.bf16.mxu0 0
    %2348 = vmatpush1.bf16.msra.mxu0 %v2302
    %2349 = vmatprep.subr.bf16.mxu0 0
    %2350 = vmatpush1.bf16.msra.mxu0 %v2303
    %2351 = vmatprep.subr.bf16.mxu0 0
    %2352 = vmatpush1.bf16.msra.mxu0 %v2304
    %2353 = vmatprep.mubr.bf16.mxu0 %v2224
    %2354 = vmatmul.mubr.bf16.gmra.mrb[0].mxu0 %v2223
    %v2355 = vpop.f32.mrb[0].mxu0
    %v2356 = vadd.f32 0.0, %v2355
    %v2357 = vpop.f32.mrb[0].mxu0
    %v2358 = vpop.f32.mrb[0].mxu0
    %v2359 = vpop.f32.mrb[0].mxu0
    %2360 = vdwg.mxu0
    %v2361 = vadd.f32 %v1951, %v2356
    %v2362 = vld [vmem:[%s6 + $0x1] sm:$0x1]
    %s2363 = scalar_lea.vmem [#allocation15], 64
    %v2364 = vld [vmem:[%s2363] sm:$0xf]
    %v2365 = vld [vmem:[%s2363 + $0x4] sm:$0xf]
    %v2366 = vld [vmem:[%s2363 + $0x8] sm:$0xf]
    %v2367 = vld [vmem:[%s2363 + $0xc] sm:$0xf]
    %v2368 = vld [vmem:[%s2363 + $0x10] sm:$0xf]
    %v2369 = vld [vmem:[%s2363 + $0x14] sm:$0xf]
    %v2370 = vld [vmem:[%s2363 + $0x18] sm:$0xf]
    %v2371 = vld [vmem:[%s2363 + $0x1c] sm:$0xf]
    %v2372 = vld [vmem:[%s2363 + $0x20] sm:$0xf]
    %v2373 = vld [vmem:[%s2363 + $0x24] sm:$0xf]
    %v2374 = vld [vmem:[%s2363 + $0x28] sm:$0xf]
    %v2375 = vld [vmem:[%s2363 + $0x2c] sm:$0xf]
    %v2376 = vld [vmem:[%s2363 + $0x30] sm:$0xf]
    %v2377 = vld [vmem:[%s2363 + $0x34] sm:$0xf]
    %v2378 = vld [vmem:[%s2363 + $0x38] sm:$0xf]
    %v2379 = vld [vmem:[%s2363 + $0x3c] sm:$0xf]
    %s2380 = scalar_lea.vmem %s8, 64
    %v2381 = vld [vmem:[%s2380] sm:$0xf]
    %v2382 = vld [vmem:[%s2380 + $0x4] sm:$0xf]
    %v2383 = vld [vmem:[%s2380 + $0x8] sm:$0xf]
    %v2384 = vld [vmem:[%s2380 + $0xc] sm:$0xf]
    %v2385 = vld [vmem:[%s2380 + $0x10] sm:$0xf]
    %v2386 = vld [vmem:[%s2380 + $0x14] sm:$0xf]
    %v2387 = vld [vmem:[%s2380 + $0x18] sm:$0xf]
    %v2388 = vld [vmem:[%s2380 + $0x1c] sm:$0xf]
    %v2389 = vld [vmem:[%s2380 + $0x20] sm:$0xf]
    %v2390 = vld [vmem:[%s2380 + $0x24] sm:$0xf]
    %v2391 = vld [vmem:[%s2380 + $0x28] sm:$0xf]
    %v2392 = vld [vmem:[%s2380 + $0x2c] sm:$0xf]
    %v2393 = vld [vmem:[%s2380 + $0x30] sm:$0xf]
    %v2394 = vld [vmem:[%s2380 + $0x34] sm:$0xf]
    %v2395 = vld [vmem:[%s2380 + $0x38] sm:$0xf]
    %v2396 = vld [vmem:[%s2380 + $0x3c] sm:$0xf]
    %s2397 = scalar_lea.vmem [#allocation16], 64
    %v2398 = vld [vmem:[%s2397] sm:$0xf]
    %v2399 = vld [vmem:[%s2397 + $0x4] sm:$0xf]
    %v2400 = vld [vmem:[%s2397 + $0x8] sm:$0xf]
    %v2401 = vld [vmem:[%s2397 + $0xc] sm:$0xf]
    %v2402 = vld [vmem:[%s2397 + $0x10] sm:$0xf]
    %v2403 = vld [vmem:[%s2397 + $0x14] sm:$0xf]
    %v2404 = vld [vmem:[%s2397 + $0x18] sm:$0xf]
    %v2405 = vld [vmem:[%s2397 + $0x1c] sm:$0xf]
    %v2406 = vld [vmem:[%s2397 + $0x20] sm:$0xf]
    %v2407 = vld [vmem:[%s2397 + $0x24] sm:$0xf]
    %v2408 = vld [vmem:[%s2397 + $0x28] sm:$0xf]
    %v2409 = vld [vmem:[%s2397 + $0x2c] sm:$0xf]
    %v2410 = vld [vmem:[%s2397 + $0x30] sm:$0xf]
    %v2411 = vld [vmem:[%s2397 + $0x34] sm:$0xf]
    %v2412 = vld [vmem:[%s2397 + $0x38] sm:$0xf]
    %v2413 = vld [vmem:[%s2397 + $0x3c] sm:$0xf]
    %v2414 = vld [vmem:[#allocation18 + $0x1] sm:$0x1]
    %s2415 = scalar_lea.vmem [#allocation19], 64
    %v2416 = vld [vmem:[%s2415] sm:$0xf]
    %v2417 = vld [vmem:[%s2415 + $0x4] sm:$0xf]
    %v2418 = vld [vmem:[%s2415 + $0x8] sm:$0xf]
    %v2419 = vld [vmem:[%s2415 + $0xc] sm:$0xf]
    %v2420 = vld [vmem:[%s2415 + $0x10] sm:$0xf]
    %v2421 = vld [vmem:[%s2415 + $0x14] sm:$0xf]
    %v2422 = vld [vmem:[%s2415 + $0x18] sm:$0xf]
    %v2423 = vld [vmem:[%s2415 + $0x1c] sm:$0xf]
    %v2424 = vld [vmem:[%s2415 + $0x20] sm:$0xf]
    %v2425 = vld [vmem:[%s2415 + $0x24] sm:$0xf]
    %v2426 = vld [vmem:[%s2415 + $0x28] sm:$0xf]
    %v2427 = vld [vmem:[%s2415 + $0x2c] sm:$0xf]
    %v2428 = vld [vmem:[%s2415 + $0x30] sm:$0xf]
    %v2429 = vld [vmem:[%s2415 + $0x34] sm:$0xf]
    %v2430 = vld [vmem:[%s2415 + $0x38] sm:$0xf]
    %v2431 = vld [vmem:[%s2415 + $0x3c] sm:$0xf]
    %s2432 = scalar_lea.vmem %s12, 64
    %v2433 = vld [vmem:[%s2432] sm:$0xf]
    %v2434 = vld [vmem:[%s2432 + $0x4] sm:$0xf]
    %v2435 = vld [vmem:[%s2432 + $0x8] sm:$0xf]
    %v2436 = vld [vmem:[%s2432 + $0xc] sm:$0xf]
    %v2437 = vld [vmem:[%s2432 + $0x10] sm:$0xf]
    %v2438 = vld [vmem:[%s2432 + $0x14] sm:$0xf]
    %v2439 = vld [vmem:[%s2432 + $0x18] sm:$0xf]
    %v2440 = vld [vmem:[%s2432 + $0x1c] sm:$0xf]
    %v2441 = vld [vmem:[%s2432 + $0x20] sm:$0xf]
    %v2442 = vld [vmem:[%s2432 + $0x24] sm:$0xf]
    %v2443 = vld [vmem:[%s2432 + $0x28] sm:$0xf]
    %v2444 = vld [vmem:[%s2432 + $0x2c] sm:$0xf]
    %v2445 = vld [vmem:[%s2432 + $0x30] sm:$0xf]
    %v2446 = vld [vmem:[%s2432 + $0x34] sm:$0xf]
    %v2447 = vld [vmem:[%s2432 + $0x38] sm:$0xf]
    %v2448 = vld [vmem:[%s2432 + $0x3c] sm:$0xf]
    %s2449 = scalar_lea.vmem [#allocation21], 64
    %v2450 = vld [vmem:[%s2449] sm:$0xf]
    %v2451 = vld [vmem:[%s2449 + $0x4] sm:$0xf]
    %v2452 = vld [vmem:[%s2449 + $0x8] sm:$0xf]
    %v2453 = vld [vmem:[%s2449 + $0xc] sm:$0xf]
    %v2454 = vld [vmem:[%s2449 + $0x10] sm:$0xf]
    %v2455 = vld [vmem:[%s2449 + $0x14] sm:$0xf]
    %v2456 = vld [vmem:[%s2449 + $0x18] sm:$0xf]
    %v2457 = vld [vmem:[%s2449 + $0x1c] sm:$0xf]
    %v2458 = vld [vmem:[%s2449 + $0x20] sm:$0xf]
    %v2459 = vld [vmem:[%s2449 + $0x24] sm:$0xf]
    %v2460 = vld [vmem:[%s2449 + $0x28] sm:$0xf]
    %v2461 = vld [vmem:[%s2449 + $0x2c] sm:$0xf]
    %v2462 = vld [vmem:[%s2449 + $0x30] sm:$0xf]
    %v2463 = vld [vmem:[%s2449 + $0x34] sm:$0xf]
    %v2464 = vld [vmem:[%s2449 + $0x38] sm:$0xf]
    %v2465 = vld [vmem:[%s2449 + $0x3c] sm:$0xf]
    %v2466 = vld [vmem:[#allocation22 + $0x1] sm:$0x1]
    %s2467 = scalar_lea.vmem %s15, 256
    %v2468 = vld [vmem:[%s2467] sm:$0xff]
    %v2469 = vld [vmem:[%s2467 + $0x8] sm:$0xff]
    %v2470 = vld [vmem:[%s2467 + $0x10] sm:$0xff]
    %v2471 = vld [vmem:[%s2467 + $0x18] sm:$0xff]
    %v2472 = vld [vmem:[%s2467 + $0x20] sm:$0xff]
    %v2473 = vld [vmem:[%s2467 + $0x28] sm:$0xff]
    %v2474 = vld [vmem:[%s2467 + $0x30] sm:$0xff]
    %v2475 = vld [vmem:[%s2467 + $0x38] sm:$0xff]
    %v2476 = vld [vmem:[%s2467 + $0x40] sm:$0xff]
    %v2477 = vld [vmem:[%s2467 + $0x48] sm:$0xff]
    %v2478 = vld [vmem:[%s2467 + $0x50] sm:$0xff]
    %v2479 = vld [vmem:[%s2467 + $0x58] sm:$0xff]
    %v2480 = vld [vmem:[%s2467 + $0x60] sm:$0xff]
    %v2481 = vld [vmem:[%s2467 + $0x68] sm:$0xff]
    %v2482 = vld [vmem:[%s2467 + $0x70] sm:$0xff]
    %v2483 = vld [vmem:[%s2467 + $0x78] sm:$0xff]
    %v2484 = vld [vmem:[%s2467 + $0x80] sm:$0xff]
    %v2485 = vld [vmem:[%s2467 + $0x88] sm:$0xff]
    %v2486 = vld [vmem:[%s2467 + $0x90] sm:$0xff]
    %v2487 = vld [vmem:[%s2467 + $0x98] sm:$0xff]
    %v2488 = vld [vmem:[%s2467 + $0xa0] sm:$0xff]
    %v2489 = vld [vmem:[%s2467 + $0xa8] sm:$0xff]
    %v2490 = vld [vmem:[%s2467 + $0xb0] sm:$0xff]
    %v2491 = vld [vmem:[%s2467 + $0xb8] sm:$0xff]
    %v2492 = vld [vmem:[%s2467 + $0xc0] sm:$0xff]
    %v2493 = vld [vmem:[%s2467 + $0xc8] sm:$0xff]
    %v2494 = vld [vmem:[%s2467 + $0xd0] sm:$0xff]
    %v2495 = vld [vmem:[%s2467 + $0xd8] sm:$0xff]
    %v2496 = vld [vmem:[%s2467 + $0xe0] sm:$0xff]
    %v2497 = vld [vmem:[%s2467 + $0xe8] sm:$0xff]
    %v2498 = vld [vmem:[%s2467 + $0xf0] sm:$0xff]
    %v2499 = vld [vmem:[%s2467 + $0xf8] sm:$0xff]
    %s2500 = scalar_lea.vmem %s16, 128
    %v2501 = vld [vmem:[%s2500] sm:$0xf]
    %v2502 = vld [vmem:[%s2500 + $0x4] sm:$0xf]
    %v2503 = vld [vmem:[%s2500 + $0x8] sm:$0xf]
    %v2504 = vld [vmem:[%s2500 + $0xc] sm:$0xf]
    %v2505 = vld [vmem:[%s2500 + $0x10] sm:$0xf]
    %v2506 = vld [vmem:[%s2500 + $0x14] sm:$0xf]
    %v2507 = vld [vmem:[%s2500 + $0x18] sm:$0xf]
    %v2508 = vld [vmem:[%s2500 + $0x1c] sm:$0xf]
    %v2509 = vld [vmem:[%s2500 + $0x20] sm:$0xf]
    %v2510 = vld [vmem:[%s2500 + $0x24] sm:$0xf]
    %v2511 = vld [vmem:[%s2500 + $0x28] sm:$0xf]
    %v2512 = vld [vmem:[%s2500 + $0x2c] sm:$0xf]
    %v2513 = vld [vmem:[%s2500 + $0x30] sm:$0xf]
    %v2514 = vld [vmem:[%s2500 + $0x34] sm:$0xf]
    %v2515 = vld [vmem:[%s2500 + $0x38] sm:$0xf]
    %v2516 = vld [vmem:[%s2500 + $0x3c] sm:$0xf]
    %v2517 = vld [vmem:[%s2500 + $0x40] sm:$0xf]
    %v2518 = vld [vmem:[%s2500 + $0x44] sm:$0xf]
    %v2519 = vld [vmem:[%s2500 + $0x48] sm:$0xf]
    %v2520 = vld [vmem:[%s2500 + $0x4c] sm:$0xf]
    %v2521 = vld [vmem:[%s2500 + $0x50] sm:$0xf]
    %v2522 = vld [vmem:[%s2500 + $0x54] sm:$0xf]
    %v2523 = vld [vmem:[%s2500 + $0x58] sm:$0xf]
    %v2524 = vld [vmem:[%s2500 + $0x5c] sm:$0xf]
    %v2525 = vld [vmem:[%s2500 + $0x60] sm:$0xf]
    %v2526 = vld [vmem:[%s2500 + $0x64] sm:$0xf]
    %v2527 = vld [vmem:[%s2500 + $0x68] sm:$0xf]
    %v2528 = vld [vmem:[%s2500 + $0x6c] sm:$0xf]
    %v2529 = vld [vmem:[%s2500 + $0x70] sm:$0xf]
    %v2530 = vld [vmem:[%s2500 + $0x74] sm:$0xf]
    %v2531 = vld [vmem:[%s2500 + $0x78] sm:$0xf]
    %v2532 = vld [vmem:[%s2500 + $0x7c] sm:$0xf]
    %v2533 = vmul.f32 %v2361, %v2361
    %2534 = vadd.xlane.f32.xlu0 %v2533
    %v2535 = vpop.xlane.xlu0 %2534
    %v2536 = vmul.f32 %v2535, %v695
    %v2537 = vadd.f32 %v2536, 1e-06
    %v2538 = vrsqrt.pop %v2537
    %v2539 = vmul.f32 %v2361, %v2538
    %v2540 = vlaneseq
    %v2541 = vshrl.u32 %v2540, 7
    %v2542 = vsub.s32 0, %v2541
    %v2543 = vrot.slane %v2362, %v2542
    %v2544 = vmul.f32 %v2539, %v2543
    %v2545 = vpack.c.bf16 %v2544, %v2544
    %v2562 = vunpack.c.l.b16 %v2364
    %v2563 = vunpack.c.l.b16 %v2365
    %v2564 = vunpack.c.l.b16 %v2366
    %v2565 = vunpack.c.l.b16 %v2367
    %v2566 = vunpack.c.l.b16 %v2368
    %v2567 = vunpack.c.l.b16 %v2369
    %v2568 = vunpack.c.l.b16 %v2370
    %v2569 = vunpack.c.l.b16 %v2371
    %v2570 = vunpack.c.l.b16 %v2372
    %v2571 = vunpack.c.l.b16 %v2373
    %v2572 = vunpack.c.l.b16 %v2374
    %v2573 = vunpack.c.l.b16 %v2375
    %v2574 = vunpack.c.l.b16 %v2376
    %v2575 = vunpack.c.l.b16 %v2377
    %v2576 = vunpack.c.l.b16 %v2378
    %v2577 = vunpack.c.l.b16 %v2379
    %v2578 = vpack.c.b16 %v2563, %v2562
    %v2579 = vpack.c.b16 %v2565, %v2564
    %v2580 = vpack.c.b16 %v2567, %v2566
    %v2581 = vpack.c.b16 %v2569, %v2568
    %v2582 = vpack.c.b16 %v2571, %v2570
    %v2583 = vpack.c.b16 %v2573, %v2572
    %v2584 = vpack.c.b16 %v2575, %v2574
    %v2585 = vpack.c.b16 %v2577, %v2576
    %2594 = vmatprep.subr.bf16.mxu0 0
    %2595 = vmatpush1.bf16.msra.mxu0 %v2578
    %2596 = vmatprep.subr.bf16.mxu0 0
    %2597 = vmatpush1.bf16.msra.mxu0 %v2579
    %2598 = vmatprep.subr.bf16.mxu0 0
    %2599 = vmatpush1.bf16.msra.mxu0 %v2580
    %2600 = vmatprep.subr.bf16.mxu0 0
    %2601 = vmatpush1.bf16.msra.mxu0 %v2581
    %2602 = vmatprep.subr.bf16.mxu0 0
    %2603 = vmatpush1.bf16.msra.mxu0 %v2582
    %2604 = vmatprep.subr.bf16.mxu0 0
    %2605 = vmatpush1.bf16.msra.mxu0 %v2583
    %2606 = vmatprep.subr.bf16.mxu0 0
    %2607 = vmatpush1.bf16.msra.mxu0 %v2584
    %2608 = vmatprep.subr.bf16.mxu0 0
    %2609 = vmatpush1.bf16.msra.mxu0 %v2585
    %2610 = vmatprep.subr.bf16.mxu0 0
    %2611 = vmatpush1.bf16.msra.mxu0 0
    %2612 = vmatprep.subr.bf16.mxu0 0
    %2613 = vmatpush1.bf16.msra.mxu0 0
    %2614 = vmatprep.subr.bf16.mxu0 0
    %2615 = vmatpush1.bf16.msra.mxu0 0
    %2616 = vmatprep.subr.bf16.mxu0 0
    %2617 = vmatpush1.bf16.msra.mxu0 0
    %2618 = vmatprep.subr.bf16.mxu0 0
    %2619 = vmatpush1.bf16.msra.mxu0 0
    %2620 = vmatprep.subr.bf16.mxu0 0
    %2621 = vmatpush1.bf16.msra.mxu0 0
    %2622 = vmatprep.subr.bf16.mxu0 0
    %2623 = vmatpush1.bf16.msra.mxu0 0
    %2624 = vmatprep.subr.bf16.mxu0 0
    %2625 = vmatpush1.bf16.msra.mxu0 0
    %2626 = vmatprep.mubr.bf16.mxu0 0
    %2627 = vmatmul.mubr.bf16.gmra.mrb[0].mxu0 %v2545
    %v2628 = vpop.f32.mrb[0].mxu0
    %v2629 = vadd.f32 0.0, %v2628
    %v2630 = vpop.f32.mrb[0].mxu0
    %v2631 = vpop.f32.mrb[0].mxu0
    %v2632 = vpop.f32.mrb[0].mxu0
    %2633 = vdwg.mxu0
    %v2650 = vunpack.c.l.b16 %v2381
    %v2651 = vunpack.c.l.b16 %v2382
    %v2652 = vunpack.c.l.b16 %v2383
    %v2653 = vunpack.c.l.b16 %v2384
    %v2654 = vunpack.c.l.b16 %v2385
    %v2655 = vunpack.c.l.b16 %v2386
    %v2656 = vunpack.c.l.b16 %v2387
    %v2657 = vunpack.c.l.b16 %v2388
    %v2658 = vunpack.c.l.b16 %v2389
    %v2659 = vunpack.c.l.b16 %v2390
    %v2660 = vunpack.c.l.b16 %v2391
    %v2661 = vunpack.c.l.b16 %v2392
    %v2662 = vunpack.c.l.b16 %v2393
    %v2663 = vunpack.c.l.b16 %v2394
    %v2664 = vunpack.c.l.b16 %v2395
    %v2665 = vunpack.c.l.b16 %v2396
    %v2666 = vpack.c.b16 %v2651, %v2650
    %v2667 = vpack.c.b16 %v2653, %v2652
    %v2668 = vpack.c.b16 %v2655, %v2654
    %v2669 = vpack.c.b16 %v2657, %v2656
    %v2670 = vpack.c.b16 %v2659, %v2658
    %v2671 = vpack.c.b16 %v2661, %v2660
    %v2672 = vpack.c.b16 %v2663, %v2662
    %v2673 = vpack.c.b16 %v2665, %v2664
    %2682 = vmatprep.subr.bf16.mxu0 0
    %2683 = vmatpush1.bf16.msra.mxu0 %v2666
    %2684 = vmatprep.subr.bf16.mxu0 0
    %2685 = vmatpush1.bf16.msra.mxu0 %v2667
    %2686 = vmatprep.subr.bf16.mxu0 0
    %2687 = vmatpush1.bf16.msra.mxu0 %v2668
    %2688 = vmatprep.subr.bf16.mxu0 0
    %2689 = vmatpush1.bf16.msra.mxu0 %v2669
    %2690 = vmatprep.subr.bf16.mxu0 0
    %2691 = vmatpush1.bf16.msra.mxu0 %v2670
    %2692 = vmatprep.subr.bf16.mxu0 0
    %2693 = vmatpush1.bf16.msra.mxu0 %v2671
    %2694 = vmatprep.subr.bf16.mxu0 0
    %2695 = vmatpush1.bf16.msra.mxu0 %v2672
    %2696 = vmatprep.subr.bf16.mxu0 0
    %2697 = vmatpush1.bf16.msra.mxu0 %v2673
    %2698 = vmatprep.subr.bf16.mxu0 0
    %2699 = vmatpush1.bf16.msra.mxu0 0
    %2700 = vmatprep.subr.bf16.mxu0 0
    %2701 = vmatpush1.bf16.msra.mxu0 0
    %2702 = vmatprep.subr.bf16.mxu0 0
    %2703 = vmatpush1.bf16.msra.mxu0 0
    %2704 = vmatprep.subr.bf16.mxu0 0
    %2705 = vmatpush1.bf16.msra.mxu0 0
    %2706 = vmatprep.subr.bf16.mxu0 0
    %2707 = vmatpush1.bf16.msra.mxu0 0
    %2708 = vmatprep.subr.bf16.mxu0 0
    %2709 = vmatpush1.bf16.msra.mxu0 0
    %2710 = vmatprep.subr.bf16.mxu0 0
    %2711 = vmatpush1.bf16.msra.mxu0 0
    %2712 = vmatprep.subr.bf16.mxu0 0
    %2713 = vmatpush1.bf16.msra.mxu0 0
    %2714 = vmatprep.mubr.bf16.mxu0 0
    %2715 = vmatmul.mubr.bf16.gmra.mrb[0].mxu0 %v2545
    %v2716 = vpop.f32.mrb[0].mxu0
    %v2717 = vadd.f32 0.0, %v2716
    %v2718 = vpop.f32.mrb[0].mxu0
    %v2719 = vpop.f32.mrb[0].mxu0
    %v2720 = vpop.f32.mrb[0].mxu0
    %2721 = vdwg.mxu0
    %v2722 = vmul.f32 %v2629, %v511
    %2723 = vmatprep.subr.mxu0 0.0
    %2724 = vmatpush1.msra.mxu0 %v513
    %2725 = vmatprep.subr.mxu0 0.0
    %2726 = vmatpush1.msra.mxu0 %v514
    %2727 = vmatprep.subr.mxu0 0.0
    %2728 = vmatpush1.msra.mxu0 %v515
    %2729 = vmatprep.subr.mxu0 0.0
    %2730 = vmatpush1.msra.mxu0 %v516
    %2731 = vmatprep.subr.mxu0 0.0
    %2732 = vmatpush1.msra.mxu0 %v517
    %2733 = vmatprep.subr.mxu0 0.0
    %2734 = vmatpush1.msra.mxu0 %v518
    %2735 = vmatprep.subr.mxu0 0.0
    %2736 = vmatpush1.msra.mxu0 %v519
    %2737 = vmatprep.subr.mxu0 0.0
    %2738 = vmatpush1.msra.mxu0 %v520
    %2739 = vmatprep.subr.mxu0 0.0
    %2740 = vmatpush1.msra.mxu0 %v521
    %2741 = vmatprep.subr.mxu0 0.0
    %2742 = vmatpush1.msra.mxu0 %v522
    %2743 = vmatprep.subr.mxu0 0.0
    %2744 = vmatpush1.msra.mxu0 %v523
    %2745 = vmatprep.subr.mxu0 0.0
    %2746 = vmatpush1.msra.mxu0 %v524
    %2747 = vmatprep.subr.mxu0 0.0
    %2748 = vmatpush1.msra.mxu0 %v525
    %2749 = vmatprep.subr.mxu0 0.0
    %2750 = vmatpush1.msra.mxu0 %v526
    %2751 = vmatprep.subr.mxu0 0.0
    %2752 = vmatpush1.msra.mxu0 %v527
    %2753 = vmatprep.subr.mxu0 0.0
    %2754 = vmatpush1.msra.mxu0 %v528
    %2755 = vmatprep.subr.mxu0 0.0
    %2756 = vmatpush1.msra.mxu0 0.0
    %2757 = vmatprep.subr.mxu0 0.0
    %2758 = vmatpush1.msra.mxu0 0.0
    %2759 = vmatprep.subr.mxu0 0.0
    %2760 = vmatpush1.msra.mxu0 0.0
    %2761 = vmatprep.subr.mxu0 0.0
    %2762 = vmatpush1.msra.mxu0 0.0
    %2763 = vmatprep.subr.mxu0 0.0
    %2764 = vmatpush1.msra.mxu0 0.0
    %2765 = vmatprep.subr.mxu0 0.0
    %2766 = vmatpush1.msra.mxu0 0.0
    %2767 = vmatprep.subr.mxu0 0.0
    %2768 = vmatpush1.msra.mxu0 0.0
    %2769 = vmatprep.subr.mxu0 0.0
    %2770 = vmatpush1.msra.mxu0 0.0
    %2771 = vmatprep.subr.mxu0 0.0
    %2772 = vmatpush1.msra.mxu0 0.0
    %2773 = vmatprep.subr.mxu0 0.0
    %2774 = vmatpush1.msra.mxu0 0.0
    %2775 = vmatprep.subr.mxu0 0.0
    %2776 = vmatpush1.msra.mxu0 0.0
    %2777 = vmatprep.subr.mxu0 0.0
    %2778 = vmatpush1.msra.mxu0 0.0
    %2779 = vmatprep.subr.mxu0 0.0
    %2780 = vmatpush1.msra.mxu0 0.0
    %2781 = vmatprep.subr.mxu0 0.0
    %2782 = vmatpush1.msra.mxu0 0.0
    %2783 = vmatprep.subr.mxu0 0.0
    %2784 = vmatpush1.msra.mxu0 0.0
    %2785 = vmatprep.subr.mxu0 0.0
    %2786 = vmatpush1.msra.mxu0 0.0
    %2787 = vmatprep.mubr.f32.mxu0 0.0
    %2788 = vmatmul.mubr.f32.gmra.mrb[0].mxu0 %v2629
    %v2789 = vpop.f32.mrb[0].mxu0
    %v2790 = vadd.f32 0.0, %v2789
    %v2791 = vpop.f32.mrb[0].mxu0
    %2792 = vdwg.mxu0
    %v2793 = vmul.f32 %v2790, %v512
    %v2794 = vadd.f32 %v2722, %v2793
    %v2795 = vmul.f32 %v2717, %v511
    %v2797 = vsel %vm956, %v2717, 0
    %2799 = vmatprep.subr.mxu0 0.0
    %2800 = vmatpush1.msra.mxu0 %v513
    %2801 = vmatprep.subr.mxu0 0.0
    %2802 = vmatpush1.msra.mxu0 %v514
    %2803 = vmatprep.subr.mxu0 0.0
    %2804 = vmatpush1.msra.mxu0 %v515
    %2805 = vmatprep.subr.mxu0 0.0
    %2806 = vmatpush1.msra.mxu0 %v516
    %2807 = vmatprep.subr.mxu0 0.0
    %2808 = vmatpush1.msra.mxu0 0.0
    %2809 = vmatprep.subr.mxu0 0.0
    %2810 = vmatpush1.msra.mxu0 0.0
    %2811 = vmatprep.subr.mxu0 0.0
    %2812 = vmatpush1.msra.mxu0 0.0
    %2813 = vmatprep.subr.mxu0 0.0
    %2814 = vmatpush1.msra.mxu0 0.0
    %2815 = vmatprep.subr.mxu0 0.0
    %2816 = vmatpush1.msra.mxu0 0.0
    %2817 = vmatprep.subr.mxu0 0.0
    %2818 = vmatpush1.msra.mxu0 0.0
    %2819 = vmatprep.subr.mxu0 0.0
    %2820 = vmatpush1.msra.mxu0 0.0
    %2821 = vmatprep.subr.mxu0 0.0
    %2822 = vmatpush1.msra.mxu0 0.0
    %2823 = vmatprep.subr.mxu0 0.0
    %2824 = vmatpush1.msra.mxu0 0.0
    %2825 = vmatprep.subr.mxu0 0.0
    %2826 = vmatpush1.msra.mxu0 0.0
    %2827 = vmatprep.subr.mxu0 0.0
    %2828 = vmatpush1.msra.mxu0 0.0
    %2829 = vmatprep.subr.mxu0 0.0
    %2830 = vmatpush1.msra.mxu0 0.0
    %2831 = vmatprep.subr.mxu0 0.0
    %2832 = vmatpush1.msra.mxu0 0.0
    %2833 = vmatprep.subr.mxu0 0.0
    %2834 = vmatpush1.msra.mxu0 0.0
    %2835 = vmatprep.subr.mxu0 0.0
    %2836 = vmatpush1.msra.mxu0 0.0
    %2837 = vmatprep.subr.mxu0 0.0
    %2838 = vmatpush1.msra.mxu0 0.0
    %2839 = vmatprep.subr.mxu0 0.0
    %2840 = vmatpush1.msra.mxu0 0.0
    %2841 = vmatprep.subr.mxu0 0.0
    %2842 = vmatpush1.msra.mxu0 0.0
    %2843 = vmatprep.subr.mxu0 0.0
    %2844 = vmatpush1.msra.mxu0 0.0
    %2845 = vmatprep.subr.mxu0 0.0
    %2846 = vmatpush1.msra.mxu0 0.0
    %2847 = vmatprep.subr.mxu0 0.0
    %2848 = vmatpush1.msra.mxu0 0.0
    %2849 = vmatprep.subr.mxu0 0.0
    %2850 = vmatpush1.msra.mxu0 0.0
    %2851 = vmatprep.subr.mxu0 0.0
    %2852 = vmatpush1.msra.mxu0 0.0
    %2853 = vmatprep.subr.mxu0 0.0
    %2854 = vmatpush1.msra.mxu0 0.0
    %2855 = vmatprep.subr.mxu0 0.0
    %2856 = vmatpush1.msra.mxu0 0.0
    %2857 = vmatprep.subr.mxu0 0.0
    %2858 = vmatpush1.msra.mxu0 0.0
    %2859 = vmatprep.subr.mxu0 0.0
    %2860 = vmatpush1.msra.mxu0 0.0
    %2861 = vmatprep.subr.mxu0 0.0
    %2862 = vmatpush1.msra.mxu0 0.0
    %2863 = vmatprep.mubr.f32.mxu0 0.0
    %2864 = vmatmul.mubr.f32.gmra.mrb[0].mxu0 %v2797
    %v2865 = vpop.f32.mrb[0].mxu0
    %v2866 = vadd.f32 0.0, %v2865
    %v2867 = vpop.f32.mrb[0].mxu0
    %2868 = vdwg.mxu0
    %v2869 = vmul.f32 %v2866, %v512
    %v2870 = vadd.f32 %v2795, %v2869
    %2872 = vrot.lane.b32.xlu0 %v2794, 96
    %v2873 = vpop.permute.xlu0 %2872
    %2874 = vrot.lane.b32.xlu0 %v2794, 64
    %v2875 = vpop.permute.xlu0 %2874
    %2876 = vrot.lane.b32.xlu0 %v2794, 32
    %v2877 = vpop.permute.xlu0 %2876
    %v2878 = vsel %vm956, %v2794, 0
    %v2880 = vsel %vm956, %v2873, 0
    %v2882 = vsel %vm956, %v2875, 0
    %v2884 = vsel %vm956, %v2877, 0
    %v2887 = vsel %vm956, %v2870, 0
    %2889 = vmatprep.subr.mxu0 0.0
    %2890 = vmatpush1.xpose.msra.mxu0 %v2887
    %2891 = vmatprep.subr.mxu0 0.0
    %2892 = vmatpush1.xpose.msra.mxu0 0.0
    %2893 = vmatprep.subr.mxu0 0.0
    %2894 = vmatpush1.xpose.msra.mxu0 0.0
    %2895 = vmatprep.subr.mxu0 0.0
    %2896 = vmatpush1.xpose.msra.mxu0 0.0
    %2897 = vmatprep.subr.mxu0 0.0
    %2898 = vmatpush1.xpose.msra.mxu0 0.0
    %2899 = vmatprep.subr.mxu0 0.0
    %2900 = vmatpush1.xpose.msra.mxu0 0.0
    %2901 = vmatprep.subr.mxu0 0.0
    %2902 = vmatpush1.xpose.msra.mxu0 0.0
    %2903 = vmatprep.subr.mxu0 0.0
    %2904 = vmatpush1.xpose.msra.mxu0 0.0
    %2905 = vmatprep.subr.mxu0 0.0
    %2906 = vmatpush1.xpose.msra.mxu0 0.0
    %2907 = vmatprep.subr.mxu0 0.0
    %2908 = vmatpush1.xpose.msra.mxu0 0.0
    %2909 = vmatprep.subr.mxu0 0.0
    %2910 = vmatpush1.xpose.msra.mxu0 0.0
    %2911 = vmatprep.subr.mxu0 0.0
    %2912 = vmatpush1.xpose.msra.mxu0 0.0
    %2913 = vmatprep.subr.mxu0 0.0
    %2914 = vmatpush1.xpose.msra.mxu0 0.0
    %2915 = vmatprep.subr.mxu0 0.0
    %2916 = vmatpush1.xpose.msra.mxu0 0.0
    %2917 = vmatprep.subr.mxu0 0.0
    %2918 = vmatpush1.xpose.msra.mxu0 0.0
    %2919 = vmatprep.subr.mxu0 0.0
    %2920 = vmatpush1.xpose.msra.mxu0 0.0
    %2921 = vmatprep.subr.mxu0 0.0
    %2922 = vmatpush1.xpose.msra.mxu0 0.0
    %2923 = vmatprep.subr.mxu0 0.0
    %2924 = vmatpush1.xpose.msra.mxu0 0.0
    %2925 = vmatprep.subr.mxu0 0.0
    %2926 = vmatpush1.xpose.msra.mxu0 0.0
    %2927 = vmatprep.subr.mxu0 0.0
    %2928 = vmatpush1.xpose.msra.mxu0 0.0
    %2929 = vmatprep.subr.mxu0 0.0
    %2930 = vmatpush1.xpose.msra.mxu0 0.0
    %2931 = vmatprep.subr.mxu0 0.0
    %2932 = vmatpush1.xpose.msra.mxu0 0.0
    %2933 = vmatprep.subr.mxu0 0.0
    %2934 = vmatpush1.xpose.msra.mxu0 0.0
    %2935 = vmatprep.subr.mxu0 0.0
    %2936 = vmatpush1.xpose.msra.mxu0 0.0
    %2937 = vmatprep.subr.mxu0 0.0
    %2938 = vmatpush1.xpose.msra.mxu0 0.0
    %2939 = vmatprep.subr.mxu0 0.0
    %2940 = vmatpush1.xpose.msra.mxu0 0.0
    %2941 = vmatprep.subr.mxu0 0.0
    %2942 = vmatpush1.xpose.msra.mxu0 0.0
    %2943 = vmatprep.subr.mxu0 0.0
    %2944 = vmatpush1.xpose.msra.mxu0 0.0
    %2945 = vmatprep.subr.mxu0 0.0
    %2946 = vmatpush1.xpose.msra.mxu0 0.0
    %2947 = vmatprep.subr.mxu0 0.0
    %2948 = vmatpush1.xpose.msra.mxu0 0.0
    %2949 = vmatprep.subr.mxu0 0.0
    %2950 = vmatpush1.xpose.msra.mxu0 0.0
    %2951 = vmatprep.subr.mxu0 0.0
    %2952 = vmatpush1.xpose.msra.mxu0 0.0
    %2953 = vmatprep.mubr.f32.mxu0 0.0
    %2954 = vmatmul.mubr.f32.gmra.mrb[0].mxu0 %v2878
    %v2955 = vpop.f32.mrb[0].mxu0
    %v2956 = vadd.f32 0.0, %v2955
    %v2957 = vpop.f32.mrb[0].mxu0
    %2958 = vmatprep.mubr.f32.mxu0 0.0
    %2959 = vmatmul.mubr.f32.gmra.mrb[0].mxu0 %v2880
    %v2960 = vpop.f32.mrb[0].mxu0
    %v2961 = vadd.f32 0.0, %v2960
    %v2962 = vpop.f32.mrb[0].mxu0
    %2963 = vmatprep.mubr.f32.mxu0 0.0
    %2964 = vmatmul.mubr.f32.gmra.mrb[0].mxu0 %v2882
    %v2965 = vpop.f32.mrb[0].mxu0
    %v2966 = vadd.f32 0.0, %v2965
    %v2967 = vpop.f32.mrb[0].mxu0
    %2968 = vmatprep.mubr.f32.mxu0 0.0
    %2969 = vmatmul.mubr.f32.gmra.mrb[0].mxu0 %v2884
    %v2970 = vpop.f32.mrb[0].mxu0
    %v2971 = vadd.f32 0.0, %v2970
    %v2972 = vpop.f32.mrb[0].mxu0
    %2973 = vdwg.mxu0
    %v2974 = vmul.f32 %v2956, 0.17677669
    %v2975 = vmul.f32 %v2961, 0.17677669
    %v2976 = vmul.f32 %v2966, 0.17677669
    %v2977 = vmul.f32 %v2971, 0.17677669
    %v2978 = vsel %vm1141, %v2974, -1e+30
    %v2979 = vsel %vm1141, %v2975, -1e+30
    %v2980 = vsel %vm1141, %v2976, -1e+30
    %v2981 = vsel %vm1141, %v2977, -1e+30
    %v2982 = vsel %vm1146, %v2978, -inf
    %2983 = vmax.xlane.f32.xlu0 %v2982
    %v2984 = vpop.xlane.xlu0 %2983
    %v2985 = vsel %vm1146, %v2979, -inf
    %2986 = vmax.xlane.f32.xlu0 %v2985
    %v2987 = vpop.xlane.xlu0 %2986
    %v2988 = vsel %vm1146, %v2980, -inf
    %2989 = vmax.xlane.f32.xlu0 %v2988
    %v2990 = vpop.xlane.xlu0 %2989
    %v2991 = vsel %vm1146, %v2981, -inf
    %2992 = vmax.xlane.f32.xlu0 %v2991
    %v2993 = vpop.xlane.xlu0 %2992
    %v2994 = vsub.f32 %v2978, %v2984
    %v2995 = vsub.f32 %v2979, %v2987
    %v2996 = vsub.f32 %v2980, %v2990
    %v2997 = vsub.f32 %v2981, %v2993
    %v2998 = vmul.f32 %v2994, 1.442695
    %v2999 = vpow.pop %v2998
    %v3000 = vmul.f32 %v2995, 1.442695
    %v3001 = vpow.pop %v3000
    %v3002 = vmul.f32 %v2996, 1.442695
    %v3003 = vpow.pop %v3002
    %v3004 = vmul.f32 %v2997, 1.442695
    %v3005 = vpow.pop %v3004
    %v3006 = vsel %vm1146, %v2999, 0.0
    %3007 = vadd.xlane.f32.xlu0 %v3006
    %v3008 = vpop.xlane.xlu0 %3007
    %v3009 = vsel %vm1146, %v3001, 0.0
    %3010 = vadd.xlane.f32.xlu0 %v3009
    %v3011 = vpop.xlane.xlu0 %3010
    %v3012 = vsel %vm1146, %v3003, 0.0
    %3013 = vadd.xlane.f32.xlu0 %v3012
    %v3014 = vpop.xlane.xlu0 %3013
    %v3015 = vsel %vm1146, %v3005, 0.0
    %3016 = vadd.xlane.f32.xlu0 %v3015
    %v3017 = vpop.xlane.xlu0 %3016
    %v3018 = vrcp.pop %v3008
    %v3019 = vrcp.pop %v3011
    %v3020 = vrcp.pop %v3014
    %v3021 = vrcp.pop %v3017
    %v3022 = vmul.f32 %v2999, %v3018
    %v3023 = vmul.f32 %v3001, %v3019
    %v3024 = vmul.f32 %v3003, %v3020
    %v3025 = vmul.f32 %v3005, %v3021
    %3026 = vrot.lane.b32.xlu0 %v2717, 96
    %v3027 = vpop.permute.xlu0 %3026
    %v3030 = vsel %vm1146, %v3022, 0
    %v3033 = vsel %vm1146, %v3023, 0
    %v3036 = vsel %vm1146, %v3024, 0
    %v3039 = vsel %vm1146, %v3025, 0
    %3041 = vmatprep.subr.mxu0 0.0
    %3042 = vmatpush1.msra.mxu0 %v3027
    %3043 = vmatprep.subr.mxu0 0.0
    %3044 = vmatpush1.msra.mxu0 0.0
    %3045 = vmatprep.subr.mxu0 0.0
    %3046 = vmatpush1.msra.mxu0 0.0
    %3047 = vmatprep.subr.mxu0 0.0
    %3048 = vmatpush1.msra.mxu0 0.0
    %3049 = vmatprep.subr.mxu0 0.0
    %3050 = vmatpush1.msra.mxu0 0.0
    %3051 = vmatprep.subr.mxu0 0.0
    %3052 = vmatpush1.msra.mxu0 0.0
    %3053 = vmatprep.subr.mxu0 0.0
    %3054 = vmatpush1.msra.mxu0 0.0
    %3055 = vmatprep.subr.mxu0 0.0
    %3056 = vmatpush1.msra.mxu0 0.0
    %3057 = vmatprep.subr.mxu0 0.0
    %3058 = vmatpush1.msra.mxu0 0.0
    %3059 = vmatprep.subr.mxu0 0.0
    %3060 = vmatpush1.msra.mxu0 0.0
    %3061 = vmatprep.subr.mxu0 0.0
    %3062 = vmatpush1.msra.mxu0 0.0
    %3063 = vmatprep.subr.mxu0 0.0
    %3064 = vmatpush1.msra.mxu0 0.0
    %3065 = vmatprep.subr.mxu0 0.0
    %3066 = vmatpush1.msra.mxu0 0.0
    %3067 = vmatprep.subr.mxu0 0.0
    %3068 = vmatpush1.msra.mxu0 0.0
    %3069 = vmatprep.subr.mxu0 0.0
    %3070 = vmatpush1.msra.mxu0 0.0
    %3071 = vmatprep.subr.mxu0 0.0
    %3072 = vmatpush1.msra.mxu0 0.0
    %3073 = vmatprep.subr.mxu0 0.0
    %3074 = vmatpush1.msra.mxu0 0.0
    %3075 = vmatprep.subr.mxu0 0.0
    %3076 = vmatpush1.msra.mxu0 0.0
    %3077 = vmatprep.subr.mxu0 0.0
    %3078 = vmatpush1.msra.mxu0 0.0
    %3079 = vmatprep.subr.mxu0 0.0
    %3080 = vmatpush1.msra.mxu0 0.0
    %3081 = vmatprep.subr.mxu0 0.0
    %3082 = vmatpush1.msra.mxu0 0.0
    %3083 = vmatprep.subr.mxu0 0.0
    %3084 = vmatpush1.msra.mxu0 0.0
    %3085 = vmatprep.subr.mxu0 0.0
    %3086 = vmatpush1.msra.mxu0 0.0
    %3087 = vmatprep.subr.mxu0 0.0
    %3088 = vmatpush1.msra.mxu0 0.0
    %3089 = vmatprep.subr.mxu0 0.0
    %3090 = vmatpush1.msra.mxu0 0.0
    %3091 = vmatprep.subr.mxu0 0.0
    %3092 = vmatpush1.msra.mxu0 0.0
    %3093 = vmatprep.subr.mxu0 0.0
    %3094 = vmatpush1.msra.mxu0 0.0
    %3095 = vmatprep.subr.mxu0 0.0
    %3096 = vmatpush1.msra.mxu0 0.0
    %3097 = vmatprep.subr.mxu0 0.0
    %3098 = vmatpush1.msra.mxu0 0.0
    %3099 = vmatprep.subr.mxu0 0.0
    %3100 = vmatpush1.msra.mxu0 0.0
    %3101 = vmatprep.subr.mxu0 0.0
    %3102 = vmatpush1.msra.mxu0 0.0
    %3103 = vmatprep.subr.mxu0 0.0
    %3104 = vmatpush1.msra.mxu0 0.0
    %3105 = vmatprep.mubr.f32.mxu0 0.0
    %3106 = vmatmul.mubr.f32.gmra.mrb[0].mxu0 %v3030
    %v3107 = vpop.f32.mrb[0].mxu0
    %v3108 = vadd.f32 0.0, %v3107
    %v3109 = vpop.f32.mrb[0].mxu0
    %3110 = vmatprep.mubr.f32.mxu0 0.0
    %3111 = vmatmul.mubr.f32.gmra.mrb[0].mxu0 %v3033
    %v3112 = vpop.f32.mrb[0].mxu0
    %v3113 = vadd.f32 0.0, %v3112
    %v3114 = vpop.f32.mrb[0].mxu0
    %3115 = vmatprep.mubr.f32.mxu0 0.0
    %3116 = vmatmul.mubr.f32.gmra.mrb[0].mxu0 %v3036
    %v3117 = vpop.f32.mrb[0].mxu0
    %v3118 = vadd.f32 0.0, %v3117
    %v3119 = vpop.f32.mrb[0].mxu0
    %3120 = vmatprep.mubr.f32.mxu0 0.0
    %3121 = vmatmul.mubr.f32.gmra.mrb[0].mxu0 %v3039
    %v3122 = vpop.f32.mrb[0].mxu0
    %v3123 = vadd.f32 0.0, %v3122
    %v3124 = vpop.f32.mrb[0].mxu0
    %3125 = vdwg.mxu0
    %3127 = vrot.lane.b32.xlu0 %v3113, 32
    %v3128 = vpop.permute.xlu0 %3127
    %3131 = vrot.lane.b32.xlu0 %v3118, 64
    %v3132 = vpop.permute.xlu0 %3131
    %3135 = vrot.lane.b32.xlu0 %v3123, 96
    %v3136 = vpop.permute.xlu0 %3135
    %v3138 = vsel %vm956, %v3108, %v3128
    %v3139 = vsel %vm1304, %v3138, %v3132
    %v3140 = vsel %vm1306, %v3139, %v3136
    %v3141 = vpack.c.bf16 %v3140, %v3140
    %v3158 = vunpack.c.l.b16 %v2398
    %v3159 = vunpack.c.l.b16 %v2399
    %v3160 = vunpack.c.l.b16 %v2400
    %v3161 = vunpack.c.l.b16 %v2401
    %v3162 = vunpack.c.l.b16 %v2402
    %v3163 = vunpack.c.l.b16 %v2403
    %v3164 = vunpack.c.l.b16 %v2404
    %v3165 = vunpack.c.l.b16 %v2405
    %v3166 = vunpack.c.l.b16 %v2406
    %v3167 = vunpack.c.l.b16 %v2407
    %v3168 = vunpack.c.l.b16 %v2408
    %v3169 = vunpack.c.l.b16 %v2409
    %v3170 = vunpack.c.l.b16 %v2410
    %v3171 = vunpack.c.l.b16 %v2411
    %v3172 = vunpack.c.l.b16 %v2412
    %v3173 = vunpack.c.l.b16 %v2413
    %v3174 = vpack.c.b16 %v3159, %v3158
    %v3175 = vpack.c.b16 %v3161, %v3160
    %v3176 = vpack.c.b16 %v3163, %v3162
    %v3177 = vpack.c.b16 %v3165, %v3164
    %v3178 = vpack.c.b16 %v3167, %v3166
    %v3179 = vpack.c.b16 %v3169, %v3168
    %v3180 = vpack.c.b16 %v3171, %v3170
    %v3181 = vpack.c.b16 %v3173, %v3172
    %3190 = vmatprep.subr.bf16.mxu0 0
    %3191 = vmatpush1.bf16.msra.mxu0 %v3174
    %3192 = vmatprep.subr.bf16.mxu0 0
    %3193 = vmatpush1.bf16.msra.mxu0 %v3175
    %3194 = vmatprep.subr.bf16.mxu0 0
    %3195 = vmatpush1.bf16.msra.mxu0 %v3176
    %3196 = vmatprep.subr.bf16.mxu0 0
    %3197 = vmatpush1.bf16.msra.mxu0 %v3177
    %3198 = vmatprep.subr.bf16.mxu0 0
    %3199 = vmatpush1.bf16.msra.mxu0 %v3178
    %3200 = vmatprep.subr.bf16.mxu0 0
    %3201 = vmatpush1.bf16.msra.mxu0 %v3179
    %3202 = vmatprep.subr.bf16.mxu0 0
    %3203 = vmatpush1.bf16.msra.mxu0 %v3180
    %3204 = vmatprep.subr.bf16.mxu0 0
    %3205 = vmatpush1.bf16.msra.mxu0 %v3181
    %3206 = vmatprep.subr.bf16.mxu0 0
    %3207 = vmatpush1.bf16.msra.mxu0 0
    %3208 = vmatprep.subr.bf16.mxu0 0
    %3209 = vmatpush1.bf16.msra.mxu0 0
    %3210 = vmatprep.subr.bf16.mxu0 0
    %3211 = vmatpush1.bf16.msra.mxu0 0
    %3212 = vmatprep.subr.bf16.mxu0 0
    %3213 = vmatpush1.bf16.msra.mxu0 0
    %3214 = vmatprep.subr.bf16.mxu0 0
    %3215 = vmatpush1.bf16.msra.mxu0 0
    %3216 = vmatprep.subr.bf16.mxu0 0
    %3217 = vmatpush1.bf16.msra.mxu0 0
    %3218 = vmatprep.subr.bf16.mxu0 0
    %3219 = vmatpush1.bf16.msra.mxu0 0
    %3220 = vmatprep.subr.bf16.mxu0 0
    %3221 = vmatpush1.bf16.msra.mxu0 0
    %3222 = vmatprep.mubr.bf16.mxu0 0
    %3223 = vmatmul.mubr.bf16.gmra.mrb[0].mxu0 %v3141
    %v3224 = vpop.f32.mrb[0].mxu0
    %v3225 = vadd.f32 0.0, %v3224
    %v3226 = vpop.f32.mrb[0].mxu0
    %v3227 = vpop.f32.mrb[0].mxu0
    %v3228 = vpop.f32.mrb[0].mxu0
    %3229 = vdwg.mxu0
    %v3230 = vadd.f32 %v2361, %v3225
    %v3231 = vmul.f32 %v3230, %v3230
    %3232 = vadd.xlane.f32.xlu0 %v3231
    %v3233 = vpop.xlane.xlu0 %3232
    %v3234 = vmul.f32 %v3233, %v695
    %v3235 = vadd.f32 %v3234, 1e-06
    %v3236 = vrsqrt.pop %v3235
    %v3237 = vmul.f32 %v3230, %v3236
    %v3238 = vlaneseq
    %v3239 = vshrl.u32 %v3238, 7
    %v3240 = vsub.s32 0, %v3239
    %v3241 = vrot.slane %v2414, %v3240
    %v3242 = vmul.f32 %v3237, %v3241
    %v3243 = vpack.c.bf16 %v3242, %v3242
    %v3260 = vunpack.c.l.b16 %v2416
    %v3261 = vunpack.c.l.b16 %v2417
    %v3262 = vunpack.c.l.b16 %v2418
    %v3263 = vunpack.c.l.b16 %v2419
    %v3264 = vunpack.c.l.b16 %v2420
    %v3265 = vunpack.c.l.b16 %v2421
    %v3266 = vunpack.c.l.b16 %v2422
    %v3267 = vunpack.c.l.b16 %v2423
    %v3268 = vunpack.c.l.b16 %v2424
    %v3269 = vunpack.c.l.b16 %v2425
    %v3270 = vunpack.c.l.b16 %v2426
    %v3271 = vunpack.c.l.b16 %v2427
    %v3272 = vunpack.c.l.b16 %v2428
    %v3273 = vunpack.c.l.b16 %v2429
    %v3274 = vunpack.c.l.b16 %v2430
    %v3275 = vunpack.c.l.b16 %v2431
    %v3276 = vpack.c.b16 %v3261, %v3260
    %v3277 = vpack.c.b16 %v3263, %v3262
    %v3278 = vpack.c.b16 %v3265, %v3264
    %v3279 = vpack.c.b16 %v3267, %v3266
    %v3280 = vpack.c.b16 %v3269, %v3268
    %v3281 = vpack.c.b16 %v3271, %v3270
    %v3282 = vpack.c.b16 %v3273, %v3272
    %v3283 = vpack.c.b16 %v3275, %v3274
    %3292 = vmatprep.subr.bf16.mxu0 0
    %3293 = vmatpush1.bf16.msra.mxu0 %v3276
    %3294 = vmatprep.subr.bf16.mxu0 0
    %3295 = vmatpush1.bf16.msra.mxu0 %v3277
    %3296 = vmatprep.subr.bf16.mxu0 0
    %3297 = vmatpush1.bf16.msra.mxu0 %v3278
    %3298 = vmatprep.subr.bf16.mxu0 0
    %3299 = vmatpush1.bf16.msra.mxu0 %v3279
    %3300 = vmatprep.subr.bf16.mxu0 0
    %3301 = vmatpush1.bf16.msra.mxu0 %v3280
    %3302 = vmatprep.subr.bf16.mxu0 0
    %3303 = vmatpush1.bf16.msra.mxu0 %v3281
    %3304 = vmatprep.subr.bf16.mxu0 0
    %3305 = vmatpush1.bf16.msra.mxu0 %v3282
    %3306 = vmatprep.subr.bf16.mxu0 0
    %3307 = vmatpush1.bf16.msra.mxu0 %v3283
    %3308 = vmatprep.subr.bf16.mxu0 0
    %3309 = vmatpush1.bf16.msra.mxu0 0
    %3310 = vmatprep.subr.bf16.mxu0 0
    %3311 = vmatpush1.bf16.msra.mxu0 0
    %3312 = vmatprep.subr.bf16.mxu0 0
    %3313 = vmatpush1.bf16.msra.mxu0 0
    %3314 = vmatprep.subr.bf16.mxu0 0
    %3315 = vmatpush1.bf16.msra.mxu0 0
    %3316 = vmatprep.subr.bf16.mxu0 0
    %3317 = vmatpush1.bf16.msra.mxu0 0
    %3318 = vmatprep.subr.bf16.mxu0 0
    %3319 = vmatpush1.bf16.msra.mxu0 0
    %3320 = vmatprep.subr.bf16.mxu0 0
    %3321 = vmatpush1.bf16.msra.mxu0 0
    %3322 = vmatprep.subr.bf16.mxu0 0
    %3323 = vmatpush1.bf16.msra.mxu0 0
    %3324 = vmatprep.mubr.bf16.mxu0 0
    %3325 = vmatmul.mubr.bf16.gmra.mrb[0].mxu0 %v3243
    %v3326 = vpop.f32.mrb[0].mxu0
    %v3327 = vadd.f32 0.0, %v3326
    %v3328 = vpop.f32.mrb[0].mxu0
    %v3329 = vpop.f32.mrb[0].mxu0
    %v3330 = vpop.f32.mrb[0].mxu0
    %3331 = vdwg.mxu0
    %v3348 = vunpack.c.l.b16 %v2433
    %v3349 = vunpack.c.l.b16 %v2434
    %v3350 = vunpack.c.l.b16 %v2435
    %v3351 = vunpack.c.l.b16 %v2436
    %v3352 = vunpack.c.l.b16 %v2437
    %v3353 = vunpack.c.l.b16 %v2438
    %v3354 = vunpack.c.l.b16 %v2439
    %v3355 = vunpack.c.l.b16 %v2440
    %v3356 = vunpack.c.l.b16 %v2441
    %v3357 = vunpack.c.l.b16 %v2442
    %v3358 = vunpack.c.l.b16 %v2443
    %v3359 = vunpack.c.l.b16 %v2444
    %v3360 = vunpack.c.l.b16 %v2445
    %v3361 = vunpack.c.l.b16 %v2446
    %v3362 = vunpack.c.l.b16 %v2447
    %v3363 = vunpack.c.l.b16 %v2448
    %v3364 = vpack.c.b16 %v3349, %v3348
    %v3365 = vpack.c.b16 %v3351, %v3350
    %v3366 = vpack.c.b16 %v3353, %v3352
    %v3367 = vpack.c.b16 %v3355, %v3354
    %v3368 = vpack.c.b16 %v3357, %v3356
    %v3369 = vpack.c.b16 %v3359, %v3358
    %v3370 = vpack.c.b16 %v3361, %v3360
    %v3371 = vpack.c.b16 %v3363, %v3362
    %3380 = vmatprep.subr.bf16.mxu0 0
    %3381 = vmatpush1.bf16.msra.mxu0 %v3364
    %3382 = vmatprep.subr.bf16.mxu0 0
    %3383 = vmatpush1.bf16.msra.mxu0 %v3365
    %3384 = vmatprep.subr.bf16.mxu0 0
    %3385 = vmatpush1.bf16.msra.mxu0 %v3366
    %3386 = vmatprep.subr.bf16.mxu0 0
    %3387 = vmatpush1.bf16.msra.mxu0 %v3367
    %3388 = vmatprep.subr.bf16.mxu0 0
    %3389 = vmatpush1.bf16.msra.mxu0 %v3368
    %3390 = vmatprep.subr.bf16.mxu0 0
    %3391 = vmatpush1.bf16.msra.mxu0 %v3369
    %3392 = vmatprep.subr.bf16.mxu0 0
    %3393 = vmatpush1.bf16.msra.mxu0 %v3370
    %3394 = vmatprep.subr.bf16.mxu0 0
    %3395 = vmatpush1.bf16.msra.mxu0 %v3371
    %3396 = vmatprep.subr.bf16.mxu0 0
    %3397 = vmatpush1.bf16.msra.mxu0 0
    %3398 = vmatprep.subr.bf16.mxu0 0
    %3399 = vmatpush1.bf16.msra.mxu0 0
    %3400 = vmatprep.subr.bf16.mxu0 0
    %3401 = vmatpush1.bf16.msra.mxu0 0
    %3402 = vmatprep.subr.bf16.mxu0 0
    %3403 = vmatpush1.bf16.msra.mxu0 0
    %3404 = vmatprep.subr.bf16.mxu0 0
    %3405 = vmatpush1.bf16.msra.mxu0 0
    %3406 = vmatprep.subr.bf16.mxu0 0
    %3407 = vmatpush1.bf16.msra.mxu0 0
    %3408 = vmatprep.subr.bf16.mxu0 0
    %3409 = vmatpush1.bf16.msra.mxu0 0
    %3410 = vmatprep.subr.bf16.mxu0 0
    %3411 = vmatpush1.bf16.msra.mxu0 0
    %3412 = vmatprep.mubr.bf16.mxu0 0
    %3413 = vmatmul.mubr.bf16.gmra.mrb[0].mxu0 %v1499
    %v3414 = vpop.f32.mrb[0].mxu0
    %v3415 = vadd.f32 0.0, %v3414
    %v3416 = vpop.f32.mrb[0].mxu0
    %v3417 = vpop.f32.mrb[0].mxu0
    %v3418 = vadd.f32 0.0, %v3417
    %v3419 = vpop.f32.mrb[0].mxu0
    %3420 = vdwg.mxu0
    %3422 = vrot.lane.b32.xlu0 %v3327, 96
    %v3423 = vpop.permute.xlu0 %3422
    %3424 = vrot.lane.b32.xlu0 %v3327, 64
    %v3425 = vpop.permute.xlu0 %3424
    %3426 = vrot.lane.b32.xlu0 %v3327, 32
    %v3427 = vpop.permute.xlu0 %3426
    %v3428 = vsel %vm956, %v3327, 0
    %v3430 = vsel %vm956, %v3423, 0
    %v3432 = vsel %vm956, %v3425, 0
    %v3434 = vsel %vm956, %v3427, 0
    %v3437 = vsel %vm956, %v3415, 0
    %v3440 = vsel %vm956, %v3418, 0
    %3442 = vmatprep.subr.mxu0 0.0
    %3443 = vmatpush1.xpose.msra.mxu0 %v3437
    %3444 = vmatprep.subr.mxu0 0.0
    %3445 = vmatpush1.xpose.msra.mxu0 %v3440
    %3446 = vmatprep.subr.mxu0 0.0
    %3447 = vmatpush1.xpose.msra.mxu0 0.0
    %3448 = vmatprep.subr.mxu0 0.0
    %3449 = vmatpush1.xpose.msra.mxu0 0.0
    %3450 = vmatprep.subr.mxu0 0.0
    %3451 = vmatpush1.xpose.msra.mxu0 0.0
    %3452 = vmatprep.subr.mxu0 0.0
    %3453 = vmatpush1.xpose.msra.mxu0 0.0
    %3454 = vmatprep.subr.mxu0 0.0
    %3455 = vmatpush1.xpose.msra.mxu0 0.0
    %3456 = vmatprep.subr.mxu0 0.0
    %3457 = vmatpush1.xpose.msra.mxu0 0.0
    %3458 = vmatprep.subr.mxu0 0.0
    %3459 = vmatpush1.xpose.msra.mxu0 0.0
    %3460 = vmatprep.subr.mxu0 0.0
    %3461 = vmatpush1.xpose.msra.mxu0 0.0
    %3462 = vmatprep.subr.mxu0 0.0
    %3463 = vmatpush1.xpose.msra.mxu0 0.0
    %3464 = vmatprep.subr.mxu0 0.0
    %3465 = vmatpush1.xpose.msra.mxu0 0.0
    %3466 = vmatprep.subr.mxu0 0.0
    %3467 = vmatpush1.xpose.msra.mxu0 0.0
    %3468 = vmatprep.subr.mxu0 0.0
    %3469 = vmatpush1.xpose.msra.mxu0 0.0
    %3470 = vmatprep.subr.mxu0 0.0
    %3471 = vmatpush1.xpose.msra.mxu0 0.0
    %3472 = vmatprep.subr.mxu0 0.0
    %3473 = vmatpush1.xpose.msra.mxu0 0.0
    %3474 = vmatprep.subr.mxu0 0.0
    %3475 = vmatpush1.xpose.msra.mxu0 0.0
    %3476 = vmatprep.subr.mxu0 0.0
    %3477 = vmatpush1.xpose.msra.mxu0 0.0
    %3478 = vmatprep.subr.mxu0 0.0
    %3479 = vmatpush1.xpose.msra.mxu0 0.0
    %3480 = vmatprep.subr.mxu0 0.0
    %3481 = vmatpush1.xpose.msra.mxu0 0.0
    %3482 = vmatprep.subr.mxu0 0.0
    %3483 = vmatpush1.xpose.msra.mxu0 0.0
    %3484 = vmatprep.subr.mxu0 0.0
    %3485 = vmatpush1.xpose.msra.mxu0 0.0
    %3486 = vmatprep.subr.mxu0 0.0
    %3487 = vmatpush1.xpose.msra.mxu0 0.0
    %3488 = vmatprep.subr.mxu0 0.0
    %3489 = vmatpush1.xpose.msra.mxu0 0.0
    %3490 = vmatprep.subr.mxu0 0.0
    %3491 = vmatpush1.xpose.msra.mxu0 0.0
    %3492 = vmatprep.subr.mxu0 0.0
    %3493 = vmatpush1.xpose.msra.mxu0 0.0
    %3494 = vmatprep.subr.mxu0 0.0
    %3495 = vmatpush1.xpose.msra.mxu0 0.0
    %3496 = vmatprep.subr.mxu0 0.0
    %3497 = vmatpush1.xpose.msra.mxu0 0.0
    %3498 = vmatprep.subr.mxu0 0.0
    %3499 = vmatpush1.xpose.msra.mxu0 0.0
    %3500 = vmatprep.subr.mxu0 0.0
    %3501 = vmatpush1.xpose.msra.mxu0 0.0
    %3502 = vmatprep.subr.mxu0 0.0
    %3503 = vmatpush1.xpose.msra.mxu0 0.0
    %3504 = vmatprep.subr.mxu0 0.0
    %3505 = vmatpush1.xpose.msra.mxu0 0.0
    %3506 = vmatprep.mubr.f32.mxu0 0.0
    %3507 = vmatmul.mubr.f32.gmra.mrb[0].mxu0 %v3428
    %v3508 = vpop.f32.mrb[0].mxu0
    %v3509 = vadd.f32 0.0, %v3508
    %v3510 = vpop.f32.mrb[0].mxu0
    %3511 = vmatprep.mubr.f32.mxu0 0.0
    %3512 = vmatmul.mubr.f32.gmra.mrb[0].mxu0 %v3430
    %v3513 = vpop.f32.mrb[0].mxu0
    %v3514 = vadd.f32 0.0, %v3513
    %v3515 = vpop.f32.mrb[0].mxu0
    %3516 = vmatprep.mubr.f32.mxu0 0.0
    %3517 = vmatmul.mubr.f32.gmra.mrb[0].mxu0 %v3432
    %v3518 = vpop.f32.mrb[0].mxu0
    %v3519 = vadd.f32 0.0, %v3518
    %v3520 = vpop.f32.mrb[0].mxu0
    %3521 = vmatprep.mubr.f32.mxu0 0.0
    %3522 = vmatmul.mubr.f32.gmra.mrb[0].mxu0 %v3434
    %v3523 = vpop.f32.mrb[0].mxu0
    %v3524 = vadd.f32 0.0, %v3523
    %v3525 = vpop.f32.mrb[0].mxu0
    %3526 = vdwg.mxu0
    %v3527 = vmul.f32 %v3509, 0.17677669
    %v3528 = vmul.f32 %v3514, 0.17677669
    %v3529 = vmul.f32 %v3519, 0.17677669
    %v3530 = vmul.f32 %v3524, 0.17677669
    %v3531 = vsel %vm1699, %v3527, -inf
    %3532 = vmax.xlane.f32.xlu0 %v3531
    %v3533 = vpop.xlane.xlu0 %3532
    %v3534 = vsel %vm1699, %v3528, -inf
    %3535 = vmax.xlane.f32.xlu0 %v3534
    %v3536 = vpop.xlane.xlu0 %3535
    %v3537 = vsel %vm1699, %v3529, -inf
    %3538 = vmax.xlane.f32.xlu0 %v3537
    %v3539 = vpop.xlane.xlu0 %3538
    %v3540 = vsel %vm1699, %v3530, -inf
    %3541 = vmax.xlane.f32.xlu0 %v3540
    %v3542 = vpop.xlane.xlu0 %3541
    %v3543 = vsub.f32 %v3527, %v3533
    %v3544 = vsub.f32 %v3528, %v3536
    %v3545 = vsub.f32 %v3529, %v3539
    %v3546 = vsub.f32 %v3530, %v3542
    %v3547 = vmul.f32 %v3543, 1.442695
    %v3548 = vpow.pop %v3547
    %v3549 = vmul.f32 %v3544, 1.442695
    %v3550 = vpow.pop %v3549
    %v3551 = vmul.f32 %v3545, 1.442695
    %v3552 = vpow.pop %v3551
    %v3553 = vmul.f32 %v3546, 1.442695
    %v3554 = vpow.pop %v3553
    %v3555 = vsel %vm1699, %v3548, 0.0
    %3556 = vadd.xlane.f32.xlu0 %v3555
    %v3557 = vpop.xlane.xlu0 %3556
    %v3558 = vsel %vm1699, %v3550, 0.0
    %3559 = vadd.xlane.f32.xlu0 %v3558
    %v3560 = vpop.xlane.xlu0 %3559
    %v3561 = vsel %vm1699, %v3552, 0.0
    %3562 = vadd.xlane.f32.xlu0 %v3561
    %v3563 = vpop.xlane.xlu0 %3562
    %v3564 = vsel %vm1699, %v3554, 0.0
    %3565 = vadd.xlane.f32.xlu0 %v3564
    %v3566 = vpop.xlane.xlu0 %3565
    %v3567 = vrcp.pop %v3557
    %v3568 = vrcp.pop %v3560
    %v3569 = vrcp.pop %v3563
    %v3570 = vrcp.pop %v3566
    %v3571 = vmul.f32 %v3548, %v3567
    %v3572 = vmul.f32 %v3550, %v3568
    %v3573 = vmul.f32 %v3552, %v3569
    %v3574 = vmul.f32 %v3554, %v3570
    %3575 = vrot.lane.b32.xlu0 %v3415, 96
    %v3576 = vpop.permute.xlu0 %3575
    %3577 = vrot.lane.b32.xlu0 %v3418, 96
    %v3578 = vpop.permute.xlu0 %3577
    %v3582 = vsel %vm1699, %v3571, 0
    %v3585 = vsel %vm1699, %v3572, 0
    %v3588 = vsel %vm1699, %v3573, 0
    %v3591 = vsel %vm1699, %v3574, 0
    %3593 = vmatprep.subr.mxu0 0.0
    %3594 = vmatpush1.msra.mxu0 %v3576
    %3595 = vmatprep.subr.mxu0 0.0
    %3596 = vmatpush1.msra.mxu0 %v3578
    %3597 = vmatprep.subr.mxu0 0.0
    %3598 = vmatpush1.msra.mxu0 0.0
    %3599 = vmatprep.subr.mxu0 0.0
    %3600 = vmatpush1.msra.mxu0 0.0
    %3601 = vmatprep.subr.mxu0 0.0
    %3602 = vmatpush1.msra.mxu0 0.0
    %3603 = vmatprep.subr.mxu0 0.0
    %3604 = vmatpush1.msra.mxu0 0.0
    %3605 = vmatprep.subr.mxu0 0.0
    %3606 = vmatpush1.msra.mxu0 0.0
    %3607 = vmatprep.subr.mxu0 0.0
    %3608 = vmatpush1.msra.mxu0 0.0
    %3609 = vmatprep.subr.mxu0 0.0
    %3610 = vmatpush1.msra.mxu0 0.0
    %3611 = vmatprep.subr.mxu0 0.0
    %3612 = vmatpush1.msra.mxu0 0.0
    %3613 = vmatprep.subr.mxu0 0.0
    %3614 = vmatpush1.msra.mxu0 0.0
    %3615 = vmatprep.subr.mxu0 0.0
    %3616 = vmatpush1.msra.mxu0 0.0
    %3617 = vmatprep.subr.mxu0 0.0
    %3618 = vmatpush1.msra.mxu0 0.0
    %3619 = vmatprep.subr.mxu0 0.0
    %3620 = vmatpush1.msra.mxu0 0.0
    %3621 = vmatprep.subr.mxu0 0.0
    %3622 = vmatpush1.msra.mxu0 0.0
    %3623 = vmatprep.subr.mxu0 0.0
    %3624 = vmatpush1.msra.mxu0 0.0
    %3625 = vmatprep.subr.mxu0 0.0
    %3626 = vmatpush1.msra.mxu0 0.0
    %3627 = vmatprep.subr.mxu0 0.0
    %3628 = vmatpush1.msra.mxu0 0.0
    %3629 = vmatprep.subr.mxu0 0.0
    %3630 = vmatpush1.msra.mxu0 0.0
    %3631 = vmatprep.subr.mxu0 0.0
    %3632 = vmatpush1.msra.mxu0 0.0
    %3633 = vmatprep.subr.mxu0 0.0
    %3634 = vmatpush1.msra.mxu0 0.0
    %3635 = vmatprep.subr.mxu0 0.0
    %3636 = vmatpush1.msra.mxu0 0.0
    %3637 = vmatprep.subr.mxu0 0.0
    %3638 = vmatpush1.msra.mxu0 0.0
    %3639 = vmatprep.subr.mxu0 0.0
    %3640 = vmatpush1.msra.mxu0 0.0
    %3641 = vmatprep.subr.mxu0 0.0
    %3642 = vmatpush1.msra.mxu0 0.0
    %3643 = vmatprep.subr.mxu0 0.0
    %3644 = vmatpush1.msra.mxu0 0.0
    %3645 = vmatprep.subr.mxu0 0.0
    %3646 = vmatpush1.msra.mxu0 0.0
    %3647 = vmatprep.subr.mxu0 0.0
    %3648 = vmatpush1.msra.mxu0 0.0
    %3649 = vmatprep.subr.mxu0 0.0
    %3650 = vmatpush1.msra.mxu0 0.0
    %3651 = vmatprep.subr.mxu0 0.0
    %3652 = vmatpush1.msra.mxu0 0.0
    %3653 = vmatprep.subr.mxu0 0.0
    %3654 = vmatpush1.msra.mxu0 0.0
    %3655 = vmatprep.subr.mxu0 0.0
    %3656 = vmatpush1.msra.mxu0 0.0
    %3657 = vmatprep.mubr.f32.mxu0 0.0
    %3658 = vmatmul.mubr.f32.gmra.mrb[0].mxu0 %v3582
    %v3659 = vpop.f32.mrb[0].mxu0
    %v3660 = vadd.f32 0.0, %v3659
    %v3661 = vpop.f32.mrb[0].mxu0
    %3662 = vmatprep.mubr.f32.mxu0 0.0
    %3663 = vmatmul.mubr.f32.gmra.mrb[0].mxu0 %v3585
    %v3664 = vpop.f32.mrb[0].mxu0
    %v3665 = vadd.f32 0.0, %v3664
    %v3666 = vpop.f32.mrb[0].mxu0
    %3667 = vmatprep.mubr.f32.mxu0 0.0
    %3668 = vmatmul.mubr.f32.gmra.mrb[0].mxu0 %v3588
    %v3669 = vpop.f32.mrb[0].mxu0
    %v3670 = vadd.f32 0.0, %v3669
    %v3671 = vpop.f32.mrb[0].mxu0
    %3672 = vmatprep.mubr.f32.mxu0 0.0
    %3673 = vmatmul.mubr.f32.gmra.mrb[0].mxu0 %v3591
    %v3674 = vpop.f32.mrb[0].mxu0
    %v3675 = vadd.f32 0.0, %v3674
    %v3676 = vpop.f32.mrb[0].mxu0
    %3677 = vdwg.mxu0
    %3679 = vrot.lane.b32.xlu0 %v3665, 32
    %v3680 = vpop.permute.xlu0 %3679
    %3683 = vrot.lane.b32.xlu0 %v3670, 64
    %v3684 = vpop.permute.xlu0 %3683
    %3687 = vrot.lane.b32.xlu0 %v3675, 96
    %v3688 = vpop.permute.xlu0 %3687
    %v3690 = vsel %vm956, %v3660, %v3680
    %v3691 = vsel %vm1304, %v3690, %v3684
    %v3692 = vsel %vm1306, %v3691, %v3688
    %v3693 = vpack.c.bf16 %v3692, %v3692
    %v3710 = vunpack.c.l.b16 %v2450
    %v3711 = vunpack.c.l.b16 %v2451
    %v3712 = vunpack.c.l.b16 %v2452
    %v3713 = vunpack.c.l.b16 %v2453
    %v3714 = vunpack.c.l.b16 %v2454
    %v3715 = vunpack.c.l.b16 %v2455
    %v3716 = vunpack.c.l.b16 %v2456
    %v3717 = vunpack.c.l.b16 %v2457
    %v3718 = vunpack.c.l.b16 %v2458
    %v3719 = vunpack.c.l.b16 %v2459
    %v3720 = vunpack.c.l.b16 %v2460
    %v3721 = vunpack.c.l.b16 %v2461
    %v3722 = vunpack.c.l.b16 %v2462
    %v3723 = vunpack.c.l.b16 %v2463
    %v3724 = vunpack.c.l.b16 %v2464
    %v3725 = vunpack.c.l.b16 %v2465
    %v3726 = vpack.c.b16 %v3711, %v3710
    %v3727 = vpack.c.b16 %v3713, %v3712
    %v3728 = vpack.c.b16 %v3715, %v3714
    %v3729 = vpack.c.b16 %v3717, %v3716
    %v3730 = vpack.c.b16 %v3719, %v3718
    %v3731 = vpack.c.b16 %v3721, %v3720
    %v3732 = vpack.c.b16 %v3723, %v3722
    %v3733 = vpack.c.b16 %v3725, %v3724
    %3742 = vmatprep.subr.bf16.mxu0 0
    %3743 = vmatpush1.bf16.msra.mxu0 %v3726
    %3744 = vmatprep.subr.bf16.mxu0 0
    %3745 = vmatpush1.bf16.msra.mxu0 %v3727
    %3746 = vmatprep.subr.bf16.mxu0 0
    %3747 = vmatpush1.bf16.msra.mxu0 %v3728
    %3748 = vmatprep.subr.bf16.mxu0 0
    %3749 = vmatpush1.bf16.msra.mxu0 %v3729
    %3750 = vmatprep.subr.bf16.mxu0 0
    %3751 = vmatpush1.bf16.msra.mxu0 %v3730
    %3752 = vmatprep.subr.bf16.mxu0 0
    %3753 = vmatpush1.bf16.msra.mxu0 %v3731
    %3754 = vmatprep.subr.bf16.mxu0 0
    %3755 = vmatpush1.bf16.msra.mxu0 %v3732
    %3756 = vmatprep.subr.bf16.mxu0 0
    %3757 = vmatpush1.bf16.msra.mxu0 %v3733
    %3758 = vmatprep.subr.bf16.mxu0 0
    %3759 = vmatpush1.bf16.msra.mxu0 0
    %3760 = vmatprep.subr.bf16.mxu0 0
    %3761 = vmatpush1.bf16.msra.mxu0 0
    %3762 = vmatprep.subr.bf16.mxu0 0
    %3763 = vmatpush1.bf16.msra.mxu0 0
    %3764 = vmatprep.subr.bf16.mxu0 0
    %3765 = vmatpush1.bf16.msra.mxu0 0
    %3766 = vmatprep.subr.bf16.mxu0 0
    %3767 = vmatpush1.bf16.msra.mxu0 0
    %3768 = vmatprep.subr.bf16.mxu0 0
    %3769 = vmatpush1.bf16.msra.mxu0 0
    %3770 = vmatprep.subr.bf16.mxu0 0
    %3771 = vmatpush1.bf16.msra.mxu0 0
    %3772 = vmatprep.subr.bf16.mxu0 0
    %3773 = vmatpush1.bf16.msra.mxu0 0
    %3774 = vmatprep.mubr.bf16.mxu0 0
    %3775 = vmatmul.mubr.bf16.gmra.mrb[0].mxu0 %v3693
    %v3776 = vpop.f32.mrb[0].mxu0
    %v3777 = vadd.f32 0.0, %v3776
    %v3778 = vpop.f32.mrb[0].mxu0
    %v3779 = vpop.f32.mrb[0].mxu0
    %v3780 = vpop.f32.mrb[0].mxu0
    %3781 = vdwg.mxu0
    %v3782 = vadd.f32 %v3230, %v3777
    %v3783 = vmul.f32 %v3782, %v3782
    %3784 = vadd.xlane.f32.xlu0 %v3783
    %v3785 = vpop.xlane.xlu0 %3784
    %v3786 = vmul.f32 %v3785, %v695
    %v3787 = vadd.f32 %v3786, 1e-06
    %v3788 = vrsqrt.pop %v3787
    %v3789 = vmul.f32 %v3782, %v3788
    %v3790 = vlaneseq
    %v3791 = vshrl.u32 %v3790, 7
    %v3792 = vsub.s32 0, %v3791
    %v3793 = vrot.slane %v2466, %v3792
    %v3794 = vmul.f32 %v3789, %v3793
    %v3795 = vpack.c.bf16 %v3794, %v3794
    %v3828 = vunpack.c.l.b16 %v2468
    %v3829 = vunpack.c.h.b16 %v2468
    %v3830 = vunpack.c.l.b16 %v2469
    %v3831 = vunpack.c.h.b16 %v2469
    %v3832 = vunpack.c.l.b16 %v2470
    %v3833 = vunpack.c.h.b16 %v2470
    %v3834 = vunpack.c.l.b16 %v2471
    %v3835 = vunpack.c.h.b16 %v2471
    %v3836 = vunpack.c.l.b16 %v2472
    %v3837 = vunpack.c.h.b16 %v2472
    %v3838 = vunpack.c.l.b16 %v2473
    %v3839 = vunpack.c.h.b16 %v2473
    %v3840 = vunpack.c.l.b16 %v2474
    %v3841 = vunpack.c.h.b16 %v2474
    %v3842 = vunpack.c.l.b16 %v2475
    %v3843 = vunpack.c.h.b16 %v2475
    %v3844 = vunpack.c.l.b16 %v2476
    %v3845 = vunpack.c.h.b16 %v2476
    %v3846 = vunpack.c.l.b16 %v2477
    %v3847 = vunpack.c.h.b16 %v2477
    %v3848 = vunpack.c.l.b16 %v2478
    %v3849 = vunpack.c.h.b16 %v2478
    %v3850 = vunpack.c.l.b16 %v2479
    %v3851 = vunpack.c.h.b16 %v2479
    %v3852 = vunpack.c.l.b16 %v2480
    %v3853 = vunpack.c.h.b16 %v2480
    %v3854 = vunpack.c.l.b16 %v2481
    %v3855 = vunpack.c.h.b16 %v2481
    %v3856 = vunpack.c.l.b16 %v2482
    %v3857 = vunpack.c.h.b16 %v2482
    %v3858 = vunpack.c.l.b16 %v2483
    %v3859 = vunpack.c.h.b16 %v2483
    %v3860 = vunpack.c.l.b16 %v2484
    %v3861 = vunpack.c.h.b16 %v2484
    %v3862 = vunpack.c.l.b16 %v2485
    %v3863 = vunpack.c.h.b16 %v2485
    %v3864 = vunpack.c.l.b16 %v2486
    %v3865 = vunpack.c.h.b16 %v2486
    %v3866 = vunpack.c.l.b16 %v2487
    %v3867 = vunpack.c.h.b16 %v2487
    %v3868 = vunpack.c.l.b16 %v2488
    %v3869 = vunpack.c.h.b16 %v2488
    %v3870 = vunpack.c.l.b16 %v2489
    %v3871 = vunpack.c.h.b16 %v2489
    %v3872 = vunpack.c.l.b16 %v2490
    %v3873 = vunpack.c.h.b16 %v2490
    %v3874 = vunpack.c.l.b16 %v2491
    %v3875 = vunpack.c.h.b16 %v2491
    %v3876 = vunpack.c.l.b16 %v2492
    %v3877 = vunpack.c.h.b16 %v2492
    %v3878 = vunpack.c.l.b16 %v2493
    %v3879 = vunpack.c.h.b16 %v2493
    %v3880 = vunpack.c.l.b16 %v2494
    %v3881 = vunpack.c.h.b16 %v2494
    %v3882 = vunpack.c.l.b16 %v2495
    %v3883 = vunpack.c.h.b16 %v2495
    %v3884 = vunpack.c.l.b16 %v2496
    %v3885 = vunpack.c.h.b16 %v2496
    %v3886 = vunpack.c.l.b16 %v2497
    %v3887 = vunpack.c.h.b16 %v2497
    %v3888 = vunpack.c.l.b16 %v2498
    %v3889 = vunpack.c.h.b16 %v2498
    %v3890 = vunpack.c.l.b16 %v2499
    %v3891 = vunpack.c.h.b16 %v2499
    %v3892 = vpack.c.b16 %v3832, %v3828
    %v3893 = vpack.c.b16 %v3833, %v3829
    %v3894 = vpack.c.b16 %v3834, %v3830
    %v3895 = vpack.c.b16 %v3835, %v3831
    %v3896 = vpack.c.b16 %v3840, %v3836
    %v3897 = vpack.c.b16 %v3841, %v3837
    %v3898 = vpack.c.b16 %v3842, %v3838
    %v3899 = vpack.c.b16 %v3843, %v3839
    %v3900 = vpack.c.b16 %v3848, %v3844
    %v3901 = vpack.c.b16 %v3849, %v3845
    %v3902 = vpack.c.b16 %v3850, %v3846
    %v3903 = vpack.c.b16 %v3851, %v3847
    %v3904 = vpack.c.b16 %v3856, %v3852
    %v3905 = vpack.c.b16 %v3857, %v3853
    %v3906 = vpack.c.b16 %v3858, %v3854
    %v3907 = vpack.c.b16 %v3859, %v3855
    %v3908 = vpack.c.b16 %v3864, %v3860
    %v3909 = vpack.c.b16 %v3865, %v3861
    %v3910 = vpack.c.b16 %v3866, %v3862
    %v3911 = vpack.c.b16 %v3867, %v3863
    %v3912 = vpack.c.b16 %v3872, %v3868
    %v3913 = vpack.c.b16 %v3873, %v3869
    %v3914 = vpack.c.b16 %v3874, %v3870
    %v3915 = vpack.c.b16 %v3875, %v3871
    %v3916 = vpack.c.b16 %v3880, %v3876
    %v3917 = vpack.c.b16 %v3881, %v3877
    %v3918 = vpack.c.b16 %v3882, %v3878
    %v3919 = vpack.c.b16 %v3883, %v3879
    %v3920 = vpack.c.b16 %v3888, %v3884
    %v3921 = vpack.c.b16 %v3889, %v3885
    %v3922 = vpack.c.b16 %v3890, %v3886
    %v3923 = vpack.c.b16 %v3891, %v3887
    %3956 = vmatprep.subr.bf16.mxu0 %v3893
    %3957 = vmatpush1.bf16.msra.mxu0 %v3892
    %3958 = vmatprep.subr.bf16.mxu0 %v3897
    %3959 = vmatpush1.bf16.msra.mxu0 %v3896
    %3960 = vmatprep.subr.bf16.mxu0 %v3901
    %3961 = vmatpush1.bf16.msra.mxu0 %v3900
    %3962 = vmatprep.subr.bf16.mxu0 %v3905
    %3963 = vmatpush1.bf16.msra.mxu0 %v3904
    %3964 = vmatprep.subr.bf16.mxu0 %v3909
    %3965 = vmatpush1.bf16.msra.mxu0 %v3908
    %3966 = vmatprep.subr.bf16.mxu0 %v3913
    %3967 = vmatpush1.bf16.msra.mxu0 %v3912
    %3968 = vmatprep.subr.bf16.mxu0 %v3917
    %3969 = vmatpush1.bf16.msra.mxu0 %v3916
    %3970 = vmatprep.subr.bf16.mxu0 %v3921
    %3971 = vmatpush1.bf16.msra.mxu0 %v3920
    %3972 = vmatprep.subr.bf16.mxu0 0
    %3973 = vmatpush1.bf16.msra.mxu0 0
    %3974 = vmatprep.subr.bf16.mxu0 0
    %3975 = vmatpush1.bf16.msra.mxu0 0
    %3976 = vmatprep.subr.bf16.mxu0 0
    %3977 = vmatpush1.bf16.msra.mxu0 0
    %3978 = vmatprep.subr.bf16.mxu0 0
    %3979 = vmatpush1.bf16.msra.mxu0 0
    %3980 = vmatprep.subr.bf16.mxu0 0
    %3981 = vmatpush1.bf16.msra.mxu0 0
    %3982 = vmatprep.subr.bf16.mxu0 0
    %3983 = vmatpush1.bf16.msra.mxu0 0
    %3984 = vmatprep.subr.bf16.mxu0 0
    %3985 = vmatpush1.bf16.msra.mxu0 0
    %3986 = vmatprep.subr.bf16.mxu0 0
    %3987 = vmatpush1.bf16.msra.mxu0 0
    %3988 = vmatprep.mubr.bf16.mxu0 0
    %3989 = vmatmul.mubr.bf16.gmra.mrb[0].mxu0 %v3795
    %v3990 = vpop.f32.mrb[0].mxu0
    %v3991 = vadd.f32 0.0, %v3990
    %v3992 = vpop.f32.mrb[0].mxu0
    %v3993 = vadd.f32 0.0, %v3992
    %v3994 = vpop.f32.mrb[0].mxu0
    %v3995 = vpop.f32.mrb[0].mxu0
    %3996 = vdwg.mxu0
    %3997 = vmatprep.subr.bf16.mxu0 %v3895
    %3998 = vmatpush1.bf16.msra.mxu0 %v3894
    %3999 = vmatprep.subr.bf16.mxu0 %v3899
    %4000 = vmatpush1.bf16.msra.mxu0 %v3898
    %4001 = vmatprep.subr.bf16.mxu0 %v3903
    %4002 = vmatpush1.bf16.msra.mxu0 %v3902
    %4003 = vmatprep.subr.bf16.mxu0 %v3907
    %4004 = vmatpush1.bf16.msra.mxu0 %v3906
    %4005 = vmatprep.subr.bf16.mxu0 %v3911
    %4006 = vmatpush1.bf16.msra.mxu0 %v3910
    %4007 = vmatprep.subr.bf16.mxu0 %v3915
    %4008 = vmatpush1.bf16.msra.mxu0 %v3914
    %4009 = vmatprep.subr.bf16.mxu0 %v3919
    %4010 = vmatpush1.bf16.msra.mxu0 %v3918
    %4011 = vmatprep.subr.bf16.mxu0 %v3923
    %4012 = vmatpush1.bf16.msra.mxu0 %v3922
    %4013 = vmatprep.subr.bf16.mxu0 0
    %4014 = vmatpush1.bf16.msra.mxu0 0
    %4015 = vmatprep.subr.bf16.mxu0 0
    %4016 = vmatpush1.bf16.msra.mxu0 0
    %4017 = vmatprep.subr.bf16.mxu0 0
    %4018 = vmatpush1.bf16.msra.mxu0 0
    %4019 = vmatprep.subr.bf16.mxu0 0
    %4020 = vmatpush1.bf16.msra.mxu0 0
    %4021 = vmatprep.subr.bf16.mxu0 0
    %4022 = vmatpush1.bf16.msra.mxu0 0
    %4023 = vmatprep.subr.bf16.mxu0 0
    %4024 = vmatpush1.bf16.msra.mxu0 0
    %4025 = vmatprep.subr.bf16.mxu0 0
    %4026 = vmatpush1.bf16.msra.mxu0 0
    %4027 = vmatprep.subr.bf16.mxu0 0
    %4028 = vmatpush1.bf16.msra.mxu0 0
    %4029 = vmatprep.mubr.bf16.mxu0 0
    %4030 = vmatmul.mubr.bf16.gmra.mrb[0].mxu0 %v3795
    %v4031 = vpop.f32.mrb[0].mxu0
    %v4032 = vadd.f32 0.0, %v4031
    %v4033 = vpop.f32.mrb[0].mxu0
    %v4034 = vadd.f32 0.0, %v4033
    %v4035 = vpop.f32.mrb[0].mxu0
    %v4036 = vpop.f32.mrb[0].mxu0
    %4037 = vdwg.mxu0
    %v4038 = vxor.u32 %v3991, 2147483648
    %v4039 = vxor.u32 %v3993, 2147483648
    %v4040 = vmul.f32 %v4038, 1.442695
    %v4041 = vpow.pop %v4040
    %v4042 = vmul.f32 %v4039, 1.442695
    %v4043 = vpow.pop %v4042
    %v4044 = vadd.f32 %v4041, 1.0
    %v4045 = vadd.f32 %v4043, 1.0
    %v4046 = vrcp.pop %v4044
    %v4047 = vmul.f32 1.0, %v4046
    %v4048 = vrcp.pop %v4045
    %v4049 = vmul.f32 1.0, %v4048
    %v4050 = vmul.f32 %v3991, %v4047
    %v4051 = vmul.f32 %v3993, %v4049
    %v4052 = vmul.f32 %v4050, %v4032
    %v4053 = vmul.f32 %v4051, %v4034
    %v4054 = vpack.c.bf16 %v4052, %v4052
    %v4055 = vpack.c.bf16 %v4053, %v4053
    %v4088 = vunpack.c.l.b16 %v2501
    %v4089 = vunpack.c.l.b16 %v2502
    %v4090 = vunpack.c.l.b16 %v2503
    %v4091 = vunpack.c.l.b16 %v2504
    %v4092 = vunpack.c.l.b16 %v2505
    %v4093 = vunpack.c.l.b16 %v2506
    %v4094 = vunpack.c.l.b16 %v2507
    %v4095 = vunpack.c.l.b16 %v2508
    %v4096 = vunpack.c.l.b16 %v2509
    %v4097 = vunpack.c.l.b16 %v2510
    %v4098 = vunpack.c.l.b16 %v2511
    %v4099 = vunpack.c.l.b16 %v2512
    %v4100 = vunpack.c.l.b16 %v2513
    %v4101 = vunpack.c.l.b16 %v2514
    %v4102 = vunpack.c.l.b16 %v2515
    %v4103 = vunpack.c.l.b16 %v2516
    %v4104 = vunpack.c.l.b16 %v2517
    %v4105 = vunpack.c.l.b16 %v2518
    %v4106 = vunpack.c.l.b16 %v2519
    %v4107 = vunpack.c.l.b16 %v2520
    %v4108 = vunpack.c.l.b16 %v2521
    %v4109 = vunpack.c.l.b16 %v2522
    %v4110 = vunpack.c.l.b16 %v2523
    %v4111 = vunpack.c.l.b16 %v2524
    %v4112 = vunpack.c.l.b16 %v2525
    %v4113 = vunpack.c.l.b16 %v2526
    %v4114 = vunpack.c.l.b16 %v2527
    %v4115 = vunpack.c.l.b16 %v2528
    %v4116 = vunpack.c.l.b16 %v2529
    %v4117 = vunpack.c.l.b16 %v2530
    %v4118 = vunpack.c.l.b16 %v2531
    %v4119 = vunpack.c.l.b16 %v2532
    %v4120 = vpack.c.b16 %v4089, %v4088
    %v4121 = vpack.c.b16 %v4091, %v4090
    %v4122 = vpack.c.b16 %v4093, %v4092
    %v4123 = vpack.c.b16 %v4095, %v4094
    %v4124 = vpack.c.b16 %v4097, %v4096
    %v4125 = vpack.c.b16 %v4099, %v4098
    %v4126 = vpack.c.b16 %v4101, %v4100
    %v4127 = vpack.c.b16 %v4103, %v4102
    %v4128 = vpack.c.b16 %v4105, %v4104
    %v4129 = vpack.c.b16 %v4107, %v4106
    %v4130 = vpack.c.b16 %v4109, %v4108
    %v4131 = vpack.c.b16 %v4111, %v4110
    %v4132 = vpack.c.b16 %v4113, %v4112
    %v4133 = vpack.c.b16 %v4115, %v4114
    %v4134 = vpack.c.b16 %v4117, %v4116
    %v4135 = vpack.c.b16 %v4119, %v4118
    %4152 = vmatprep.subr.bf16.mxu0 0
    %4153 = vmatpush1.bf16.msra.mxu0 %v4120
    %4154 = vmatprep.subr.bf16.mxu0 0
    %4155 = vmatpush1.bf16.msra.mxu0 %v4121
    %4156 = vmatprep.subr.bf16.mxu0 0
    %4157 = vmatpush1.bf16.msra.mxu0 %v4122
    %4158 = vmatprep.subr.bf16.mxu0 0
    %4159 = vmatpush1.bf16.msra.mxu0 %v4123
    %4160 = vmatprep.subr.bf16.mxu0 0
    %4161 = vmatpush1.bf16.msra.mxu0 %v4124
    %4162 = vmatprep.subr.bf16.mxu0 0
    %4163 = vmatpush1.bf16.msra.mxu0 %v4125
    %4164 = vmatprep.subr.bf16.mxu0 0
    %4165 = vmatpush1.bf16.msra.mxu0 %v4126
    %4166 = vmatprep.subr.bf16.mxu0 0
    %4167 = vmatpush1.bf16.msra.mxu0 %v4127
    %4168 = vmatprep.subr.bf16.mxu0 0
    %4169 = vmatpush1.bf16.msra.mxu0 %v4128
    %4170 = vmatprep.subr.bf16.mxu0 0
    %4171 = vmatpush1.bf16.msra.mxu0 %v4129
    %4172 = vmatprep.subr.bf16.mxu0 0
    %4173 = vmatpush1.bf16.msra.mxu0 %v4130
    %4174 = vmatprep.subr.bf16.mxu0 0
    %4175 = vmatpush1.bf16.msra.mxu0 %v4131
    %4176 = vmatprep.subr.bf16.mxu0 0
    %4177 = vmatpush1.bf16.msra.mxu0 %v4132
    %4178 = vmatprep.subr.bf16.mxu0 0
    %4179 = vmatpush1.bf16.msra.mxu0 %v4133
    %4180 = vmatprep.subr.bf16.mxu0 0
    %4181 = vmatpush1.bf16.msra.mxu0 %v4134
    %4182 = vmatprep.subr.bf16.mxu0 0
    %4183 = vmatpush1.bf16.msra.mxu0 %v4135
    %4184 = vmatprep.mubr.bf16.mxu0 %v4055
    %4185 = vmatmul.mubr.bf16.gmra.mrb[0].mxu0 %v4054
    %v4186 = vpop.f32.mrb[0].mxu0
    %v4187 = vadd.f32 0.0, %v4186
    %v4188 = vpop.f32.mrb[0].mxu0
    %v4189 = vpop.f32.mrb[0].mxu0
    %v4190 = vpop.f32.mrb[0].mxu0
    %4191 = vdwg.mxu0
    %v4192 = vadd.f32 %v3782, %v4187
    %4193 = vst [vmem:[#allocation24] sm:$0xff] %v4192
    %v4194 = vadd.f32 %v506, %v4192
    %s4195 = smul.u32 2, 1
    %s4196 = sshll.u32 %s4195, 4
    %4197 = dma.done [#allocation9], %s4196
    %s4198 = smul.u32 4, 2
    %s4199 = smul.u32 %s4198, 16
    %s4200 = smul.u32 %s4199, 1
    %s4201 = sshll.u32 %s4200, 4
    %4202 = dma.done %s181, %s4201
    %s4203 = sshll.u32 %s4200, 4
    %4204 = dma.done %s193, %s4203
    %s4205 = sshll.u32 %s4200, 4
    %4206 = dma.done %s266, %s4205
    %s4207 = sshll.u32 %s4195, 4
    %4208 = dma.done %s339, %s4207
    %s4209 = smul.u32 %s4199, 4
    %s4210 = sshll.u32 %s4209, 4
    %4211 = dma.done %s351, %s4210
    %s4212 = smul.u32 %s4198, 32
    %s4213 = smul.u32 %s4212, 1
    %s4214 = sshll.u32 %s4213, 4
    %4215 = dma.done %s387, %s4214
    %v4216 = vld [vmem:[#allocation2] sm:$0x1]
    %v4217 = vld [vmem:[#allocation3] sm:$0xff]
    %v4218 = vld [vmem:[#allocation3 + $0x8] sm:$0xff]
    %v4219 = vld [vmem:[#allocation3 + $0x10] sm:$0xff]
    %v4220 = vld [vmem:[#allocation3 + $0x18] sm:$0xff]
    %v4221 = vld [vmem:[#allocation3 + $0x20] sm:$0xff]
    %v4222 = vld [vmem:[#allocation3 + $0x28] sm:$0xff]
    %v4223 = vld [vmem:[#allocation3 + $0x30] sm:$0xff]
    %v4224 = vld [vmem:[#allocation3 + $0x38] sm:$0xff]
    %v4225 = vld [vmem:[#allocation4] sm:$0xff]
    %v4226 = vld [vmem:[#allocation4 + $0x8] sm:$0xff]
    %v4227 = vld [vmem:[#allocation4 + $0x10] sm:$0xff]
    %v4228 = vld [vmem:[#allocation4 + $0x18] sm:$0xff]
    %v4229 = vld [vmem:[#allocation4 + $0x20] sm:$0xff]
    %v4230 = vld [vmem:[#allocation4 + $0x28] sm:$0xff]
    %v4231 = vld [vmem:[#allocation4 + $0x30] sm:$0xff]
    %v4232 = vld [vmem:[#allocation4 + $0x38] sm:$0xff]
    %v4233 = vld [vmem:[#allocation5] sm:$0xff]
    %v4234 = vld [vmem:[#allocation5 + $0x8] sm:$0xff]
    %v4235 = vld [vmem:[#allocation5 + $0x10] sm:$0xff]
    %v4236 = vld [vmem:[#allocation5 + $0x18] sm:$0xff]
    %v4237 = vld [vmem:[#allocation5 + $0x20] sm:$0xff]
    %v4238 = vld [vmem:[#allocation5 + $0x28] sm:$0xff]
    %v4239 = vld [vmem:[#allocation5 + $0x30] sm:$0xff]
    %v4240 = vld [vmem:[#allocation5 + $0x38] sm:$0xff]
    %v4241 = vld [vmem:[#allocation6] sm:$0x1]
    %v4242 = vld [vmem:[#allocation7] sm:$0xff]
    %v4243 = vld [vmem:[#allocation7 + $0x8] sm:$0xff]
    %v4244 = vld [vmem:[#allocation7 + $0x10] sm:$0xff]
    %v4245 = vld [vmem:[#allocation7 + $0x18] sm:$0xff]
    %v4246 = vld [vmem:[#allocation7 + $0x20] sm:$0xff]
    %v4247 = vld [vmem:[#allocation7 + $0x28] sm:$0xff]
    %v4248 = vld [vmem:[#allocation7 + $0x30] sm:$0xff]
    %v4249 = vld [vmem:[#allocation7 + $0x38] sm:$0xff]
    %v4250 = vld [vmem:[#allocation7 + $0x40] sm:$0xff]
    %v4251 = vld [vmem:[#allocation7 + $0x48] sm:$0xff]
    %v4252 = vld [vmem:[#allocation7 + $0x50] sm:$0xff]
    %v4253 = vld [vmem:[#allocation7 + $0x58] sm:$0xff]
    %v4254 = vld [vmem:[#allocation7 + $0x60] sm:$0xff]
    %v4255 = vld [vmem:[#allocation7 + $0x68] sm:$0xff]
    %v4256 = vld [vmem:[#allocation7 + $0x70] sm:$0xff]
    %v4257 = vld [vmem:[#allocation7 + $0x78] sm:$0xff]
    %v4258 = vld [vmem:[#allocation7 + $0x80] sm:$0xff]
    %v4259 = vld [vmem:[#allocation7 + $0x88] sm:$0xff]
    %v4260 = vld [vmem:[#allocation7 + $0x90] sm:$0xff]
    %v4261 = vld [vmem:[#allocation7 + $0x98] sm:$0xff]
    %v4262 = vld [vmem:[#allocation7 + $0xa0] sm:$0xff]
    %v4263 = vld [vmem:[#allocation7 + $0xa8] sm:$0xff]
    %v4264 = vld [vmem:[#allocation7 + $0xb0] sm:$0xff]
    %v4265 = vld [vmem:[#allocation7 + $0xb8] sm:$0xff]
    %v4266 = vld [vmem:[#allocation7 + $0xc0] sm:$0xff]
    %v4267 = vld [vmem:[#allocation7 + $0xc8] sm:$0xff]
    %v4268 = vld [vmem:[#allocation7 + $0xd0] sm:$0xff]
    %v4269 = vld [vmem:[#allocation7 + $0xd8] sm:$0xff]
    %v4270 = vld [vmem:[#allocation7 + $0xe0] sm:$0xff]
    %v4271 = vld [vmem:[#allocation7 + $0xe8] sm:$0xff]
    %v4272 = vld [vmem:[#allocation7 + $0xf0] sm:$0xff]
    %v4273 = vld [vmem:[#allocation7 + $0xf8] sm:$0xff]
    %v4274 = vld [vmem:[#allocation8] sm:$0xff]
    %v4275 = vld [vmem:[#allocation8 + $0x8] sm:$0xff]
    %v4276 = vld [vmem:[#allocation8 + $0x10] sm:$0xff]
    %v4277 = vld [vmem:[#allocation8 + $0x18] sm:$0xff]
    %v4278 = vld [vmem:[#allocation8 + $0x20] sm:$0xff]
    %v4279 = vld [vmem:[#allocation8 + $0x28] sm:$0xff]
    %v4280 = vld [vmem:[#allocation8 + $0x30] sm:$0xff]
    %v4281 = vld [vmem:[#allocation8 + $0x38] sm:$0xff]
    %v4282 = vld [vmem:[#allocation8 + $0x40] sm:$0xff]
    %v4283 = vld [vmem:[#allocation8 + $0x48] sm:$0xff]
    %v4284 = vld [vmem:[#allocation8 + $0x50] sm:$0xff]
    %v4285 = vld [vmem:[#allocation8 + $0x58] sm:$0xff]
    %v4286 = vld [vmem:[#allocation8 + $0x60] sm:$0xff]
    %v4287 = vld [vmem:[#allocation8 + $0x68] sm:$0xff]
    %v4288 = vld [vmem:[#allocation8 + $0x70] sm:$0xff]
    %v4289 = vld [vmem:[#allocation8 + $0x78] sm:$0xff]
    %v4290 = vmul.f32 %v4194, %v4194
    %4291 = vadd.xlane.f32.xlu0 %v4290
    %v4292 = vpop.xlane.xlu0 %4291
    %v4293 = vmul.f32 %v4292, %v695
    %v4294 = vadd.f32 %v4293, 1e-06
    %v4295 = vrsqrt.pop %v4294
    %v4296 = vmul.f32 %v4194, %v4295
    %v4297 = vlaneseq
    %v4298 = vshrl.u32 %v4297, 7
    %v4299 = vsub.s32 0, %v4298
    %v4300 = vrot.slane %v4216, %v4299
    %v4301 = vmul.f32 %v4296, %v4300
    %v4302 = vpack.c.bf16 %v4301, %v4301
    %4303 = vmatprep.subr.bf16.mxu0 0
    %4304 = vmatpush1.bf16.msra.mxu0 %v4217
    %4305 = vmatprep.subr.bf16.mxu0 0
    %4306 = vmatpush1.bf16.msra.mxu0 %v4218
    %4307 = vmatprep.subr.bf16.mxu0 0
    %4308 = vmatpush1.bf16.msra.mxu0 %v4219
    %4309 = vmatprep.subr.bf16.mxu0 0
    %4310 = vmatpush1.bf16.msra.mxu0 %v4220
    %4311 = vmatprep.subr.bf16.mxu0 0
    %4312 = vmatpush1.bf16.msra.mxu0 %v4221
    %4313 = vmatprep.subr.bf16.mxu0 0
    %4314 = vmatpush1.bf16.msra.mxu0 %v4222
    %4315 = vmatprep.subr.bf16.mxu0 0
    %4316 = vmatpush1.bf16.msra.mxu0 %v4223
    %4317 = vmatprep.subr.bf16.mxu0 0
    %4318 = vmatpush1.bf16.msra.mxu0 %v4224
    %4319 = vmatprep.subr.bf16.mxu0 0
    %4320 = vmatpush1.bf16.msra.mxu0 0
    %4321 = vmatprep.subr.bf16.mxu0 0
    %4322 = vmatpush1.bf16.msra.mxu0 0
    %4323 = vmatprep.subr.bf16.mxu0 0
    %4324 = vmatpush1.bf16.msra.mxu0 0
    %4325 = vmatprep.subr.bf16.mxu0 0
    %4326 = vmatpush1.bf16.msra.mxu0 0
    %4327 = vmatprep.subr.bf16.mxu0 0
    %4328 = vmatpush1.bf16.msra.mxu0 0
    %4329 = vmatprep.subr.bf16.mxu0 0
    %4330 = vmatpush1.bf16.msra.mxu0 0
    %4331 = vmatprep.subr.bf16.mxu0 0
    %4332 = vmatpush1.bf16.msra.mxu0 0
    %4333 = vmatprep.subr.bf16.mxu0 0
    %4334 = vmatpush1.bf16.msra.mxu0 0
    %4335 = vmatprep.mubr.bf16.mxu0 0
    %4336 = vmatmul.mubr.bf16.gmra.mrb[0].mxu0 %v4302
    %v4337 = vpop.f32.mrb[0].mxu0
    %v4338 = vadd.f32 0.0, %v4337
    %v4339 = vpop.f32.mrb[0].mxu0
    %v4340 = vpop.f32.mrb[0].mxu0
    %v4341 = vpop.f32.mrb[0].mxu0
    %4342 = vdwg.mxu0
    %4343 = vmatprep.subr.bf16.mxu0 0
    %4344 = vmatpush1.bf16.msra.mxu0 %v4225
    %4345 = vmatprep.subr.bf16.mxu0 0
    %4346 = vmatpush1.bf16.msra.mxu0 %v4226
    %4347 = vmatprep.subr.bf16.mxu0 0
    %4348 = vmatpush1.bf16.msra.mxu0 %v4227
    %4349 = vmatprep.subr.bf16.mxu0 0
    %4350 = vmatpush1.bf16.msra.mxu0 %v4228
    %4351 = vmatprep.subr.bf16.mxu0 0
    %4352 = vmatpush1.bf16.msra.mxu0 %v4229
    %4353 = vmatprep.subr.bf16.mxu0 0
    %4354 = vmatpush1.bf16.msra.mxu0 %v4230
    %4355 = vmatprep.subr.bf16.mxu0 0
    %4356 = vmatpush1.bf16.msra.mxu0 %v4231
    %4357 = vmatprep.subr.bf16.mxu0 0
    %4358 = vmatpush1.bf16.msra.mxu0 %v4232
    %4359 = vmatprep.subr.bf16.mxu0 0
    %4360 = vmatpush1.bf16.msra.mxu0 0
    %4361 = vmatprep.subr.bf16.mxu0 0
    %4362 = vmatpush1.bf16.msra.mxu0 0
    %4363 = vmatprep.subr.bf16.mxu0 0
    %4364 = vmatpush1.bf16.msra.mxu0 0
    %4365 = vmatprep.subr.bf16.mxu0 0
    %4366 = vmatpush1.bf16.msra.mxu0 0
    %4367 = vmatprep.subr.bf16.mxu0 0
    %4368 = vmatpush1.bf16.msra.mxu0 0
    %4369 = vmatprep.subr.bf16.mxu0 0
    %4370 = vmatpush1.bf16.msra.mxu0 0
    %4371 = vmatprep.subr.bf16.mxu0 0
    %4372 = vmatpush1.bf16.msra.mxu0 0
    %4373 = vmatprep.subr.bf16.mxu0 0
    %4374 = vmatpush1.bf16.msra.mxu0 0
    %4375 = vmatprep.mubr.bf16.mxu0 0
    %4376 = vmatmul.mubr.bf16.gmra.mrb[0].mxu0 %v4302
    %v4377 = vpop.f32.mrb[0].mxu0
    %v4378 = vadd.f32 0.0, %v4377
    %v4379 = vpop.f32.mrb[0].mxu0
    %v4380 = vpop.f32.mrb[0].mxu0
    %v4381 = vpop.f32.mrb[0].mxu0
    %4382 = vdwg.mxu0
    %v4383 = vmul.f32 %v4338, %v511
    %4384 = vmatprep.subr.mxu0 0.0
    %4385 = vmatpush1.msra.mxu0 %v513
    %4386 = vmatprep.subr.mxu0 0.0
    %4387 = vmatpush1.msra.mxu0 %v514
    %4388 = vmatprep.subr.mxu0 0.0
    %4389 = vmatpush1.msra.mxu0 %v515
    %4390 = vmatprep.subr.mxu0 0.0
    %4391 = vmatpush1.msra.mxu0 %v516
    %4392 = vmatprep.subr.mxu0 0.0
    %4393 = vmatpush1.msra.mxu0 %v517
    %4394 = vmatprep.subr.mxu0 0.0
    %4395 = vmatpush1.msra.mxu0 %v518
    %4396 = vmatprep.subr.mxu0 0.0
    %4397 = vmatpush1.msra.mxu0 %v519
    %4398 = vmatprep.subr.mxu0 0.0
    %4399 = vmatpush1.msra.mxu0 %v520
    %4400 = vmatprep.subr.mxu0 0.0
    %4401 = vmatpush1.msra.mxu0 %v521
    %4402 = vmatprep.subr.mxu0 0.0
    %4403 = vmatpush1.msra.mxu0 %v522
    %4404 = vmatprep.subr.mxu0 0.0
    %4405 = vmatpush1.msra.mxu0 %v523
    %4406 = vmatprep.subr.mxu0 0.0
    %4407 = vmatpush1.msra.mxu0 %v524
    %4408 = vmatprep.subr.mxu0 0.0
    %4409 = vmatpush1.msra.mxu0 %v525
    %4410 = vmatprep.subr.mxu0 0.0
    %4411 = vmatpush1.msra.mxu0 %v526
    %4412 = vmatprep.subr.mxu0 0.0
    %4413 = vmatpush1.msra.mxu0 %v527
    %4414 = vmatprep.subr.mxu0 0.0
    %4415 = vmatpush1.msra.mxu0 %v528
    %4416 = vmatprep.subr.mxu0 0.0
    %4417 = vmatpush1.msra.mxu0 0.0
    %4418 = vmatprep.subr.mxu0 0.0
    %4419 = vmatpush1.msra.mxu0 0.0
    %4420 = vmatprep.subr.mxu0 0.0
    %4421 = vmatpush1.msra.mxu0 0.0
    %4422 = vmatprep.subr.mxu0 0.0
    %4423 = vmatpush1.msra.mxu0 0.0
    %4424 = vmatprep.subr.mxu0 0.0
    %4425 = vmatpush1.msra.mxu0 0.0
    %4426 = vmatprep.subr.mxu0 0.0
    %4427 = vmatpush1.msra.mxu0 0.0
    %4428 = vmatprep.subr.mxu0 0.0
    %4429 = vmatpush1.msra.mxu0 0.0
    %4430 = vmatprep.subr.mxu0 0.0
    %4431 = vmatpush1.msra.mxu0 0.0
    %4432 = vmatprep.subr.mxu0 0.0
    %4433 = vmatpush1.msra.mxu0 0.0
    %4434 = vmatprep.subr.mxu0 0.0
    %4435 = vmatpush1.msra.mxu0 0.0
    %4436 = vmatprep.subr.mxu0 0.0
    %4437 = vmatpush1.msra.mxu0 0.0
    %4438 = vmatprep.subr.mxu0 0.0
    %4439 = vmatpush1.msra.mxu0 0.0
    %4440 = vmatprep.subr.mxu0 0.0
    %4441 = vmatpush1.msra.mxu0 0.0
    %4442 = vmatprep.subr.mxu0 0.0
    %4443 = vmatpush1.msra.mxu0 0.0
    %4444 = vmatprep.subr.mxu0 0.0
    %4445 = vmatpush1.msra.mxu0 0.0
    %4446 = vmatprep.subr.mxu0 0.0
    %4447 = vmatpush1.msra.mxu0 0.0
    %4448 = vmatprep.mubr.f32.mxu0 0.0
    %4449 = vmatmul.mubr.f32.gmra.mrb[0].mxu0 %v4338
    %v4450 = vpop.f32.mrb[0].mxu0
    %v4451 = vadd.f32 0.0, %v4450
    %v4452 = vpop.f32.mrb[0].mxu0
    %4453 = vdwg.mxu0
    %v4454 = vmul.f32 %v4451, %v512
    %v4455 = vadd.f32 %v4383, %v4454
    %v4456 = vmul.f32 %v4378, %v511
    %v4458 = vsel %vm956, %v4378, 0
    %4460 = vmatprep.subr.mxu0 0.0
    %4461 = vmatpush1.msra.mxu0 %v513
    %4462 = vmatprep.subr.mxu0 0.0
    %4463 = vmatpush1.msra.mxu0 %v514
    %4464 = vmatprep.subr.mxu0 0.0
    %4465 = vmatpush1.msra.mxu0 %v515
    %4466 = vmatprep.subr.mxu0 0.0
    %4467 = vmatpush1.msra.mxu0 %v516
    %4468 = vmatprep.subr.mxu0 0.0
    %4469 = vmatpush1.msra.mxu0 0.0
    %4470 = vmatprep.subr.mxu0 0.0
    %4471 = vmatpush1.msra.mxu0 0.0
    %4472 = vmatprep.subr.mxu0 0.0
    %4473 = vmatpush1.msra.mxu0 0.0
    %4474 = vmatprep.subr.mxu0 0.0
    %4475 = vmatpush1.msra.mxu0 0.0
    %4476 = vmatprep.subr.mxu0 0.0
    %4477 = vmatpush1.msra.mxu0 0.0
    %4478 = vmatprep.subr.mxu0 0.0
    %4479 = vmatpush1.msra.mxu0 0.0
    %4480 = vmatprep.subr.mxu0 0.0
    %4481 = vmatpush1.msra.mxu0 0.0
    %4482 = vmatprep.subr.mxu0 0.0
    %4483 = vmatpush1.msra.mxu0 0.0
    %4484 = vmatprep.subr.mxu0 0.0
    %4485 = vmatpush1.msra.mxu0 0.0
    %4486 = vmatprep.subr.mxu0 0.0
    %4487 = vmatpush1.msra.mxu0 0.0
    %4488 = vmatprep.subr.mxu0 0.0
    %4489 = vmatpush1.msra.mxu0 0.0
    %4490 = vmatprep.subr.mxu0 0.0
    %4491 = vmatpush1.msra.mxu0 0.0
    %4492 = vmatprep.subr.mxu0 0.0
    %4493 = vmatpush1.msra.mxu0 0.0
    %4494 = vmatprep.subr.mxu0 0.0
    %4495 = vmatpush1.msra.mxu0 0.0
    %4496 = vmatprep.subr.mxu0 0.0
    %4497 = vmatpush1.msra.mxu0 0.0
    %4498 = vmatprep.subr.mxu0 0.0
    %4499 = vmatpush1.msra.mxu0 0.0
    %4500 = vmatprep.subr.mxu0 0.0
    %4501 = vmatpush1.msra.mxu0 0.0
    %4502 = vmatprep.subr.mxu0 0.0
    %4503 = vmatpush1.msra.mxu0 0.0
    %4504 = vmatprep.subr.mxu0 0.0
    %4505 = vmatpush1.msra.mxu0 0.0
    %4506 = vmatprep.subr.mxu0 0.0
    %4507 = vmatpush1.msra.mxu0 0.0
    %4508 = vmatprep.subr.mxu0 0.0
    %4509 = vmatpush1.msra.mxu0 0.0
    %4510 = vmatprep.subr.mxu0 0.0
    %4511 = vmatpush1.msra.mxu0 0.0
    %4512 = vmatprep.subr.mxu0 0.0
    %4513 = vmatpush1.msra.mxu0 0.0
    %4514 = vmatprep.subr.mxu0 0.0
    %4515 = vmatpush1.msra.mxu0 0.0
    %4516 = vmatprep.subr.mxu0 0.0
    %4517 = vmatpush1.msra.mxu0 0.0
    %4518 = vmatprep.subr.mxu0 0.0
    %4519 = vmatpush1.msra.mxu0 0.0
    %4520 = vmatprep.subr.mxu0 0.0
    %4521 = vmatpush1.msra.mxu0 0.0
    %4522 = vmatprep.subr.mxu0 0.0
    %4523 = vmatpush1.msra.mxu0 0.0
    %4524 = vmatprep.mubr.f32.mxu0 0.0
    %4525 = vmatmul.mubr.f32.gmra.mrb[0].mxu0 %v4458
    %v4526 = vpop.f32.mrb[0].mxu0
    %v4527 = vadd.f32 0.0, %v4526
    %v4528 = vpop.f32.mrb[0].mxu0
    %4529 = vdwg.mxu0
    %v4530 = vmul.f32 %v4527, %v512
    %v4531 = vadd.f32 %v4456, %v4530
    %4533 = vrot.lane.b32.xlu0 %v4455, 96
    %v4534 = vpop.permute.xlu0 %4533
    %4535 = vrot.lane.b32.xlu0 %v4455, 64
    %v4536 = vpop.permute.xlu0 %4535
    %4537 = vrot.lane.b32.xlu0 %v4455, 32
    %v4538 = vpop.permute.xlu0 %4537
    %v4539 = vsel %vm956, %v4455, 0
    %v4541 = vsel %vm956, %v4534, 0
    %v4543 = vsel %vm956, %v4536, 0
    %v4545 = vsel %vm956, %v4538, 0
    %v4548 = vsel %vm956, %v4531, 0
    %4550 = vmatprep.subr.mxu0 0.0
    %4551 = vmatpush1.xpose.msra.mxu0 %v4548
    %4552 = vmatprep.subr.mxu0 0.0
    %4553 = vmatpush1.xpose.msra.mxu0 0.0
    %4554 = vmatprep.subr.mxu0 0.0
    %4555 = vmatpush1.xpose.msra.mxu0 0.0
    %4556 = vmatprep.subr.mxu0 0.0
    %4557 = vmatpush1.xpose.msra.mxu0 0.0
    %4558 = vmatprep.subr.mxu0 0.0
    %4559 = vmatpush1.xpose.msra.mxu0 0.0
    %4560 = vmatprep.subr.mxu0 0.0
    %4561 = vmatpush1.xpose.msra.mxu0 0.0
    %4562 = vmatprep.subr.mxu0 0.0
    %4563 = vmatpush1.xpose.msra.mxu0 0.0
    %4564 = vmatprep.subr.mxu0 0.0
    %4565 = vmatpush1.xpose.msra.mxu0 0.0
    %4566 = vmatprep.subr.mxu0 0.0
    %4567 = vmatpush1.xpose.msra.mxu0 0.0
    %4568 = vmatprep.subr.mxu0 0.0
    %4569 = vmatpush1.xpose.msra.mxu0 0.0
    %4570 = vmatprep.subr.mxu0 0.0
    %4571 = vmatpush1.xpose.msra.mxu0 0.0
    %4572 = vmatprep.subr.mxu0 0.0
    %4573 = vmatpush1.xpose.msra.mxu0 0.0
    %4574 = vmatprep.subr.mxu0 0.0
    %4575 = vmatpush1.xpose.msra.mxu0 0.0
    %4576 = vmatprep.subr.mxu0 0.0
    %4577 = vmatpush1.xpose.msra.mxu0 0.0
    %4578 = vmatprep.subr.mxu0 0.0
    %4579 = vmatpush1.xpose.msra.mxu0 0.0
    %4580 = vmatprep.subr.mxu0 0.0
    %4581 = vmatpush1.xpose.msra.mxu0 0.0
    %4582 = vmatprep.subr.mxu0 0.0
    %4583 = vmatpush1.xpose.msra.mxu0 0.0
    %4584 = vmatprep.subr.mxu0 0.0
    %4585 = vmatpush1.xpose.msra.mxu0 0.0
    %4586 = vmatprep.subr.mxu0 0.0
    %4587 = vmatpush1.xpose.msra.mxu0 0.0
    %4588 = vmatprep.subr.mxu0 0.0
    %4589 = vmatpush1.xpose.msra.mxu0 0.0
    %4590 = vmatprep.subr.mxu0 0.0
    %4591 = vmatpush1.xpose.msra.mxu0 0.0
    %4592 = vmatprep.subr.mxu0 0.0
    %4593 = vmatpush1.xpose.msra.mxu0 0.0
    %4594 = vmatprep.subr.mxu0 0.0
    %4595 = vmatpush1.xpose.msra.mxu0 0.0
    %4596 = vmatprep.subr.mxu0 0.0
    %4597 = vmatpush1.xpose.msra.mxu0 0.0
    %4598 = vmatprep.subr.mxu0 0.0
    %4599 = vmatpush1.xpose.msra.mxu0 0.0
    %4600 = vmatprep.subr.mxu0 0.0
    %4601 = vmatpush1.xpose.msra.mxu0 0.0
    %4602 = vmatprep.subr.mxu0 0.0
    %4603 = vmatpush1.xpose.msra.mxu0 0.0
    %4604 = vmatprep.subr.mxu0 0.0
    %4605 = vmatpush1.xpose.msra.mxu0 0.0
    %4606 = vmatprep.subr.mxu0 0.0
    %4607 = vmatpush1.xpose.msra.mxu0 0.0
    %4608 = vmatprep.subr.mxu0 0.0
    %4609 = vmatpush1.xpose.msra.mxu0 0.0
    %4610 = vmatprep.subr.mxu0 0.0
    %4611 = vmatpush1.xpose.msra.mxu0 0.0
    %4612 = vmatprep.subr.mxu0 0.0
    %4613 = vmatpush1.xpose.msra.mxu0 0.0
    %4614 = vmatprep.mubr.f32.mxu0 0.0
    %4615 = vmatmul.mubr.f32.gmra.mrb[0].mxu0 %v4539
    %v4616 = vpop.f32.mrb[0].mxu0
    %v4617 = vadd.f32 0.0, %v4616
    %v4618 = vpop.f32.mrb[0].mxu0
    %4619 = vmatprep.mubr.f32.mxu0 0.0
    %4620 = vmatmul.mubr.f32.gmra.mrb[0].mxu0 %v4541
    %v4621 = vpop.f32.mrb[0].mxu0
    %v4622 = vadd.f32 0.0, %v4621
    %v4623 = vpop.f32.mrb[0].mxu0
    %4624 = vmatprep.mubr.f32.mxu0 0.0
    %4625 = vmatmul.mubr.f32.gmra.mrb[0].mxu0 %v4543
    %v4626 = vpop.f32.mrb[0].mxu0
    %v4627 = vadd.f32 0.0, %v4626
    %v4628 = vpop.f32.mrb[0].mxu0
    %4629 = vmatprep.mubr.f32.mxu0 0.0
    %4630 = vmatmul.mubr.f32.gmra.mrb[0].mxu0 %v4545
    %v4631 = vpop.f32.mrb[0].mxu0
    %v4632 = vadd.f32 0.0, %v4631
    %v4633 = vpop.f32.mrb[0].mxu0
    %4634 = vdwg.mxu0
    %v4635 = vmul.f32 %v4617, 0.17677669
    %v4636 = vmul.f32 %v4622, 0.17677669
    %v4637 = vmul.f32 %v4627, 0.17677669
    %v4638 = vmul.f32 %v4632, 0.17677669
    %v4639 = vsel %vm1141, %v4635, -1e+30
    %v4640 = vsel %vm1141, %v4636, -1e+30
    %v4641 = vsel %vm1141, %v4637, -1e+30
    %v4642 = vsel %vm1141, %v4638, -1e+30
    %v4643 = vsel %vm1146, %v4639, -inf
    %4644 = vmax.xlane.f32.xlu0 %v4643
    %v4645 = vpop.xlane.xlu0 %4644
    %v4646 = vsel %vm1146, %v4640, -inf
    %4647 = vmax.xlane.f32.xlu0 %v4646
    %v4648 = vpop.xlane.xlu0 %4647
    %v4649 = vsel %vm1146, %v4641, -inf
    %4650 = vmax.xlane.f32.xlu0 %v4649
    %v4651 = vpop.xlane.xlu0 %4650
    %v4652 = vsel %vm1146, %v4642, -inf
    %4653 = vmax.xlane.f32.xlu0 %v4652
    %v4654 = vpop.xlane.xlu0 %4653
    %v4655 = vsub.f32 %v4639, %v4645
    %v4656 = vsub.f32 %v4640, %v4648
    %v4657 = vsub.f32 %v4641, %v4651
    %v4658 = vsub.f32 %v4642, %v4654
    %v4659 = vmul.f32 %v4655, 1.442695
    %v4660 = vpow.pop %v4659
    %v4661 = vmul.f32 %v4656, 1.442695
    %v4662 = vpow.pop %v4661
    %v4663 = vmul.f32 %v4657, 1.442695
    %v4664 = vpow.pop %v4663
    %v4665 = vmul.f32 %v4658, 1.442695
    %v4666 = vpow.pop %v4665
    %v4667 = vsel %vm1146, %v4660, 0.0
    %4668 = vadd.xlane.f32.xlu0 %v4667
    %v4669 = vpop.xlane.xlu0 %4668
    %v4670 = vsel %vm1146, %v4662, 0.0
    %4671 = vadd.xlane.f32.xlu0 %v4670
    %v4672 = vpop.xlane.xlu0 %4671
    %v4673 = vsel %vm1146, %v4664, 0.0
    %4674 = vadd.xlane.f32.xlu0 %v4673
    %v4675 = vpop.xlane.xlu0 %4674
    %v4676 = vsel %vm1146, %v4666, 0.0
    %4677 = vadd.xlane.f32.xlu0 %v4676
    %v4678 = vpop.xlane.xlu0 %4677
    %v4679 = vrcp.pop %v4669
    %v4680 = vrcp.pop %v4672
    %v4681 = vrcp.pop %v4675
    %v4682 = vrcp.pop %v4678
    %v4683 = vmul.f32 %v4660, %v4679
    %v4684 = vmul.f32 %v4662, %v4680
    %v4685 = vmul.f32 %v4664, %v4681
    %v4686 = vmul.f32 %v4666, %v4682
    %4687 = vrot.lane.b32.xlu0 %v4378, 96
    %v4688 = vpop.permute.xlu0 %4687
    %v4691 = vsel %vm1146, %v4683, 0
    %v4694 = vsel %vm1146, %v4684, 0
    %v4697 = vsel %vm1146, %v4685, 0
    %v4700 = vsel %vm1146, %v4686, 0
    %4702 = vmatprep.subr.mxu0 0.0
    %4703 = vmatpush1.msra.mxu0 %v4688
    %4704 = vmatprep.subr.mxu0 0.0
    %4705 = vmatpush1.msra.mxu0 0.0
    %4706 = vmatprep.subr.mxu0 0.0
    %4707 = vmatpush1.msra.mxu0 0.0
    %4708 = vmatprep.subr.mxu0 0.0
    %4709 = vmatpush1.msra.mxu0 0.0
    %4710 = vmatprep.subr.mxu0 0.0
    %4711 = vmatpush1.msra.mxu0 0.0
    %4712 = vmatprep.subr.mxu0 0.0
    %4713 = vmatpush1.msra.mxu0 0.0
    %4714 = vmatprep.subr.mxu0 0.0
    %4715 = vmatpush1.msra.mxu0 0.0
    %4716 = vmatprep.subr.mxu0 0.0
    %4717 = vmatpush1.msra.mxu0 0.0
    %4718 = vmatprep.subr.mxu0 0.0
    %4719 = vmatpush1.msra.mxu0 0.0
    %4720 = vmatprep.subr.mxu0 0.0
    %4721 = vmatpush1.msra.mxu0 0.0
    %4722 = vmatprep.subr.mxu0 0.0
    %4723 = vmatpush1.msra.mxu0 0.0
    %4724 = vmatprep.subr.mxu0 0.0
    %4725 = vmatpush1.msra.mxu0 0.0
    %4726 = vmatprep.subr.mxu0 0.0
    %4727 = vmatpush1.msra.mxu0 0.0
    %4728 = vmatprep.subr.mxu0 0.0
    %4729 = vmatpush1.msra.mxu0 0.0
    %4730 = vmatprep.subr.mxu0 0.0
    %4731 = vmatpush1.msra.mxu0 0.0
    %4732 = vmatprep.subr.mxu0 0.0
    %4733 = vmatpush1.msra.mxu0 0.0
    %4734 = vmatprep.subr.mxu0 0.0
    %4735 = vmatpush1.msra.mxu0 0.0
    %4736 = vmatprep.subr.mxu0 0.0
    %4737 = vmatpush1.msra.mxu0 0.0
    %4738 = vmatprep.subr.mxu0 0.0
    %4739 = vmatpush1.msra.mxu0 0.0
    %4740 = vmatprep.subr.mxu0 0.0
    %4741 = vmatpush1.msra.mxu0 0.0
    %4742 = vmatprep.subr.mxu0 0.0
    %4743 = vmatpush1.msra.mxu0 0.0
    %4744 = vmatprep.subr.mxu0 0.0
    %4745 = vmatpush1.msra.mxu0 0.0
    %4746 = vmatprep.subr.mxu0 0.0
    %4747 = vmatpush1.msra.mxu0 0.0
    %4748 = vmatprep.subr.mxu0 0.0
    %4749 = vmatpush1.msra.mxu0 0.0
    %4750 = vmatprep.subr.mxu0 0.0
    %4751 = vmatpush1.msra.mxu0 0.0
    %4752 = vmatprep.subr.mxu0 0.0
    %4753 = vmatpush1.msra.mxu0 0.0
    %4754 = vmatprep.subr.mxu0 0.0
    %4755 = vmatpush1.msra.mxu0 0.0
    %4756 = vmatprep.subr.mxu0 0.0
    %4757 = vmatpush1.msra.mxu0 0.0
    %4758 = vmatprep.subr.mxu0 0.0
    %4759 = vmatpush1.msra.mxu0 0.0
    %4760 = vmatprep.subr.mxu0 0.0
    %4761 = vmatpush1.msra.mxu0 0.0
    %4762 = vmatprep.subr.mxu0 0.0
    %4763 = vmatpush1.msra.mxu0 0.0
    %4764 = vmatprep.subr.mxu0 0.0
    %4765 = vmatpush1.msra.mxu0 0.0
    %4766 = vmatprep.mubr.f32.mxu0 0.0
    %4767 = vmatmul.mubr.f32.gmra.mrb[0].mxu0 %v4691
    %v4768 = vpop.f32.mrb[0].mxu0
    %v4769 = vadd.f32 0.0, %v4768
    %v4770 = vpop.f32.mrb[0].mxu0
    %4771 = vmatprep.mubr.f32.mxu0 0.0
    %4772 = vmatmul.mubr.f32.gmra.mrb[0].mxu0 %v4694
    %v4773 = vpop.f32.mrb[0].mxu0
    %v4774 = vadd.f32 0.0, %v4773
    %v4775 = vpop.f32.mrb[0].mxu0
    %4776 = vmatprep.mubr.f32.mxu0 0.0
    %4777 = vmatmul.mubr.f32.gmra.mrb[0].mxu0 %v4697
    %v4778 = vpop.f32.mrb[0].mxu0
    %v4779 = vadd.f32 0.0, %v4778
    %v4780 = vpop.f32.mrb[0].mxu0
    %4781 = vmatprep.mubr.f32.mxu0 0.0
    %4782 = vmatmul.mubr.f32.gmra.mrb[0].mxu0 %v4700
    %v4783 = vpop.f32.mrb[0].mxu0
    %v4784 = vadd.f32 0.0, %v4783
    %v4785 = vpop.f32.mrb[0].mxu0
    %4786 = vdwg.mxu0
    %4788 = vrot.lane.b32.xlu0 %v4774, 32
    %v4789 = vpop.permute.xlu0 %4788
    %4792 = vrot.lane.b32.xlu0 %v4779, 64
    %v4793 = vpop.permute.xlu0 %4792
    %4796 = vrot.lane.b32.xlu0 %v4784, 96
    %v4797 = vpop.permute.xlu0 %4796
    %v4799 = vsel %vm956, %v4769, %v4789
    %v4800 = vsel %vm1304, %v4799, %v4793
    %v4801 = vsel %vm1306, %v4800, %v4797
    %v4802 = vpack.c.bf16 %v4801, %v4801
    %4803 = vmatprep.subr.bf16.mxu0 0
    %4804 = vmatpush1.bf16.msra.mxu0 %v4233
    %4805 = vmatprep.subr.bf16.mxu0 0
    %4806 = vmatpush1.bf16.msra.mxu0 %v4234
    %4807 = vmatprep.subr.bf16.mxu0 0
    %4808 = vmatpush1.bf16.msra.mxu0 %v4235
    %4809 = vmatprep.subr.bf16.mxu0 0
    %4810 = vmatpush1.bf16.msra.mxu0 %v4236
    %4811 = vmatprep.subr.bf16.mxu0 0
    %4812 = vmatpush1.bf16.msra.mxu0 %v4237
    %4813 = vmatprep.subr.bf16.mxu0 0
    %4814 = vmatpush1.bf16.msra.mxu0 %v4238
    %4815 = vmatprep.subr.bf16.mxu0 0
    %4816 = vmatpush1.bf16.msra.mxu0 %v4239
    %4817 = vmatprep.subr.bf16.mxu0 0
    %4818 = vmatpush1.bf16.msra.mxu0 %v4240
    %4819 = vmatprep.subr.bf16.mxu0 0
    %4820 = vmatpush1.bf16.msra.mxu0 0
    %4821 = vmatprep.subr.bf16.mxu0 0
    %4822 = vmatpush1.bf16.msra.mxu0 0
    %4823 = vmatprep.subr.bf16.mxu0 0
    %4824 = vmatpush1.bf16.msra.mxu0 0
    %4825 = vmatprep.subr.bf16.mxu0 0
    %4826 = vmatpush1.bf16.msra.mxu0 0
    %4827 = vmatprep.subr.bf16.mxu0 0
    %4828 = vmatpush1.bf16.msra.mxu0 0
    %4829 = vmatprep.subr.bf16.mxu0 0
    %4830 = vmatpush1.bf16.msra.mxu0 0
    %4831 = vmatprep.subr.bf16.mxu0 0
    %4832 = vmatpush1.bf16.msra.mxu0 0
    %4833 = vmatprep.subr.bf16.mxu0 0
    %4834 = vmatpush1.bf16.msra.mxu0 0
    %4835 = vmatprep.mubr.bf16.mxu0 0
    %4836 = vmatmul.mubr.bf16.gmra.mrb[0].mxu0 %v4802
    %v4837 = vpop.f32.mrb[0].mxu0
    %v4838 = vadd.f32 0.0, %v4837
    %v4839 = vpop.f32.mrb[0].mxu0
    %v4840 = vpop.f32.mrb[0].mxu0
    %v4841 = vpop.f32.mrb[0].mxu0
    %4842 = vdwg.mxu0
    %v4843 = vadd.f32 %v4194, %v4838
    %v4844 = vmul.f32 %v4843, %v4843
    %4845 = vadd.xlane.f32.xlu0 %v4844
    %v4846 = vpop.xlane.xlu0 %4845
    %v4847 = vmul.f32 %v4846, %v695
    %v4848 = vadd.f32 %v4847, 1e-06
    %v4849 = vrsqrt.pop %v4848
    %v4850 = vmul.f32 %v4843, %v4849
    %v4851 = vlaneseq
    %v4852 = vshrl.u32 %v4851, 7
    %v4853 = vsub.s32 0, %v4852
    %v4854 = vrot.slane %v4241, %v4853
    %v4855 = vmul.f32 %v4850, %v4854
    %v4856 = vpack.c.bf16 %v4855, %v4855
    %4857 = vmatprep.subr.bf16.mxu0 %v4243
    %4858 = vmatpush1.bf16.msra.mxu0 %v4242
    %4859 = vmatprep.subr.bf16.mxu0 %v4247
    %4860 = vmatpush1.bf16.msra.mxu0 %v4246
    %4861 = vmatprep.subr.bf16.mxu0 %v4251
    %4862 = vmatpush1.bf16.msra.mxu0 %v4250
    %4863 = vmatprep.subr.bf16.mxu0 %v4255
    %4864 = vmatpush1.bf16.msra.mxu0 %v4254
    %4865 = vmatprep.subr.bf16.mxu0 %v4259
    %4866 = vmatpush1.bf16.msra.mxu0 %v4258
    %4867 = vmatprep.subr.bf16.mxu0 %v4263
    %4868 = vmatpush1.bf16.msra.mxu0 %v4262
    %4869 = vmatprep.subr.bf16.mxu0 %v4267
    %4870 = vmatpush1.bf16.msra.mxu0 %v4266
    %4871 = vmatprep.subr.bf16.mxu0 %v4271
    %4872 = vmatpush1.bf16.msra.mxu0 %v4270
    %4873 = vmatprep.subr.bf16.mxu0 0
    %4874 = vmatpush1.bf16.msra.mxu0 0
    %4875 = vmatprep.subr.bf16.mxu0 0
    %4876 = vmatpush1.bf16.msra.mxu0 0
    %4877 = vmatprep.subr.bf16.mxu0 0
    %4878 = vmatpush1.bf16.msra.mxu0 0
    %4879 = vmatprep.subr.bf16.mxu0 0
    %4880 = vmatpush1.bf16.msra.mxu0 0
    %4881 = vmatprep.subr.bf16.mxu0 0
    %4882 = vmatpush1.bf16.msra.mxu0 0
    %4883 = vmatprep.subr.bf16.mxu0 0
    %4884 = vmatpush1.bf16.msra.mxu0 0
    %4885 = vmatprep.subr.bf16.mxu0 0
    %4886 = vmatpush1.bf16.msra.mxu0 0
    %4887 = vmatprep.subr.bf16.mxu0 0
    %4888 = vmatpush1.bf16.msra.mxu0 0
    %4889 = vmatprep.mubr.bf16.mxu0 0
    %4890 = vmatmul.mubr.bf16.gmra.mrb[0].mxu0 %v4856
    %v4891 = vpop.f32.mrb[0].mxu0
    %v4892 = vadd.f32 0.0, %v4891
    %v4893 = vpop.f32.mrb[0].mxu0
    %v4894 = vadd.f32 0.0, %v4893
    %v4895 = vpop.f32.mrb[0].mxu0
    %v4896 = vpop.f32.mrb[0].mxu0
    %4897 = vdwg.mxu0
    %4898 = vmatprep.subr.bf16.mxu0 %v4245
    %4899 = vmatpush1.bf16.msra.mxu0 %v4244
    %4900 = vmatprep.subr.bf16.mxu0 %v4249
    %4901 = vmatpush1.bf16.msra.mxu0 %v4248
    %4902 = vmatprep.subr.bf16.mxu0 %v4253
    %4903 = vmatpush1.bf16.msra.mxu0 %v4252
    %4904 = vmatprep.subr.bf16.mxu0 %v4257
    %4905 = vmatpush1.bf16.msra.mxu0 %v4256
    %4906 = vmatprep.subr.bf16.mxu0 %v4261
    %4907 = vmatpush1.bf16.msra.mxu0 %v4260
    %4908 = vmatprep.subr.bf16.mxu0 %v4265
    %4909 = vmatpush1.bf16.msra.mxu0 %v4264
    %4910 = vmatprep.subr.bf16.mxu0 %v4269
    %4911 = vmatpush1.bf16.msra.mxu0 %v4268
    %4912 = vmatprep.subr.bf16.mxu0 %v4273
    %4913 = vmatpush1.bf16.msra.mxu0 %v4272
    %4914 = vmatprep.subr.bf16.mxu0 0
    %4915 = vmatpush1.bf16.msra.mxu0 0
    %4916 = vmatprep.subr.bf16.mxu0 0
    %4917 = vmatpush1.bf16.msra.mxu0 0
    %4918 = vmatprep.subr.bf16.mxu0 0
    %4919 = vmatpush1.bf16.msra.mxu0 0
    %4920 = vmatprep.subr.bf16.mxu0 0
    %4921 = vmatpush1.bf16.msra.mxu0 0
    %4922 = vmatprep.subr.bf16.mxu0 0
    %4923 = vmatpush1.bf16.msra.mxu0 0
    %4924 = vmatprep.subr.bf16.mxu0 0
    %4925 = vmatpush1.bf16.msra.mxu0 0
    %4926 = vmatprep.subr.bf16.mxu0 0
    %4927 = vmatpush1.bf16.msra.mxu0 0
    %4928 = vmatprep.subr.bf16.mxu0 0
    %4929 = vmatpush1.bf16.msra.mxu0 0
    %4930 = vmatprep.mubr.bf16.mxu0 0
    %4931 = vmatmul.mubr.bf16.gmra.mrb[0].mxu0 %v4856
    %v4932 = vpop.f32.mrb[0].mxu0
    %v4933 = vadd.f32 0.0, %v4932
    %v4934 = vpop.f32.mrb[0].mxu0
    %v4935 = vadd.f32 0.0, %v4934
    %v4936 = vpop.f32.mrb[0].mxu0
    %v4937 = vpop.f32.mrb[0].mxu0
    %4938 = vdwg.mxu0
    %v4939 = vxor.u32 %v4892, 2147483648
    %v4940 = vxor.u32 %v4894, 2147483648
    %v4941 = vmul.f32 %v4939, 1.442695
    %v4942 = vpow.pop %v4941
    %v4943 = vmul.f32 %v4940, 1.442695
    %v4944 = vpow.pop %v4943
    %v4945 = vadd.f32 %v4942, 1.0
    %v4946 = vadd.f32 %v4944, 1.0
    %v4947 = vrcp.pop %v4945
    %v4948 = vmul.f32 1.0, %v4947
    %v4949 = vrcp.pop %v4946
    %v4950 = vmul.f32 1.0, %v4949
    %v4951 = vmul.f32 %v4892, %v4948
    %v4952 = vmul.f32 %v4894, %v4950
    %v4953 = vmul.f32 %v4951, %v4933
    %v4954 = vmul.f32 %v4952, %v4935
    %v4955 = vpack.c.bf16 %v4953, %v4953
    %v4956 = vpack.c.bf16 %v4954, %v4954
    %4957 = vmatprep.subr.bf16.mxu0 0
    %4958 = vmatpush1.bf16.msra.mxu0 %v4274
    %4959 = vmatprep.subr.bf16.mxu0 0
    %4960 = vmatpush1.bf16.msra.mxu0 %v4275
    %4961 = vmatprep.subr.bf16.mxu0 0
    %4962 = vmatpush1.bf16.msra.mxu0 %v4276
    %4963 = vmatprep.subr.bf16.mxu0 0
    %4964 = vmatpush1.bf16.msra.mxu0 %v4277
    %4965 = vmatprep.subr.bf16.mxu0 0
    %4966 = vmatpush1.bf16.msra.mxu0 %v4278
    %4967 = vmatprep.subr.bf16.mxu0 0
    %4968 = vmatpush1.bf16.msra.mxu0 %v4279
    %4969 = vmatprep.subr.bf16.mxu0 0
    %4970 = vmatpush1.bf16.msra.mxu0 %v4280
    %4971 = vmatprep.subr.bf16.mxu0 0
    %4972 = vmatpush1.bf16.msra.mxu0 %v4281
    %4973 = vmatprep.subr.bf16.mxu0 0
    %4974 = vmatpush1.bf16.msra.mxu0 %v4282
    %4975 = vmatprep.subr.bf16.mxu0 0
    %4976 = vmatpush1.bf16.msra.mxu0 %v4283
    %4977 = vmatprep.subr.bf16.mxu0 0
    %4978 = vmatpush1.bf16.msra.mxu0 %v4284
    %4979 = vmatprep.subr.bf16.mxu0 0
    %4980 = vmatpush1.bf16.msra.mxu0 %v4285
    %4981 = vmatprep.subr.bf16.mxu0 0
    %4982 = vmatpush1.bf16.msra.mxu0 %v4286
    %4983 = vmatprep.subr.bf16.mxu0 0
    %4984 = vmatpush1.bf16.msra.mxu0 %v4287
    %4985 = vmatprep.subr.bf16.mxu0 0
    %4986 = vmatpush1.bf16.msra.mxu0 %v4288
    %4987 = vmatprep.subr.bf16.mxu0 0
    %4988 = vmatpush1.bf16.msra.mxu0 %v4289
    %4989 = vmatprep.mubr.bf16.mxu0 %v4956
    %4990 = vmatmul.mubr.bf16.gmra.mrb[0].mxu0 %v4955
    %v4991 = vpop.f32.mrb[0].mxu0
    %v4992 = vadd.f32 0.0, %v4991
    %v4993 = vpop.f32.mrb[0].mxu0
    %v4994 = vpop.f32.mrb[0].mxu0
    %v4995 = vpop.f32.mrb[0].mxu0
    %4996 = vdwg.mxu0
    %v4997 = vadd.f32 %v4843, %v4992
    %v4998 = vld [vmem:[#allocation2 + $0x1] sm:$0x1]
    %s4999 = scalar_lea.vmem [#allocation3], 64
    %v5000 = vld [vmem:[%s4999] sm:$0xff]
    %v5001 = vld [vmem:[%s4999 + $0x8] sm:$0xff]
    %v5002 = vld [vmem:[%s4999 + $0x10] sm:$0xff]
    %v5003 = vld [vmem:[%s4999 + $0x18] sm:$0xff]
    %v5004 = vld [vmem:[%s4999 + $0x20] sm:$0xff]
    %v5005 = vld [vmem:[%s4999 + $0x28] sm:$0xff]
    %v5006 = vld [vmem:[%s4999 + $0x30] sm:$0xff]
    %v5007 = vld [vmem:[%s4999 + $0x38] sm:$0xff]
    %s5008 = scalar_lea.vmem [#allocation4], 64
    %v5009 = vld [vmem:[%s5008] sm:$0xff]
    %v5010 = vld [vmem:[%s5008 + $0x8] sm:$0xff]
    %v5011 = vld [vmem:[%s5008 + $0x10] sm:$0xff]
    %v5012 = vld [vmem:[%s5008 + $0x18] sm:$0xff]
    %v5013 = vld [vmem:[%s5008 + $0x20] sm:$0xff]
    %v5014 = vld [vmem:[%s5008 + $0x28] sm:$0xff]
    %v5015 = vld [vmem:[%s5008 + $0x30] sm:$0xff]
    %v5016 = vld [vmem:[%s5008 + $0x38] sm:$0xff]
    %s5017 = scalar_lea.vmem [#allocation5], 64
    %v5018 = vld [vmem:[%s5017] sm:$0xff]
    %v5019 = vld [vmem:[%s5017 + $0x8] sm:$0xff]
    %v5020 = vld [vmem:[%s5017 + $0x10] sm:$0xff]
    %v5021 = vld [vmem:[%s5017 + $0x18] sm:$0xff]
    %v5022 = vld [vmem:[%s5017 + $0x20] sm:$0xff]
    %v5023 = vld [vmem:[%s5017 + $0x28] sm:$0xff]
    %v5024 = vld [vmem:[%s5017 + $0x30] sm:$0xff]
    %v5025 = vld [vmem:[%s5017 + $0x38] sm:$0xff]
    %v5026 = vld [vmem:[#allocation6 + $0x1] sm:$0x1]
    %s5027 = scalar_lea.vmem [#allocation7], 256
    %v5028 = vld [vmem:[%s5027] sm:$0xff]
    %v5029 = vld [vmem:[%s5027 + $0x8] sm:$0xff]
    %v5030 = vld [vmem:[%s5027 + $0x10] sm:$0xff]
    %v5031 = vld [vmem:[%s5027 + $0x18] sm:$0xff]
    %v5032 = vld [vmem:[%s5027 + $0x20] sm:$0xff]
    %v5033 = vld [vmem:[%s5027 + $0x28] sm:$0xff]
    %v5034 = vld [vmem:[%s5027 + $0x30] sm:$0xff]
    %v5035 = vld [vmem:[%s5027 + $0x38] sm:$0xff]
    %v5036 = vld [vmem:[%s5027 + $0x40] sm:$0xff]
    %v5037 = vld [vmem:[%s5027 + $0x48] sm:$0xff]
    %v5038 = vld [vmem:[%s5027 + $0x50] sm:$0xff]
    %v5039 = vld [vmem:[%s5027 + $0x58] sm:$0xff]
    %v5040 = vld [vmem:[%s5027 + $0x60] sm:$0xff]
    %v5041 = vld [vmem:[%s5027 + $0x68] sm:$0xff]
    %v5042 = vld [vmem:[%s5027 + $0x70] sm:$0xff]
    %v5043 = vld [vmem:[%s5027 + $0x78] sm:$0xff]
    %v5044 = vld [vmem:[%s5027 + $0x80] sm:$0xff]
    %v5045 = vld [vmem:[%s5027 + $0x88] sm:$0xff]
    %v5046 = vld [vmem:[%s5027 + $0x90] sm:$0xff]
    %v5047 = vld [vmem:[%s5027 + $0x98] sm:$0xff]
    %v5048 = vld [vmem:[%s5027 + $0xa0] sm:$0xff]
    %v5049 = vld [vmem:[%s5027 + $0xa8] sm:$0xff]
    %v5050 = vld [vmem:[%s5027 + $0xb0] sm:$0xff]
    %v5051 = vld [vmem:[%s5027 + $0xb8] sm:$0xff]
    %v5052 = vld [vmem:[%s5027 + $0xc0] sm:$0xff]
    %v5053 = vld [vmem:[%s5027 + $0xc8] sm:$0xff]
    %v5054 = vld [vmem:[%s5027 + $0xd0] sm:$0xff]
    %v5055 = vld [vmem:[%s5027 + $0xd8] sm:$0xff]
    %v5056 = vld [vmem:[%s5027 + $0xe0] sm:$0xff]
    %v5057 = vld [vmem:[%s5027 + $0xe8] sm:$0xff]
    %v5058 = vld [vmem:[%s5027 + $0xf0] sm:$0xff]
    %v5059 = vld [vmem:[%s5027 + $0xf8] sm:$0xff]
    %s5060 = scalar_lea.vmem [#allocation8], 128
    %v5061 = vld [vmem:[%s5060] sm:$0xff]
    %v5062 = vld [vmem:[%s5060 + $0x8] sm:$0xff]
    %v5063 = vld [vmem:[%s5060 + $0x10] sm:$0xff]
    %v5064 = vld [vmem:[%s5060 + $0x18] sm:$0xff]
    %v5065 = vld [vmem:[%s5060 + $0x20] sm:$0xff]
    %v5066 = vld [vmem:[%s5060 + $0x28] sm:$0xff]
    %v5067 = vld [vmem:[%s5060 + $0x30] sm:$0xff]
    %v5068 = vld [vmem:[%s5060 + $0x38] sm:$0xff]
    %v5069 = vld [vmem:[%s5060 + $0x40] sm:$0xff]
    %v5070 = vld [vmem:[%s5060 + $0x48] sm:$0xff]
    %v5071 = vld [vmem:[%s5060 + $0x50] sm:$0xff]
    %v5072 = vld [vmem:[%s5060 + $0x58] sm:$0xff]
    %v5073 = vld [vmem:[%s5060 + $0x60] sm:$0xff]
    %v5074 = vld [vmem:[%s5060 + $0x68] sm:$0xff]
    %v5075 = vld [vmem:[%s5060 + $0x70] sm:$0xff]
    %v5076 = vld [vmem:[%s5060 + $0x78] sm:$0xff]
    %v5077 = vmul.f32 %v4997, %v4997
    %5078 = vadd.xlane.f32.xlu0 %v5077
    %v5079 = vpop.xlane.xlu0 %5078
    %v5080 = vmul.f32 %v5079, %v695
    %v5081 = vadd.f32 %v5080, 1e-06
    %v5082 = vrsqrt.pop %v5081
    %v5083 = vmul.f32 %v4997, %v5082
    %v5084 = vlaneseq
    %v5085 = vshrl.u32 %v5084, 7
    %v5086 = vsub.s32 0, %v5085
    %v5087 = vrot.slane %v4998, %v5086
    %v5088 = vmul.f32 %v5083, %v5087
    %v5089 = vpack.c.bf16 %v5088, %v5088
    %5090 = vmatprep.subr.bf16.mxu0 0
    %5091 = vmatpush1.bf16.msra.mxu0 %v5000
    %5092 = vmatprep.subr.bf16.mxu0 0
    %5093 = vmatpush1.bf16.msra.mxu0 %v5001
    %5094 = vmatprep.subr.bf16.mxu0 0
    %5095 = vmatpush1.bf16.msra.mxu0 %v5002
    %5096 = vmatprep.subr.bf16.mxu0 0
    %5097 = vmatpush1.bf16.msra.mxu0 %v5003
    %5098 = vmatprep.subr.bf16.mxu0 0
    %5099 = vmatpush1.bf16.msra.mxu0 %v5004
    %5100 = vmatprep.subr.bf16.mxu0 0
    %5101 = vmatpush1.bf16.msra.mxu0 %v5005
    %5102 = vmatprep.subr.bf16.mxu0 0
    %5103 = vmatpush1.bf16.msra.mxu0 %v5006
    %5104 = vmatprep.subr.bf16.mxu0 0
    %5105 = vmatpush1.bf16.msra.mxu0 %v5007
    %5106 = vmatprep.subr.bf16.mxu0 0
    %5107 = vmatpush1.bf16.msra.mxu0 0
    %5108 = vmatprep.subr.bf16.mxu0 0
    %5109 = vmatpush1.bf16.msra.mxu0 0
    %5110 = vmatprep.subr.bf16.mxu0 0
    %5111 = vmatpush1.bf16.msra.mxu0 0
    %5112 = vmatprep.subr.bf16.mxu0 0
    %5113 = vmatpush1.bf16.msra.mxu0 0
    %5114 = vmatprep.subr.bf16.mxu0 0
    %5115 = vmatpush1.bf16.msra.mxu0 0
    %5116 = vmatprep.subr.bf16.mxu0 0
    %5117 = vmatpush1.bf16.msra.mxu0 0
    %5118 = vmatprep.subr.bf16.mxu0 0
    %5119 = vmatpush1.bf16.msra.mxu0 0
    %5120 = vmatprep.subr.bf16.mxu0 0
    %5121 = vmatpush1.bf16.msra.mxu0 0
    %5122 = vmatprep.mubr.bf16.mxu0 0
    %5123 = vmatmul.mubr.bf16.gmra.mrb[0].mxu0 %v5089
    %v5124 = vpop.f32.mrb[0].mxu0
    %v5125 = vadd.f32 0.0, %v5124
    %v5126 = vpop.f32.mrb[0].mxu0
    %v5127 = vpop.f32.mrb[0].mxu0
    %v5128 = vpop.f32.mrb[0].mxu0
    %5129 = vdwg.mxu0
    %5130 = vmatprep.subr.bf16.mxu0 0
    %5131 = vmatpush1.bf16.msra.mxu0 %v5009
    %5132 = vmatprep.subr.bf16.mxu0 0
    %5133 = vmatpush1.bf16.msra.mxu0 %v5010
    %5134 = vmatprep.subr.bf16.mxu0 0
    %5135 = vmatpush1.bf16.msra.mxu0 %v5011
    %5136 = vmatprep.subr.bf16.mxu0 0
    %5137 = vmatpush1.bf16.msra.mxu0 %v5012
    %5138 = vmatprep.subr.bf16.mxu0 0
    %5139 = vmatpush1.bf16.msra.mxu0 %v5013
    %5140 = vmatprep.subr.bf16.mxu0 0
    %5141 = vmatpush1.bf16.msra.mxu0 %v5014
    %5142 = vmatprep.subr.bf16.mxu0 0
    %5143 = vmatpush1.bf16.msra.mxu0 %v5015
    %5144 = vmatprep.subr.bf16.mxu0 0
    %5145 = vmatpush1.bf16.msra.mxu0 %v5016
    %5146 = vmatprep.subr.bf16.mxu0 0
    %5147 = vmatpush1.bf16.msra.mxu0 0
    %5148 = vmatprep.subr.bf16.mxu0 0
    %5149 = vmatpush1.bf16.msra.mxu0 0
    %5150 = vmatprep.subr.bf16.mxu0 0
    %5151 = vmatpush1.bf16.msra.mxu0 0
    %5152 = vmatprep.subr.bf16.mxu0 0
    %5153 = vmatpush1.bf16.msra.mxu0 0
    %5154 = vmatprep.subr.bf16.mxu0 0
    %5155 = vmatpush1.bf16.msra.mxu0 0
    %5156 = vmatprep.subr.bf16.mxu0 0
    %5157 = vmatpush1.bf16.msra.mxu0 0
    %5158 = vmatprep.subr.bf16.mxu0 0
    %5159 = vmatpush1.bf16.msra.mxu0 0
    %5160 = vmatprep.subr.bf16.mxu0 0
    %5161 = vmatpush1.bf16.msra.mxu0 0
    %5162 = vmatprep.mubr.bf16.mxu0 0
    %5163 = vmatmul.mubr.bf16.gmra.mrb[0].mxu0 %v5089
    %v5164 = vpop.f32.mrb[0].mxu0
    %v5165 = vadd.f32 0.0, %v5164
    %v5166 = vpop.f32.mrb[0].mxu0
    %v5167 = vpop.f32.mrb[0].mxu0
    %v5168 = vpop.f32.mrb[0].mxu0
    %5169 = vdwg.mxu0
    %v5170 = vmul.f32 %v5125, %v511
    %5171 = vmatprep.subr.mxu0 0.0
    %5172 = vmatpush1.msra.mxu0 %v513
    %5173 = vmatprep.subr.mxu0 0.0
    %5174 = vmatpush1.msra.mxu0 %v514
    %5175 = vmatprep.subr.mxu0 0.0
    %5176 = vmatpush1.msra.mxu0 %v515
    %5177 = vmatprep.subr.mxu0 0.0
    %5178 = vmatpush1.msra.mxu0 %v516
    %5179 = vmatprep.subr.mxu0 0.0
    %5180 = vmatpush1.msra.mxu0 %v517
    %5181 = vmatprep.subr.mxu0 0.0
    %5182 = vmatpush1.msra.mxu0 %v518
    %5183 = vmatprep.subr.mxu0 0.0
    %5184 = vmatpush1.msra.mxu0 %v519
    %5185 = vmatprep.subr.mxu0 0.0
    %5186 = vmatpush1.msra.mxu0 %v520
    %5187 = vmatprep.subr.mxu0 0.0
    %5188 = vmatpush1.msra.mxu0 %v521
    %5189 = vmatprep.subr.mxu0 0.0
    %5190 = vmatpush1.msra.mxu0 %v522
    %5191 = vmatprep.subr.mxu0 0.0
    %5192 = vmatpush1.msra.mxu0 %v523
    %5193 = vmatprep.subr.mxu0 0.0
    %5194 = vmatpush1.msra.mxu0 %v524
    %5195 = vmatprep.subr.mxu0 0.0
    %5196 = vmatpush1.msra.mxu0 %v525
    %5197 = vmatprep.subr.mxu0 0.0
    %5198 = vmatpush1.msra.mxu0 %v526
    %5199 = vmatprep.subr.mxu0 0.0
    %5200 = vmatpush1.msra.mxu0 %v527
    %5201 = vmatprep.subr.mxu0 0.0
    %5202 = vmatpush1.msra.mxu0 %v528
    %5203 = vmatprep.subr.mxu0 0.0
    %5204 = vmatpush1.msra.mxu0 0.0
    %5205 = vmatprep.subr.mxu0 0.0
    %5206 = vmatpush1.msra.mxu0 0.0
    %5207 = vmatprep.subr.mxu0 0.0
    %5208 = vmatpush1.msra.mxu0 0.0
    %5209 = vmatprep.subr.mxu0 0.0
    %5210 = vmatpush1.msra.mxu0 0.0
    %5211 = vmatprep.subr.mxu0 0.0
    %5212 = vmatpush1.msra.mxu0 0.0
    %5213 = vmatprep.subr.mxu0 0.0
    %5214 = vmatpush1.msra.mxu0 0.0
    %5215 = vmatprep.subr.mxu0 0.0
    %5216 = vmatpush1.msra.mxu0 0.0
    %5217 = vmatprep.subr.mxu0 0.0
    %5218 = vmatpush1.msra.mxu0 0.0
    %5219 = vmatprep.subr.mxu0 0.0
    %5220 = vmatpush1.msra.mxu0 0.0
    %5221 = vmatprep.subr.mxu0 0.0
    %5222 = vmatpush1.msra.mxu0 0.0
    %5223 = vmatprep.subr.mxu0 0.0
    %5224 = vmatpush1.msra.mxu0 0.0
    %5225 = vmatprep.subr.mxu0 0.0
    %5226 = vmatpush1.msra.mxu0 0.0
    %5227 = vmatprep.subr.mxu0 0.0
    %5228 = vmatpush1.msra.mxu0 0.0
    %5229 = vmatprep.subr.mxu0 0.0
    %5230 = vmatpush1.msra.mxu0 0.0
    %5231 = vmatprep.subr.mxu0 0.0
    %5232 = vmatpush1.msra.mxu0 0.0
    %5233 = vmatprep.subr.mxu0 0.0
    %5234 = vmatpush1.msra.mxu0 0.0
    %5235 = vmatprep.mubr.f32.mxu0 0.0
    %5236 = vmatmul.mubr.f32.gmra.mrb[0].mxu0 %v5125
    %v5237 = vpop.f32.mrb[0].mxu0
    %v5238 = vadd.f32 0.0, %v5237
    %v5239 = vpop.f32.mrb[0].mxu0
    %5240 = vdwg.mxu0
    %v5241 = vmul.f32 %v5238, %v512
    %v5242 = vadd.f32 %v5170, %v5241
    %v5243 = vmul.f32 %v5165, %v511
    %v5245 = vsel %vm956, %v5165, 0
    %5247 = vmatprep.subr.mxu0 0.0
    %5248 = vmatpush1.msra.mxu0 %v513
    %5249 = vmatprep.subr.mxu0 0.0
    %5250 = vmatpush1.msra.mxu0 %v514
    %5251 = vmatprep.subr.mxu0 0.0
    %5252 = vmatpush1.msra.mxu0 %v515
    %5253 = vmatprep.subr.mxu0 0.0
    %5254 = vmatpush1.msra.mxu0 %v516
    %5255 = vmatprep.subr.mxu0 0.0
    %5256 = vmatpush1.msra.mxu0 0.0
    %5257 = vmatprep.subr.mxu0 0.0
    %5258 = vmatpush1.msra.mxu0 0.0
    %5259 = vmatprep.subr.mxu0 0.0
    %5260 = vmatpush1.msra.mxu0 0.0
    %5261 = vmatprep.subr.mxu0 0.0
    %5262 = vmatpush1.msra.mxu0 0.0
    %5263 = vmatprep.subr.mxu0 0.0
    %5264 = vmatpush1.msra.mxu0 0.0
    %5265 = vmatprep.subr.mxu0 0.0
    %5266 = vmatpush1.msra.mxu0 0.0
    %5267 = vmatprep.subr.mxu0 0.0
    %5268 = vmatpush1.msra.mxu0 0.0
    %5269 = vmatprep.subr.mxu0 0.0
    %5270 = vmatpush1.msra.mxu0 0.0
    %5271 = vmatprep.subr.mxu0 0.0
    %5272 = vmatpush1.msra.mxu0 0.0
    %5273 = vmatprep.subr.mxu0 0.0
    %5274 = vmatpush1.msra.mxu0 0.0
    %5275 = vmatprep.subr.mxu0 0.0
    %5276 = vmatpush1.msra.mxu0 0.0
    %5277 = vmatprep.subr.mxu0 0.0
    %5278 = vmatpush1.msra.mxu0 0.0
    %5279 = vmatprep.subr.mxu0 0.0
    %5280 = vmatpush1.msra.mxu0 0.0
    %5281 = vmatprep.subr.mxu0 0.0
    %5282 = vmatpush1.msra.mxu0 0.0
    %5283 = vmatprep.subr.mxu0 0.0
    %5284 = vmatpush1.msra.mxu0 0.0
    %5285 = vmatprep.subr.mxu0 0.0
    %5286 = vmatpush1.msra.mxu0 0.0
    %5287 = vmatprep.subr.mxu0 0.0
    %5288 = vmatpush1.msra.mxu0 0.0
    %5289 = vmatprep.subr.mxu0 0.0
    %5290 = vmatpush1.msra.mxu0 0.0
    %5291 = vmatprep.subr.mxu0 0.0
    %5292 = vmatpush1.msra.mxu0 0.0
    %5293 = vmatprep.subr.mxu0 0.0
    %5294 = vmatpush1.msra.mxu0 0.0
    %5295 = vmatprep.subr.mxu0 0.0
    %5296 = vmatpush1.msra.mxu0 0.0
    %5297 = vmatprep.subr.mxu0 0.0
    %5298 = vmatpush1.msra.mxu0 0.0
    %5299 = vmatprep.subr.mxu0 0.0
    %5300 = vmatpush1.msra.mxu0 0.0
    %5301 = vmatprep.subr.mxu0 0.0
    %5302 = vmatpush1.msra.mxu0 0.0
    %5303 = vmatprep.subr.mxu0 0.0
    %5304 = vmatpush1.msra.mxu0 0.0
    %5305 = vmatprep.subr.mxu0 0.0
    %5306 = vmatpush1.msra.mxu0 0.0
    %5307 = vmatprep.subr.mxu0 0.0
    %5308 = vmatpush1.msra.mxu0 0.0
    %5309 = vmatprep.subr.mxu0 0.0
    %5310 = vmatpush1.msra.mxu0 0.0
    %5311 = vmatprep.mubr.f32.mxu0 0.0
    %5312 = vmatmul.mubr.f32.gmra.mrb[0].mxu0 %v5245
    %v5313 = vpop.f32.mrb[0].mxu0
    %v5314 = vadd.f32 0.0, %v5313
    %v5315 = vpop.f32.mrb[0].mxu0
    %5316 = vdwg.mxu0
    %v5317 = vmul.f32 %v5314, %v512
    %v5318 = vadd.f32 %v5243, %v5317
    %5320 = vrot.lane.b32.xlu0 %v5242, 96
    %v5321 = vpop.permute.xlu0 %5320
    %5322 = vrot.lane.b32.xlu0 %v5242, 64
    %v5323 = vpop.permute.xlu0 %5322
    %5324 = vrot.lane.b32.xlu0 %v5242, 32
    %v5325 = vpop.permute.xlu0 %5324
    %v5326 = vsel %vm956, %v5242, 0
    %v5328 = vsel %vm956, %v5321, 0
    %v5330 = vsel %vm956, %v5323, 0
    %v5332 = vsel %vm956, %v5325, 0
    %v5335 = vsel %vm956, %v5318, 0
    %5337 = vmatprep.subr.mxu0 0.0
    %5338 = vmatpush1.xpose.msra.mxu0 %v5335
    %5339 = vmatprep.subr.mxu0 0.0
    %5340 = vmatpush1.xpose.msra.mxu0 0.0
    %5341 = vmatprep.subr.mxu0 0.0
    %5342 = vmatpush1.xpose.msra.mxu0 0.0
    %5343 = vmatprep.subr.mxu0 0.0
    %5344 = vmatpush1.xpose.msra.mxu0 0.0
    %5345 = vmatprep.subr.mxu0 0.0
    %5346 = vmatpush1.xpose.msra.mxu0 0.0
    %5347 = vmatprep.subr.mxu0 0.0
    %5348 = vmatpush1.xpose.msra.mxu0 0.0
    %5349 = vmatprep.subr.mxu0 0.0
    %5350 = vmatpush1.xpose.msra.mxu0 0.0
    %5351 = vmatprep.subr.mxu0 0.0
    %5352 = vmatpush1.xpose.msra.mxu0 0.0
    %5353 = vmatprep.subr.mxu0 0.0
    %5354 = vmatpush1.xpose.msra.mxu0 0.0
    %5355 = vmatprep.subr.mxu0 0.0
    %5356 = vmatpush1.xpose.msra.mxu0 0.0
    %5357 = vmatprep.subr.mxu0 0.0
    %5358 = vmatpush1.xpose.msra.mxu0 0.0
    %5359 = vmatprep.subr.mxu0 0.0
    %5360 = vmatpush1.xpose.msra.mxu0 0.0
    %5361 = vmatprep.subr.mxu0 0.0
    %5362 = vmatpush1.xpose.msra.mxu0 0.0
    %5363 = vmatprep.subr.mxu0 0.0
    %5364 = vmatpush1.xpose.msra.mxu0 0.0
    %5365 = vmatprep.subr.mxu0 0.0
    %5366 = vmatpush1.xpose.msra.mxu0 0.0
    %5367 = vmatprep.subr.mxu0 0.0
    %5368 = vmatpush1.xpose.msra.mxu0 0.0
    %5369 = vmatprep.subr.mxu0 0.0
    %5370 = vmatpush1.xpose.msra.mxu0 0.0
    %5371 = vmatprep.subr.mxu0 0.0
    %5372 = vmatpush1.xpose.msra.mxu0 0.0
    %5373 = vmatprep.subr.mxu0 0.0
    %5374 = vmatpush1.xpose.msra.mxu0 0.0
    %5375 = vmatprep.subr.mxu0 0.0
    %5376 = vmatpush1.xpose.msra.mxu0 0.0
    %5377 = vmatprep.subr.mxu0 0.0
    %5378 = vmatpush1.xpose.msra.mxu0 0.0
    %5379 = vmatprep.subr.mxu0 0.0
    %5380 = vmatpush1.xpose.msra.mxu0 0.0
    %5381 = vmatprep.subr.mxu0 0.0
    %5382 = vmatpush1.xpose.msra.mxu0 0.0
    %5383 = vmatprep.subr.mxu0 0.0
    %5384 = vmatpush1.xpose.msra.mxu0 0.0
    %5385 = vmatprep.subr.mxu0 0.0
    %5386 = vmatpush1.xpose.msra.mxu0 0.0
    %5387 = vmatprep.subr.mxu0 0.0
    %5388 = vmatpush1.xpose.msra.mxu0 0.0
    %5389 = vmatprep.subr.mxu0 0.0
    %5390 = vmatpush1.xpose.msra.mxu0 0.0
    %5391 = vmatprep.subr.mxu0 0.0
    %5392 = vmatpush1.xpose.msra.mxu0 0.0
    %5393 = vmatprep.subr.mxu0 0.0
    %5394 = vmatpush1.xpose.msra.mxu0 0.0
    %5395 = vmatprep.subr.mxu0 0.0
    %5396 = vmatpush1.xpose.msra.mxu0 0.0
    %5397 = vmatprep.subr.mxu0 0.0
    %5398 = vmatpush1.xpose.msra.mxu0 0.0
    %5399 = vmatprep.subr.mxu0 0.0
    %5400 = vmatpush1.xpose.msra.mxu0 0.0
    %5401 = vmatprep.mubr.f32.mxu0 0.0
    %5402 = vmatmul.mubr.f32.gmra.mrb[0].mxu0 %v5326
    %v5403 = vpop.f32.mrb[0].mxu0
    %v5404 = vadd.f32 0.0, %v5403
    %v5405 = vpop.f32.mrb[0].mxu0
    %5406 = vmatprep.mubr.f32.mxu0 0.0
    %5407 = vmatmul.mubr.f32.gmra.mrb[0].mxu0 %v5328
    %v5408 = vpop.f32.mrb[0].mxu0
    %v5409 = vadd.f32 0.0, %v5408
    %v5410 = vpop.f32.mrb[0].mxu0
    %5411 = vmatprep.mubr.f32.mxu0 0.0
    %5412 = vmatmul.mubr.f32.gmra.mrb[0].mxu0 %v5330
    %v5413 = vpop.f32.mrb[0].mxu0
    %v5414 = vadd.f32 0.0, %v5413
    %v5415 = vpop.f32.mrb[0].mxu0
    %5416 = vmatprep.mubr.f32.mxu0 0.0
    %5417 = vmatmul.mubr.f32.gmra.mrb[0].mxu0 %v5332
    %v5418 = vpop.f32.mrb[0].mxu0
    %v5419 = vadd.f32 0.0, %v5418
    %v5420 = vpop.f32.mrb[0].mxu0
    %5421 = vdwg.mxu0
    %v5422 = vmul.f32 %v5404, 0.17677669
    %v5423 = vmul.f32 %v5409, 0.17677669
    %v5424 = vmul.f32 %v5414, 0.17677669
    %v5425 = vmul.f32 %v5419, 0.17677669
    %v5426 = vsel %vm1141, %v5422, -1e+30
    %v5427 = vsel %vm1141, %v5423, -1e+30
    %v5428 = vsel %vm1141, %v5424, -1e+30
    %v5429 = vsel %vm1141, %v5425, -1e+30
    %v5430 = vsel %vm1146, %v5426, -inf
    %5431 = vmax.xlane.f32.xlu0 %v5430
    %v5432 = vpop.xlane.xlu0 %5431
    %v5433 = vsel %vm1146, %v5427, -inf
    %5434 = vmax.xlane.f32.xlu0 %v5433
    %v5435 = vpop.xlane.xlu0 %5434
    %v5436 = vsel %vm1146, %v5428, -inf
    %5437 = vmax.xlane.f32.xlu0 %v5436
    %v5438 = vpop.xlane.xlu0 %5437
    %v5439 = vsel %vm1146, %v5429, -inf
    %5440 = vmax.xlane.f32.xlu0 %v5439
    %v5441 = vpop.xlane.xlu0 %5440
    %v5442 = vsub.f32 %v5426, %v5432
    %v5443 = vsub.f32 %v5427, %v5435
    %v5444 = vsub.f32 %v5428, %v5438
    %v5445 = vsub.f32 %v5429, %v5441
    %v5446 = vmul.f32 %v5442, 1.442695
    %v5447 = vpow.pop %v5446
    %v5448 = vmul.f32 %v5443, 1.442695
    %v5449 = vpow.pop %v5448
    %v5450 = vmul.f32 %v5444, 1.442695
    %v5451 = vpow.pop %v5450
    %v5452 = vmul.f32 %v5445, 1.442695
    %v5453 = vpow.pop %v5452
    %v5454 = vsel %vm1146, %v5447, 0.0
    %5455 = vadd.xlane.f32.xlu0 %v5454
    %v5456 = vpop.xlane.xlu0 %5455
    %v5457 = vsel %vm1146, %v5449, 0.0
    %5458 = vadd.xlane.f32.xlu0 %v5457
    %v5459 = vpop.xlane.xlu0 %5458
    %v5460 = vsel %vm1146, %v5451, 0.0
    %5461 = vadd.xlane.f32.xlu0 %v5460
    %v5462 = vpop.xlane.xlu0 %5461
    %v5463 = vsel %vm1146, %v5453, 0.0
    %5464 = vadd.xlane.f32.xlu0 %v5463
    %v5465 = vpop.xlane.xlu0 %5464
    %v5466 = vrcp.pop %v5456
    %v5467 = vrcp.pop %v5459
    %v5468 = vrcp.pop %v5462
    %v5469 = vrcp.pop %v5465
    %v5470 = vmul.f32 %v5447, %v5466
    %v5471 = vmul.f32 %v5449, %v5467
    %v5472 = vmul.f32 %v5451, %v5468
    %v5473 = vmul.f32 %v5453, %v5469
    %5474 = vrot.lane.b32.xlu0 %v5165, 96
    %v5475 = vpop.permute.xlu0 %5474
    %v5478 = vsel %vm1146, %v5470, 0
    %v5481 = vsel %vm1146, %v5471, 0
    %v5484 = vsel %vm1146, %v5472, 0
    %v5487 = vsel %vm1146, %v5473, 0
    %5489 = vmatprep.subr.mxu0 0.0
    %5490 = vmatpush1.msra.mxu0 %v5475
    %5491 = vmatprep.subr.mxu0 0.0
    %5492 = vmatpush1.msra.mxu0 0.0
    %5493 = vmatprep.subr.mxu0 0.0
    %5494 = vmatpush1.msra.mxu0 0.0
    %5495 = vmatprep.subr.mxu0 0.0
    %5496 = vmatpush1.msra.mxu0 0.0
    %5497 = vmatprep.subr.mxu0 0.0
    %5498 = vmatpush1.msra.mxu0 0.0
    %5499 = vmatprep.subr.mxu0 0.0
    %5500 = vmatpush1.msra.mxu0 0.0
    %5501 = vmatprep.subr.mxu0 0.0
    %5502 = vmatpush1.msra.mxu0 0.0
    %5503 = vmatprep.subr.mxu0 0.0
    %5504 = vmatpush1.msra.mxu0 0.0
    %5505 = vmatprep.subr.mxu0 0.0
    %5506 = vmatpush1.msra.mxu0 0.0
    %5507 = vmatprep.subr.mxu0 0.0
    %5508 = vmatpush1.msra.mxu0 0.0
    %5509 = vmatprep.subr.mxu0 0.0
    %5510 = vmatpush1.msra.mxu0 0.0
    %5511 = vmatprep.subr.mxu0 0.0
    %5512 = vmatpush1.msra.mxu0 0.0
    %5513 = vmatprep.subr.mxu0 0.0
    %5514 = vmatpush1.msra.mxu0 0.0
    %5515 = vmatprep.subr.mxu0 0.0
    %5516 = vmatpush1.msra.mxu0 0.0
    %5517 = vmatprep.subr.mxu0 0.0
    %5518 = vmatpush1.msra.mxu0 0.0
    %5519 = vmatprep.subr.mxu0 0.0
    %5520 = vmatpush1.msra.mxu0 0.0
    %5521 = vmatprep.subr.mxu0 0.0
    %5522 = vmatpush1.msra.mxu0 0.0
    %5523 = vmatprep.subr.mxu0 0.0
    %5524 = vmatpush1.msra.mxu0 0.0
    %5525 = vmatprep.subr.mxu0 0.0
    %5526 = vmatpush1.msra.mxu0 0.0
    %5527 = vmatprep.subr.mxu0 0.0
    %5528 = vmatpush1.msra.mxu0 0.0
    %5529 = vmatprep.subr.mxu0 0.0
    %5530 = vmatpush1.msra.mxu0 0.0
    %5531 = vmatprep.subr.mxu0 0.0
    %5532 = vmatpush1.msra.mxu0 0.0
    %5533 = vmatprep.subr.mxu0 0.0
    %5534 = vmatpush1.msra.mxu0 0.0
    %5535 = vmatprep.subr.mxu0 0.0
    %5536 = vmatpush1.msra.mxu0 0.0
    %5537 = vmatprep.subr.mxu0 0.0
    %5538 = vmatpush1.msra.mxu0 0.0
    %5539 = vmatprep.subr.mxu0 0.0
    %5540 = vmatpush1.msra.mxu0 0.0
    %5541 = vmatprep.subr.mxu0 0.0
    %5542 = vmatpush1.msra.mxu0 0.0
    %5543 = vmatprep.subr.mxu0 0.0
    %5544 = vmatpush1.msra.mxu0 0.0
    %5545 = vmatprep.subr.mxu0 0.0
    %5546 = vmatpush1.msra.mxu0 0.0
    %5547 = vmatprep.subr.mxu0 0.0
    %5548 = vmatpush1.msra.mxu0 0.0
    %5549 = vmatprep.subr.mxu0 0.0
    %5550 = vmatpush1.msra.mxu0 0.0
    %5551 = vmatprep.subr.mxu0 0.0
    %5552 = vmatpush1.msra.mxu0 0.0
    %5553 = vmatprep.mubr.f32.mxu0 0.0
    %5554 = vmatmul.mubr.f32.gmra.mrb[0].mxu0 %v5478
    %v5555 = vpop.f32.mrb[0].mxu0
    %v5556 = vadd.f32 0.0, %v5555
    %v5557 = vpop.f32.mrb[0].mxu0
    %5558 = vmatprep.mubr.f32.mxu0 0.0
    %5559 = vmatmul.mubr.f32.gmra.mrb[0].mxu0 %v5481
    %v5560 = vpop.f32.mrb[0].mxu0
    %v5561 = vadd.f32 0.0, %v5560
    %v5562 = vpop.f32.mrb[0].mxu0
    %5563 = vmatprep.mubr.f32.mxu0 0.0
    %5564 = vmatmul.mubr.f32.gmra.mrb[0].mxu0 %v5484
    %v5565 = vpop.f32.mrb[0].mxu0
    %v5566 = vadd.f32 0.0, %v5565
    %v5567 = vpop.f32.mrb[0].mxu0
    %5568 = vmatprep.mubr.f32.mxu0 0.0
    %5569 = vmatmul.mubr.f32.gmra.mrb[0].mxu0 %v5487
    %v5570 = vpop.f32.mrb[0].mxu0
    %v5571 = vadd.f32 0.0, %v5570
    %v5572 = vpop.f32.mrb[0].mxu0
    %5573 = vdwg.mxu0
    %5575 = vrot.lane.b32.xlu0 %v5561, 32
    %v5576 = vpop.permute.xlu0 %5575
    %5579 = vrot.lane.b32.xlu0 %v5566, 64
    %v5580 = vpop.permute.xlu0 %5579
    %5583 = vrot.lane.b32.xlu0 %v5571, 96
    %v5584 = vpop.permute.xlu0 %5583
    %v5586 = vsel %vm956, %v5556, %v5576
    %v5587 = vsel %vm1304, %v5586, %v5580
    %v5588 = vsel %vm1306, %v5587, %v5584
    %v5589 = vpack.c.bf16 %v5588, %v5588
    %5590 = vmatprep.subr.bf16.mxu0 0
    %5591 = vmatpush1.bf16.msra.mxu0 %v5018
    %5592 = vmatprep.subr.bf16.mxu0 0
    %5593 = vmatpush1.bf16.msra.mxu0 %v5019
    %5594 = vmatprep.subr.bf16.mxu0 0
    %5595 = vmatpush1.bf16.msra.mxu0 %v5020
    %5596 = vmatprep.subr.bf16.mxu0 0
    %5597 = vmatpush1.bf16.msra.mxu0 %v5021
    %5598 = vmatprep.subr.bf16.mxu0 0
    %5599 = vmatpush1.bf16.msra.mxu0 %v5022
    %5600 = vmatprep.subr.bf16.mxu0 0
    %5601 = vmatpush1.bf16.msra.mxu0 %v5023
    %5602 = vmatprep.subr.bf16.mxu0 0
    %5603 = vmatpush1.bf16.msra.mxu0 %v5024
    %5604 = vmatprep.subr.bf16.mxu0 0
    %5605 = vmatpush1.bf16.msra.mxu0 %v5025
    %5606 = vmatprep.subr.bf16.mxu0 0
    %5607 = vmatpush1.bf16.msra.mxu0 0
    %5608 = vmatprep.subr.bf16.mxu0 0
    %5609 = vmatpush1.bf16.msra.mxu0 0
    %5610 = vmatprep.subr.bf16.mxu0 0
    %5611 = vmatpush1.bf16.msra.mxu0 0
    %5612 = vmatprep.subr.bf16.mxu0 0
    %5613 = vmatpush1.bf16.msra.mxu0 0
    %5614 = vmatprep.subr.bf16.mxu0 0
    %5615 = vmatpush1.bf16.msra.mxu0 0
    %5616 = vmatprep.subr.bf16.mxu0 0
    %5617 = vmatpush1.bf16.msra.mxu0 0
    %5618 = vmatprep.subr.bf16.mxu0 0
    %5619 = vmatpush1.bf16.msra.mxu0 0
    %5620 = vmatprep.subr.bf16.mxu0 0
    %5621 = vmatpush1.bf16.msra.mxu0 0
    %5622 = vmatprep.mubr.bf16.mxu0 0
    %5623 = vmatmul.mubr.bf16.gmra.mrb[0].mxu0 %v5589
    %v5624 = vpop.f32.mrb[0].mxu0
    %v5625 = vadd.f32 0.0, %v5624
    %v5626 = vpop.f32.mrb[0].mxu0
    %v5627 = vpop.f32.mrb[0].mxu0
    %v5628 = vpop.f32.mrb[0].mxu0
    %5629 = vdwg.mxu0
    %v5630 = vadd.f32 %v4997, %v5625
    %v5631 = vmul.f32 %v5630, %v5630
    %5632 = vadd.xlane.f32.xlu0 %v5631
    %v5633 = vpop.xlane.xlu0 %5632
    %v5634 = vmul.f32 %v5633, %v695
    %v5635 = vadd.f32 %v5634, 1e-06
    %v5636 = vrsqrt.pop %v5635
    %v5637 = vmul.f32 %v5630, %v5636
    %v5638 = vlaneseq
    %v5639 = vshrl.u32 %v5638, 7
    %v5640 = vsub.s32 0, %v5639
    %v5641 = vrot.slane %v5026, %v5640
    %v5642 = vmul.f32 %v5637, %v5641
    %v5643 = vpack.c.bf16 %v5642, %v5642
    %5644 = vmatprep.subr.bf16.mxu0 %v5029
    %5645 = vmatpush1.bf16.msra.mxu0 %v5028
    %5646 = vmatprep.subr.bf16.mxu0 %v5033
    %5647 = vmatpush1.bf16.msra.mxu0 %v5032
    %5648 = vmatprep.subr.bf16.mxu0 %v5037
    %5649 = vmatpush1.bf16.msra.mxu0 %v5036
    %5650 = vmatprep.subr.bf16.mxu0 %v5041
    %5651 = vmatpush1.bf16.msra.mxu0 %v5040
    %5652 = vmatprep.subr.bf16.mxu0 %v5045
    %5653 = vmatpush1.bf16.msra.mxu0 %v5044
    %5654 = vmatprep.subr.bf16.mxu0 %v5049
    %5655 = vmatpush1.bf16.msra.mxu0 %v5048
    %5656 = vmatprep.subr.bf16.mxu0 %v5053
    %5657 = vmatpush1.bf16.msra.mxu0 %v5052
    %5658 = vmatprep.subr.bf16.mxu0 %v5057
    %5659 = vmatpush1.bf16.msra.mxu0 %v5056
    %5660 = vmatprep.subr.bf16.mxu0 0
    %5661 = vmatpush1.bf16.msra.mxu0 0
    %5662 = vmatprep.subr.bf16.mxu0 0
    %5663 = vmatpush1.bf16.msra.mxu0 0
    %5664 = vmatprep.subr.bf16.mxu0 0
    %5665 = vmatpush1.bf16.msra.mxu0 0
    %5666 = vmatprep.subr.bf16.mxu0 0
    %5667 = vmatpush1.bf16.msra.mxu0 0
    %5668 = vmatprep.subr.bf16.mxu0 0
    %5669 = vmatpush1.bf16.msra.mxu0 0
    %5670 = vmatprep.subr.bf16.mxu0 0
    %5671 = vmatpush1.bf16.msra.mxu0 0
    %5672 = vmatprep.subr.bf16.mxu0 0
    %5673 = vmatpush1.bf16.msra.mxu0 0
    %5674 = vmatprep.subr.bf16.mxu0 0
    %5675 = vmatpush1.bf16.msra.mxu0 0
    %5676 = vmatprep.mubr.bf16.mxu0 0
    %5677 = vmatmul.mubr.bf16.gmra.mrb[0].mxu0 %v5643
    %v5678 = vpop.f32.mrb[0].mxu0
    %v5679 = vadd.f32 0.0, %v5678
    %v5680 = vpop.f32.mrb[0].mxu0
    %v5681 = vadd.f32 0.0, %v5680
    %v5682 = vpop.f32.mrb[0].mxu0
    %v5683 = vpop.f32.mrb[0].mxu0
    %5684 = vdwg.mxu0
    %5685 = vmatprep.subr.bf16.mxu0 %v5031
    %5686 = vmatpush1.bf16.msra.mxu0 %v5030
    %5687 = vmatprep.subr.bf16.mxu0 %v5035
    %5688 = vmatpush1.bf16.msra.mxu0 %v5034
    %5689 = vmatprep.subr.bf16.mxu0 %v5039
    %5690 = vmatpush1.bf16.msra.mxu0 %v5038
    %5691 = vmatprep.subr.bf16.mxu0 %v5043
    %5692 = vmatpush1.bf16.msra.mxu0 %v5042
    %5693 = vmatprep.subr.bf16.mxu0 %v5047
    %5694 = vmatpush1.bf16.msra.mxu0 %v5046
    %5695 = vmatprep.subr.bf16.mxu0 %v5051
    %5696 = vmatpush1.bf16.msra.mxu0 %v5050
    %5697 = vmatprep.subr.bf16.mxu0 %v5055
    %5698 = vmatpush1.bf16.msra.mxu0 %v5054
    %5699 = vmatprep.subr.bf16.mxu0 %v5059
    %5700 = vmatpush1.bf16.msra.mxu0 %v5058
    %5701 = vmatprep.subr.bf16.mxu0 0
    %5702 = vmatpush1.bf16.msra.mxu0 0
    %5703 = vmatprep.subr.bf16.mxu0 0
    %5704 = vmatpush1.bf16.msra.mxu0 0
    %5705 = vmatprep.subr.bf16.mxu0 0
    %5706 = vmatpush1.bf16.msra.mxu0 0
    %5707 = vmatprep.subr.bf16.mxu0 0
    %5708 = vmatpush1.bf16.msra.mxu0 0
    %5709 = vmatprep.subr.bf16.mxu0 0
    %5710 = vmatpush1.bf16.msra.mxu0 0
    %5711 = vmatprep.subr.bf16.mxu0 0
    %5712 = vmatpush1.bf16.msra.mxu0 0
    %5713 = vmatprep.subr.bf16.mxu0 0
    %5714 = vmatpush1.bf16.msra.mxu0 0
    %5715 = vmatprep.subr.bf16.mxu0 0
    %5716 = vmatpush1.bf16.msra.mxu0 0
    %5717 = vmatprep.mubr.bf16.mxu0 0
    %5718 = vmatmul.mubr.bf16.gmra.mrb[0].mxu0 %v5643
    %v5719 = vpop.f32.mrb[0].mxu0
    %v5720 = vadd.f32 0.0, %v5719
    %v5721 = vpop.f32.mrb[0].mxu0
    %v5722 = vadd.f32 0.0, %v5721
    %v5723 = vpop.f32.mrb[0].mxu0
    %v5724 = vpop.f32.mrb[0].mxu0
    %5725 = vdwg.mxu0
    %v5726 = vxor.u32 %v5679, 2147483648
    %v5727 = vxor.u32 %v5681, 2147483648
    %v5728 = vmul.f32 %v5726, 1.442695
    %v5729 = vpow.pop %v5728
    %v5730 = vmul.f32 %v5727, 1.442695
    %v5731 = vpow.pop %v5730
    %v5732 = vadd.f32 %v5729, 1.0
    %v5733 = vadd.f32 %v5731, 1.0
    %v5734 = vrcp.pop %v5732
    %v5735 = vmul.f32 1.0, %v5734
    %v5736 = vrcp.pop %v5733
    %v5737 = vmul.f32 1.0, %v5736
    %v5738 = vmul.f32 %v5679, %v5735
    %v5739 = vmul.f32 %v5681, %v5737
    %v5740 = vmul.f32 %v5738, %v5720
    %v5741 = vmul.f32 %v5739, %v5722
    %v5742 = vpack.c.bf16 %v5740, %v5740
    %v5743 = vpack.c.bf16 %v5741, %v5741
    %5744 = vmatprep.subr.bf16.mxu0 0
    %5745 = vmatpush1.bf16.msra.mxu0 %v5061
    %5746 = vmatprep.subr.bf16.mxu0 0
    %5747 = vmatpush1.bf16.msra.mxu0 %v5062
    %5748 = vmatprep.subr.bf16.mxu0 0
    %5749 = vmatpush1.bf16.msra.mxu0 %v5063
    %5750 = vmatprep.subr.bf16.mxu0 0
    %5751 = vmatpush1.bf16.msra.mxu0 %v5064
    %5752 = vmatprep.subr.bf16.mxu0 0
    %5753 = vmatpush1.bf16.msra.mxu0 %v5065
    %5754 = vmatprep.subr.bf16.mxu0 0
    %5755 = vmatpush1.bf16.msra.mxu0 %v5066
    %5756 = vmatprep.subr.bf16.mxu0 0
    %5757 = vmatpush1.bf16.msra.mxu0 %v5067
    %5758 = vmatprep.subr.bf16.mxu0 0
    %5759 = vmatpush1.bf16.msra.mxu0 %v5068
    %5760 = vmatprep.subr.bf16.mxu0 0
    %5761 = vmatpush1.bf16.msra.mxu0 %v5069
    %5762 = vmatprep.subr.bf16.mxu0 0
    %5763 = vmatpush1.bf16.msra.mxu0 %v5070
    %5764 = vmatprep.subr.bf16.mxu0 0
    %5765 = vmatpush1.bf16.msra.mxu0 %v5071
    %5766 = vmatprep.subr.bf16.mxu0 0
    %5767 = vmatpush1.bf16.msra.mxu0 %v5072
    %5768 = vmatprep.subr.bf16.mxu0 0
    %5769 = vmatpush1.bf16.msra.mxu0 %v5073
    %5770 = vmatprep.subr.bf16.mxu0 0
    %5771 = vmatpush1.bf16.msra.mxu0 %v5074
    %5772 = vmatprep.subr.bf16.mxu0 0
    %5773 = vmatpush1.bf16.msra.mxu0 %v5075
    %5774 = vmatprep.subr.bf16.mxu0 0
    %5775 = vmatpush1.bf16.msra.mxu0 %v5076
    %5776 = vmatprep.mubr.bf16.mxu0 %v5743
    %5777 = vmatmul.mubr.bf16.gmra.mrb[0].mxu0 %v5742
    %v5778 = vpop.f32.mrb[0].mxu0
    %v5779 = vadd.f32 0.0, %v5778
    %v5780 = vpop.f32.mrb[0].mxu0
    %v5781 = vpop.f32.mrb[0].mxu0
    %v5782 = vpop.f32.mrb[0].mxu0
    %5783 = vdwg.mxu0
    %v5784 = vadd.f32 %v5630, %v5779
    %5785 = vst [vmem:[#allocation24 + $0x8] sm:$0xff] %v5784
    // Predicated region
    $region186: #{tts_adapter_forward.1} parent=1 // pred_check
      _
    $region187: #{tts_adapter_forward.1} parent=1 // pred_check_branch
      %5787 = sbr.rel (0) target = $region189
    $region188: #{tts_adapter_forward.1} parent=1 // pred_region
      %s5789 = ssub.s32 256, 256
      %5790 = vsyncadd [#allocation12], %s5789
      %s5792 = sshll.u32 [#allocation24], 4
      %s5793 = int_to_ptr.vmem [resolvable:$true] %s5792
      %5795 = dma.vmem_to_hbm [thread:$0]  %s5793, 256, %s24, [#allocation12]
    $region189: #{tts_adapter_forward.1} parent=1 // pred_fallthru
      _
    // Predicated region
    $region190: #{tts_adapter_forward.1} parent=1 // pred_check
      _
    $region191: #{tts_adapter_forward.1} parent=1 // pred_check_branch
      %5797 = sbr.rel (0) target = $region193
    $region192: #{tts_adapter_forward.1} parent=1 // pred_region
      %5798 = dma.done [#allocation12], 256
    $region193: #{tts_adapter_forward.1} parent=1 // pred_fallthru
      _
    %5799 = vsyncpa [#allocation11], 1
    %5800 = vsyncpa [#allocation14], 1
    %5801 = vsyncpa [#allocation17], 1
    %5802 = vsyncpa [#allocation20], 1
    %5803 = vsyncpa [#allocation23], 1
    %5804 = vsyncpa [#allocation12], 1
  %5805 = vsyncmov [#allocation9]
  %s5806 = vpop.sfrf %5805
  %p5807 = scmp.eq.s32.totalorder %s5806, 0
  %p5808 = pneg %p5807
  %5810 = shalt.err (%p5808)
  %s5811 = scalar_lea.sflag [#allocation9], 1
  %5812 = vsyncmov %s5811
  %s5813 = vpop.sfrf %5812
  %p5814 = scmp.eq.s32.totalorder %s5813, 0
  %p5815 = pneg %p5814
  %5817 = shalt.err (%p5815)
  %s5818 = scalar_lea.sflag [#allocation9], 2
  %5819 = vsyncmov %s5818
  %s5820 = vpop.sfrf %5819
  %p5821 = scmp.eq.s32.totalorder %s5820, 0
  %p5822 = pneg %p5821
  %5824 = shalt.err (%p5822)
  %s5825 = scalar_lea.sflag [#allocation9], 3
  %5826 = vsyncmov %s5825
  %s5827 = vpop.sfrf %5826
  %p5828 = scmp.eq.s32.totalorder %s5827, 0
  %p5829 = pneg %p5828
  %5831 = shalt.err (%p5829)
  %s5832 = scalar_lea.sflag [#allocation9], 4
  %5833 = vsyncmov %s5832
  %s5834 = vpop.sfrf %5833
  %p5835 = scmp.eq.s32.totalorder %s5834, 0
  %p5836 = pneg %p5835
  %5838 = shalt.err (%p5836)
  %s5839 = scalar_lea.sflag [#allocation9], 5
  %5840 = vsyncmov %s5839
  %s5841 = vpop.sfrf %5840
  %p5842 = scmp.eq.s32.totalorder %s5841, 0
  %p5843 = pneg %p5842
  %5845 = shalt.err (%p5843)
  %s5846 = scalar_lea.sflag [#allocation9], 6
  %5847 = vsyncmov %s5846
  %s5848 = vpop.sfrf %5847
  %p5849 = scmp.eq.s32.totalorder %s5848, 0
  %p5850 = pneg %p5849
  %5852 = shalt.err (%p5850)

</llo_original>
